<compile_context>
chip_gen: v7x
topology: tpu7x:2x2x1
jax: 0.10.0
libtpu: 0.0.40
codegen_flags: <defaults>
</compile_context>

<pallas_src>
import functools

import jax
import jax.numpy as jnp
from jax.experimental import pallas as pl
from jax.experimental.pallas import tpu as pltpu


def _make_kernel(NB, HC, H, W, C):
    C9 = 9 * C
    n_chunks = H // HC
    n_col_buf = min(2, n_chunks)

    def kernel(x_ref, w1_ref, b1_ref, w2_ref, b2_ref, o_ref,
               xw1_ref, xw2_ref, col_ref):
        # x_ref   : (NB, H, W, C)        f32 input block (also the residual)
        # w*_ref  : (9C, C)              bf16 conv weights, BN scale folded in,
        #                                row index = kw*3C + kh*C + cin
        # b*_ref  : (1, C)               f32 folded BN bias
        # o_ref   : (NB, H, W, C)        output block
        # xw1_ref : (NB, H+2, W+2, C)    bf16 scratch: padded conv1 input
        # xw2_ref : (NB, H+2, W+2, C)    bf16 scratch: padded conv2 input
        # col_ref : (nbuf, NB, HC, W, 9C) bf16 scratch: per-chunk im2col LHS
        bf16 = jnp.bfloat16

        # Zero only the two W-border columns of both padded scratches
        # (everything else is overwritten below).  Unconditional on purpose:
        # with megacore each TensorCore has its own scratch.
        zcol = jnp.zeros((NB, H + 2, 1, C), bf16)
        xw1_ref[:, :, 0:1, :] = zcol
        xw1_ref[:, :, W + 1:W + 2, :] = zcol
        xw2_ref[:, :, 0:1, :] = zcol
        xw2_ref[:, :, W + 1:W + 2, :] = zcol

        # conv1 input: single f32->bf16 cast; circular-H pad via two row writes.
        xw1_ref[:, 1:H + 1, 1:W + 1, :] = x_ref[...].astype(bf16)
        xw1_ref[:, 0:1, 1:W + 1, :] = x_ref[:, H - 1:H].astype(bf16)
        xw1_ref[:, H + 1:H + 2, 1:W + 1, :] = x_ref[:, 0:1].astype(bf16)

        def conv_chunks(src_ref, w_ref, b_ref, emit):
            # 3x3 conv (circular H / zero W padding already baked into src_ref)
            # as an H-chunked im2col + one (NB*HC*W, 9C)x(9C, C) MXU matmul per
            # chunk.  col is double-buffered so the im2col stores of chunk i+1
            # can overlap the matmul of chunk i.
            for c in range(n_chunks):
                r0 = c * HC
                slot = c % n_col_buf
                for kw in range(3):
                    for kh in range(3):
                        j = 3 * kw + kh
                        col_ref[slot, :, :, :, j * C:(j + 1) * C] = (
                            src_ref[:, r0 + kh:r0 + kh + HC, kw:kw + W, :])
                lhs = col_ref[slot].reshape(NB * HC * W, C9)
                acc = jnp.dot(lhs, w_ref[...],
                              preferred_element_type=jnp.float32)
                acc = (acc + b_ref[...]).reshape(NB, HC, W, C)
                emit(r0, acc)

        # conv1 + BN + ReLU -> bf16 interior of conv2's padded input.
        def emit1(r0, acc):
            xw2_ref[:, 1 + r0:1 + r0 + HC, 1:W + 1, :] = (
                jnp.maximum(acc, 0.0).astype(bf16))

        conv_chunks(xw1_ref, w1_ref, b1_ref, emit1)

        # Circular-H wrap rows for conv2's input (copied from its interior;
        # the zero W-border columns are carried along).
        xw2_ref[:, 0:1, :, :] = xw2_ref[:, H:H + 1, :, :]
        xw2_ref[:, H + 1:H + 2, :, :] = xw2_ref[:, 1:2, :, :]

        # conv2 + BN + residual(x, f32) + ReLU -> output.
        def emit2(r0, acc):
            out = jnp.maximum(acc + x_ref[:, r0:r0 + HC], 0.0)
            o_ref[:, r0:r0 + HC] = out.astype(o_ref.dtype)

        conv_chunks(xw2_ref, w2_ref, b2_ref, emit2)

    return kernel


def _fuse_weight(w_hwio, scale):
    # (kh, kw, Cin, Cout) * BN scale (per Cout) -> (9*Cin, Cout), row order
    # kw*3*Cin + kh*Cin + cin, matching the kernel's im2col channel order.
    kh, kw, cin, cout = w_hwio.shape
    wf = w_hwio * scale[None, None, None, :]
    wf = jnp.transpose(wf, (1, 0, 2, 3)).reshape(kh * kw * cin, cout)
    return wf.astype(jnp.bfloat16)


def _tpu_profile():
    """(num TensorCores sharing the grid, VMEM scratch budget, scoped limit)."""
    try:
        kind = jax.devices()[0].device_kind.lower()
    except Exception:  # pragma: no cover
        kind = ""
    if "v7" in kind:
        # 2 TCs/chip, only 64 MiB VMEM per TC -> tight budget, >=4 grid steps.
        return 2, 36 << 20, 48 << 20
    if "v5e" in kind or "v5 lite" in kind or "v5lite" in kind or "v6" in kind:
        # 1 TC, 128 MiB VMEM; default scoped limit is only 16/32 MiB -> raise.
        return 1, 64 << 20, 96 << 20
    # Unknown chip: conservative numbers that fit every current generation.
    return 1, 32 << 20, 48 << 20


def _pick_h_chunk(H):
    # 8..16-row chunks; prefer >=2 chunks so the im2col (VPU/store) of chunk
    # i+1 can overlap the MXU matmul of chunk i.
    for hc in (8, 16, 12, 4, 2):
        if H % hc == 0 and (H // hc >= 2 or hc == H):
            return hc
    return H


def _pick_images_per_step(N, H, W, C, hc, cores, budget_bytes):
    # Per-image VMEM footprint of one grid step.
    blk_io = 2 * H * W * C * 4                    # input + output block (f32)
    xw = 2 * (H + 2) * (W + 2) * C * 2            # two padded bf16 scratches
    col = 2 * hc * W * 9 * C * 2                  # double-buffered bf16 col
    per_image = 2 * blk_io + xw + col             # I/O blocks double-buffered
    nb_vmem = max(1, budget_bytes // per_image)
    # Megacore (v7x): keep >=2 steps per TensorCore so block DMAs stay hidden.
    # Single-TC chips: keep >=2 steps total for DMA pipelining, otherwise
    # maximize nb (matmul M) within the VMEM budget.
    min_steps = 4 if cores >= 2 else 2
    nb_steps = max(1, N // min_steps)
    nb = int(min(N, nb_vmem, nb_steps))
    while N % nb != 0:
        nb -= 1
    return nb


@functools.partial(jax.jit,
                   static_argnames=("nb", "hc", "vmem_limit", "out_dtype"))
def _ring_call(x_nhwc, w1_hwio, s1, b1, w2_hwio, s2, b2, *,
               nb, hc, vmem_limit, out_dtype):
    N, H, W, C = x_nhwc.shape
    C9 = 9 * C
    n_col_buf = min(2, H // hc)

    w1f = _fuse_weight(w1_hwio, s1)
    w2f = _fuse_weight(w2_hwio, s2)
    b1v = b1.reshape(1, C).astype(jnp.float32)
    b2v = b2.reshape(1, C).astype(jnp.float32)

    flops = 4 * N * H * W * 9 * C * C              # 2 convs * 2 flops/MAC
    bytes_accessed = (N * H * W * C * 4            # f32 input
                      + N * H * W * C * jnp.dtype(out_dtype).itemsize
                      + 2 * C9 * C * 2             # two bf16 fused weights
                      + 2 * C * 4)                 # two bias vectors

    kernel = _make_kernel(nb, hc, H, W, C)
    return pl.pallas_call(
        kernel,
        out_shape=jax.ShapeDtypeStruct((N, H, W, C), out_dtype),
        grid_spec=pltpu.PrefetchScalarGridSpec(
            num_scalar_prefetch=0,
            grid=(N // nb,),
            in_specs=[
                pl.BlockSpec((nb, H, W, C), lambda n: (n, 0, 0, 0)),
                pl.BlockSpec((C9, C), lambda n: (0, 0)),
                pl.BlockSpec((1, C), lambda n: (0, 0)),
                pl.BlockSpec((C9, C), lambda n: (0, 0)),
                pl.BlockSpec((1, C), lambda n: (0, 0)),
            ],
            out_specs=pl.BlockSpec((nb, H, W, C), lambda n: (n, 0, 0, 0)),
            scratch_shapes=[
                pltpu.VMEM((nb, H + 2, W + 2, C), jnp.bfloat16),
                pltpu.VMEM((nb, H + 2, W + 2, C), jnp.bfloat16),
                pltpu.VMEM((n_col_buf, nb, hc, W, C9), jnp.bfloat16),
            ],
        ),
        compiler_params=pltpu.CompilerParams(
            dimension_semantics=("parallel",),
            vmem_limit_bytes=vmem_limit),
        cost_estimate=pl.CostEstimate(
            flops=flops, transcendentals=0, bytes_accessed=bytes_accessed),
    )(x_nhwc, w1f, b1v, w2f, b2v)


def ring_basic_block_nhwc(x_nhwc, w1_hwio, s1, b1, w2_hwio, s2, b2,
                          out_dtype=jnp.float32):
    """RingBasicBlock forward in NHWC (stride=1, downsample=None, eval BN).

    x_nhwc: (N, H, W, C) f32; w*_hwio: (3, 3, Cin, Cout); s*/b*: (C,) folded
    eval-mode BN scale/bias (s = gamma/sqrt(var+eps), b = beta - mean*s).
    `out_dtype=jnp.bfloat16` gives a half-bandwidth output path; the residual
    add itself always happens in f32.
    """
    N, H, W, C = x_nhwc.shape
    hc = _pick_h_chunk(H)
    cores, budget, vmem_limit = _tpu_profile()
    nb = _pick_images_per_step(N, H, W, C, hc, cores, budget)
    return _ring_call(x_nhwc, w1_hwio, s1, b1, w2_hwio, s2, b2,
                      nb=nb, hc=hc, vmem_limit=vmem_limit,
                      out_dtype=jnp.dtype(out_dtype))


def ref_forward_nchw_f32(x, w1_oihw, s1, b1, w2_oihw, s2, b2):
    """Exact f32 PyTorch-semantics reference (eval-mode BN)."""
    def circ_pad_h(t):
        return jnp.concatenate([t[:, :, -1:, :], t, t[:, :, :1, :]], axis=2)

    def block(t, w, s, bb):
        out = jax.lax.conv_general_dilated(
            circ_pad_h(t), w, (1, 1), [(0, 0), (1, 1)],
            dimension_numbers=('NCHW', 'OIHW', 'NCHW'))
        return out * s[None, :, None, None] + bb[None, :, None, None]

    out = jnp.maximum(block(x, w1_oihw, s1, b1), 0.0)
    out = jnp.maximum(block(out, w2_oihw, s2, b2) + x, 0.0)
    return out


def ref_forward_nhwc_bf16(x, w1_hwio, s1, b1, w2_hwio, s2, b2):
    """Reference mirroring the kernel's numerics: BN scale folded into bf16
    weights, bf16 conv operands, f32 accumulation, f32 epilogue."""
    def circ_pad_h(t):
        return jnp.concatenate([t[:, -1:], t, t[:, :1]], axis=1)

    def block(t, w_hwio, s, bb):
        wf = (w_hwio * s[None, None, None, :]).astype(jnp.bfloat16)
        out = jax.lax.conv_general_dilated(
            circ_pad_h(t).astype(jnp.bfloat16), wf, (1, 1), [(0, 0), (1, 1)],
            dimension_numbers=('NHWC', 'HWIO', 'NHWC'),
            preferred_element_type=jnp.float32)
        return out + bb[None, None, None, :]

    out = jnp.maximum(block(x, w1_hwio, s1, b1), 0.0)
    out = jnp.maximum(block(out, w2_hwio, s2, b2) + x, 0.0)
    return out


if __name__ == "__main__":
    N, C, H, W = 2, 32, 16, 16   # stride=1, downsample=None, Cin == Cout

    key = jax.random.PRNGKey(0)
    (kx, kw1, kw2, kg1, kb1, km1, kv1,
     kg2, kb2, km2, kv2) = jax.random.split(key, 11)

    x_nchw = jax.random.normal(kx, (N, C, H, W), jnp.float32)

    # Conv weights in PyTorch OIHW layout.
    w1_oihw = jax.random.normal(kw1, (C, C, 3, 3), jnp.float32) * 0.1
    w2_oihw = jax.random.normal(kw2, (C, C, 3, 3), jnp.float32) * 0.1

    # Eval-mode BatchNorm parameters -> fold into scale/bias.
    eps = 1e-5
    gamma1 = 1.0 + 0.1 * jax.random.normal(kg1, (C,), jnp.float32)
    beta1 = 0.1 * jax.random.normal(kb1, (C,), jnp.float32)
    mean1 = 0.1 * jax.random.normal(km1, (C,), jnp.float32)
    var1 = 1.0 + 0.1 * jax.random.uniform(kv1, (C,), jnp.float32)
    gamma2 = 1.0 + 0.1 * jax.random.normal(kg2, (C,), jnp.float32)
    beta2 = 0.1 * jax.random.normal(kb2, (C,), jnp.float32)
    mean2 = 0.1 * jax.random.normal(km2, (C,), jnp.float32)
    var2 = 1.0 + 0.1 * jax.random.uniform(kv2, (C,), jnp.float32)

    s1 = gamma1 / jnp.sqrt(var1 + eps)
    b1 = beta1 - mean1 * s1
    s2 = gamma2 / jnp.sqrt(var2 + eps)
    b2 = beta2 - mean2 * s2

    # Kernel-layout weights (kh, kw, Cin, Cout) and NCHW -> NHWC input.
    w1_hwio = jnp.transpose(w1_oihw, (2, 3, 1, 0))
    w2_hwio = jnp.transpose(w2_oihw, (2, 3, 1, 0))
    x_nhwc = jnp.transpose(x_nchw, (0, 2, 3, 1))

    out_nhwc = ring_basic_block_nhwc(x_nhwc, w1_hwio, s1, b1, w2_hwio, s2, b2)
    out_nhwc = jax.block_until_ready(out_nhwc)
    out_nchw = jnp.transpose(out_nhwc, (0, 3, 1, 2))

    assert out_nchw.shape == (N, C, H, W)

    # Tight check vs a reference with identical numerics (bf16 MXU operands,
    # f32 accumulation) -- validates the kernel logic itself.
    ref_b = ref_forward_nhwc_bf16(x_nhwc, w1_hwio, s1, b1, w2_hwio, s2, b2)
    err_b = float(jnp.max(jnp.abs(out_nhwc - ref_b)))
    assert jnp.allclose(out_nhwc, ref_b, atol=2e-3, rtol=2e-3), err_b

    # Loose check vs the exact f32 PyTorch-semantics reference -- bounds the
    # bf16 quantization gap of the MXU fast path.
    ref_f = ref_forward_nchw_f32(x_nchw, w1_oihw, s1, b1, w2_oihw, s2, b2)
    err_f = float(jnp.max(jnp.abs(out_nchw - ref_f)))
    assert jnp.allclose(out_nchw, ref_f, atol=1e-1, rtol=1e-1), err_f

    print("KERNEL_OK")
</pallas_src>

<mosaic_0001>
module attributes {stable_mosaic.version = 11 : i64} {
  func.func @kernel(%arg0: i32, %arg1: memref<1x16x16x32xf32, #tpu.memory_space<vmem>>, %arg2: memref<288x32xbf16, #tpu.memory_space<vmem>>, %arg3: memref<1x32xf32, #tpu.memory_space<vmem>>, %arg4: memref<288x32xbf16, #tpu.memory_space<vmem>>, %arg5: memref<1x32xf32, #tpu.memory_space<vmem>>, %arg6: memref<1x16x16x32xf32, #tpu.memory_space<vmem>>, %arg7: memref<1x18x18x32xbf16, #tpu.memory_space<vmem>>, %arg8: memref<1x18x18x32xbf16, #tpu.memory_space<vmem>>, %arg9: memref<2x1x8x16x288xbf16, #tpu.memory_space<vmem>>) attributes {dimension_semantics = [#tpu.dimension_semantics<parallel>], iteration_bounds = array<i64: 2>, scalar_prefetch = 0 : i64, scratch_operands = 3 : i64, tpu.core_type = #tpu.core_type<tc>, window_params = [{transform_indices = @transform_0, window_bounds = array<i64: 1, 16, 16, 32>}, {pipeline_mode = #tpu.pipeline_mode<synchronous>, transform_indices = @transform_1, window_bounds = array<i64: 288, 32>}, {pipeline_mode = #tpu.pipeline_mode<synchronous>, transform_indices = @transform_2, window_bounds = array<i64: 1, 32>}, {pipeline_mode = #tpu.pipeline_mode<synchronous>, transform_indices = @transform_3, window_bounds = array<i64: 288, 32>}, {pipeline_mode = #tpu.pipeline_mode<synchronous>, transform_indices = @transform_4, window_bounds = array<i64: 1, 32>}, {transform_indices = @transform_5, window_bounds = array<i64: 1, 16, 16, 32>}]} {
    %cst = arith.constant 0.000000e+00 : bf16
    %0 = vector.broadcast %cst : bf16 to vector<1x18x1x32xbf16>
    %c0 = arith.constant 0 : index
    %c0_0 = arith.constant 0 : index
    %c0_1 = arith.constant 0 : index
    %c0_2 = arith.constant 0 : index
    %1 = vector.load %arg7[%c0, %c0_0, %c0_1, %c0_2] : memref<1x18x18x32xbf16, #tpu.memory_space<vmem>>, vector<1x18x1x32xbf16>
    tpu.vector_store %arg7[%c0, %c0_0, %c0_1, %c0_2], %0 {strides = array<i32>} : memref<1x18x18x32xbf16, #tpu.memory_space<vmem>>, vector<1x18x1x32xbf16>,
    %c0_3 = arith.constant 0 : index
    %c0_4 = arith.constant 0 : index
    %c17 = arith.constant 17 : index
    %c0_5 = arith.constant 0 : index
    %2 = vector.load %arg7[%c0_3, %c0_4, %c17, %c0_5] : memref<1x18x18x32xbf16, #tpu.memory_space<vmem>>, vector<1x18x1x32xbf16>
    tpu.vector_store %arg7[%c0_3, %c0_4, %c17, %c0_5], %0 {strides = array<i32>} : memref<1x18x18x32xbf16, #tpu.memory_space<vmem>>, vector<1x18x1x32xbf16>,
    %c0_6 = arith.constant 0 : index
    %c0_7 = arith.constant 0 : index
    %c0_8 = arith.constant 0 : index
    %c0_9 = arith.constant 0 : index
    %3 = vector.load %arg8[%c0_6, %c0_7, %c0_8, %c0_9] : memref<1x18x18x32xbf16, #tpu.memory_space<vmem>>, vector<1x18x1x32xbf16>
    tpu.vector_store %arg8[%c0_6, %c0_7, %c0_8, %c0_9], %0 {strides = array<i32>} : memref<1x18x18x32xbf16, #tpu.memory_space<vmem>>, vector<1x18x1x32xbf16>,
    %c0_10 = arith.constant 0 : index
    %c0_11 = arith.constant 0 : index
    %c17_12 = arith.constant 17 : index
    %c0_13 = arith.constant 0 : index
    %4 = vector.load %arg8[%c0_10, %c0_11, %c17_12, %c0_13] : memref<1x18x18x32xbf16, #tpu.memory_space<vmem>>, vector<1x18x1x32xbf16>
    tpu.vector_store %arg8[%c0_10, %c0_11, %c17_12, %c0_13], %0 {strides = array<i32>} : memref<1x18x18x32xbf16, #tpu.memory_space<vmem>>, vector<1x18x1x32xbf16>,
    %c0_14 = arith.constant 0 : index
    %c0_15 = arith.constant 0 : index
    %c0_16 = arith.constant 0 : index
    %c0_17 = arith.constant 0 : index
    %5 = vector.load %arg1[%c0_14, %c0_15, %c0_16, %c0_17] : memref<1x16x16x32xf32, #tpu.memory_space<vmem>>, vector<1x16x16x32xf32>
    %6 = arith.truncf %5 : vector<1x16x16x32xf32> to vector<1x16x16x32xbf16>
    %c0_18 = arith.constant 0 : index
    %c1 = arith.constant 1 : index
    %c1_19 = arith.constant 1 : index
    %c0_20 = arith.constant 0 : index
    %7 = vector.load %arg7[%c0_18, %c1, %c1_19, %c0_20] : memref<1x18x18x32xbf16, #tpu.memory_space<vmem>>, vector<1x16x16x32xbf16>
    tpu.vector_store %arg7[%c0_18, %c1, %c1_19, %c0_20], %6 {strides = array<i32>} : memref<1x18x18x32xbf16, #tpu.memory_space<vmem>>, vector<1x16x16x32xbf16>,
    %c0_21 = arith.constant 0 : index
    %c15 = arith.constant 15 : index
    %c0_22 = arith.constant 0 : index
    %c0_23 = arith.constant 0 : index
    %8 = vector.load %arg1[%c0_21, %c15, %c0_22, %c0_23] : memref<1x16x16x32xf32, #tpu.memory_space<vmem>>, vector<1x1x16x32xf32>
    %9 = arith.truncf %8 : vector<1x1x16x32xf32> to vector<1x1x16x32xbf16>
    %c0_24 = arith.constant 0 : index
    %c0_25 = arith.constant 0 : index
    %c1_26 = arith.constant 1 : index
    %c0_27 = arith.constant 0 : index
    %10 = vector.load %arg7[%c0_24, %c0_25, %c1_26, %c0_27] : memref<1x18x18x32xbf16, #tpu.memory_space<vmem>>, vector<1x1x16x32xbf16>
    tpu.vector_store %arg7[%c0_24, %c0_25, %c1_26, %c0_27], %9 {strides = array<i32>} : memref<1x18x18x32xbf16, #tpu.memory_space<vmem>>, vector<1x1x16x32xbf16>,
    %c0_28 = arith.constant 0 : index
    %c0_29 = arith.constant 0 : index
    %c0_30 = arith.constant 0 : index
    %c0_31 = arith.constant 0 : index
    %11 = vector.load %arg1[%c0_28, %c0_29, %c0_30, %c0_31] : memref<1x16x16x32xf32, #tpu.memory_space<vmem>>, vector<1x1x16x32xf32>
    %12 = arith.truncf %11 : vector<1x1x16x32xf32> to vector<1x1x16x32xbf16>
    %c0_32 = arith.constant 0 : index
    %c17_33 = arith.constant 17 : index
    %c1_34 = arith.constant 1 : index
    %c0_35 = arith.constant 0 : index
    %13 = vector.load %arg7[%c0_32, %c17_33, %c1_34, %c0_35] : memref<1x18x18x32xbf16, #tpu.memory_space<vmem>>, vector<1x1x16x32xbf16>
    tpu.vector_store %arg7[%c0_32, %c17_33, %c1_34, %c0_35], %12 {strides = array<i32>} : memref<1x18x18x32xbf16, #tpu.memory_space<vmem>>, vector<1x1x16x32xbf16>,
    %c0_36 = arith.constant 0 : index
    %c0_37 = arith.constant 0 : index
    %c0_38 = arith.constant 0 : index
    %c0_39 = arith.constant 0 : index
    %14 = vector.load %arg7[%c0_36, %c0_37, %c0_38, %c0_39] : memref<1x18x18x32xbf16, #tpu.memory_space<vmem>>, vector<1x8x16x32xbf16>
    %c0_40 = arith.constant 0 : index
    %c0_41 = arith.constant 0 : index
    %c0_42 = arith.constant 0 : index
    %c0_43 = arith.constant 0 : index
    %c0_44 = arith.constant 0 : index
    %15 = vector.load %arg9[%c0_40, %c0_41, %c0_42, %c0_43, %c0_44] : memref<2x1x8x16x288xbf16, #tpu.memory_space<vmem>>, vector<1x1x8x16x32xbf16>
    %16 = vector.shape_cast %15 : vector<1x1x8x16x32xbf16> to vector<1x8x16x32xbf16>
    %17 = vector.shape_cast %14 : vector<1x8x16x32xbf16> to vector<1x1x8x16x32xbf16>
    tpu.vector_store %arg9[%c0_40, %c0_41, %c0_42, %c0_43, %c0_44], %17 {strides = array<i32>} : memref<2x1x8x16x288xbf16, #tpu.memory_space<vmem>>, vector<1x1x8x16x32xbf16>,
    %c0_45 = arith.constant 0 : index
    %c1_46 = arith.constant 1 : index
    %c0_47 = arith.constant 0 : index
    %c0_48 = arith.constant 0 : index
    %18 = vector.load %arg7[%c0_45, %c1_46, %c0_47, %c0_48] : memref<1x18x18x32xbf16, #tpu.memory_space<vmem>>, vector<1x8x16x32xbf16>
    %c0_49 = arith.constant 0 : index
    %c0_50 = arith.constant 0 : index
    %c0_51 = arith.constant 0 : index
    %c0_52 = arith.constant 0 : index
    %c32 = arith.constant 32 : index
    %19 = vector.load %arg9[%c0_49, %c0_50, %c0_51, %c0_52, %c32] : memref<2x1x8x16x288xbf16, #tpu.memory_space<vmem>>, vector<1x1x8x16x32xbf16>
    %20 = vector.shape_cast %19 : vector<1x1x8x16x32xbf16> to vector<1x8x16x32xbf16>
    %21 = vector.shape_cast %18 : vector<1x8x16x32xbf16> to vector<1x1x8x16x32xbf16>
    tpu.vector_store %arg9[%c0_49, %c0_50, %c0_51, %c0_52, %c32], %21 {strides = array<i32>} : memref<2x1x8x16x288xbf16, #tpu.memory_space<vmem>>, vector<1x1x8x16x32xbf16>,
    %c0_53 = arith.constant 0 : index
    %c2 = arith.constant 2 : index
    %c0_54 = arith.constant 0 : index
    %c0_55 = arith.constant 0 : index
    %22 = vector.load %arg7[%c0_53, %c2, %c0_54, %c0_55] : memref<1x18x18x32xbf16, #tpu.memory_space<vmem>>, vector<1x8x16x32xbf16>
    %c0_56 = arith.constant 0 : index
    %c0_57 = arith.constant 0 : index
    %c0_58 = arith.constant 0 : index
    %c0_59 = arith.constant 0 : index
    %c64 = arith.constant 64 : index
    %23 = vector.load %arg9[%c0_56, %c0_57, %c0_58, %c0_59, %c64] : memref<2x1x8x16x288xbf16, #tpu.memory_space<vmem>>, vector<1x1x8x16x32xbf16>
    %24 = vector.shape_cast %23 : vector<1x1x8x16x32xbf16> to vector<1x8x16x32xbf16>
    %25 = vector.shape_cast %22 : vector<1x8x16x32xbf16> to vector<1x1x8x16x32xbf16>
    tpu.vector_store %arg9[%c0_56, %c0_57, %c0_58, %c0_59, %c64], %25 {strides = array<i32>} : memref<2x1x8x16x288xbf16, #tpu.memory_space<vmem>>, vector<1x1x8x16x32xbf16>,
    %c0_60 = arith.constant 0 : index
    %c0_61 = arith.constant 0 : index
    %c1_62 = arith.constant 1 : index
    %c0_63 = arith.constant 0 : index
    %26 = vector.load %arg7[%c0_60, %c0_61, %c1_62, %c0_63] : memref<1x18x18x32xbf16, #tpu.memory_space<vmem>>, vector<1x8x16x32xbf16>
    %c0_64 = arith.constant 0 : index
    %c0_65 = arith.constant 0 : index
    %c0_66 = arith.constant 0 : index
    %c0_67 = arith.constant 0 : index
    %c96 = arith.constant 96 : index
    %27 = vector.load %arg9[%c0_64, %c0_65, %c0_66, %c0_67, %c96] : memref<2x1x8x16x288xbf16, #tpu.memory_space<vmem>>, vector<1x1x8x16x32xbf16>
    %28 = vector.shape_cast %27 : vector<1x1x8x16x32xbf16> to vector<1x8x16x32xbf16>
    %29 = vector.shape_cast %26 : vector<1x8x16x32xbf16> to vector<1x1x8x16x32xbf16>
    tpu.vector_store %arg9[%c0_64, %c0_65, %c0_66, %c0_67, %c96], %29 {strides = array<i32>} : memref<2x1x8x16x288xbf16, #tpu.memory_space<vmem>>, vector<1x1x8x16x32xbf16>,
    %c0_68 = arith.constant 0 : index
    %c1_69 = arith.constant 1 : index
    %c1_70 = arith.constant 1 : index
    %c0_71 = arith.constant 0 : index
    %30 = vector.load %arg7[%c0_68, %c1_69, %c1_70, %c0_71] : memref<1x18x18x32xbf16, #tpu.memory_space<vmem>>, vector<1x8x16x32xbf16>
    %c0_72 = arith.constant 0 : index
    %c0_73 = arith.constant 0 : index
    %c0_74 = arith.constant 0 : index
    %c0_75 = arith.constant 0 : index
    %c128 = arith.constant 128 : index
    %31 = vector.load %arg9[%c0_72, %c0_73, %c0_74, %c0_75, %c128] : memref<2x1x8x16x288xbf16, #tpu.memory_space<vmem>>, vector<1x1x8x16x32xbf16>
    %32 = vector.shape_cast %31 : vector<1x1x8x16x32xbf16> to vector<1x8x16x32xbf16>
    %33 = vector.shape_cast %30 : vector<1x8x16x32xbf16> to vector<1x1x8x16x32xbf16>
    tpu.vector_store %arg9[%c0_72, %c0_73, %c0_74, %c0_75, %c128], %33 {strides = array<i32>} : memref<2x1x8x16x288xbf16, #tpu.memory_space<vmem>>, vector<1x1x8x16x32xbf16>,
    %c0_76 = arith.constant 0 : index
    %c2_77 = arith.constant 2 : index
    %c1_78 = arith.constant 1 : index
    %c0_79 = arith.constant 0 : index
    %34 = vector.load %arg7[%c0_76, %c2_77, %c1_78, %c0_79] : memref<1x18x18x32xbf16, #tpu.memory_space<vmem>>, vector<1x8x16x32xbf16>
    %c0_80 = arith.constant 0 : index
    %c0_81 = arith.constant 0 : index
    %c0_82 = arith.constant 0 : index
    %c0_83 = arith.constant 0 : index
    %c160 = arith.constant 160 : index
    %35 = vector.load %arg9[%c0_80, %c0_81, %c0_82, %c0_83, %c160] : memref<2x1x8x16x288xbf16, #tpu.memory_space<vmem>>, vector<1x1x8x16x32xbf16>
    %36 = vector.shape_cast %35 : vector<1x1x8x16x32xbf16> to vector<1x8x16x32xbf16>
    %37 = vector.shape_cast %34 : vector<1x8x16x32xbf16> to vector<1x1x8x16x32xbf16>
    tpu.vector_store %arg9[%c0_80, %c0_81, %c0_82, %c0_83, %c160], %37 {strides = array<i32>} : memref<2x1x8x16x288xbf16, #tpu.memory_space<vmem>>, vector<1x1x8x16x32xbf16>,
    %c0_84 = arith.constant 0 : index
    %c0_85 = arith.constant 0 : index
    %c2_86 = arith.constant 2 : index
    %c0_87 = arith.constant 0 : index
    %38 = vector.load %arg7[%c0_84, %c0_85, %c2_86, %c0_87] : memref<1x18x18x32xbf16, #tpu.memory_space<vmem>>, vector<1x8x16x32xbf16>
    %c0_88 = arith.constant 0 : index
    %c0_89 = arith.constant 0 : index
    %c0_90 = arith.constant 0 : index
    %c0_91 = arith.constant 0 : index
    %c192 = arith.constant 192 : index
    %39 = vector.load %arg9[%c0_88, %c0_89, %c0_90, %c0_91, %c192] : memref<2x1x8x16x288xbf16, #tpu.memory_space<vmem>>, vector<1x1x8x16x32xbf16>
    %40 = vector.shape_cast %39 : vector<1x1x8x16x32xbf16> to vector<1x8x16x32xbf16>
    %41 = vector.shape_cast %38 : vector<1x8x16x32xbf16> to vector<1x1x8x16x32xbf16>
    tpu.vector_store %arg9[%c0_88, %c0_89, %c0_90, %c0_91, %c192], %41 {strides = array<i32>} : memref<2x1x8x16x288xbf16, #tpu.memory_space<vmem>>, vector<1x1x8x16x32xbf16>,
    %c0_92 = arith.constant 0 : index
    %c1_93 = arith.constant 1 : index
    %c2_94 = arith.constant 2 : index
    %c0_95 = arith.constant 0 : index
    %42 = vector.load %arg7[%c0_92, %c1_93, %c2_94, %c0_95] : memref<1x18x18x32xbf16, #tpu.memory_space<vmem>>, vector<1x8x16x32xbf16>
    %c0_96 = arith.constant 0 : index
    %c0_97 = arith.constant 0 : index
    %c0_98 = arith.constant 0 : index
    %c0_99 = arith.constant 0 : index
    %c224 = arith.constant 224 : index
    %43 = vector.load %arg9[%c0_96, %c0_97, %c0_98, %c0_99, %c224] : memref<2x1x8x16x288xbf16, #tpu.memory_space<vmem>>, vector<1x1x8x16x32xbf16>
    %44 = vector.shape_cast %43 : vector<1x1x8x16x32xbf16> to vector<1x8x16x32xbf16>
    %45 = vector.shape_cast %42 : vector<1x8x16x32xbf16> to vector<1x1x8x16x32xbf16>
    tpu.vector_store %arg9[%c0_96, %c0_97, %c0_98, %c0_99, %c224], %45 {strides = array<i32>} : memref<2x1x8x16x288xbf16, #tpu.memory_space<vmem>>, vector<1x1x8x16x32xbf16>,
    %c0_100 = arith.constant 0 : index
    %c2_101 = arith.constant 2 : index
    %c2_102 = arith.constant 2 : index
    %c0_103 = arith.constant 0 : index
    %46 = vector.load %arg7[%c0_100, %c2_101, %c2_102, %c0_103] : memref<1x18x18x32xbf16, #tpu.memory_space<vmem>>, vector<1x8x16x32xbf16>
    %c0_104 = arith.constant 0 : index
    %c0_105 = arith.constant 0 : index
    %c0_106 = arith.constant 0 : index
    %c0_107 = arith.constant 0 : index
    %c256 = arith.constant 256 : index
    %47 = vector.load %arg9[%c0_104, %c0_105, %c0_106, %c0_107, %c256] : memref<2x1x8x16x288xbf16, #tpu.memory_space<vmem>>, vector<1x1x8x16x32xbf16>
    %48 = vector.shape_cast %47 : vector<1x1x8x16x32xbf16> to vector<1x8x16x32xbf16>
    %49 = vector.shape_cast %46 : vector<1x8x16x32xbf16> to vector<1x1x8x16x32xbf16>
    tpu.vector_store %arg9[%c0_104, %c0_105, %c0_106, %c0_107, %c256], %49 {strides = array<i32>} : memref<2x1x8x16x288xbf16, #tpu.memory_space<vmem>>, vector<1x1x8x16x32xbf16>,
    %c0_108 = arith.constant 0 : index
    %c0_109 = arith.constant 0 : index
    %c0_110 = arith.constant 0 : index
    %c0_111 = arith.constant 0 : index
    %c0_112 = arith.constant 0 : index
    %50 = vector.load %arg9[%c0_108, %c0_109, %c0_110, %c0_111, %c0_112] : memref<2x1x8x16x288xbf16, #tpu.memory_space<vmem>>, vector<1x1x8x16x288xbf16>
    %51 = vector.shape_cast %50 : vector<1x1x8x16x288xbf16> to vector<1x8x16x288xbf16>
    %52 = vector.shape_cast %51 : vector<1x8x16x288xbf16> to vector<128x288xbf16>
    %c0_113 = arith.constant 0 : index
    %c0_114 = arith.constant 0 : index
    %53 = vector.load %arg2[%c0_113, %c0_114] : memref<288x32xbf16, #tpu.memory_space<vmem>>, vector<288x32xbf16>
    %cst_115 = arith.constant dense<0.000000e+00> : vector<128x32xf32>
    %54 = tpu.matmul %52, %53, %cst_115 {dimension_numbers = #tpu.dot_dimension_numbers<[1], [0], [0], [1], [0, 0, 1, 1], [], []>} : vector<128x288xbf16>, vector<288x32xbf16>, vector<128x32xf32> -> vector<128x32xf32>
    %c0_116 = arith.constant 0 : index
    %c0_117 = arith.constant 0 : index
    %55 = vector.load %arg3[%c0_116, %c0_117] : memref<1x32xf32, #tpu.memory_space<vmem>>, vector<1x32xf32>
    %56 = vector.broadcast %55 : vector<1x32xf32> to vector<128x32xf32>
    %57 = arith.addf %54, %56 : vector<128x32xf32>
    %58 = vector.shape_cast %57 : vector<128x32xf32> to vector<1x8x16x32xf32>
    %cst_118 = arith.constant 0.000000e+00 : f32
    %59 = vector.broadcast %cst_118 : f32 to vector<1x8x16x32xf32>
    %60 = arith.maximumf %58, %59 : vector<1x8x16x32xf32>
    %61 = arith.truncf %60 : vector<1x8x16x32xf32> to vector<1x8x16x32xbf16>
    %c0_119 = arith.constant 0 : index
    %c1_120 = arith.constant 1 : index
    %c1_121 = arith.constant 1 : index
    %c0_122 = arith.constant 0 : index
    %62 = vector.load %arg8[%c0_119, %c1_120, %c1_121, %c0_122] : memref<1x18x18x32xbf16, #tpu.memory_space<vmem>>, vector<1x8x16x32xbf16>
    tpu.vector_store %arg8[%c0_119, %c1_120, %c1_121, %c0_122], %61 {strides = array<i32>} : memref<1x18x18x32xbf16, #tpu.memory_space<vmem>>, vector<1x8x16x32xbf16>,
    %c0_123 = arith.constant 0 : index
    %c8 = arith.constant 8 : index
    %c0_124 = arith.constant 0 : index
    %c0_125 = arith.constant 0 : index
    %63 = vector.load %arg7[%c0_123, %c8, %c0_124, %c0_125] : memref<1x18x18x32xbf16, #tpu.memory_space<vmem>>, vector<1x8x16x32xbf16>
    %c1_126 = arith.constant 1 : index
    %c0_127 = arith.constant 0 : index
    %c0_128 = arith.constant 0 : index
    %c0_129 = arith.constant 0 : index
    %c0_130 = arith.constant 0 : index
    %64 = vector.load %arg9[%c1_126, %c0_127, %c0_128, %c0_129, %c0_130] : memref<2x1x8x16x288xbf16, #tpu.memory_space<vmem>>, vector<1x1x8x16x32xbf16>
    %65 = vector.shape_cast %64 : vector<1x1x8x16x32xbf16> to vector<1x8x16x32xbf16>
    %66 = vector.shape_cast %63 : vector<1x8x16x32xbf16> to vector<1x1x8x16x32xbf16>
    tpu.vector_store %arg9[%c1_126, %c0_127, %c0_128, %c0_129, %c0_130], %66 {strides = array<i32>} : memref<2x1x8x16x288xbf16, #tpu.memory_space<vmem>>, vector<1x1x8x16x32xbf16>,
    %c0_131 = arith.constant 0 : index
    %c9 = arith.constant 9 : index
    %c0_132 = arith.constant 0 : index
    %c0_133 = arith.constant 0 : index
    %67 = vector.load %arg7[%c0_131, %c9, %c0_132, %c0_133] : memref<1x18x18x32xbf16, #tpu.memory_space<vmem>>, vector<1x8x16x32xbf16>
    %c1_134 = arith.constant 1 : index
    %c0_135 = arith.constant 0 : index
    %c0_136 = arith.constant 0 : index
    %c0_137 = arith.constant 0 : index
    %c32_138 = arith.constant 32 : index
    %68 = vector.load %arg9[%c1_134, %c0_135, %c0_136, %c0_137, %c32_138] : memref<2x1x8x16x288xbf16, #tpu.memory_space<vmem>>, vector<1x1x8x16x32xbf16>
    %69 = vector.shape_cast %68 : vector<1x1x8x16x32xbf16> to vector<1x8x16x32xbf16>
    %70 = vector.shape_cast %67 : vector<1x8x16x32xbf16> to vector<1x1x8x16x32xbf16>
    tpu.vector_store %arg9[%c1_134, %c0_135, %c0_136, %c0_137, %c32_138], %70 {strides = array<i32>} : memref<2x1x8x16x288xbf16, #tpu.memory_space<vmem>>, vector<1x1x8x16x32xbf16>,
    %c0_139 = arith.constant 0 : index
    %c10 = arith.constant 10 : index
    %c0_140 = arith.constant 0 : index
    %c0_141 = arith.constant 0 : index
    %71 = vector.load %arg7[%c0_139, %c10, %c0_140, %c0_141] : memref<1x18x18x32xbf16, #tpu.memory_space<vmem>>, vector<1x8x16x32xbf16>
    %c1_142 = arith.constant 1 : index
    %c0_143 = arith.constant 0 : index
    %c0_144 = arith.constant 0 : index
    %c0_145 = arith.constant 0 : index
    %c64_146 = arith.constant 64 : index
    %72 = vector.load %arg9[%c1_142, %c0_143, %c0_144, %c0_145, %c64_146] : memref<2x1x8x16x288xbf16, #tpu.memory_space<vmem>>, vector<1x1x8x16x32xbf16>
    %73 = vector.shape_cast %72 : vector<1x1x8x16x32xbf16> to vector<1x8x16x32xbf16>
    %74 = vector.shape_cast %71 : vector<1x8x16x32xbf16> to vector<1x1x8x16x32xbf16>
    tpu.vector_store %arg9[%c1_142, %c0_143, %c0_144, %c0_145, %c64_146], %74 {strides = array<i32>} : memref<2x1x8x16x288xbf16, #tpu.memory_space<vmem>>, vector<1x1x8x16x32xbf16>,
    %c0_147 = arith.constant 0 : index
    %c8_148 = arith.constant 8 : index
    %c1_149 = arith.constant 1 : index
    %c0_150 = arith.constant 0 : index
    %75 = vector.load %arg7[%c0_147, %c8_148, %c1_149, %c0_150] : memref<1x18x18x32xbf16, #tpu.memory_space<vmem>>, vector<1x8x16x32xbf16>
    %c1_151 = arith.constant 1 : index
    %c0_152 = arith.constant 0 : index
    %c0_153 = arith.constant 0 : index
    %c0_154 = arith.constant 0 : index
    %c96_155 = arith.constant 96 : index
    %76 = vector.load %arg9[%c1_151, %c0_152, %c0_153, %c0_154, %c96_155] : memref<2x1x8x16x288xbf16, #tpu.memory_space<vmem>>, vector<1x1x8x16x32xbf16>
    %77 = vector.shape_cast %76 : vector<1x1x8x16x32xbf16> to vector<1x8x16x32xbf16>
    %78 = vector.shape_cast %75 : vector<1x8x16x32xbf16> to vector<1x1x8x16x32xbf16>
    tpu.vector_store %arg9[%c1_151, %c0_152, %c0_153, %c0_154, %c96_155], %78 {strides = array<i32>} : memref<2x1x8x16x288xbf16, #tpu.memory_space<vmem>>, vector<1x1x8x16x32xbf16>,
    %c0_156 = arith.constant 0 : index
    %c9_157 = arith.constant 9 : index
    %c1_158 = arith.constant 1 : index
    %c0_159 = arith.constant 0 : index
    %79 = vector.load %arg7[%c0_156, %c9_157, %c1_158, %c0_159] : memref<1x18x18x32xbf16, #tpu.memory_space<vmem>>, vector<1x8x16x32xbf16>
    %c1_160 = arith.constant 1 : index
    %c0_161 = arith.constant 0 : index
    %c0_162 = arith.constant 0 : index
    %c0_163 = arith.constant 0 : index
    %c128_164 = arith.constant 128 : index
    %80 = vector.load %arg9[%c1_160, %c0_161, %c0_162, %c0_163, %c128_164] : memref<2x1x8x16x288xbf16, #tpu.memory_space<vmem>>, vector<1x1x8x16x32xbf16>
    %81 = vector.shape_cast %80 : vector<1x1x8x16x32xbf16> to vector<1x8x16x32xbf16>
    %82 = vector.shape_cast %79 : vector<1x8x16x32xbf16> to vector<1x1x8x16x32xbf16>
    tpu.vector_store %arg9[%c1_160, %c0_161, %c0_162, %c0_163, %c128_164], %82 {strides = array<i32>} : memref<2x1x8x16x288xbf16, #tpu.memory_space<vmem>>, vector<1x1x8x16x32xbf16>,
    %c0_165 = arith.constant 0 : index
    %c10_166 = arith.constant 10 : index
    %c1_167 = arith.constant 1 : index
    %c0_168 = arith.constant 0 : index
    %83 = vector.load %arg7[%c0_165, %c10_166, %c1_167, %c0_168] : memref<1x18x18x32xbf16, #tpu.memory_space<vmem>>, vector<1x8x16x32xbf16>
    %c1_169 = arith.constant 1 : index
    %c0_170 = arith.constant 0 : index
    %c0_171 = arith.constant 0 : index
    %c0_172 = arith.constant 0 : index
    %c160_173 = arith.constant 160 : index
    %84 = vector.load %arg9[%c1_169, %c0_170, %c0_171, %c0_172, %c160_173] : memref<2x1x8x16x288xbf16, #tpu.memory_space<vmem>>, vector<1x1x8x16x32xbf16>
    %85 = vector.shape_cast %84 : vector<1x1x8x16x32xbf16> to vector<1x8x16x32xbf16>
    %86 = vector.shape_cast %83 : vector<1x8x16x32xbf16> to vector<1x1x8x16x32xbf16>
    tpu.vector_store %arg9[%c1_169, %c0_170, %c0_171, %c0_172, %c160_173], %86 {strides = array<i32>} : memref<2x1x8x16x288xbf16, #tpu.memory_space<vmem>>, vector<1x1x8x16x32xbf16>,
    %c0_174 = arith.constant 0 : index
    %c8_175 = arith.constant 8 : index
    %c2_176 = arith.constant 2 : index
    %c0_177 = arith.constant 0 : index
    %87 = vector.load %arg7[%c0_174, %c8_175, %c2_176, %c0_177] : memref<1x18x18x32xbf16, #tpu.memory_space<vmem>>, vector<1x8x16x32xbf16>
    %c1_178 = arith.constant 1 : index
    %c0_179 = arith.constant 0 : index
    %c0_180 = arith.constant 0 : index
    %c0_181 = arith.constant 0 : index
    %c192_182 = arith.constant 192 : index
    %88 = vector.load %arg9[%c1_178, %c0_179, %c0_180, %c0_181, %c192_182] : memref<2x1x8x16x288xbf16, #tpu.memory_space<vmem>>, vector<1x1x8x16x32xbf16>
    %89 = vector.shape_cast %88 : vector<1x1x8x16x32xbf16> to vector<1x8x16x32xbf16>
    %90 = vector.shape_cast %87 : vector<1x8x16x32xbf16> to vector<1x1x8x16x32xbf16>
    tpu.vector_store %arg9[%c1_178, %c0_179, %c0_180, %c0_181, %c192_182], %90 {strides = array<i32>} : memref<2x1x8x16x288xbf16, #tpu.memory_space<vmem>>, vector<1x1x8x16x32xbf16>,
    %c0_183 = arith.constant 0 : index
    %c9_184 = arith.constant 9 : index
    %c2_185 = arith.constant 2 : index
    %c0_186 = arith.constant 0 : index
    %91 = vector.load %arg7[%c0_183, %c9_184, %c2_185, %c0_186] : memref<1x18x18x32xbf16, #tpu.memory_space<vmem>>, vector<1x8x16x32xbf16>
    %c1_187 = arith.constant 1 : index
    %c0_188 = arith.constant 0 : index
    %c0_189 = arith.constant 0 : index
    %c0_190 = arith.constant 0 : index
    %c224_191 = arith.constant 224 : index
    %92 = vector.load %arg9[%c1_187, %c0_188, %c0_189, %c0_190, %c224_191] : memref<2x1x8x16x288xbf16, #tpu.memory_space<vmem>>, vector<1x1x8x16x32xbf16>
    %93 = vector.shape_cast %92 : vector<1x1x8x16x32xbf16> to vector<1x8x16x32xbf16>
    %94 = vector.shape_cast %91 : vector<1x8x16x32xbf16> to vector<1x1x8x16x32xbf16>
    tpu.vector_store %arg9[%c1_187, %c0_188, %c0_189, %c0_190, %c224_191], %94 {strides = array<i32>} : memref<2x1x8x16x288xbf16, #tpu.memory_space<vmem>>, vector<1x1x8x16x32xbf16>,
    %c0_192 = arith.constant 0 : index
    %c10_193 = arith.constant 10 : index
    %c2_194 = arith.constant 2 : index
    %c0_195 = arith.constant 0 : index
    %95 = vector.load %arg7[%c0_192, %c10_193, %c2_194, %c0_195] : memref<1x18x18x32xbf16, #tpu.memory_space<vmem>>, vector<1x8x16x32xbf16>
    %c1_196 = arith.constant 1 : index
    %c0_197 = arith.constant 0 : index
    %c0_198 = arith.constant 0 : index
    %c0_199 = arith.constant 0 : index
    %c256_200 = arith.constant 256 : index
    %96 = vector.load %arg9[%c1_196, %c0_197, %c0_198, %c0_199, %c256_200] : memref<2x1x8x16x288xbf16, #tpu.memory_space<vmem>>, vector<1x1x8x16x32xbf16>
    %97 = vector.shape_cast %96 : vector<1x1x8x16x32xbf16> to vector<1x8x16x32xbf16>
    %98 = vector.shape_cast %95 : vector<1x8x16x32xbf16> to vector<1x1x8x16x32xbf16>
    tpu.vector_store %arg9[%c1_196, %c0_197, %c0_198, %c0_199, %c256_200], %98 {strides = array<i32>} : memref<2x1x8x16x288xbf16, #tpu.memory_space<vmem>>, vector<1x1x8x16x32xbf16>,
    %c1_201 = arith.constant 1 : index
    %c0_202 = arith.constant 0 : index
    %c0_203 = arith.constant 0 : index
    %c0_204 = arith.constant 0 : index
    %c0_205 = arith.constant 0 : index
    %99 = vector.load %arg9[%c1_201, %c0_202, %c0_203, %c0_204, %c0_205] : memref<2x1x8x16x288xbf16, #tpu.memory_space<vmem>>, vector<1x1x8x16x288xbf16>
    %100 = vector.shape_cast %99 : vector<1x1x8x16x288xbf16> to vector<1x8x16x288xbf16>
    %101 = vector.shape_cast %100 : vector<1x8x16x288xbf16> to vector<128x288xbf16>
    %c0_206 = arith.constant 0 : index
    %c0_207 = arith.constant 0 : index
    %102 = vector.load %arg2[%c0_206, %c0_207] : memref<288x32xbf16, #tpu.memory_space<vmem>>, vector<288x32xbf16>
    %cst_208 = arith.constant dense<0.000000e+00> : vector<128x32xf32>
    %103 = tpu.matmul %101, %102, %cst_208 {dimension_numbers = #tpu.dot_dimension_numbers<[1], [0], [0], [1], [0, 0, 1, 1], [], []>} : vector<128x288xbf16>, vector<288x32xbf16>, vector<128x32xf32> -> vector<128x32xf32>
    %c0_209 = arith.constant 0 : index
    %c0_210 = arith.constant 0 : index
    %104 = vector.load %arg3[%c0_209, %c0_210] : memref<1x32xf32, #tpu.memory_space<vmem>>, vector<1x32xf32>
    %105 = vector.broadcast %104 : vector<1x32xf32> to vector<128x32xf32>
    %106 = arith.addf %103, %105 : vector<128x32xf32>
    %107 = vector.shape_cast %106 : vector<128x32xf32> to vector<1x8x16x32xf32>
    %cst_211 = arith.constant 0.000000e+00 : f32
    %108 = vector.broadcast %cst_211 : f32 to vector<1x8x16x32xf32>
    %109 = arith.maximumf %107, %108 : vector<1x8x16x32xf32>
    %110 = arith.truncf %109 : vector<1x8x16x32xf32> to vector<1x8x16x32xbf16>
    %c0_212 = arith.constant 0 : index
    %c9_213 = arith.constant 9 : index
    %c1_214 = arith.constant 1 : index
    %c0_215 = arith.constant 0 : index
    %111 = vector.load %arg8[%c0_212, %c9_213, %c1_214, %c0_215] : memref<1x18x18x32xbf16, #tpu.memory_space<vmem>>, vector<1x8x16x32xbf16>
    tpu.vector_store %arg8[%c0_212, %c9_213, %c1_214, %c0_215], %110 {strides = array<i32>} : memref<1x18x18x32xbf16, #tpu.memory_space<vmem>>, vector<1x8x16x32xbf16>,
    %c0_216 = arith.constant 0 : index
    %c16 = arith.constant 16 : index
    %c0_217 = arith.constant 0 : index
    %c0_218 = arith.constant 0 : index
    %112 = vector.load %arg8[%c0_216, %c16, %c0_217, %c0_218] : memref<1x18x18x32xbf16, #tpu.memory_space<vmem>>, vector<1x1x18x32xbf16>
    %c0_219 = arith.constant 0 : index
    %c0_220 = arith.constant 0 : index
    %c0_221 = arith.constant 0 : index
    %c0_222 = arith.constant 0 : index
    %113 = vector.load %arg8[%c0_219, %c0_220, %c0_221, %c0_222] : memref<1x18x18x32xbf16, #tpu.memory_space<vmem>>, vector<1x1x18x32xbf16>
    tpu.vector_store %arg8[%c0_219, %c0_220, %c0_221, %c0_222], %112 {strides = array<i32>} : memref<1x18x18x32xbf16, #tpu.memory_space<vmem>>, vector<1x1x18x32xbf16>,
    %c0_223 = arith.constant 0 : index
    %c1_224 = arith.constant 1 : index
    %c0_225 = arith.constant 0 : index
    %c0_226 = arith.constant 0 : index
    %114 = vector.load %arg8[%c0_223, %c1_224, %c0_225, %c0_226] : memref<1x18x18x32xbf16, #tpu.memory_space<vmem>>, vector<1x1x18x32xbf16>
    %c0_227 = arith.constant 0 : index
    %c17_228 = arith.constant 17 : index
    %c0_229 = arith.constant 0 : index
    %c0_230 = arith.constant 0 : index
    %115 = vector.load %arg8[%c0_227, %c17_228, %c0_229, %c0_230] : memref<1x18x18x32xbf16, #tpu.memory_space<vmem>>, vector<1x1x18x32xbf16>
    tpu.vector_store %arg8[%c0_227, %c17_228, %c0_229, %c0_230], %114 {strides = array<i32>} : memref<1x18x18x32xbf16, #tpu.memory_space<vmem>>, vector<1x1x18x32xbf16>,
    %c0_231 = arith.constant 0 : index
    %c0_232 = arith.constant 0 : index
    %c0_233 = arith.constant 0 : index
    %c0_234 = arith.constant 0 : index
    %116 = vector.load %arg8[%c0_231, %c0_232, %c0_233, %c0_234] : memref<1x18x18x32xbf16, #tpu.memory_space<vmem>>, vector<1x8x16x32xbf16>
    %c0_235 = arith.constant 0 : index
    %c0_236 = arith.constant 0 : index
    %c0_237 = arith.constant 0 : index
    %c0_238 = arith.constant 0 : index
    %c0_239 = arith.constant 0 : index
    %117 = vector.load %arg9[%c0_235, %c0_236, %c0_237, %c0_238, %c0_239] : memref<2x1x8x16x288xbf16, #tpu.memory_space<vmem>>, vector<1x1x8x16x32xbf16>
    %118 = vector.shape_cast %117 : vector<1x1x8x16x32xbf16> to vector<1x8x16x32xbf16>
    %119 = vector.shape_cast %116 : vector<1x8x16x32xbf16> to vector<1x1x8x16x32xbf16>
    tpu.vector_store %arg9[%c0_235, %c0_236, %c0_237, %c0_238, %c0_239], %119 {strides = array<i32>} : memref<2x1x8x16x288xbf16, #tpu.memory_space<vmem>>, vector<1x1x8x16x32xbf16>,
    %c0_240 = arith.constant 0 : index
    %c1_241 = arith.constant 1 : index
    %c0_242 = arith.constant 0 : index
    %c0_243 = arith.constant 0 : index
    %120 = vector.load %arg8[%c0_240, %c1_241, %c0_242, %c0_243] : memref<1x18x18x32xbf16, #tpu.memory_space<vmem>>, vector<1x8x16x32xbf16>
    %c0_244 = arith.constant 0 : index
    %c0_245 = arith.constant 0 : index
    %c0_246 = arith.constant 0 : index
    %c0_247 = arith.constant 0 : index
    %c32_248 = arith.constant 32 : index
    %121 = vector.load %arg9[%c0_244, %c0_245, %c0_246, %c0_247, %c32_248] : memref<2x1x8x16x288xbf16, #tpu.memory_space<vmem>>, vector<1x1x8x16x32xbf16>
    %122 = vector.shape_cast %121 : vector<1x1x8x16x32xbf16> to vector<1x8x16x32xbf16>
    %123 = vector.shape_cast %120 : vector<1x8x16x32xbf16> to vector<1x1x8x16x32xbf16>
    tpu.vector_store %arg9[%c0_244, %c0_245, %c0_246, %c0_247, %c32_248], %123 {strides = array<i32>} : memref<2x1x8x16x288xbf16, #tpu.memory_space<vmem>>, vector<1x1x8x16x32xbf16>,
    %c0_249 = arith.constant 0 : index
    %c2_250 = arith.constant 2 : index
    %c0_251 = arith.constant 0 : index
    %c0_252 = arith.constant 0 : index
    %124 = vector.load %arg8[%c0_249, %c2_250, %c0_251, %c0_252] : memref<1x18x18x32xbf16, #tpu.memory_space<vmem>>, vector<1x8x16x32xbf16>
    %c0_253 = arith.constant 0 : index
    %c0_254 = arith.constant 0 : index
    %c0_255 = arith.constant 0 : index
    %c0_256 = arith.constant 0 : index
    %c64_257 = arith.constant 64 : index
    %125 = vector.load %arg9[%c0_253, %c0_254, %c0_255, %c0_256, %c64_257] : memref<2x1x8x16x288xbf16, #tpu.memory_space<vmem>>, vector<1x1x8x16x32xbf16>
    %126 = vector.shape_cast %125 : vector<1x1x8x16x32xbf16> to vector<1x8x16x32xbf16>
    %127 = vector.shape_cast %124 : vector<1x8x16x32xbf16> to vector<1x1x8x16x32xbf16>
    tpu.vector_store %arg9[%c0_253, %c0_254, %c0_255, %c0_256, %c64_257], %127 {strides = array<i32>} : memref<2x1x8x16x288xbf16, #tpu.memory_space<vmem>>, vector<1x1x8x16x32xbf16>,
    %c0_258 = arith.constant 0 : index
    %c0_259 = arith.constant 0 : index
    %c1_260 = arith.constant 1 : index
    %c0_261 = arith.constant 0 : index
    %128 = vector.load %arg8[%c0_258, %c0_259, %c1_260, %c0_261] : memref<1x18x18x32xbf16, #tpu.memory_space<vmem>>, vector<1x8x16x32xbf16>
    %c0_262 = arith.constant 0 : index
    %c0_263 = arith.constant 0 : index
    %c0_264 = arith.constant 0 : index
    %c0_265 = arith.constant 0 : index
    %c96_266 = arith.constant 96 : index
    %129 = vector.load %arg9[%c0_262, %c0_263, %c0_264, %c0_265, %c96_266] : memref<2x1x8x16x288xbf16, #tpu.memory_space<vmem>>, vector<1x1x8x16x32xbf16>
    %130 = vector.shape_cast %129 : vector<1x1x8x16x32xbf16> to vector<1x8x16x32xbf16>
    %131 = vector.shape_cast %128 : vector<1x8x16x32xbf16> to vector<1x1x8x16x32xbf16>
    tpu.vector_store %arg9[%c0_262, %c0_263, %c0_264, %c0_265, %c96_266], %131 {strides = array<i32>} : memref<2x1x8x16x288xbf16, #tpu.memory_space<vmem>>, vector<1x1x8x16x32xbf16>,
    %c0_267 = arith.constant 0 : index
    %c1_268 = arith.constant 1 : index
    %c1_269 = arith.constant 1 : index
    %c0_270 = arith.constant 0 : index
    %132 = vector.load %arg8[%c0_267, %c1_268, %c1_269, %c0_270] : memref<1x18x18x32xbf16, #tpu.memory_space<vmem>>, vector<1x8x16x32xbf16>
    %c0_271 = arith.constant 0 : index
    %c0_272 = arith.constant 0 : index
    %c0_273 = arith.constant 0 : index
    %c0_274 = arith.constant 0 : index
    %c128_275 = arith.constant 128 : index
    %133 = vector.load %arg9[%c0_271, %c0_272, %c0_273, %c0_274, %c128_275] : memref<2x1x8x16x288xbf16, #tpu.memory_space<vmem>>, vector<1x1x8x16x32xbf16>
    %134 = vector.shape_cast %133 : vector<1x1x8x16x32xbf16> to vector<1x8x16x32xbf16>
    %135 = vector.shape_cast %132 : vector<1x8x16x32xbf16> to vector<1x1x8x16x32xbf16>
    tpu.vector_store %arg9[%c0_271, %c0_272, %c0_273, %c0_274, %c128_275], %135 {strides = array<i32>} : memref<2x1x8x16x288xbf16, #tpu.memory_space<vmem>>, vector<1x1x8x16x32xbf16>,
    %c0_276 = arith.constant 0 : index
    %c2_277 = arith.constant 2 : index
    %c1_278 = arith.constant 1 : index
    %c0_279 = arith.constant 0 : index
    %136 = vector.load %arg8[%c0_276, %c2_277, %c1_278, %c0_279] : memref<1x18x18x32xbf16, #tpu.memory_space<vmem>>, vector<1x8x16x32xbf16>
    %c0_280 = arith.constant 0 : index
    %c0_281 = arith.constant 0 : index
    %c0_282 = arith.constant 0 : index
    %c0_283 = arith.constant 0 : index
    %c160_284 = arith.constant 160 : index
    %137 = vector.load %arg9[%c0_280, %c0_281, %c0_282, %c0_283, %c160_284] : memref<2x1x8x16x288xbf16, #tpu.memory_space<vmem>>, vector<1x1x8x16x32xbf16>
    %138 = vector.shape_cast %137 : vector<1x1x8x16x32xbf16> to vector<1x8x16x32xbf16>
    %139 = vector.shape_cast %136 : vector<1x8x16x32xbf16> to vector<1x1x8x16x32xbf16>
    tpu.vector_store %arg9[%c0_280, %c0_281, %c0_282, %c0_283, %c160_284], %139 {strides = array<i32>} : memref<2x1x8x16x288xbf16, #tpu.memory_space<vmem>>, vector<1x1x8x16x32xbf16>,
    %c0_285 = arith.constant 0 : index
    %c0_286 = arith.constant 0 : index
    %c2_287 = arith.constant 2 : index
    %c0_288 = arith.constant 0 : index
    %140 = vector.load %arg8[%c0_285, %c0_286, %c2_287, %c0_288] : memref<1x18x18x32xbf16, #tpu.memory_space<vmem>>, vector<1x8x16x32xbf16>
    %c0_289 = arith.constant 0 : index
    %c0_290 = arith.constant 0 : index
    %c0_291 = arith.constant 0 : index
    %c0_292 = arith.constant 0 : index
    %c192_293 = arith.constant 192 : index
    %141 = vector.load %arg9[%c0_289, %c0_290, %c0_291, %c0_292, %c192_293] : memref<2x1x8x16x288xbf16, #tpu.memory_space<vmem>>, vector<1x1x8x16x32xbf16>
    %142 = vector.shape_cast %141 : vector<1x1x8x16x32xbf16> to vector<1x8x16x32xbf16>
    %143 = vector.shape_cast %140 : vector<1x8x16x32xbf16> to vector<1x1x8x16x32xbf16>
    tpu.vector_store %arg9[%c0_289, %c0_290, %c0_291, %c0_292, %c192_293], %143 {strides = array<i32>} : memref<2x1x8x16x288xbf16, #tpu.memory_space<vmem>>, vector<1x1x8x16x32xbf16>,
    %c0_294 = arith.constant 0 : index
    %c1_295 = arith.constant 1 : index
    %c2_296 = arith.constant 2 : index
    %c0_297 = arith.constant 0 : index
    %144 = vector.load %arg8[%c0_294, %c1_295, %c2_296, %c0_297] : memref<1x18x18x32xbf16, #tpu.memory_space<vmem>>, vector<1x8x16x32xbf16>
    %c0_298 = arith.constant 0 : index
    %c0_299 = arith.constant 0 : index
    %c0_300 = arith.constant 0 : index
    %c0_301 = arith.constant 0 : index
    %c224_302 = arith.constant 224 : index
    %145 = vector.load %arg9[%c0_298, %c0_299, %c0_300, %c0_301, %c224_302] : memref<2x1x8x16x288xbf16, #tpu.memory_space<vmem>>, vector<1x1x8x16x32xbf16>
    %146 = vector.shape_cast %145 : vector<1x1x8x16x32xbf16> to vector<1x8x16x32xbf16>
    %147 = vector.shape_cast %144 : vector<1x8x16x32xbf16> to vector<1x1x8x16x32xbf16>
    tpu.vector_store %arg9[%c0_298, %c0_299, %c0_300, %c0_301, %c224_302], %147 {strides = array<i32>} : memref<2x1x8x16x288xbf16, #tpu.memory_space<vmem>>, vector<1x1x8x16x32xbf16>,
    %c0_303 = arith.constant 0 : index
    %c2_304 = arith.constant 2 : index
    %c2_305 = arith.constant 2 : index
    %c0_306 = arith.constant 0 : index
    %148 = vector.load %arg8[%c0_303, %c2_304, %c2_305, %c0_306] : memref<1x18x18x32xbf16, #tpu.memory_space<vmem>>, vector<1x8x16x32xbf16>
    %c0_307 = arith.constant 0 : index
    %c0_308 = arith.constant 0 : index
    %c0_309 = arith.constant 0 : index
    %c0_310 = arith.constant 0 : index
    %c256_311 = arith.constant 256 : index
    %149 = vector.load %arg9[%c0_307, %c0_308, %c0_309, %c0_310, %c256_311] : memref<2x1x8x16x288xbf16, #tpu.memory_space<vmem>>, vector<1x1x8x16x32xbf16>
    %150 = vector.shape_cast %149 : vector<1x1x8x16x32xbf16> to vector<1x8x16x32xbf16>
    %151 = vector.shape_cast %148 : vector<1x8x16x32xbf16> to vector<1x1x8x16x32xbf16>
    tpu.vector_store %arg9[%c0_307, %c0_308, %c0_309, %c0_310, %c256_311], %151 {strides = array<i32>} : memref<2x1x8x16x288xbf16, #tpu.memory_space<vmem>>, vector<1x1x8x16x32xbf16>,
    %c0_312 = arith.constant 0 : index
    %c0_313 = arith.constant 0 : index
    %c0_314 = arith.constant 0 : index
    %c0_315 = arith.constant 0 : index
    %c0_316 = arith.constant 0 : index
    %152 = vector.load %arg9[%c0_312, %c0_313, %c0_314, %c0_315, %c0_316] : memref<2x1x8x16x288xbf16, #tpu.memory_space<vmem>>, vector<1x1x8x16x288xbf16>
    %153 = vector.shape_cast %152 : vector<1x1x8x16x288xbf16> to vector<1x8x16x288xbf16>
    %154 = vector.shape_cast %153 : vector<1x8x16x288xbf16> to vector<128x288xbf16>
    %c0_317 = arith.constant 0 : index
    %c0_318 = arith.constant 0 : index
    %155 = vector.load %arg4[%c0_317, %c0_318] : memref<288x32xbf16, #tpu.memory_space<vmem>>, vector<288x32xbf16>
    %cst_319 = arith.constant dense<0.000000e+00> : vector<128x32xf32>
    %156 = tpu.matmul %154, %155, %cst_319 {dimension_numbers = #tpu.dot_dimension_numbers<[1], [0], [0], [1], [0, 0, 1, 1], [], []>} : vector<128x288xbf16>, vector<288x32xbf16>, vector<128x32xf32> -> vector<128x32xf32>
    %c0_320 = arith.constant 0 : index
    %c0_321 = arith.constant 0 : index
    %157 = vector.load %arg5[%c0_320, %c0_321] : memref<1x32xf32, #tpu.memory_space<vmem>>, vector<1x32xf32>
    %158 = vector.broadcast %157 : vector<1x32xf32> to vector<128x32xf32>
    %159 = arith.addf %156, %158 : vector<128x32xf32>
    %160 = vector.shape_cast %159 : vector<128x32xf32> to vector<1x8x16x32xf32>
    %c0_322 = arith.constant 0 : index
    %c0_323 = arith.constant 0 : index
    %c0_324 = arith.constant 0 : index
    %c0_325 = arith.constant 0 : index
    %161 = vector.load %arg1[%c0_322, %c0_323, %c0_324, %c0_325] : memref<1x16x16x32xf32, #tpu.memory_space<vmem>>, vector<1x8x16x32xf32>
    %162 = arith.addf %160, %161 : vector<1x8x16x32xf32>
    %cst_326 = arith.constant 0.000000e+00 : f32
    %163 = vector.broadcast %cst_326 : f32 to vector<1x8x16x32xf32>
    %164 = arith.maximumf %162, %163 : vector<1x8x16x32xf32>
    %c0_327 = arith.constant 0 : index
    %c0_328 = arith.constant 0 : index
    %c0_329 = arith.constant 0 : index
    %c0_330 = arith.constant 0 : index
    %165 = vector.load %arg6[%c0_327, %c0_328, %c0_329, %c0_330] : memref<1x16x16x32xf32, #tpu.memory_space<vmem>>, vector<1x8x16x32xf32>
    tpu.vector_store %arg6[%c0_327, %c0_328, %c0_329, %c0_330], %164 {strides = array<i32>} : memref<1x16x16x32xf32, #tpu.memory_space<vmem>>, vector<1x8x16x32xf32>,
    %c0_331 = arith.constant 0 : index
    %c8_332 = arith.constant 8 : index
    %c0_333 = arith.constant 0 : index
    %c0_334 = arith.constant 0 : index
    %166 = vector.load %arg8[%c0_331, %c8_332, %c0_333, %c0_334] : memref<1x18x18x32xbf16, #tpu.memory_space<vmem>>, vector<1x8x16x32xbf16>
    %c1_335 = arith.constant 1 : index
    %c0_336 = arith.constant 0 : index
    %c0_337 = arith.constant 0 : index
    %c0_338 = arith.constant 0 : index
    %c0_339 = arith.constant 0 : index
    %167 = vector.load %arg9[%c1_335, %c0_336, %c0_337, %c0_338, %c0_339] : memref<2x1x8x16x288xbf16, #tpu.memory_space<vmem>>, vector<1x1x8x16x32xbf16>
    %168 = vector.shape_cast %167 : vector<1x1x8x16x32xbf16> to vector<1x8x16x32xbf16>
    %169 = vector.shape_cast %166 : vector<1x8x16x32xbf16> to vector<1x1x8x16x32xbf16>
    tpu.vector_store %arg9[%c1_335, %c0_336, %c0_337, %c0_338, %c0_339], %169 {strides = array<i32>} : memref<2x1x8x16x288xbf16, #tpu.memory_space<vmem>>, vector<1x1x8x16x32xbf16>,
    %c0_340 = arith.constant 0 : index
    %c9_341 = arith.constant 9 : index
    %c0_342 = arith.constant 0 : index
    %c0_343 = arith.constant 0 : index
    %170 = vector.load %arg8[%c0_340, %c9_341, %c0_342, %c0_343] : memref<1x18x18x32xbf16, #tpu.memory_space<vmem>>, vector<1x8x16x32xbf16>
    %c1_344 = arith.constant 1 : index
    %c0_345 = arith.constant 0 : index
    %c0_346 = arith.constant 0 : index
    %c0_347 = arith.constant 0 : index
    %c32_348 = arith.constant 32 : index
    %171 = vector.load %arg9[%c1_344, %c0_345, %c0_346, %c0_347, %c32_348] : memref<2x1x8x16x288xbf16, #tpu.memory_space<vmem>>, vector<1x1x8x16x32xbf16>
    %172 = vector.shape_cast %171 : vector<1x1x8x16x32xbf16> to vector<1x8x16x32xbf16>
    %173 = vector.shape_cast %170 : vector<1x8x16x32xbf16> to vector<1x1x8x16x32xbf16>
    tpu.vector_store %arg9[%c1_344, %c0_345, %c0_346, %c0_347, %c32_348], %173 {strides = array<i32>} : memref<2x1x8x16x288xbf16, #tpu.memory_space<vmem>>, vector<1x1x8x16x32xbf16>,
    %c0_349 = arith.constant 0 : index
    %c10_350 = arith.constant 10 : index
    %c0_351 = arith.constant 0 : index
    %c0_352 = arith.constant 0 : index
    %174 = vector.load %arg8[%c0_349, %c10_350, %c0_351, %c0_352] : memref<1x18x18x32xbf16, #tpu.memory_space<vmem>>, vector<1x8x16x32xbf16>
    %c1_353 = arith.constant 1 : index
    %c0_354 = arith.constant 0 : index
    %c0_355 = arith.constant 0 : index
    %c0_356 = arith.constant 0 : index
    %c64_357 = arith.constant 64 : index
    %175 = vector.load %arg9[%c1_353, %c0_354, %c0_355, %c0_356, %c64_357] : memref<2x1x8x16x288xbf16, #tpu.memory_space<vmem>>, vector<1x1x8x16x32xbf16>
    %176 = vector.shape_cast %175 : vector<1x1x8x16x32xbf16> to vector<1x8x16x32xbf16>
    %177 = vector.shape_cast %174 : vector<1x8x16x32xbf16> to vector<1x1x8x16x32xbf16>
    tpu.vector_store %arg9[%c1_353, %c0_354, %c0_355, %c0_356, %c64_357], %177 {strides = array<i32>} : memref<2x1x8x16x288xbf16, #tpu.memory_space<vmem>>, vector<1x1x8x16x32xbf16>,
    %c0_358 = arith.constant 0 : index
    %c8_359 = arith.constant 8 : index
    %c1_360 = arith.constant 1 : index
    %c0_361 = arith.constant 0 : index
    %178 = vector.load %arg8[%c0_358, %c8_359, %c1_360, %c0_361] : memref<1x18x18x32xbf16, #tpu.memory_space<vmem>>, vector<1x8x16x32xbf16>
    %c1_362 = arith.constant 1 : index
    %c0_363 = arith.constant 0 : index
    %c0_364 = arith.constant 0 : index
    %c0_365 = arith.constant 0 : index
    %c96_366 = arith.constant 96 : index
    %179 = vector.load %arg9[%c1_362, %c0_363, %c0_364, %c0_365, %c96_366] : memref<2x1x8x16x288xbf16, #tpu.memory_space<vmem>>, vector<1x1x8x16x32xbf16>
    %180 = vector.shape_cast %179 : vector<1x1x8x16x32xbf16> to vector<1x8x16x32xbf16>
    %181 = vector.shape_cast %178 : vector<1x8x16x32xbf16> to vector<1x1x8x16x32xbf16>
    tpu.vector_store %arg9[%c1_362, %c0_363, %c0_364, %c0_365, %c96_366], %181 {strides = array<i32>} : memref<2x1x8x16x288xbf16, #tpu.memory_space<vmem>>, vector<1x1x8x16x32xbf16>,
    %c0_367 = arith.constant 0 : index
    %c9_368 = arith.constant 9 : index
    %c1_369 = arith.constant 1 : index
    %c0_370 = arith.constant 0 : index
    %182 = vector.load %arg8[%c0_367, %c9_368, %c1_369, %c0_370] : memref<1x18x18x32xbf16, #tpu.memory_space<vmem>>, vector<1x8x16x32xbf16>
    %c1_371 = arith.constant 1 : index
    %c0_372 = arith.constant 0 : index
    %c0_373 = arith.constant 0 : index
    %c0_374 = arith.constant 0 : index
    %c128_375 = arith.constant 128 : index
    %183 = vector.load %arg9[%c1_371, %c0_372, %c0_373, %c0_374, %c128_375] : memref<2x1x8x16x288xbf16, #tpu.memory_space<vmem>>, vector<1x1x8x16x32xbf16>
    %184 = vector.shape_cast %183 : vector<1x1x8x16x32xbf16> to vector<1x8x16x32xbf16>
    %185 = vector.shape_cast %182 : vector<1x8x16x32xbf16> to vector<1x1x8x16x32xbf16>
    tpu.vector_store %arg9[%c1_371, %c0_372, %c0_373, %c0_374, %c128_375], %185 {strides = array<i32>} : memref<2x1x8x16x288xbf16, #tpu.memory_space<vmem>>, vector<1x1x8x16x32xbf16>,
    %c0_376 = arith.constant 0 : index
    %c10_377 = arith.constant 10 : index
    %c1_378 = arith.constant 1 : index
    %c0_379 = arith.constant 0 : index
    %186 = vector.load %arg8[%c0_376, %c10_377, %c1_378, %c0_379] : memref<1x18x18x32xbf16, #tpu.memory_space<vmem>>, vector<1x8x16x32xbf16>
    %c1_380 = arith.constant 1 : index
    %c0_381 = arith.constant 0 : index
    %c0_382 = arith.constant 0 : index
    %c0_383 = arith.constant 0 : index
    %c160_384 = arith.constant 160 : index
    %187 = vector.load %arg9[%c1_380, %c0_381, %c0_382, %c0_383, %c160_384] : memref<2x1x8x16x288xbf16, #tpu.memory_space<vmem>>, vector<1x1x8x16x32xbf16>
    %188 = vector.shape_cast %187 : vector<1x1x8x16x32xbf16> to vector<1x8x16x32xbf16>
    %189 = vector.shape_cast %186 : vector<1x8x16x32xbf16> to vector<1x1x8x16x32xbf16>
    tpu.vector_store %arg9[%c1_380, %c0_381, %c0_382, %c0_383, %c160_384], %189 {strides = array<i32>} : memref<2x1x8x16x288xbf16, #tpu.memory_space<vmem>>, vector<1x1x8x16x32xbf16>,
    %c0_385 = arith.constant 0 : index
    %c8_386 = arith.constant 8 : index
    %c2_387 = arith.constant 2 : index
    %c0_388 = arith.constant 0 : index
    %190 = vector.load %arg8[%c0_385, %c8_386, %c2_387, %c0_388] : memref<1x18x18x32xbf16, #tpu.memory_space<vmem>>, vector<1x8x16x32xbf16>
    %c1_389 = arith.constant 1 : index
    %c0_390 = arith.constant 0 : index
    %c0_391 = arith.constant 0 : index
    %c0_392 = arith.constant 0 : index
    %c192_393 = arith.constant 192 : index
    %191 = vector.load %arg9[%c1_389, %c0_390, %c0_391, %c0_392, %c192_393] : memref<2x1x8x16x288xbf16, #tpu.memory_space<vmem>>, vector<1x1x8x16x32xbf16>
    %192 = vector.shape_cast %191 : vector<1x1x8x16x32xbf16> to vector<1x8x16x32xbf16>
    %193 = vector.shape_cast %190 : vector<1x8x16x32xbf16> to vector<1x1x8x16x32xbf16>
    tpu.vector_store %arg9[%c1_389, %c0_390, %c0_391, %c0_392, %c192_393], %193 {strides = array<i32>} : memref<2x1x8x16x288xbf16, #tpu.memory_space<vmem>>, vector<1x1x8x16x32xbf16>,
    %c0_394 = arith.constant 0 : index
    %c9_395 = arith.constant 9 : index
    %c2_396 = arith.constant 2 : index
    %c0_397 = arith.constant 0 : index
    %194 = vector.load %arg8[%c0_394, %c9_395, %c2_396, %c0_397] : memref<1x18x18x32xbf16, #tpu.memory_space<vmem>>, vector<1x8x16x32xbf16>
    %c1_398 = arith.constant 1 : index
    %c0_399 = arith.constant 0 : index
    %c0_400 = arith.constant 0 : index
    %c0_401 = arith.constant 0 : index
    %c224_402 = arith.constant 224 : index
    %195 = vector.load %arg9[%c1_398, %c0_399, %c0_400, %c0_401, %c224_402] : memref<2x1x8x16x288xbf16, #tpu.memory_space<vmem>>, vector<1x1x8x16x32xbf16>
    %196 = vector.shape_cast %195 : vector<1x1x8x16x32xbf16> to vector<1x8x16x32xbf16>
    %197 = vector.shape_cast %194 : vector<1x8x16x32xbf16> to vector<1x1x8x16x32xbf16>
    tpu.vector_store %arg9[%c1_398, %c0_399, %c0_400, %c0_401, %c224_402], %197 {strides = array<i32>} : memref<2x1x8x16x288xbf16, #tpu.memory_space<vmem>>, vector<1x1x8x16x32xbf16>,
    %c0_403 = arith.constant 0 : index
    %c10_404 = arith.constant 10 : index
    %c2_405 = arith.constant 2 : index
    %c0_406 = arith.constant 0 : index
    %198 = vector.load %arg8[%c0_403, %c10_404, %c2_405, %c0_406] : memref<1x18x18x32xbf16, #tpu.memory_space<vmem>>, vector<1x8x16x32xbf16>
    %c1_407 = arith.constant 1 : index
    %c0_408 = arith.constant 0 : index
    %c0_409 = arith.constant 0 : index
    %c0_410 = arith.constant 0 : index
    %c256_411 = arith.constant 256 : index
    %199 = vector.load %arg9[%c1_407, %c0_408, %c0_409, %c0_410, %c256_411] : memref<2x1x8x16x288xbf16, #tpu.memory_space<vmem>>, vector<1x1x8x16x32xbf16>
    %200 = vector.shape_cast %199 : vector<1x1x8x16x32xbf16> to vector<1x8x16x32xbf16>
    %201 = vector.shape_cast %198 : vector<1x8x16x32xbf16> to vector<1x1x8x16x32xbf16>
    tpu.vector_store %arg9[%c1_407, %c0_408, %c0_409, %c0_410, %c256_411], %201 {strides = array<i32>} : memref<2x1x8x16x288xbf16, #tpu.memory_space<vmem>>, vector<1x1x8x16x32xbf16>,
    %c1_412 = arith.constant 1 : index
    %c0_413 = arith.constant 0 : index
    %c0_414 = arith.constant 0 : index
    %c0_415 = arith.constant 0 : index
    %c0_416 = arith.constant 0 : index
    %202 = vector.load %arg9[%c1_412, %c0_413, %c0_414, %c0_415, %c0_416] : memref<2x1x8x16x288xbf16, #tpu.memory_space<vmem>>, vector<1x1x8x16x288xbf16>
    %203 = vector.shape_cast %202 : vector<1x1x8x16x288xbf16> to vector<1x8x16x288xbf16>
    %204 = vector.shape_cast %203 : vector<1x8x16x288xbf16> to vector<128x288xbf16>
    %c0_417 = arith.constant 0 : index
    %c0_418 = arith.constant 0 : index
    %205 = vector.load %arg4[%c0_417, %c0_418] : memref<288x32xbf16, #tpu.memory_space<vmem>>, vector<288x32xbf16>
    %cst_419 = arith.constant dense<0.000000e+00> : vector<128x32xf32>
    %206 = tpu.matmul %204, %205, %cst_419 {dimension_numbers = #tpu.dot_dimension_numbers<[1], [0], [0], [1], [0, 0, 1, 1], [], []>} : vector<128x288xbf16>, vector<288x32xbf16>, vector<128x32xf32> -> vector<128x32xf32>
    %c0_420 = arith.constant 0 : index
    %c0_421 = arith.constant 0 : index
    %207 = vector.load %arg5[%c0_420, %c0_421] : memref<1x32xf32, #tpu.memory_space<vmem>>, vector<1x32xf32>
    %208 = vector.broadcast %207 : vector<1x32xf32> to vector<128x32xf32>
    %209 = arith.addf %206, %208 : vector<128x32xf32>
    %210 = vector.shape_cast %209 : vector<128x32xf32> to vector<1x8x16x32xf32>
    %c0_422 = arith.constant 0 : index
    %c8_423 = arith.constant 8 : index
    %c0_424 = arith.constant 0 : index
    %c0_425 = arith.constant 0 : index
    %211 = vector.load %arg1[%c0_422, %c8_423, %c0_424, %c0_425] : memref<1x16x16x32xf32, #tpu.memory_space<vmem>>, vector<1x8x16x32xf32>
    %212 = arith.addf %210, %211 : vector<1x8x16x32xf32>
    %cst_426 = arith.constant 0.000000e+00 : f32
    %213 = vector.broadcast %cst_426 : f32 to vector<1x8x16x32xf32>
    %214 = arith.maximumf %212, %213 : vector<1x8x16x32xf32>
    %c0_427 = arith.constant 0 : index
    %c8_428 = arith.constant 8 : index
    %c0_429 = arith.constant 0 : index
    %c0_430 = arith.constant 0 : index
    %215 = vector.load %arg6[%c0_427, %c8_428, %c0_429, %c0_430] : memref<1x16x16x32xf32, #tpu.memory_space<vmem>>, vector<1x8x16x32xf32>
    tpu.vector_store %arg6[%c0_427, %c8_428, %c0_429, %c0_430], %214 {strides = array<i32>} : memref<1x16x16x32xf32, #tpu.memory_space<vmem>>, vector<1x8x16x32xf32>,
    return
  }
  func.func @transform_0(%arg0: i32) -> (i32, i32, i32, i32) {
    %c0_i32 = arith.constant 0 : i32
    %c0_i32_0 = arith.constant 0 : i32
    %c0_i32_1 = arith.constant 0 : i32
    %c0_i32_2 = arith.constant 0 : i32
    return %arg0, %c0_i32, %c0_i32_0, %c0_i32_1 : i32, i32, i32, i32
  }
  func.func @transform_1(%arg0: i32) -> (i32, i32) {
    %c0_i32 = arith.constant 0 : i32
    %c0_i32_0 = arith.constant 0 : i32
    %c0_i32_1 = arith.constant 0 : i32
    return %c0_i32, %c0_i32_0 : i32, i32
  }
  func.func @transform_2(%arg0: i32) -> (i32, i32) {
    %c0_i32 = arith.constant 0 : i32
    %c0_i32_0 = arith.constant 0 : i32
    %c0_i32_1 = arith.constant 0 : i32
    return %c0_i32, %c0_i32_0 : i32, i32
  }
  func.func @transform_3(%arg0: i32) -> (i32, i32) {
    %c0_i32 = arith.constant 0 : i32
    %c0_i32_0 = arith.constant 0 : i32
    %c0_i32_1 = arith.constant 0 : i32
    return %c0_i32, %c0_i32_0 : i32, i32
  }
  func.func @transform_4(%arg0: i32) -> (i32, i32) {
    %c0_i32 = arith.constant 0 : i32
    %c0_i32_0 = arith.constant 0 : i32
    %c0_i32_1 = arith.constant 0 : i32
    return %c0_i32, %c0_i32_0 : i32, i32
  }
  func.func @transform_5(%arg0: i32) -> (i32, i32, i32, i32) {
    %c0_i32 = arith.constant 0 : i32
    %c0_i32_0 = arith.constant 0 : i32
    %c0_i32_1 = arith.constant 0 : i32
    %c0_i32_2 = arith.constant 0 : i32
    return %arg0, %c0_i32, %c0_i32_0, %c0_i32_1 : i32, i32, i32, i32
  }
}

</mosaic_0001>

<llo_original>
// kernel: _ring_call.1
$region0: #{_ring_call.1}
  #allocation0 [shape = 'u32[]', space=smem, size = 0x4, offset = 0x4, fixed_abs, tag = 'smem constant byte address 0x4 - core index']
  #allocation1 [shape = 'u32[144,128]{1,0:T(1,128)}', space=vmem, size = 0x12000, scoped, tag = 'internal scratch']
  #allocation2 [shape = 'bf16[1,18,18,32]{3,2,1,0:T(8,128)(2,1)}', space=vmem, size = 0x1b000, scoped, tag = 'scratch operand']
  #allocation3 [shape = 'bf16[1,18,18,32]{3,2,1,0:T(8,128)(2,1)}', space=vmem, size = 0x1b000, scoped, tag = 'scratch operand']
  #allocation4 [shape = 'bf16[2,1,8,16,288]{4,3,2,1,0:T(16,128)(2,1)}', space=vmem, size = 0x30000, scoped, tag = 'scratch operand']
  %s0 = inlined_call_operand.vmem [shape: f32[2,16,16,32], index: 0, kind: input, shape index: {}]
  %s1 = inlined_call_operand.vmem [shape: bf16[288,32], index: 1, kind: input, shape index: {}]
  %s2 = inlined_call_operand.vmem [shape: f32[1,32], index: 2, kind: input, shape index: {}]
  %s3 = inlined_call_operand.vmem [shape: bf16[288,32], index: 3, kind: input, shape index: {}]
  %s4 = inlined_call_operand.vmem [shape: f32[1,32], index: 4, kind: input, shape index: {}]
  %s5 = inlined_call_operand.hbm [shape: f32[2,16,16,32], index: 5, kind: output, shape index: {}]
  %s6 = sld [smem:[#allocation0]]
  $region53: #{_ring_call.1} parent=0
    _
  %s8 = ssub.s32 1, %s6
  %s9 = scalar_select 0, %s8, %s6
  $region1: #{_ring_call.1} parent=0
    #allocation5 [shape = 'u8[262144]{0}', space=vmem, size = 0x40000, scoped, tag = 'output window, operand 0']
    #allocation6 [shape = 's32[2]{0}', space=sflag, size = 0x8, scoped, tag = 'scoped memory for _ring_call.1']
    %10 = vsyncpa [#allocation6], 0
    %s11 = scalar_lea.sflag [#allocation6], 1
    %12 = vsyncpa %s11, 0
    loop: start=0, step=1, limit=4
    $region2: #{_ring_call.1} parent=1 // loop_pre_header
      _
    $region3: #{_ring_call.1} parent=1 // loop_header
      %s14 = sphi 0, %s18
      %p15 = scmp.ge.s32.totalorder %s14, 4
      %s24 = sphi 0, %s26
      %s27 = sphi 0, %s24
      %s28 = sphi 0, %s27
      %s44 = sphi 0, %s28
      %s48 = sphi 0, %s48
      %s50 = sphi 0, %s48
      %s51 = sphi 0, %s50
      %s65 = sphi 0, %s51
      %s69 = sphi 0, %s69
      %s71 = sphi 0, %s69
      %s72 = sphi 0, %s71
      %s86 = sphi 0, %s72
      %s90 = sphi 0, %s90
      %s92 = sphi 0, %s90
      %s93 = sphi 0, %s92
      %s107 = sphi 0, %s93
      %s111 = sphi 0, %s111
      %s113 = sphi 0, %s111
      %s114 = sphi 0, %s113
      %s128 = sphi 0, %s114
      %s134 = sphi 0, %s136
      %s137 = sphi 0, %s134
      %s138 = sphi 0, %s137
      %s154 = sphi 0, %s138
    $region4: #{_ring_call.1} parent=1 // loop_header_branch
      %17 = sbr.rel (%p15) target = $region8
    $region5: #{_ring_call.1} parent=1 // loop_body
      %s19 = ssub.s32 %s14, 1
      %s20 = ssub.s32 %s14, 2
      %s21 = sadd.s32 %s14, 1
      %s22 = ssub.s32 %s14, %s21
      %p23 = scmp.eq.s32.totalorder %s22, 0
      %s25 = sadd.s32 %s24, 1
      %s26 = scalar_select %p23, %s24, %s25
      %p29 = pneg %p23
      %p30 = scmp.eq.s32.totalorder %s14, 1
      %p31 = por %p29, %p30
      %p32 = scmp.ne.s32.totalorder %s24, %s27
      %p33 = scmp.eq.s32.totalorder %s14, 0
      %p34 = por %p32, %p33
      %p35 = scmp.ne.s32.totalorder %s24, %s27
      %p36 = scmp.eq.s32.totalorder %s19, 1
      %p37 = por %p35, %p36
      %p38 = scmp.ne.s32.totalorder %s27, %s28
      %p39 = scmp.eq.s32.totalorder %s19, 0
      %p40 = por %p38, %p39
      %p41 = scmp.ne.s32.totalorder %s27, %s28
      %p42 = scmp.eq.s32.totalorder %s20, 1
      %p43 = por %p41, %p42
      %p45 = scmp.ne.s32.totalorder %s28, %s44
      %p46 = scmp.eq.s32.totalorder %s20, 0
      %p47 = por %p45, %p46
      %s49 = sadd.s32 %s48, 1
      %p52 = scmp.eq.s32.totalorder %s14, 1
      %p53 = scmp.ne.s32.totalorder %s48, %s50
      %p54 = scmp.eq.s32.totalorder %s14, 0
      %p55 = por %p53, %p54
      %p56 = scmp.ne.s32.totalorder %s48, %s50
      %p57 = scmp.eq.s32.totalorder %s19, 1
      %p58 = por %p56, %p57
      %p59 = scmp.ne.s32.totalorder %s50, %s51
      %p60 = scmp.eq.s32.totalorder %s19, 0
      %p61 = por %p59, %p60
      %p62 = scmp.ne.s32.totalorder %s50, %s51
      %p63 = scmp.eq.s32.totalorder %s20, 1
      %p64 = por %p62, %p63
      %p66 = scmp.ne.s32.totalorder %s51, %s65
      %p67 = scmp.eq.s32.totalorder %s20, 0
      %p68 = por %p66, %p67
      %s70 = sadd.s32 %s69, 1
      %p73 = scmp.eq.s32.totalorder %s14, 1
      %p74 = scmp.ne.s32.totalorder %s69, %s71
      %p75 = scmp.eq.s32.totalorder %s14, 0
      %p76 = por %p74, %p75
      %p77 = scmp.ne.s32.totalorder %s69, %s71
      %p78 = scmp.eq.s32.totalorder %s19, 1
      %p79 = por %p77, %p78
      %p80 = scmp.ne.s32.totalorder %s71, %s72
      %p81 = scmp.eq.s32.totalorder %s19, 0
      %p82 = por %p80, %p81
      %p83 = scmp.ne.s32.totalorder %s71, %s72
      %p84 = scmp.eq.s32.totalorder %s20, 1
      %p85 = por %p83, %p84
      %p87 = scmp.ne.s32.totalorder %s72, %s86
      %p88 = scmp.eq.s32.totalorder %s20, 0
      %p89 = por %p87, %p88
      %s91 = sadd.s32 %s90, 1
      %p94 = scmp.eq.s32.totalorder %s14, 1
      %p95 = scmp.ne.s32.totalorder %s90, %s92
      %p96 = scmp.eq.s32.totalorder %s14, 0
      %p97 = por %p95, %p96
      %p98 = scmp.ne.s32.totalorder %s90, %s92
      %p99 = scmp.eq.s32.totalorder %s19, 1
      %p100 = por %p98, %p99
      %p101 = scmp.ne.s32.totalorder %s92, %s93
      %p102 = scmp.eq.s32.totalorder %s19, 0
      %p103 = por %p101, %p102
      %p104 = scmp.ne.s32.totalorder %s92, %s93
      %p105 = scmp.eq.s32.totalorder %s20, 1
      %p106 = por %p104, %p105
      %p108 = scmp.ne.s32.totalorder %s93, %s107
      %p109 = scmp.eq.s32.totalorder %s20, 0
      %p110 = por %p108, %p109
      %s112 = sadd.s32 %s111, 1
      %p115 = scmp.eq.s32.totalorder %s14, 1
      %p116 = scmp.ne.s32.totalorder %s111, %s113
      %p117 = scmp.eq.s32.totalorder %s14, 0
      %p118 = por %p116, %p117
      %p119 = scmp.ne.s32.totalorder %s111, %s113
      %p120 = scmp.eq.s32.totalorder %s19, 1
      %p121 = por %p119, %p120
      %p122 = scmp.ne.s32.totalorder %s113, %s114
      %p123 = scmp.eq.s32.totalorder %s19, 0
      %p124 = por %p122, %p123
      %p125 = scmp.ne.s32.totalorder %s113, %s114
      %p126 = scmp.eq.s32.totalorder %s20, 1
      %p127 = por %p125, %p126
      %p129 = scmp.ne.s32.totalorder %s114, %s128
      %p130 = scmp.eq.s32.totalorder %s20, 0
      %p131 = por %p129, %p130
      %s132 = ssub.s32 %s14, %s21
      %p133 = scmp.eq.s32.totalorder %s132, 0
      %s135 = sadd.s32 %s134, 1
      %s136 = scalar_select %p133, %s134, %s135
      %p139 = pneg %p133
      %p140 = scmp.eq.s32.totalorder %s14, 1
      %p141 = por %p139, %p140
      %p142 = scmp.ne.s32.totalorder %s134, %s137
      %p143 = scmp.eq.s32.totalorder %s14, 0
      %p144 = por %p142, %p143
      %p145 = scmp.ne.s32.totalorder %s134, %s137
      %p146 = scmp.eq.s32.totalorder %s19, 1
      %p147 = por %p145, %p146
      %p148 = scmp.ne.s32.totalorder %s137, %s138
      %p149 = scmp.eq.s32.totalorder %s19, 0
      %p150 = por %p148, %p149
      %p151 = scmp.ne.s32.totalorder %s137, %s138
      %p152 = scmp.eq.s32.totalorder %s20, 1
      %p153 = por %p151, %p152
      %p155 = scmp.ne.s32.totalorder %s138, %s154
      %p156 = scmp.eq.s32.totalorder %s20, 0
      %p157 = por %p155, %p156
      %p158 = scmp.le.s32.totalorder 1, %s14
      %p159 = scmp.lt.s32.totalorder %s14, 3
      %p160 = pnand %p158, %p159
      %p161 = pneg %p160
      // Predicated region
      $region9: #{_ring_call.1} parent=5 // pred_check
        _
      $region10: #{_ring_call.1} parent=5 // pred_check_branch
        %163 = sbr.rel (%p160) target = $region12
      $region11: #{_ring_call.1} parent=5 // pred_region
        %s164 = ssub.s32 %s14, 1
        // Predicated region
        $region13: #{_ring_call.1} parent=11 // pred_check
          %p165 = pneg %p61
        $region14: #{_ring_call.1} parent=11 // pred_check_branch
          %167 = sbr.rel (%p165) target = $region16
        $region15: #{_ring_call.1} parent=11 // pred_region
          _
        $region16: #{_ring_call.1} parent=11 // pred_fallthru
          _
        // Predicated region
        $region17: #{_ring_call.1} parent=11 // pred_check
          %p168 = pneg %p82
        $region18: #{_ring_call.1} parent=11 // pred_check_branch
          %170 = sbr.rel (%p168) target = $region20
        $region19: #{_ring_call.1} parent=11 // pred_region
          _
        $region20: #{_ring_call.1} parent=11 // pred_fallthru
          _
        // Predicated region
        $region21: #{_ring_call.1} parent=11 // pred_check
          %p171 = pneg %p103
        $region22: #{_ring_call.1} parent=11 // pred_check_branch
          %173 = sbr.rel (%p171) target = $region24
        $region23: #{_ring_call.1} parent=11 // pred_region
          _
        $region24: #{_ring_call.1} parent=11 // pred_fallthru
          _
        // Predicated region
        $region25: #{_ring_call.1} parent=11 // pred_check
          %p174 = pneg %p124
        $region26: #{_ring_call.1} parent=11 // pred_check_branch
          %176 = sbr.rel (%p174) target = $region28
        $region27: #{_ring_call.1} parent=11 // pred_region
          _
        $region28: #{_ring_call.1} parent=11 // pred_fallthru
          _
      $region12: #{_ring_call.1} parent=5 // pred_fallthru
        _
      %p177 = scmp.lt.s32.totalorder %s14, 2
      // Predicated region
      $region29: #{_ring_call.1} parent=5 // pred_check
        %p178 = pneg %p177
      $region30: #{_ring_call.1} parent=5 // pred_check_branch
        %180 = sbr.rel (%p178) target = $region32
      $region31: #{_ring_call.1} parent=5 // pred_region
        // Predicated region
        $region33: #{_ring_call.1} parent=31 // pred_check
          %p181 = pneg %p34
        $region34: #{_ring_call.1} parent=31 // pred_check_branch
          %183 = sbr.rel (%p181) target = $region36
        $region35: #{_ring_call.1} parent=31 // pred_region
          %p184 = scmp.lt.s32.totalorder %s14, 1
          %s185 = scalar_select %p184, %s14, 1
          %s186 = smul.addr %s185, 32
          %s187 = smul.addr %s186, 8
          %s188 = scalar_lea.vmem %s0, %s187
        $region36: #{_ring_call.1} parent=31 // pred_fallthru
          _
      $region32: #{_ring_call.1} parent=5 // pred_fallthru
        _
      %p189 = scmp.le.s32.totalorder 1, %s14
      %p190 = scmp.lt.s32.totalorder %s14, 3
      %p191 = pnand %p189, %p190
      %p192 = pneg %p191
      // Predicated region
      $region37: #{_ring_call.1} parent=5 // pred_check
        _
      $region38: #{_ring_call.1} parent=5 // pred_check_branch
        %194 = sbr.rel (%p191) target = $region40
      $region39: #{_ring_call.1} parent=5 // pred_region
        %s195 = ssub.s32 %s14, 1
        %p196 = scmp.lt.s32.totalorder %s19, 1
        %s197 = scalar_select %p196, %s19, 1
        %s198 = smul.addr %s197, 32
        %s199 = smul.addr %s198, 8
        %s200 = scalar_lea.vmem %s0, %s199
        %p201 = pneg %p40
        %p202 = pneg %p37
        %p203 = pneg %p61
        %p204 = pneg %p58
        %p205 = pneg %p82
        %p206 = pneg %p79
        %p207 = pneg %p103
        %p208 = pneg %p100
        %p209 = pneg %p124
        %p210 = pneg %p121
        %p211 = pneg %p150
        %p212 = pneg %p147
        %s213 = sand.u32 %s137, 1
        %s214 = scalar_lea.sflag [#allocation6], %s213
        %s215 = sand.u32 %s137, 1
        %s216 = smul.addr %s215, 256
        %s217 = scalar_lea.vmem [#allocation5], %s216
        %p218 = scmp.lt.s32.totalorder %s19, 1
        %s219 = scalar_select %p218, %s19, 1
        %s220 = smul.addr %s219, 32
        %s221 = smul.addr %s220, 8
        %s222 = scalar_lea.vmem %s0, %s221
        %vm224 = vcmask 253952
        %vm225 = vsmask.f32 256
        %vm226 = vmand %vm224, %vm225
        %v227 = vld [vmem:[#allocation2] sm:$0x1]
        %v228 = vsel %vm226, 0, %v227
        %229 = vst [vmem:[#allocation2] sm:$0x1] %v228
        %v230 = vld [vmem:[#allocation2 + $0xc] sm:$0x1]
        %v231 = vsel %vm226, 0, %v230
        %232 = vst [vmem:[#allocation2 + $0xc] sm:$0x1] %v231
        %v233 = vld [vmem:[#allocation2 + $0x18] sm:$0x1]
        %v234 = vsel %vm226, 0, %v233
        %235 = vst [vmem:[#allocation2 + $0x18] sm:$0x1] %v234
        %v236 = vld [vmem:[#allocation2 + $0x24] sm:$0x1]
        %v237 = vsel %vm226, 0, %v236
        %238 = vst [vmem:[#allocation2 + $0x24] sm:$0x1] %v237
        %v239 = vld [vmem:[#allocation2 + $0x30] sm:$0x1]
        %v240 = vsel %vm226, 0, %v239
        %241 = vst [vmem:[#allocation2 + $0x30] sm:$0x1] %v240
        %v242 = vld [vmem:[#allocation2 + $0x3c] sm:$0x1]
        %v243 = vsel %vm226, 0, %v242
        %244 = vst [vmem:[#allocation2 + $0x3c] sm:$0x1] %v243
        %v245 = vld [vmem:[#allocation2 + $0x48] sm:$0x1]
        %v246 = vsel %vm226, 0, %v245
        %247 = vst [vmem:[#allocation2 + $0x48] sm:$0x1] %v246
        %v248 = vld [vmem:[#allocation2 + $0x54] sm:$0x1]
        %v249 = vsel %vm226, 0, %v248
        %250 = vst [vmem:[#allocation2 + $0x54] sm:$0x1] %v249
        %v251 = vld [vmem:[#allocation2 + $0x60] sm:$0x1]
        %v252 = vsel %vm226, 0, %v251
        %253 = vst [vmem:[#allocation2 + $0x60] sm:$0x1] %v252
        %v254 = vld [vmem:[#allocation2 + $0x6c] sm:$0x1]
        %v255 = vsel %vm226, 0, %v254
        %256 = vst [vmem:[#allocation2 + $0x6c] sm:$0x1] %v255
        %v257 = vld [vmem:[#allocation2 + $0x78] sm:$0x1]
        %v258 = vsel %vm226, 0, %v257
        %259 = vst [vmem:[#allocation2 + $0x78] sm:$0x1] %v258
        %v260 = vld [vmem:[#allocation2 + $0x84] sm:$0x1]
        %v261 = vsel %vm226, 0, %v260
        %262 = vst [vmem:[#allocation2 + $0x84] sm:$0x1] %v261
        %v263 = vld [vmem:[#allocation2 + $0x90] sm:$0x1]
        %v264 = vsel %vm226, 0, %v263
        %265 = vst [vmem:[#allocation2 + $0x90] sm:$0x1] %v264
        %v266 = vld [vmem:[#allocation2 + $0x9c] sm:$0x1]
        %v267 = vsel %vm226, 0, %v266
        %268 = vst [vmem:[#allocation2 + $0x9c] sm:$0x1] %v267
        %v269 = vld [vmem:[#allocation2 + $0xa8] sm:$0x1]
        %v270 = vsel %vm226, 0, %v269
        %271 = vst [vmem:[#allocation2 + $0xa8] sm:$0x1] %v270
        %v272 = vld [vmem:[#allocation2 + $0xb4] sm:$0x1]
        %v273 = vsel %vm226, 0, %v272
        %274 = vst [vmem:[#allocation2 + $0xb4] sm:$0x1] %v273
        %v275 = vld [vmem:[#allocation2 + $0xc0] sm:$0x1]
        %v276 = vsel %vm226, 0, %v275
        %277 = vst [vmem:[#allocation2 + $0xc0] sm:$0x1] %v276
        %v278 = vld [vmem:[#allocation2 + $0xcc] sm:$0x1]
        %v279 = vsel %vm226, 0, %v278
        %280 = vst [vmem:[#allocation2 + $0xcc] sm:$0x1] %v279
        %vm281 = vsmask.f32 7938
        %vm282 = vmand %vm224, %vm281
        %v283 = vld [vmem:[#allocation2 + $0x8] sm:$0x1]
        %v284 = vsel %vm282, 0, %v283
        %285 = vst [vmem:[#allocation2 + $0x8] sm:$0x1] %v284
        %v286 = vld [vmem:[#allocation2 + $0x14] sm:$0x1]
        %v287 = vsel %vm282, 0, %v286
        %288 = vst [vmem:[#allocation2 + $0x14] sm:$0x1] %v287
        %v289 = vld [vmem:[#allocation2 + $0x20] sm:$0x1]
        %v290 = vsel %vm282, 0, %v289
        %291 = vst [vmem:[#allocation2 + $0x20] sm:$0x1] %v290
        %v292 = vld [vmem:[#allocation2 + $0x2c] sm:$0x1]
        %v293 = vsel %vm282, 0, %v292
        %294 = vst [vmem:[#allocation2 + $0x2c] sm:$0x1] %v293
        %v295 = vld [vmem:[#allocation2 + $0x38] sm:$0x1]
        %v296 = vsel %vm282, 0, %v295
        %297 = vst [vmem:[#allocation2 + $0x38] sm:$0x1] %v296
        %v298 = vld [vmem:[#allocation2 + $0x44] sm:$0x1]
        %v299 = vsel %vm282, 0, %v298
        %300 = vst [vmem:[#allocation2 + $0x44] sm:$0x1] %v299
        %v301 = vld [vmem:[#allocation2 + $0x50] sm:$0x1]
        %v302 = vsel %vm282, 0, %v301
        %303 = vst [vmem:[#allocation2 + $0x50] sm:$0x1] %v302
        %v304 = vld [vmem:[#allocation2 + $0x5c] sm:$0x1]
        %v305 = vsel %vm282, 0, %v304
        %306 = vst [vmem:[#allocation2 + $0x5c] sm:$0x1] %v305
        %v307 = vld [vmem:[#allocation2 + $0x68] sm:$0x1]
        %v308 = vsel %vm282, 0, %v307
        %309 = vst [vmem:[#allocation2 + $0x68] sm:$0x1] %v308
        %v310 = vld [vmem:[#allocation2 + $0x74] sm:$0x1]
        %v311 = vsel %vm282, 0, %v310
        %312 = vst [vmem:[#allocation2 + $0x74] sm:$0x1] %v311
        %v313 = vld [vmem:[#allocation2 + $0x80] sm:$0x1]
        %v314 = vsel %vm282, 0, %v313
        %315 = vst [vmem:[#allocation2 + $0x80] sm:$0x1] %v314
        %v316 = vld [vmem:[#allocation2 + $0x8c] sm:$0x1]
        %v317 = vsel %vm282, 0, %v316
        %318 = vst [vmem:[#allocation2 + $0x8c] sm:$0x1] %v317
        %v319 = vld [vmem:[#allocation2 + $0x98] sm:$0x1]
        %v320 = vsel %vm282, 0, %v319
        %321 = vst [vmem:[#allocation2 + $0x98] sm:$0x1] %v320
        %v322 = vld [vmem:[#allocation2 + $0xa4] sm:$0x1]
        %v323 = vsel %vm282, 0, %v322
        %324 = vst [vmem:[#allocation2 + $0xa4] sm:$0x1] %v323
        %v325 = vld [vmem:[#allocation2 + $0xb0] sm:$0x1]
        %v326 = vsel %vm282, 0, %v325
        %327 = vst [vmem:[#allocation2 + $0xb0] sm:$0x1] %v326
        %v328 = vld [vmem:[#allocation2 + $0xbc] sm:$0x1]
        %v329 = vsel %vm282, 0, %v328
        %330 = vst [vmem:[#allocation2 + $0xbc] sm:$0x1] %v329
        %v331 = vld [vmem:[#allocation2 + $0xc8] sm:$0x1]
        %v332 = vsel %vm282, 0, %v331
        %333 = vst [vmem:[#allocation2 + $0xc8] sm:$0x1] %v332
        %v334 = vld [vmem:[#allocation2 + $0xd4] sm:$0x1]
        %v335 = vsel %vm282, 0, %v334
        %336 = vst [vmem:[#allocation2 + $0xd4] sm:$0x1] %v335
        %v337 = vld [vmem:[#allocation3] sm:$0x1]
        %v338 = vsel %vm226, 0, %v337
        %339 = vst [vmem:[#allocation3] sm:$0x1] %v338
        %v340 = vld [vmem:[#allocation3 + $0xc] sm:$0x1]
        %v341 = vsel %vm226, 0, %v340
        %342 = vst [vmem:[#allocation3 + $0xc] sm:$0x1] %v341
        %v343 = vld [vmem:[#allocation3 + $0x18] sm:$0x1]
        %v344 = vsel %vm226, 0, %v343
        %345 = vst [vmem:[#allocation3 + $0x18] sm:$0x1] %v344
        %v346 = vld [vmem:[#allocation3 + $0x24] sm:$0x1]
        %v347 = vsel %vm226, 0, %v346
        %348 = vst [vmem:[#allocation3 + $0x24] sm:$0x1] %v347
        %v349 = vld [vmem:[#allocation3 + $0x30] sm:$0x1]
        %v350 = vsel %vm226, 0, %v349
        %351 = vst [vmem:[#allocation3 + $0x30] sm:$0x1] %v350
        %v352 = vld [vmem:[#allocation3 + $0x3c] sm:$0x1]
        %v353 = vsel %vm226, 0, %v352
        %354 = vst [vmem:[#allocation3 + $0x3c] sm:$0x1] %v353
        %v355 = vld [vmem:[#allocation3 + $0x48] sm:$0x1]
        %v356 = vsel %vm226, 0, %v355
        %357 = vst [vmem:[#allocation3 + $0x48] sm:$0x1] %v356
        %v358 = vld [vmem:[#allocation3 + $0x54] sm:$0x1]
        %v359 = vsel %vm226, 0, %v358
        %360 = vst [vmem:[#allocation3 + $0x54] sm:$0x1] %v359
        %v361 = vld [vmem:[#allocation3 + $0x60] sm:$0x1]
        %v362 = vsel %vm226, 0, %v361
        %363 = vst [vmem:[#allocation3 + $0x60] sm:$0x1] %v362
        %v364 = vld [vmem:[#allocation3 + $0x6c] sm:$0x1]
        %v365 = vsel %vm226, 0, %v364
        %366 = vst [vmem:[#allocation3 + $0x6c] sm:$0x1] %v365
        %v367 = vld [vmem:[#allocation3 + $0x78] sm:$0x1]
        %v368 = vsel %vm226, 0, %v367
        %369 = vst [vmem:[#allocation3 + $0x78] sm:$0x1] %v368
        %v370 = vld [vmem:[#allocation3 + $0x84] sm:$0x1]
        %v371 = vsel %vm226, 0, %v370
        %372 = vst [vmem:[#allocation3 + $0x84] sm:$0x1] %v371
        %v373 = vld [vmem:[#allocation3 + $0x90] sm:$0x1]
        %v374 = vsel %vm226, 0, %v373
        %375 = vst [vmem:[#allocation3 + $0x90] sm:$0x1] %v374
        %v376 = vld [vmem:[#allocation3 + $0x9c] sm:$0x1]
        %v377 = vsel %vm226, 0, %v376
        %378 = vst [vmem:[#allocation3 + $0x9c] sm:$0x1] %v377
        %v379 = vld [vmem:[#allocation3 + $0xa8] sm:$0x1]
        %v380 = vsel %vm226, 0, %v379
        %381 = vst [vmem:[#allocation3 + $0xa8] sm:$0x1] %v380
        %v382 = vld [vmem:[#allocation3 + $0xb4] sm:$0x1]
        %v383 = vsel %vm226, 0, %v382
        %384 = vst [vmem:[#allocation3 + $0xb4] sm:$0x1] %v383
        %v385 = vld [vmem:[#allocation3 + $0xc0] sm:$0x1]
        %v386 = vsel %vm226, 0, %v385
        %387 = vst [vmem:[#allocation3 + $0xc0] sm:$0x1] %v386
        %v388 = vld [vmem:[#allocation3 + $0xcc] sm:$0x1]
        %v389 = vsel %vm226, 0, %v388
        %390 = vst [vmem:[#allocation3 + $0xcc] sm:$0x1] %v389
        %v391 = vld [vmem:[#allocation3 + $0x8] sm:$0x1]
        %v392 = vsel %vm282, 0, %v391
        %393 = vst [vmem:[#allocation3 + $0x8] sm:$0x1] %v392
        %v394 = vld [vmem:[#allocation3 + $0x14] sm:$0x1]
        %v395 = vsel %vm282, 0, %v394
        %396 = vst [vmem:[#allocation3 + $0x14] sm:$0x1] %v395
        %v397 = vld [vmem:[#allocation3 + $0x20] sm:$0x1]
        %v398 = vsel %vm282, 0, %v397
        %399 = vst [vmem:[#allocation3 + $0x20] sm:$0x1] %v398
        %v400 = vld [vmem:[#allocation3 + $0x2c] sm:$0x1]
        %v401 = vsel %vm282, 0, %v400
        %402 = vst [vmem:[#allocation3 + $0x2c] sm:$0x1] %v401
        %v403 = vld [vmem:[#allocation3 + $0x38] sm:$0x1]
        %v404 = vsel %vm282, 0, %v403
        %405 = vst [vmem:[#allocation3 + $0x38] sm:$0x1] %v404
        %v406 = vld [vmem:[#allocation3 + $0x44] sm:$0x1]
        %v407 = vsel %vm282, 0, %v406
        %408 = vst [vmem:[#allocation3 + $0x44] sm:$0x1] %v407
        %v409 = vld [vmem:[#allocation3 + $0x50] sm:$0x1]
        %v410 = vsel %vm282, 0, %v409
        %411 = vst [vmem:[#allocation3 + $0x50] sm:$0x1] %v410
        %v412 = vld [vmem:[#allocation3 + $0x5c] sm:$0x1]
        %v413 = vsel %vm282, 0, %v412
        %414 = vst [vmem:[#allocation3 + $0x5c] sm:$0x1] %v413
        %v415 = vld [vmem:[#allocation3 + $0x68] sm:$0x1]
        %v416 = vsel %vm282, 0, %v415
        %417 = vst [vmem:[#allocation3 + $0x68] sm:$0x1] %v416
        %v418 = vld [vmem:[#allocation3 + $0x74] sm:$0x1]
        %v419 = vsel %vm282, 0, %v418
        %420 = vst [vmem:[#allocation3 + $0x74] sm:$0x1] %v419
        %v421 = vld [vmem:[#allocation3 + $0x80] sm:$0x1]
        %v422 = vsel %vm282, 0, %v421
        %423 = vst [vmem:[#allocation3 + $0x80] sm:$0x1] %v422
        %v424 = vld [vmem:[#allocation3 + $0x8c] sm:$0x1]
        %v425 = vsel %vm282, 0, %v424
        %426 = vst [vmem:[#allocation3 + $0x8c] sm:$0x1] %v425
        %v427 = vld [vmem:[#allocation3 + $0x98] sm:$0x1]
        %v428 = vsel %vm282, 0, %v427
        %429 = vst [vmem:[#allocation3 + $0x98] sm:$0x1] %v428
        %v430 = vld [vmem:[#allocation3 + $0xa4] sm:$0x1]
        %v431 = vsel %vm282, 0, %v430
        %432 = vst [vmem:[#allocation3 + $0xa4] sm:$0x1] %v431
        %v433 = vld [vmem:[#allocation3 + $0xb0] sm:$0x1]
        %v434 = vsel %vm282, 0, %v433
        %435 = vst [vmem:[#allocation3 + $0xb0] sm:$0x1] %v434
        %v436 = vld [vmem:[#allocation3 + $0xbc] sm:$0x1]
        %v437 = vsel %vm282, 0, %v436
        %438 = vst [vmem:[#allocation3 + $0xbc] sm:$0x1] %v437
        %v439 = vld [vmem:[#allocation3 + $0xc8] sm:$0x1]
        %v440 = vsel %vm282, 0, %v439
        %441 = vst [vmem:[#allocation3 + $0xc8] sm:$0x1] %v440
        %v442 = vld [vmem:[#allocation3 + $0xd4] sm:$0x1]
        %v443 = vsel %vm282, 0, %v442
        %444 = vst [vmem:[#allocation3 + $0xd4] sm:$0x1] %v443
        %v445 = vld [vmem:[%s222] sm:$0xff]
        %v446 = vld [vmem:[%s222 + $0x8] sm:$0xff]
        %v447 = vld [vmem:[%s222 + $0x10] sm:$0xff]
        %v448 = vld [vmem:[%s222 + $0x18] sm:$0xff]
        %v449 = vld [vmem:[%s222 + $0x20] sm:$0xff]
        %v450 = vld [vmem:[%s222 + $0x28] sm:$0xff]
        %v451 = vld [vmem:[%s222 + $0x30] sm:$0xff]
        %v452 = vld [vmem:[%s222 + $0x38] sm:$0xff]
        %v453 = vld [vmem:[%s222 + $0x40] sm:$0xff]
        %v454 = vld [vmem:[%s222 + $0x48] sm:$0xff]
        %v455 = vld [vmem:[%s222 + $0x50] sm:$0xff]
        %v456 = vld [vmem:[%s222 + $0x58] sm:$0xff]
        %v457 = vld [vmem:[%s222 + $0x60] sm:$0xff]
        %v458 = vld [vmem:[%s222 + $0x68] sm:$0xff]
        %v459 = vld [vmem:[%s222 + $0x70] sm:$0xff]
        %v460 = vld [vmem:[%s222 + $0x78] sm:$0xff]
        %v461 = vld [vmem:[%s222 + $0x80] sm:$0xff]
        %v462 = vld [vmem:[%s222 + $0x88] sm:$0xff]
        %v463 = vld [vmem:[%s222 + $0x90] sm:$0xff]
        %v464 = vld [vmem:[%s222 + $0x98] sm:$0xff]
        %v465 = vld [vmem:[%s222 + $0xa0] sm:$0xff]
        %v466 = vld [vmem:[%s222 + $0xa8] sm:$0xff]
        %v467 = vld [vmem:[%s222 + $0xb0] sm:$0xff]
        %v468 = vld [vmem:[%s222 + $0xb8] sm:$0xff]
        %v469 = vld [vmem:[%s222 + $0xc0] sm:$0xff]
        %v470 = vld [vmem:[%s222 + $0xc8] sm:$0xff]
        %v471 = vld [vmem:[%s222 + $0xd0] sm:$0xff]
        %v472 = vld [vmem:[%s222 + $0xd8] sm:$0xff]
        %v473 = vld [vmem:[%s222 + $0xe0] sm:$0xff]
        %v474 = vld [vmem:[%s222 + $0xe8] sm:$0xff]
        %v475 = vld [vmem:[%s222 + $0xf0] sm:$0xff]
        %v476 = vld [vmem:[%s222 + $0xf8] sm:$0xff]
        %v477 = vpack.c.bf16 %v446, %v445
        %v478 = vpack.c.bf16 %v448, %v447
        %v479 = vpack.c.bf16 %v450, %v449
        %v480 = vpack.c.bf16 %v452, %v451
        %v481 = vpack.c.bf16 %v454, %v453
        %v482 = vpack.c.bf16 %v456, %v455
        %v483 = vpack.c.bf16 %v458, %v457
        %v484 = vpack.c.bf16 %v460, %v459
        %v485 = vpack.c.bf16 %v462, %v461
        %v486 = vpack.c.bf16 %v464, %v463
        %v487 = vpack.c.bf16 %v466, %v465
        %v488 = vpack.c.bf16 %v468, %v467
        %v489 = vpack.c.bf16 %v470, %v469
        %v490 = vpack.c.bf16 %v472, %v471
        %v491 = vpack.c.bf16 %v474, %v473
        %v492 = vpack.c.bf16 %v476, %v475
        %v509 = vunpack.c.l.b16 %v477
        %v510 = vunpack.c.h.b16 %v477
        %v511 = vunpack.c.l.b16 %v478
        %v512 = vunpack.c.h.b16 %v478
        %v513 = vunpack.c.l.b16 %v479
        %v514 = vunpack.c.h.b16 %v479
        %v515 = vunpack.c.l.b16 %v480
        %v516 = vunpack.c.h.b16 %v480
        %v517 = vunpack.c.l.b16 %v481
        %v518 = vunpack.c.h.b16 %v481
        %v519 = vunpack.c.l.b16 %v482
        %v520 = vunpack.c.h.b16 %v482
        %v521 = vunpack.c.l.b16 %v483
        %v522 = vunpack.c.h.b16 %v483
        %v523 = vunpack.c.l.b16 %v484
        %v524 = vunpack.c.h.b16 %v484
        %v525 = vunpack.c.l.b16 %v485
        %v526 = vunpack.c.h.b16 %v485
        %v527 = vunpack.c.l.b16 %v486
        %v528 = vunpack.c.h.b16 %v486
        %v529 = vunpack.c.l.b16 %v487
        %v530 = vunpack.c.h.b16 %v487
        %v531 = vunpack.c.l.b16 %v488
        %v532 = vunpack.c.h.b16 %v488
        %v533 = vunpack.c.l.b16 %v489
        %v534 = vunpack.c.h.b16 %v489
        %v535 = vunpack.c.l.b16 %v490
        %v536 = vunpack.c.h.b16 %v490
        %v537 = vunpack.c.l.b16 %v491
        %v538 = vunpack.c.h.b16 %v491
        %v539 = vunpack.c.l.b16 %v492
        %v540 = vunpack.c.h.b16 %v492
        %v541 = vpack.c.b16 %v509, %v509
        %v542 = vpack.c.b16 %v510, %v510
        %v543 = vpack.c.b16 %v511, %v511
        %v544 = vpack.c.b16 %v512, %v512
        %v545 = vpack.c.b16 %v513, %v513
        %v546 = vpack.c.b16 %v514, %v514
        %v547 = vpack.c.b16 %v515, %v515
        %v548 = vpack.c.b16 %v516, %v516
        %v549 = vpack.c.b16 %v517, %v517
        %v550 = vpack.c.b16 %v518, %v518
        %v551 = vpack.c.b16 %v519, %v519
        %v552 = vpack.c.b16 %v520, %v520
        %v553 = vpack.c.b16 %v521, %v521
        %v554 = vpack.c.b16 %v522, %v522
        %v555 = vpack.c.b16 %v523, %v523
        %v556 = vpack.c.b16 %v524, %v524
        %v557 = vpack.c.b16 %v525, %v525
        %v558 = vpack.c.b16 %v526, %v526
        %v559 = vpack.c.b16 %v527, %v527
        %v560 = vpack.c.b16 %v528, %v528
        %v561 = vpack.c.b16 %v529, %v529
        %v562 = vpack.c.b16 %v530, %v530
        %v563 = vpack.c.b16 %v531, %v531
        %v564 = vpack.c.b16 %v532, %v532
        %v565 = vpack.c.b16 %v533, %v533
        %v566 = vpack.c.b16 %v534, %v534
        %v567 = vpack.c.b16 %v535, %v535
        %v568 = vpack.c.b16 %v536, %v536
        %v569 = vpack.c.b16 %v537, %v537
        %v570 = vpack.c.b16 %v538, %v538
        %v571 = vpack.c.b16 %v539, %v539
        %v572 = vpack.c.b16 %v540, %v540
        %vm573 = vsmask.f32 4368
        %vm574 = vmor %vm225, %vm573
        %v576 = vshrl.u32 %v541, 16
        %v578 = vrot.slane %v576, 7
        %v579 = vshll.u32 %v541, 16
        %v581 = vor.u32 %v578, %v579
        %v582 = vrot.slane %v578, 4
        %v584 = vshrl.u32 %v542, 16
        %v586 = vrot.slane %v584, 7
        %v587 = vshll.u32 %v542, 16
        %v589 = vor.u32 %v586, %v587
        %v590 = vsel %vm574, %v582, %v589
        %v591 = vrot.slane %v586, 4
        %v593 = vshrl.u32 %v543, 16
        %v595 = vrot.slane %v593, 7
        %v596 = vshll.u32 %v543, 16
        %v598 = vor.u32 %v595, %v596
        %v599 = vrot.slane %v595, 4
        %v601 = vshrl.u32 %v544, 16
        %v603 = vrot.slane %v601, 7
        %v604 = vshll.u32 %v544, 16
        %v606 = vor.u32 %v603, %v604
        %v607 = vsel %vm574, %v599, %v606
        %v608 = vrot.slane %v603, 4
        %v610 = vshrl.u32 %v545, 16
        %v612 = vrot.slane %v610, 7
        %v613 = vshll.u32 %v545, 16
        %v615 = vor.u32 %v612, %v613
        %v616 = vrot.slane %v612, 4
        %v618 = vshrl.u32 %v546, 16
        %v620 = vrot.slane %v618, 7
        %v621 = vshll.u32 %v546, 16
        %v623 = vor.u32 %v620, %v621
        %v624 = vsel %vm574, %v616, %v623
        %v625 = vrot.slane %v620, 4
        %v627 = vshrl.u32 %v547, 16
        %v629 = vrot.slane %v627, 7
        %v630 = vshll.u32 %v547, 16
        %v632 = vor.u32 %v629, %v630
        %v633 = vrot.slane %v629, 4
        %v635 = vshrl.u32 %v548, 16
        %v637 = vrot.slane %v635, 7
        %v638 = vshll.u32 %v548, 16
        %v640 = vor.u32 %v637, %v638
        %v641 = vsel %vm574, %v633, %v640
        %v642 = vrot.slane %v637, 4
        %v644 = vshrl.u32 %v549, 16
        %v646 = vrot.slane %v644, 7
        %v647 = vshll.u32 %v549, 16
        %v649 = vor.u32 %v646, %v647
        %v650 = vrot.slane %v646, 4
        %v652 = vshrl.u32 %v550, 16
        %v654 = vrot.slane %v652, 7
        %v655 = vshll.u32 %v550, 16
        %v657 = vor.u32 %v654, %v655
        %v658 = vsel %vm574, %v650, %v657
        %v659 = vrot.slane %v654, 4
        %v661 = vshrl.u32 %v551, 16
        %v663 = vrot.slane %v661, 7
        %v664 = vshll.u32 %v551, 16
        %v666 = vor.u32 %v663, %v664
        %v667 = vrot.slane %v663, 4
        %v669 = vshrl.u32 %v552, 16
        %v671 = vrot.slane %v669, 7
        %v672 = vshll.u32 %v552, 16
        %v674 = vor.u32 %v671, %v672
        %v675 = vsel %vm574, %v667, %v674
        %v676 = vrot.slane %v671, 4
        %v678 = vshrl.u32 %v553, 16
        %v680 = vrot.slane %v678, 7
        %v681 = vshll.u32 %v553, 16
        %v683 = vor.u32 %v680, %v681
        %v684 = vrot.slane %v680, 4
        %v686 = vshrl.u32 %v554, 16
        %v688 = vrot.slane %v686, 7
        %v689 = vshll.u32 %v554, 16
        %v691 = vor.u32 %v688, %v689
        %v692 = vsel %vm574, %v684, %v691
        %v693 = vrot.slane %v688, 4
        %v695 = vshrl.u32 %v555, 16
        %v697 = vrot.slane %v695, 7
        %v698 = vshll.u32 %v555, 16
        %v700 = vor.u32 %v697, %v698
        %v701 = vrot.slane %v697, 4
        %v703 = vshrl.u32 %v556, 16
        %v705 = vrot.slane %v703, 7
        %v706 = vshll.u32 %v556, 16
        %v708 = vor.u32 %v705, %v706
        %v709 = vsel %vm574, %v701, %v708
        %v710 = vrot.slane %v705, 4
        %v712 = vshrl.u32 %v557, 16
        %v714 = vrot.slane %v712, 7
        %v715 = vshll.u32 %v557, 16
        %v717 = vor.u32 %v714, %v715
        %v718 = vrot.slane %v714, 4
        %v720 = vshrl.u32 %v558, 16
        %v722 = vrot.slane %v720, 7
        %v723 = vshll.u32 %v558, 16
        %v725 = vor.u32 %v722, %v723
        %v726 = vsel %vm574, %v718, %v725
        %v727 = vrot.slane %v722, 4
        %v729 = vshrl.u32 %v559, 16
        %v731 = vrot.slane %v729, 7
        %v732 = vshll.u32 %v559, 16
        %v734 = vor.u32 %v731, %v732
        %v735 = vrot.slane %v731, 4
        %v737 = vshrl.u32 %v560, 16
        %v739 = vrot.slane %v737, 7
        %v740 = vshll.u32 %v560, 16
        %v742 = vor.u32 %v739, %v740
        %v743 = vsel %vm574, %v735, %v742
        %v744 = vrot.slane %v739, 4
        %v746 = vshrl.u32 %v561, 16
        %v748 = vrot.slane %v746, 7
        %v749 = vshll.u32 %v561, 16
        %v751 = vor.u32 %v748, %v749
        %v752 = vrot.slane %v748, 4
        %v754 = vshrl.u32 %v562, 16
        %v756 = vrot.slane %v754, 7
        %v757 = vshll.u32 %v562, 16
        %v759 = vor.u32 %v756, %v757
        %v760 = vsel %vm574, %v752, %v759
        %v761 = vrot.slane %v756, 4
        %v763 = vshrl.u32 %v563, 16
        %v765 = vrot.slane %v763, 7
        %v766 = vshll.u32 %v563, 16
        %v768 = vor.u32 %v765, %v766
        %v769 = vrot.slane %v765, 4
        %v771 = vshrl.u32 %v564, 16
        %v773 = vrot.slane %v771, 7
        %v774 = vshll.u32 %v564, 16
        %v776 = vor.u32 %v773, %v774
        %v777 = vsel %vm574, %v769, %v776
        %v778 = vrot.slane %v773, 4
        %v780 = vshrl.u32 %v565, 16
        %v782 = vrot.slane %v780, 7
        %v783 = vshll.u32 %v565, 16
        %v785 = vor.u32 %v782, %v783
        %v786 = vrot.slane %v782, 4
        %v788 = vshrl.u32 %v566, 16
        %v790 = vrot.slane %v788, 7
        %v791 = vshll.u32 %v566, 16
        %v793 = vor.u32 %v790, %v791
        %v794 = vsel %vm574, %v786, %v793
        %v795 = vrot.slane %v790, 4
        %v797 = vshrl.u32 %v567, 16
        %v799 = vrot.slane %v797, 7
        %v800 = vshll.u32 %v567, 16
        %v802 = vor.u32 %v799, %v800
        %v803 = vrot.slane %v799, 4
        %v805 = vshrl.u32 %v568, 16
        %v807 = vrot.slane %v805, 7
        %v808 = vshll.u32 %v568, 16
        %v810 = vor.u32 %v807, %v808
        %v811 = vsel %vm574, %v803, %v810
        %v812 = vrot.slane %v807, 4
        %v814 = vshrl.u32 %v569, 16
        %v816 = vrot.slane %v814, 7
        %v817 = vshll.u32 %v569, 16
        %v819 = vor.u32 %v816, %v817
        %v820 = vrot.slane %v816, 4
        %v822 = vshrl.u32 %v570, 16
        %v824 = vrot.slane %v822, 7
        %v825 = vshll.u32 %v570, 16
        %v827 = vor.u32 %v824, %v825
        %v828 = vsel %vm574, %v820, %v827
        %v829 = vrot.slane %v824, 4
        %v831 = vshrl.u32 %v571, 16
        %v833 = vrot.slane %v831, 7
        %v834 = vshll.u32 %v571, 16
        %v836 = vor.u32 %v833, %v834
        %v837 = vrot.slane %v833, 4
        %v839 = vshrl.u32 %v572, 16
        %v841 = vrot.slane %v839, 7
        %v842 = vshll.u32 %v572, 16
        %v844 = vor.u32 %v841, %v842
        %v845 = vsel %vm574, %v837, %v844
        %v846 = vrot.slane %v841, 4
        %s895 = scalar_lea.vmem [#allocation2], 12
        %vm896 = vcmask 257024
        %vm897 = vmand %vm896, %vm281
        %v898 = vld [vmem:[%s895] sm:$0xf]
        %v899 = vsel %vm897, %v581, %v898
        %900 = vst [vmem:[%s895] sm:$0xf] %v899
        %vm901 = vcmask 257024
        %902 = vst.msk [vmem:[%s895 + $0x4] sm:$0xf] %vm901, %v590
        %v903 = vld [vmem:[%s895 + $0x8] sm:$0x1]
        %v904 = vsel %vm226, %v591, %v903
        %905 = vst [vmem:[%s895 + $0x8] sm:$0x1] %v904
        %v906 = vld [vmem:[%s895 + $0xc] sm:$0xf]
        %v907 = vsel %vm897, %v598, %v906
        %908 = vst [vmem:[%s895 + $0xc] sm:$0xf] %v907
        %909 = vst.msk [vmem:[%s895 + $0x10] sm:$0xf] %vm901, %v607
        %v910 = vld [vmem:[%s895 + $0x14] sm:$0x1]
        %v911 = vsel %vm226, %v608, %v910
        %912 = vst [vmem:[%s895 + $0x14] sm:$0x1] %v911
        %v913 = vld [vmem:[%s895 + $0x18] sm:$0xf]
        %v914 = vsel %vm897, %v615, %v913
        %915 = vst [vmem:[%s895 + $0x18] sm:$0xf] %v914
        %916 = vst.msk [vmem:[%s895 + $0x1c] sm:$0xf] %vm901, %v624
        %v917 = vld [vmem:[%s895 + $0x20] sm:$0x1]
        %v918 = vsel %vm226, %v625, %v917
        %919 = vst [vmem:[%s895 + $0x20] sm:$0x1] %v918
        %v920 = vld [vmem:[%s895 + $0x24] sm:$0xf]
        %v921 = vsel %vm897, %v632, %v920
        %922 = vst [vmem:[%s895 + $0x24] sm:$0xf] %v921
        %923 = vst.msk [vmem:[%s895 + $0x28] sm:$0xf] %vm901, %v641
        %v924 = vld [vmem:[%s895 + $0x2c] sm:$0x1]
        %v925 = vsel %vm226, %v642, %v924
        %926 = vst [vmem:[%s895 + $0x2c] sm:$0x1] %v925
        %v927 = vld [vmem:[%s895 + $0x30] sm:$0xf]
        %v928 = vsel %vm897, %v649, %v927
        %929 = vst [vmem:[%s895 + $0x30] sm:$0xf] %v928
        %930 = vst.msk [vmem:[%s895 + $0x34] sm:$0xf] %vm901, %v658
        %v931 = vld [vmem:[%s895 + $0x38] sm:$0x1]
        %v932 = vsel %vm226, %v659, %v931
        %933 = vst [vmem:[%s895 + $0x38] sm:$0x1] %v932
        %v934 = vld [vmem:[%s895 + $0x3c] sm:$0xf]
        %v935 = vsel %vm897, %v666, %v934
        %936 = vst [vmem:[%s895 + $0x3c] sm:$0xf] %v935
        %937 = vst.msk [vmem:[%s895 + $0x40] sm:$0xf] %vm901, %v675
        %v938 = vld [vmem:[%s895 + $0x44] sm:$0x1]
        %v939 = vsel %vm226, %v676, %v938
        %940 = vst [vmem:[%s895 + $0x44] sm:$0x1] %v939
        %v941 = vld [vmem:[%s895 + $0x48] sm:$0xf]
        %v942 = vsel %vm897, %v683, %v941
        %943 = vst [vmem:[%s895 + $0x48] sm:$0xf] %v942
        %944 = vst.msk [vmem:[%s895 + $0x4c] sm:$0xf] %vm901, %v692
        %v945 = vld [vmem:[%s895 + $0x50] sm:$0x1]
        %v946 = vsel %vm226, %v693, %v945
        %947 = vst [vmem:[%s895 + $0x50] sm:$0x1] %v946
        %v948 = vld [vmem:[%s895 + $0x54] sm:$0xf]
        %v949 = vsel %vm897, %v700, %v948
        %950 = vst [vmem:[%s895 + $0x54] sm:$0xf] %v949
        %951 = vst.msk [vmem:[%s895 + $0x58] sm:$0xf] %vm901, %v709
        %v952 = vld [vmem:[%s895 + $0x5c] sm:$0x1]
        %v953 = vsel %vm226, %v710, %v952
        %954 = vst [vmem:[%s895 + $0x5c] sm:$0x1] %v953
        %v955 = vld [vmem:[%s895 + $0x60] sm:$0xf]
        %v956 = vsel %vm897, %v717, %v955
        %957 = vst [vmem:[%s895 + $0x60] sm:$0xf] %v956
        %958 = vst.msk [vmem:[%s895 + $0x64] sm:$0xf] %vm901, %v726
        %v959 = vld [vmem:[%s895 + $0x68] sm:$0x1]
        %v960 = vsel %vm226, %v727, %v959
        %961 = vst [vmem:[%s895 + $0x68] sm:$0x1] %v960
        %v962 = vld [vmem:[%s895 + $0x6c] sm:$0xf]
        %v963 = vsel %vm897, %v734, %v962
        %964 = vst [vmem:[%s895 + $0x6c] sm:$0xf] %v963
        %965 = vst.msk [vmem:[%s895 + $0x70] sm:$0xf] %vm901, %v743
        %v966 = vld [vmem:[%s895 + $0x74] sm:$0x1]
        %v967 = vsel %vm226, %v744, %v966
        %968 = vst [vmem:[%s895 + $0x74] sm:$0x1] %v967
        %v969 = vld [vmem:[%s895 + $0x78] sm:$0xf]
        %v970 = vsel %vm897, %v751, %v969
        %971 = vst [vmem:[%s895 + $0x78] sm:$0xf] %v970
        %972 = vst.msk [vmem:[%s895 + $0x7c] sm:$0xf] %vm901, %v760
        %v973 = vld [vmem:[%s895 + $0x80] sm:$0x1]
        %v974 = vsel %vm226, %v761, %v973
        %975 = vst [vmem:[%s895 + $0x80] sm:$0x1] %v974
        %v976 = vld [vmem:[%s895 + $0x84] sm:$0xf]
        %v977 = vsel %vm897, %v768, %v976
        %978 = vst [vmem:[%s895 + $0x84] sm:$0xf] %v977
        %979 = vst.msk [vmem:[%s895 + $0x88] sm:$0xf] %vm901, %v777
        %v980 = vld [vmem:[%s895 + $0x8c] sm:$0x1]
        %v981 = vsel %vm226, %v778, %v980
        %982 = vst [vmem:[%s895 + $0x8c] sm:$0x1] %v981
        %v983 = vld [vmem:[%s895 + $0x90] sm:$0xf]
        %v984 = vsel %vm897, %v785, %v983
        %985 = vst [vmem:[%s895 + $0x90] sm:$0xf] %v984
        %986 = vst.msk [vmem:[%s895 + $0x94] sm:$0xf] %vm901, %v794
        %v987 = vld [vmem:[%s895 + $0x98] sm:$0x1]
        %v988 = vsel %vm226, %v795, %v987
        %989 = vst [vmem:[%s895 + $0x98] sm:$0x1] %v988
        %v990 = vld [vmem:[%s895 + $0x9c] sm:$0xf]
        %v991 = vsel %vm897, %v802, %v990
        %992 = vst [vmem:[%s895 + $0x9c] sm:$0xf] %v991
        %993 = vst.msk [vmem:[%s895 + $0xa0] sm:$0xf] %vm901, %v811
        %v994 = vld [vmem:[%s895 + $0xa4] sm:$0x1]
        %v995 = vsel %vm226, %v812, %v994
        %996 = vst [vmem:[%s895 + $0xa4] sm:$0x1] %v995
        %v997 = vld [vmem:[%s895 + $0xa8] sm:$0xf]
        %v998 = vsel %vm897, %v819, %v997
        %999 = vst [vmem:[%s895 + $0xa8] sm:$0xf] %v998
        %1000 = vst.msk [vmem:[%s895 + $0xac] sm:$0xf] %vm901, %v828
        %v1001 = vld [vmem:[%s895 + $0xb0] sm:$0x1]
        %v1002 = vsel %vm226, %v829, %v1001
        %1003 = vst [vmem:[%s895 + $0xb0] sm:$0x1] %v1002
        %v1004 = vld [vmem:[%s895 + $0xb4] sm:$0xf]
        %v1005 = vsel %vm897, %v836, %v1004
        %1006 = vst [vmem:[%s895 + $0xb4] sm:$0xf] %v1005
        %1007 = vst.msk [vmem:[%s895 + $0xb8] sm:$0xf] %vm901, %v845
        %v1008 = vld [vmem:[%s895 + $0xbc] sm:$0x1]
        %v1009 = vsel %vm226, %v846, %v1008
        %1010 = vst [vmem:[%s895 + $0xbc] sm:$0x1] %v1009
        %s1011 = scalar_lea.vmem %s222, 240
        %v1012 = vld [vmem:[%s1011] sm:$0xff]
        %v1013 = vld [vmem:[%s1011 + $0x8] sm:$0xff]
        %v1014 = vpack.c.bf16 %v1013, %v1012
        %v1016 = vunpack.c.l.b16 %v1014
        %v1017 = vunpack.c.h.b16 %v1014
        %v1018 = vpack.c.b16 %v1016, %v1016
        %v1019 = vpack.c.b16 %v1017, %v1017
        %v1021 = vshrl.u32 %v1018, 16
        %v1023 = vrot.slane %v1021, 7
        %v1024 = vshll.u32 %v1018, 16
        %v1026 = vor.u32 %v1023, %v1024
        %v1027 = vrot.slane %v1023, 4
        %v1029 = vshrl.u32 %v1019, 16
        %v1031 = vrot.slane %v1029, 7
        %v1032 = vshll.u32 %v1019, 16
        %v1034 = vor.u32 %v1031, %v1032
        %v1035 = vsel %vm574, %v1027, %v1034
        %v1036 = vrot.slane %v1031, 4
        %v1040 = vld [vmem:[#allocation2] sm:$0xf]
        %v1041 = vsel %vm897, %v1026, %v1040
        %1042 = vst [vmem:[#allocation2] sm:$0xf] %v1041
        %1043 = vst.msk [vmem:[#allocation2 + $0x4] sm:$0xf] %vm901, %v1035
        %v1044 = vld [vmem:[#allocation2 + $0x8] sm:$0x1]
        %v1045 = vsel %vm226, %v1036, %v1044
        %1046 = vst [vmem:[#allocation2 + $0x8] sm:$0x1] %v1045
        %v1047 = vld [vmem:[%s222] sm:$0xff]
        %v1048 = vld [vmem:[%s222 + $0x8] sm:$0xff]
        %v1049 = vpack.c.bf16 %v1048, %v1047
        %v1051 = vunpack.c.l.b16 %v1049
        %v1052 = vunpack.c.h.b16 %v1049
        %v1053 = vpack.c.b16 %v1051, %v1051
        %v1054 = vpack.c.b16 %v1052, %v1052
        %v1056 = vshrl.u32 %v1053, 16
        %v1058 = vrot.slane %v1056, 7
        %v1059 = vshll.u32 %v1053, 16
        %v1061 = vor.u32 %v1058, %v1059
        %v1062 = vrot.slane %v1058, 4
        %v1064 = vshrl.u32 %v1054, 16
        %v1066 = vrot.slane %v1064, 7
        %v1067 = vshll.u32 %v1054, 16
        %v1069 = vor.u32 %v1066, %v1067
        %v1070 = vsel %vm574, %v1062, %v1069
        %v1071 = vrot.slane %v1066, 4
        %s1075 = scalar_lea.vmem [#allocation2], 204
        %v1076 = vld [vmem:[%s1075] sm:$0xf]
        %v1077 = vsel %vm897, %v1061, %v1076
        %1078 = vst [vmem:[%s1075] sm:$0xf] %v1077
        %1079 = vst.msk [vmem:[%s1075 + $0x4] sm:$0xf] %vm901, %v1070
        %v1080 = vld [vmem:[%s1075 + $0x8] sm:$0x1]
        %v1081 = vsel %vm226, %v1071, %v1080
        %1082 = vst [vmem:[%s1075 + $0x8] sm:$0x1] %v1081
        %v1083 = vld [vmem:[#allocation2] sm:$0xf]
        %v1084 = vld [vmem:[#allocation2 + $0x4] sm:$0xf]
        %v1085 = vld [vmem:[#allocation2 + $0xc] sm:$0xf]
        %v1086 = vld [vmem:[#allocation2 + $0x10] sm:$0xf]
        %v1087 = vld [vmem:[#allocation2 + $0x18] sm:$0xf]
        %v1088 = vld [vmem:[#allocation2 + $0x1c] sm:$0xf]
        %v1089 = vld [vmem:[#allocation2 + $0x24] sm:$0xf]
        %v1090 = vld [vmem:[#allocation2 + $0x28] sm:$0xf]
        %v1091 = vld [vmem:[#allocation2 + $0x30] sm:$0xf]
        %v1092 = vld [vmem:[#allocation2 + $0x34] sm:$0xf]
        %v1093 = vld [vmem:[#allocation2 + $0x3c] sm:$0xf]
        %v1094 = vld [vmem:[#allocation2 + $0x40] sm:$0xf]
        %v1095 = vld [vmem:[#allocation2 + $0x48] sm:$0xf]
        %v1096 = vld [vmem:[#allocation2 + $0x4c] sm:$0xf]
        %v1097 = vld [vmem:[#allocation2 + $0x54] sm:$0xf]
        %v1098 = vld [vmem:[#allocation2 + $0x58] sm:$0xf]
        %v1115 = vunpack.c.l.b16 %v1083
        %v1116 = vunpack.c.l.b16 %v1084
        %v1117 = vunpack.c.l.b16 %v1085
        %v1118 = vunpack.c.l.b16 %v1086
        %v1119 = vunpack.c.l.b16 %v1087
        %v1120 = vunpack.c.l.b16 %v1088
        %v1121 = vunpack.c.l.b16 %v1089
        %v1122 = vunpack.c.l.b16 %v1090
        %v1123 = vunpack.c.l.b16 %v1091
        %v1124 = vunpack.c.l.b16 %v1092
        %v1125 = vunpack.c.l.b16 %v1093
        %v1126 = vunpack.c.l.b16 %v1094
        %v1127 = vunpack.c.l.b16 %v1095
        %v1128 = vunpack.c.l.b16 %v1096
        %v1129 = vunpack.c.l.b16 %v1097
        %v1130 = vunpack.c.l.b16 %v1098
        %v1131 = vpack.c.b16 %v1116, %v1115
        %v1132 = vpack.c.b16 %v1118, %v1117
        %v1133 = vpack.c.b16 %v1120, %v1119
        %v1134 = vpack.c.b16 %v1122, %v1121
        %v1135 = vpack.c.b16 %v1124, %v1123
        %v1136 = vpack.c.b16 %v1126, %v1125
        %v1137 = vpack.c.b16 %v1128, %v1127
        %v1138 = vpack.c.b16 %v1130, %v1129
        %vm1147 = vcmask 261120
        %1148 = vst.msk [vmem:[#allocation4] sm:$0xff] %vm1147, %v1131
        %1149 = vst.msk [vmem:[#allocation4 + $0x18] sm:$0xff] %vm1147, %v1132
        %1150 = vst.msk [vmem:[#allocation4 + $0x30] sm:$0xff] %vm1147, %v1133
        %1151 = vst.msk [vmem:[#allocation4 + $0x48] sm:$0xff] %vm1147, %v1134
        %1152 = vst.msk [vmem:[#allocation4 + $0x60] sm:$0xff] %vm1147, %v1135
        %1153 = vst.msk [vmem:[#allocation4 + $0x78] sm:$0xff] %vm1147, %v1136
        %1154 = vst.msk [vmem:[#allocation4 + $0x90] sm:$0xff] %vm1147, %v1137
        %1155 = vst.msk [vmem:[#allocation4 + $0xa8] sm:$0xff] %vm1147, %v1138
        %v1156 = vld [vmem:[%s895] sm:$0xf]
        %v1157 = vld [vmem:[%s895 + $0x4] sm:$0xf]
        %v1158 = vld [vmem:[%s895 + $0xc] sm:$0xf]
        %v1159 = vld [vmem:[%s895 + $0x10] sm:$0xf]
        %v1160 = vld [vmem:[%s895 + $0x18] sm:$0xf]
        %v1161 = vld [vmem:[%s895 + $0x1c] sm:$0xf]
        %v1162 = vld [vmem:[%s895 + $0x24] sm:$0xf]
        %v1163 = vld [vmem:[%s895 + $0x28] sm:$0xf]
        %v1164 = vld [vmem:[%s895 + $0x30] sm:$0xf]
        %v1165 = vld [vmem:[%s895 + $0x34] sm:$0xf]
        %v1166 = vld [vmem:[%s895 + $0x3c] sm:$0xf]
        %v1167 = vld [vmem:[%s895 + $0x40] sm:$0xf]
        %v1168 = vld [vmem:[%s895 + $0x48] sm:$0xf]
        %v1169 = vld [vmem:[%s895 + $0x4c] sm:$0xf]
        %v1170 = vld [vmem:[%s895 + $0x54] sm:$0xf]
        %v1171 = vld [vmem:[%s895 + $0x58] sm:$0xf]
        %v1188 = vunpack.c.l.b16 %v1156
        %v1189 = vunpack.c.l.b16 %v1157
        %v1190 = vunpack.c.l.b16 %v1158
        %v1191 = vunpack.c.l.b16 %v1159
        %v1192 = vunpack.c.l.b16 %v1160
        %v1193 = vunpack.c.l.b16 %v1161
        %v1194 = vunpack.c.l.b16 %v1162
        %v1195 = vunpack.c.l.b16 %v1163
        %v1196 = vunpack.c.l.b16 %v1164
        %v1197 = vunpack.c.l.b16 %v1165
        %v1198 = vunpack.c.l.b16 %v1166
        %v1199 = vunpack.c.l.b16 %v1167
        %v1200 = vunpack.c.l.b16 %v1168
        %v1201 = vunpack.c.l.b16 %v1169
        %v1202 = vunpack.c.l.b16 %v1170
        %v1203 = vunpack.c.l.b16 %v1171
        %v1204 = vpack.c.b16 %v1189, %v1188
        %v1205 = vpack.c.b16 %v1191, %v1190
        %v1206 = vpack.c.b16 %v1193, %v1192
        %v1207 = vpack.c.b16 %v1195, %v1194
        %v1208 = vpack.c.b16 %v1197, %v1196
        %v1209 = vpack.c.b16 %v1199, %v1198
        %v1210 = vpack.c.b16 %v1201, %v1200
        %v1211 = vpack.c.b16 %v1203, %v1202
        %1212 = vrot.lane.b32.xlu0 %v1204, 32
        %v1213 = vpop.permute.xlu0 %1212
        %1214 = vrot.lane.b32.xlu0 %v1205, 32
        %v1215 = vpop.permute.xlu0 %1214
        %1216 = vrot.lane.b32.xlu0 %v1206, 32
        %v1217 = vpop.permute.xlu0 %1216
        %1218 = vrot.lane.b32.xlu0 %v1207, 32
        %v1219 = vpop.permute.xlu0 %1218
        %1220 = vrot.lane.b32.xlu0 %v1208, 32
        %v1221 = vpop.permute.xlu0 %1220
        %1222 = vrot.lane.b32.xlu0 %v1209, 32
        %v1223 = vpop.permute.xlu0 %1222
        %1224 = vrot.lane.b32.xlu0 %v1210, 32
        %v1225 = vpop.permute.xlu0 %1224
        %1226 = vrot.lane.b32.xlu0 %v1211, 32
        %v1227 = vpop.permute.xlu0 %1226
        %vm1236 = vcmask 523520
        %1237 = vst.msk [vmem:[#allocation4] sm:$0xff] %vm1236, %v1213
        %1238 = vst.msk [vmem:[#allocation4 + $0x18] sm:$0xff] %vm1236, %v1215
        %1239 = vst.msk [vmem:[#allocation4 + $0x30] sm:$0xff] %vm1236, %v1217
        %1240 = vst.msk [vmem:[#allocation4 + $0x48] sm:$0xff] %vm1236, %v1219
        %1241 = vst.msk [vmem:[#allocation4 + $0x60] sm:$0xff] %vm1236, %v1221
        %1242 = vst.msk [vmem:[#allocation4 + $0x78] sm:$0xff] %vm1236, %v1223
        %1243 = vst.msk [vmem:[#allocation4 + $0x90] sm:$0xff] %vm1236, %v1225
        %1244 = vst.msk [vmem:[#allocation4 + $0xa8] sm:$0xff] %vm1236, %v1227
        %s1245 = scalar_lea.vmem [#allocation2], 24
        %v1246 = vld [vmem:[%s1245] sm:$0xf]
        %v1247 = vld [vmem:[%s1245 + $0x4] sm:$0xf]
        %v1248 = vld [vmem:[%s1245 + $0xc] sm:$0xf]
        %v1249 = vld [vmem:[%s1245 + $0x10] sm:$0xf]
        %v1250 = vld [vmem:[%s1245 + $0x18] sm:$0xf]
        %v1251 = vld [vmem:[%s1245 + $0x1c] sm:$0xf]
        %v1252 = vld [vmem:[%s1245 + $0x24] sm:$0xf]
        %v1253 = vld [vmem:[%s1245 + $0x28] sm:$0xf]
        %v1254 = vld [vmem:[%s1245 + $0x30] sm:$0xf]
        %v1255 = vld [vmem:[%s1245 + $0x34] sm:$0xf]
        %v1256 = vld [vmem:[%s1245 + $0x3c] sm:$0xf]
        %v1257 = vld [vmem:[%s1245 + $0x40] sm:$0xf]
        %v1258 = vld [vmem:[%s1245 + $0x48] sm:$0xf]
        %v1259 = vld [vmem:[%s1245 + $0x4c] sm:$0xf]
        %v1260 = vld [vmem:[%s1245 + $0x54] sm:$0xf]
        %v1261 = vld [vmem:[%s1245 + $0x58] sm:$0xf]
        %v1278 = vunpack.c.l.b16 %v1246
        %v1279 = vunpack.c.l.b16 %v1247
        %v1280 = vunpack.c.l.b16 %v1248
        %v1281 = vunpack.c.l.b16 %v1249
        %v1282 = vunpack.c.l.b16 %v1250
        %v1283 = vunpack.c.l.b16 %v1251
        %v1284 = vunpack.c.l.b16 %v1252
        %v1285 = vunpack.c.l.b16 %v1253
        %v1286 = vunpack.c.l.b16 %v1254
        %v1287 = vunpack.c.l.b16 %v1255
        %v1288 = vunpack.c.l.b16 %v1256
        %v1289 = vunpack.c.l.b16 %v1257
        %v1290 = vunpack.c.l.b16 %v1258
        %v1291 = vunpack.c.l.b16 %v1259
        %v1292 = vunpack.c.l.b16 %v1260
        %v1293 = vunpack.c.l.b16 %v1261
        %v1294 = vpack.c.b16 %v1279, %v1278
        %v1295 = vpack.c.b16 %v1281, %v1280
        %v1296 = vpack.c.b16 %v1283, %v1282
        %v1297 = vpack.c.b16 %v1285, %v1284
        %v1298 = vpack.c.b16 %v1287, %v1286
        %v1299 = vpack.c.b16 %v1289, %v1288
        %v1300 = vpack.c.b16 %v1291, %v1290
        %v1301 = vpack.c.b16 %v1293, %v1292
        %1302 = vrot.lane.b32.xlu0 %v1294, 64
        %v1303 = vpop.permute.xlu0 %1302
        %1304 = vrot.lane.b32.xlu0 %v1295, 64
        %v1305 = vpop.permute.xlu0 %1304
        %1306 = vrot.lane.b32.xlu0 %v1296, 64
        %v1307 = vpop.permute.xlu0 %1306
        %1308 = vrot.lane.b32.xlu0 %v1297, 64
        %v1309 = vpop.permute.xlu0 %1308
        %1310 = vrot.lane.b32.xlu0 %v1298, 64
        %v1311 = vpop.permute.xlu0 %1310
        %1312 = vrot.lane.b32.xlu0 %v1299, 64
        %v1313 = vpop.permute.xlu0 %1312
        %1314 = vrot.lane.b32.xlu0 %v1300, 64
        %v1315 = vpop.permute.xlu0 %1314
        %1316 = vrot.lane.b32.xlu0 %v1301, 64
        %v1317 = vpop.permute.xlu0 %1316
        %vm1326 = vcmask 785920
        %1327 = vst.msk [vmem:[#allocation4] sm:$0xff] %vm1326, %v1303
        %1328 = vst.msk [vmem:[#allocation4 + $0x18] sm:$0xff] %vm1326, %v1305
        %1329 = vst.msk [vmem:[#allocation4 + $0x30] sm:$0xff] %vm1326, %v1307
        %1330 = vst.msk [vmem:[#allocation4 + $0x48] sm:$0xff] %vm1326, %v1309
        %1331 = vst.msk [vmem:[#allocation4 + $0x60] sm:$0xff] %vm1326, %v1311
        %1332 = vst.msk [vmem:[#allocation4 + $0x78] sm:$0xff] %vm1326, %v1313
        %1333 = vst.msk [vmem:[#allocation4 + $0x90] sm:$0xff] %vm1326, %v1315
        %1334 = vst.msk [vmem:[#allocation4 + $0xa8] sm:$0xff] %vm1326, %v1317
        %v1335 = vld [vmem:[#allocation2] sm:$0xf]
        %v1336 = vld [vmem:[#allocation2 + $0x4] sm:$0xf]
        %v1337 = vld [vmem:[#allocation2 + $0x8] sm:$0x1]
        %v1338 = vld [vmem:[#allocation2 + $0xc] sm:$0xf]
        %v1339 = vld [vmem:[#allocation2 + $0x10] sm:$0xf]
        %v1340 = vld [vmem:[#allocation2 + $0x14] sm:$0x1]
        %v1341 = vld [vmem:[#allocation2 + $0x18] sm:$0xf]
        %v1342 = vld [vmem:[#allocation2 + $0x1c] sm:$0xf]
        %v1343 = vld [vmem:[#allocation2 + $0x20] sm:$0x1]
        %v1344 = vld [vmem:[#allocation2 + $0x24] sm:$0xf]
        %v1345 = vld [vmem:[#allocation2 + $0x28] sm:$0xf]
        %v1346 = vld [vmem:[#allocation2 + $0x2c] sm:$0x1]
        %v1347 = vld [vmem:[#allocation2 + $0x30] sm:$0xf]
        %v1348 = vld [vmem:[#allocation2 + $0x34] sm:$0xf]
        %v1349 = vld [vmem:[#allocation2 + $0x38] sm:$0x1]
        %v1350 = vld [vmem:[#allocation2 + $0x3c] sm:$0xf]
        %v1351 = vld [vmem:[#allocation2 + $0x40] sm:$0xf]
        %v1352 = vld [vmem:[#allocation2 + $0x44] sm:$0x1]
        %v1353 = vld [vmem:[#allocation2 + $0x48] sm:$0xf]
        %v1354 = vld [vmem:[#allocation2 + $0x4c] sm:$0xf]
        %v1355 = vld [vmem:[#allocation2 + $0x50] sm:$0x1]
        %v1356 = vld [vmem:[#allocation2 + $0x54] sm:$0xf]
        %v1357 = vld [vmem:[#allocation2 + $0x58] sm:$0xf]
        %v1358 = vld [vmem:[#allocation2 + $0x5c] sm:$0x1]
        %v1383 = vunpack.c.l.b16 %v1335
        %v1384 = vunpack.c.l.b16 %v1336
        %v1385 = vunpack.c.l.b16 %v1337
        %v1386 = vunpack.c.l.b16 %v1338
        %v1387 = vunpack.c.l.b16 %v1339
        %v1388 = vunpack.c.l.b16 %v1340
        %v1389 = vunpack.c.l.b16 %v1341
        %v1390 = vunpack.c.l.b16 %v1342
        %v1391 = vunpack.c.l.b16 %v1343
        %v1392 = vunpack.c.l.b16 %v1344
        %v1393 = vunpack.c.l.b16 %v1345
        %v1394 = vunpack.c.l.b16 %v1346
        %v1395 = vunpack.c.l.b16 %v1347
        %v1396 = vunpack.c.l.b16 %v1348
        %v1397 = vunpack.c.l.b16 %v1349
        %v1398 = vunpack.c.l.b16 %v1350
        %v1399 = vunpack.c.l.b16 %v1351
        %v1400 = vunpack.c.l.b16 %v1352
        %v1401 = vunpack.c.l.b16 %v1353
        %v1402 = vunpack.c.l.b16 %v1354
        %v1403 = vunpack.c.l.b16 %v1355
        %v1404 = vunpack.c.l.b16 %v1356
        %v1405 = vunpack.c.l.b16 %v1357
        %v1406 = vunpack.c.l.b16 %v1358
        %v1407 = vpack.c.b16 %v1384, %v1383
        %v1408 = vpack.c.b16 %v1385, %v1385
        %v1409 = vpack.c.b16 %v1387, %v1386
        %v1410 = vpack.c.b16 %v1388, %v1388
        %v1411 = vpack.c.b16 %v1390, %v1389
        %v1412 = vpack.c.b16 %v1391, %v1391
        %v1413 = vpack.c.b16 %v1393, %v1392
        %v1414 = vpack.c.b16 %v1394, %v1394
        %v1415 = vpack.c.b16 %v1396, %v1395
        %v1416 = vpack.c.b16 %v1397, %v1397
        %v1417 = vpack.c.b16 %v1399, %v1398
        %v1418 = vpack.c.b16 %v1400, %v1400
        %v1419 = vpack.c.b16 %v1402, %v1401
        %v1420 = vpack.c.b16 %v1403, %v1403
        %v1421 = vpack.c.b16 %v1405, %v1404
        %v1422 = vpack.c.b16 %v1406, %v1406
        %vm1423 = vsmask.f32 7424
        %v1425 = vshrl.u32 %v1407, 16
        %v1427 = vshll.u32 %v1407, 16
        %v1429 = vrot.slane %v1427, 1
        %v1430 = vor.u32 %v1425, %v1429
        %v1432 = vshll.u32 %v1408, 16
        %v1434 = vrot.slane %v1432, 1
        %v1435 = vsel %vm1423, %v1430, %v1434
        %v1437 = vshrl.u32 %v1409, 16
        %v1439 = vshll.u32 %v1409, 16
        %v1441 = vrot.slane %v1439, 1
        %v1442 = vor.u32 %v1437, %v1441
        %v1444 = vshll.u32 %v1410, 16
        %v1446 = vrot.slane %v1444, 1
        %v1447 = vsel %vm1423, %v1442, %v1446
        %v1449 = vshrl.u32 %v1411, 16
        %v1451 = vshll.u32 %v1411, 16
        %v1453 = vrot.slane %v1451, 1
        %v1454 = vor.u32 %v1449, %v1453
        %v1456 = vshll.u32 %v1412, 16
        %v1458 = vrot.slane %v1456, 1
        %v1459 = vsel %vm1423, %v1454, %v1458
        %v1461 = vshrl.u32 %v1413, 16
        %v1463 = vshll.u32 %v1413, 16
        %v1465 = vrot.slane %v1463, 1
        %v1466 = vor.u32 %v1461, %v1465
        %v1468 = vshll.u32 %v1414, 16
        %v1470 = vrot.slane %v1468, 1
        %v1471 = vsel %vm1423, %v1466, %v1470
        %v1473 = vshrl.u32 %v1415, 16
        %v1475 = vshll.u32 %v1415, 16
        %v1477 = vrot.slane %v1475, 1
        %v1478 = vor.u32 %v1473, %v1477
        %v1480 = vshll.u32 %v1416, 16
        %v1482 = vrot.slane %v1480, 1
        %v1483 = vsel %vm1423, %v1478, %v1482
        %v1485 = vshrl.u32 %v1417, 16
        %v1487 = vshll.u32 %v1417, 16
        %v1489 = vrot.slane %v1487, 1
        %v1490 = vor.u32 %v1485, %v1489
        %v1492 = vshll.u32 %v1418, 16
        %v1494 = vrot.slane %v1492, 1
        %v1495 = vsel %vm1423, %v1490, %v1494
        %v1497 = vshrl.u32 %v1419, 16
        %v1499 = vshll.u32 %v1419, 16
        %v1501 = vrot.slane %v1499, 1
        %v1502 = vor.u32 %v1497, %v1501
        %v1504 = vshll.u32 %v1420, 16
        %v1506 = vrot.slane %v1504, 1
        %v1507 = vsel %vm1423, %v1502, %v1506
        %v1509 = vshrl.u32 %v1421, 16
        %v1511 = vshll.u32 %v1421, 16
        %v1513 = vrot.slane %v1511, 1
        %v1514 = vor.u32 %v1509, %v1513
        %v1516 = vshll.u32 %v1422, 16
        %v1518 = vrot.slane %v1516, 1
        %v1519 = vsel %vm1423, %v1514, %v1518
        %1520 = vrot.lane.b32.xlu0 %v1435, 96
        %v1521 = vpop.permute.xlu0 %1520
        %1522 = vrot.lane.b32.xlu0 %v1447, 96
        %v1523 = vpop.permute.xlu0 %1522
        %1524 = vrot.lane.b32.xlu0 %v1459, 96
        %v1525 = vpop.permute.xlu0 %1524
        %1526 = vrot.lane.b32.xlu0 %v1471, 96
        %v1527 = vpop.permute.xlu0 %1526
        %1528 = vrot.lane.b32.xlu0 %v1483, 96
        %v1529 = vpop.permute.xlu0 %1528
        %1530 = vrot.lane.b32.xlu0 %v1495, 96
        %v1531 = vpop.permute.xlu0 %1530
        %1532 = vrot.lane.b32.xlu0 %v1507, 96
        %v1533 = vpop.permute.xlu0 %1532
        %1534 = vrot.lane.b32.xlu0 %v1519, 96
        %v1535 = vpop.permute.xlu0 %1534
        %vm1544 = vcmask 1048320
        %1545 = vst.msk [vmem:[#allocation4] sm:$0xff] %vm1544, %v1521
        %1546 = vst.msk [vmem:[#allocation4 + $0x18] sm:$0xff] %vm1544, %v1523
        %1547 = vst.msk [vmem:[#allocation4 + $0x30] sm:$0xff] %vm1544, %v1525
        %1548 = vst.msk [vmem:[#allocation4 + $0x48] sm:$0xff] %vm1544, %v1527
        %1549 = vst.msk [vmem:[#allocation4 + $0x60] sm:$0xff] %vm1544, %v1529
        %1550 = vst.msk [vmem:[#allocation4 + $0x78] sm:$0xff] %vm1544, %v1531
        %1551 = vst.msk [vmem:[#allocation4 + $0x90] sm:$0xff] %vm1544, %v1533
        %1552 = vst.msk [vmem:[#allocation4 + $0xa8] sm:$0xff] %vm1544, %v1535
        %v1553 = vld [vmem:[%s895] sm:$0xf]
        %v1554 = vld [vmem:[%s895 + $0x4] sm:$0xf]
        %v1555 = vld [vmem:[%s895 + $0x8] sm:$0x1]
        %v1556 = vld [vmem:[%s895 + $0xc] sm:$0xf]
        %v1557 = vld [vmem:[%s895 + $0x10] sm:$0xf]
        %v1558 = vld [vmem:[%s895 + $0x14] sm:$0x1]
        %v1559 = vld [vmem:[%s895 + $0x18] sm:$0xf]
        %v1560 = vld [vmem:[%s895 + $0x1c] sm:$0xf]
        %v1561 = vld [vmem:[%s895 + $0x20] sm:$0x1]
        %v1562 = vld [vmem:[%s895 + $0x24] sm:$0xf]
        %v1563 = vld [vmem:[%s895 + $0x28] sm:$0xf]
        %v1564 = vld [vmem:[%s895 + $0x2c] sm:$0x1]
        %v1565 = vld [vmem:[%s895 + $0x30] sm:$0xf]
        %v1566 = vld [vmem:[%s895 + $0x34] sm:$0xf]
        %v1567 = vld [vmem:[%s895 + $0x38] sm:$0x1]
        %v1568 = vld [vmem:[%s895 + $0x3c] sm:$0xf]
        %v1569 = vld [vmem:[%s895 + $0x40] sm:$0xf]
        %v1570 = vld [vmem:[%s895 + $0x44] sm:$0x1]
        %v1571 = vld [vmem:[%s895 + $0x48] sm:$0xf]
        %v1572 = vld [vmem:[%s895 + $0x4c] sm:$0xf]
        %v1573 = vld [vmem:[%s895 + $0x50] sm:$0x1]
        %v1574 = vld [vmem:[%s895 + $0x54] sm:$0xf]
        %v1575 = vld [vmem:[%s895 + $0x58] sm:$0xf]
        %v1576 = vld [vmem:[%s895 + $0x5c] sm:$0x1]
        %v1601 = vunpack.c.l.b16 %v1553
        %v1602 = vunpack.c.l.b16 %v1554
        %v1603 = vunpack.c.l.b16 %v1555
        %v1604 = vunpack.c.l.b16 %v1556
        %v1605 = vunpack.c.l.b16 %v1557
        %v1606 = vunpack.c.l.b16 %v1558
        %v1607 = vunpack.c.l.b16 %v1559
        %v1608 = vunpack.c.l.b16 %v1560
        %v1609 = vunpack.c.l.b16 %v1561
        %v1610 = vunpack.c.l.b16 %v1562
        %v1611 = vunpack.c.l.b16 %v1563
        %v1612 = vunpack.c.l.b16 %v1564
        %v1613 = vunpack.c.l.b16 %v1565
        %v1614 = vunpack.c.l.b16 %v1566
        %v1615 = vunpack.c.l.b16 %v1567
        %v1616 = vunpack.c.l.b16 %v1568
        %v1617 = vunpack.c.l.b16 %v1569
        %v1618 = vunpack.c.l.b16 %v1570
        %v1619 = vunpack.c.l.b16 %v1571
        %v1620 = vunpack.c.l.b16 %v1572
        %v1621 = vunpack.c.l.b16 %v1573
        %v1622 = vunpack.c.l.b16 %v1574
        %v1623 = vunpack.c.l.b16 %v1575
        %v1624 = vunpack.c.l.b16 %v1576
        %v1625 = vpack.c.b16 %v1602, %v1601
        %v1626 = vpack.c.b16 %v1603, %v1603
        %v1627 = vpack.c.b16 %v1605, %v1604
        %v1628 = vpack.c.b16 %v1606, %v1606
        %v1629 = vpack.c.b16 %v1608, %v1607
        %v1630 = vpack.c.b16 %v1609, %v1609
        %v1631 = vpack.c.b16 %v1611, %v1610
        %v1632 = vpack.c.b16 %v1612, %v1612
        %v1633 = vpack.c.b16 %v1614, %v1613
        %v1634 = vpack.c.b16 %v1615, %v1615
        %v1635 = vpack.c.b16 %v1617, %v1616
        %v1636 = vpack.c.b16 %v1618, %v1618
        %v1637 = vpack.c.b16 %v1620, %v1619
        %v1638 = vpack.c.b16 %v1621, %v1621
        %v1639 = vpack.c.b16 %v1623, %v1622
        %v1640 = vpack.c.b16 %v1624, %v1624
        %v1642 = vshrl.u32 %v1625, 16
        %v1644 = vshll.u32 %v1625, 16
        %v1646 = vrot.slane %v1644, 1
        %v1647 = vor.u32 %v1642, %v1646
        %v1649 = vshll.u32 %v1626, 16
        %v1651 = vrot.slane %v1649, 1
        %v1652 = vsel %vm1423, %v1647, %v1651
        %v1654 = vshrl.u32 %v1627, 16
        %v1656 = vshll.u32 %v1627, 16
        %v1658 = vrot.slane %v1656, 1
        %v1659 = vor.u32 %v1654, %v1658
        %v1661 = vshll.u32 %v1628, 16
        %v1663 = vrot.slane %v1661, 1
        %v1664 = vsel %vm1423, %v1659, %v1663
        %v1666 = vshrl.u32 %v1629, 16
        %v1668 = vshll.u32 %v1629, 16
        %v1670 = vrot.slane %v1668, 1
        %v1671 = vor.u32 %v1666, %v1670
        %v1673 = vshll.u32 %v1630, 16
        %v1675 = vrot.slane %v1673, 1
        %v1676 = vsel %vm1423, %v1671, %v1675
        %v1678 = vshrl.u32 %v1631, 16
        %v1680 = vshll.u32 %v1631, 16
        %v1682 = vrot.slane %v1680, 1
        %v1683 = vor.u32 %v1678, %v1682
        %v1685 = vshll.u32 %v1632, 16
        %v1687 = vrot.slane %v1685, 1
        %v1688 = vsel %vm1423, %v1683, %v1687
        %v1690 = vshrl.u32 %v1633, 16
        %v1692 = vshll.u32 %v1633, 16
        %v1694 = vrot.slane %v1692, 1
        %v1695 = vor.u32 %v1690, %v1694
        %v1697 = vshll.u32 %v1634, 16
        %v1699 = vrot.slane %v1697, 1
        %v1700 = vsel %vm1423, %v1695, %v1699
        %v1702 = vshrl.u32 %v1635, 16
        %v1704 = vshll.u32 %v1635, 16
        %v1706 = vrot.slane %v1704, 1
        %v1707 = vor.u32 %v1702, %v1706
        %v1709 = vshll.u32 %v1636, 16
        %v1711 = vrot.slane %v1709, 1
        %v1712 = vsel %vm1423, %v1707, %v1711
        %v1714 = vshrl.u32 %v1637, 16
        %v1716 = vshll.u32 %v1637, 16
        %v1718 = vrot.slane %v1716, 1
        %v1719 = vor.u32 %v1714, %v1718
        %v1721 = vshll.u32 %v1638, 16
        %v1723 = vrot.slane %v1721, 1
        %v1724 = vsel %vm1423, %v1719, %v1723
        %v1726 = vshrl.u32 %v1639, 16
        %v1728 = vshll.u32 %v1639, 16
        %v1730 = vrot.slane %v1728, 1
        %v1731 = vor.u32 %v1726, %v1730
        %v1733 = vshll.u32 %v1640, 16
        %v1735 = vrot.slane %v1733, 1
        %v1736 = vsel %vm1423, %v1731, %v1735
        %1745 = vst.msk [vmem:[#allocation4 + $0x8] sm:$0xff] %vm1147, %v1652
        %1746 = vst.msk [vmem:[#allocation4 + $0x20] sm:$0xff] %vm1147, %v1664
        %1747 = vst.msk [vmem:[#allocation4 + $0x38] sm:$0xff] %vm1147, %v1676
        %1748 = vst.msk [vmem:[#allocation4 + $0x50] sm:$0xff] %vm1147, %v1688
        %1749 = vst.msk [vmem:[#allocation4 + $0x68] sm:$0xff] %vm1147, %v1700
        %1750 = vst.msk [vmem:[#allocation4 + $0x80] sm:$0xff] %vm1147, %v1712
        %1751 = vst.msk [vmem:[#allocation4 + $0x98] sm:$0xff] %vm1147, %v1724
        %1752 = vst.msk [vmem:[#allocation4 + $0xb0] sm:$0xff] %vm1147, %v1736
        %v1753 = vld [vmem:[%s1245] sm:$0xf]
        %v1754 = vld [vmem:[%s1245 + $0x4] sm:$0xf]
        %v1755 = vld [vmem:[%s1245 + $0x8] sm:$0x1]
        %v1756 = vld [vmem:[%s1245 + $0xc] sm:$0xf]
        %v1757 = vld [vmem:[%s1245 + $0x10] sm:$0xf]
        %v1758 = vld [vmem:[%s1245 + $0x14] sm:$0x1]
        %v1759 = vld [vmem:[%s1245 + $0x18] sm:$0xf]
        %v1760 = vld [vmem:[%s1245 + $0x1c] sm:$0xf]
        %v1761 = vld [vmem:[%s1245 + $0x20] sm:$0x1]
        %v1762 = vld [vmem:[%s1245 + $0x24] sm:$0xf]
        %v1763 = vld [vmem:[%s1245 + $0x28] sm:$0xf]
        %v1764 = vld [vmem:[%s1245 + $0x2c] sm:$0x1]
        %v1765 = vld [vmem:[%s1245 + $0x30] sm:$0xf]
        %v1766 = vld [vmem:[%s1245 + $0x34] sm:$0xf]
        %v1767 = vld [vmem:[%s1245 + $0x38] sm:$0x1]
        %v1768 = vld [vmem:[%s1245 + $0x3c] sm:$0xf]
        %v1769 = vld [vmem:[%s1245 + $0x40] sm:$0xf]
        %v1770 = vld [vmem:[%s1245 + $0x44] sm:$0x1]
        %v1771 = vld [vmem:[%s1245 + $0x48] sm:$0xf]
        %v1772 = vld [vmem:[%s1245 + $0x4c] sm:$0xf]
        %v1773 = vld [vmem:[%s1245 + $0x50] sm:$0x1]
        %v1774 = vld [vmem:[%s1245 + $0x54] sm:$0xf]
        %v1775 = vld [vmem:[%s1245 + $0x58] sm:$0xf]
        %v1776 = vld [vmem:[%s1245 + $0x5c] sm:$0x1]
        %v1801 = vunpack.c.l.b16 %v1753
        %v1802 = vunpack.c.l.b16 %v1754
        %v1803 = vunpack.c.l.b16 %v1755
        %v1804 = vunpack.c.l.b16 %v1756
        %v1805 = vunpack.c.l.b16 %v1757
        %v1806 = vunpack.c.l.b16 %v1758
        %v1807 = vunpack.c.l.b16 %v1759
        %v1808 = vunpack.c.l.b16 %v1760
        %v1809 = vunpack.c.l.b16 %v1761
        %v1810 = vunpack.c.l.b16 %v1762
        %v1811 = vunpack.c.l.b16 %v1763
        %v1812 = vunpack.c.l.b16 %v1764
        %v1813 = vunpack.c.l.b16 %v1765
        %v1814 = vunpack.c.l.b16 %v1766
        %v1815 = vunpack.c.l.b16 %v1767
        %v1816 = vunpack.c.l.b16 %v1768
        %v1817 = vunpack.c.l.b16 %v1769
        %v1818 = vunpack.c.l.b16 %v1770
        %v1819 = vunpack.c.l.b16 %v1771
        %v1820 = vunpack.c.l.b16 %v1772
        %v1821 = vunpack.c.l.b16 %v1773
        %v1822 = vunpack.c.l.b16 %v1774
        %v1823 = vunpack.c.l.b16 %v1775
        %v1824 = vunpack.c.l.b16 %v1776
        %v1825 = vpack.c.b16 %v1802, %v1801
        %v1826 = vpack.c.b16 %v1803, %v1803
        %v1827 = vpack.c.b16 %v1805, %v1804
        %v1828 = vpack.c.b16 %v1806, %v1806
        %v1829 = vpack.c.b16 %v1808, %v1807
        %v1830 = vpack.c.b16 %v1809, %v1809
        %v1831 = vpack.c.b16 %v1811, %v1810
        %v1832 = vpack.c.b16 %v1812, %v1812
        %v1833 = vpack.c.b16 %v1814, %v1813
        %v1834 = vpack.c.b16 %v1815, %v1815
        %v1835 = vpack.c.b16 %v1817, %v1816
        %v1836 = vpack.c.b16 %v1818, %v1818
        %v1837 = vpack.c.b16 %v1820, %v1819
        %v1838 = vpack.c.b16 %v1821, %v1821
        %v1839 = vpack.c.b16 %v1823, %v1822
        %v1840 = vpack.c.b16 %v1824, %v1824
        %v1842 = vshrl.u32 %v1825, 16
        %v1844 = vshll.u32 %v1825, 16
        %v1846 = vrot.slane %v1844, 1
        %v1847 = vor.u32 %v1842, %v1846
        %v1849 = vshll.u32 %v1826, 16
        %v1851 = vrot.slane %v1849, 1
        %v1852 = vsel %vm1423, %v1847, %v1851
        %v1854 = vshrl.u32 %v1827, 16
        %v1856 = vshll.u32 %v1827, 16
        %v1858 = vrot.slane %v1856, 1
        %v1859 = vor.u32 %v1854, %v1858
        %v1861 = vshll.u32 %v1828, 16
        %v1863 = vrot.slane %v1861, 1
        %v1864 = vsel %vm1423, %v1859, %v1863
        %v1866 = vshrl.u32 %v1829, 16
        %v1868 = vshll.u32 %v1829, 16
        %v1870 = vrot.slane %v1868, 1
        %v1871 = vor.u32 %v1866, %v1870
        %v1873 = vshll.u32 %v1830, 16
        %v1875 = vrot.slane %v1873, 1
        %v1876 = vsel %vm1423, %v1871, %v1875
        %v1878 = vshrl.u32 %v1831, 16
        %v1880 = vshll.u32 %v1831, 16
        %v1882 = vrot.slane %v1880, 1
        %v1883 = vor.u32 %v1878, %v1882
        %v1885 = vshll.u32 %v1832, 16
        %v1887 = vrot.slane %v1885, 1
        %v1888 = vsel %vm1423, %v1883, %v1887
        %v1890 = vshrl.u32 %v1833, 16
        %v1892 = vshll.u32 %v1833, 16
        %v1894 = vrot.slane %v1892, 1
        %v1895 = vor.u32 %v1890, %v1894
        %v1897 = vshll.u32 %v1834, 16
        %v1899 = vrot.slane %v1897, 1
        %v1900 = vsel %vm1423, %v1895, %v1899
        %v1902 = vshrl.u32 %v1835, 16
        %v1904 = vshll.u32 %v1835, 16
        %v1906 = vrot.slane %v1904, 1
        %v1907 = vor.u32 %v1902, %v1906
        %v1909 = vshll.u32 %v1836, 16
        %v1911 = vrot.slane %v1909, 1
        %v1912 = vsel %vm1423, %v1907, %v1911
        %v1914 = vshrl.u32 %v1837, 16
        %v1916 = vshll.u32 %v1837, 16
        %v1918 = vrot.slane %v1916, 1
        %v1919 = vor.u32 %v1914, %v1918
        %v1921 = vshll.u32 %v1838, 16
        %v1923 = vrot.slane %v1921, 1
        %v1924 = vsel %vm1423, %v1919, %v1923
        %v1926 = vshrl.u32 %v1839, 16
        %v1928 = vshll.u32 %v1839, 16
        %v1930 = vrot.slane %v1928, 1
        %v1931 = vor.u32 %v1926, %v1930
        %v1933 = vshll.u32 %v1840, 16
        %v1935 = vrot.slane %v1933, 1
        %v1936 = vsel %vm1423, %v1931, %v1935
        %1937 = vrot.lane.b32.xlu0 %v1852, 32
        %v1938 = vpop.permute.xlu0 %1937
        %1939 = vrot.lane.b32.xlu0 %v1864, 32
        %v1940 = vpop.permute.xlu0 %1939
        %1941 = vrot.lane.b32.xlu0 %v1876, 32
        %v1942 = vpop.permute.xlu0 %1941
        %1943 = vrot.lane.b32.xlu0 %v1888, 32
        %v1944 = vpop.permute.xlu0 %1943
        %1945 = vrot.lane.b32.xlu0 %v1900, 32
        %v1946 = vpop.permute.xlu0 %1945
        %1947 = vrot.lane.b32.xlu0 %v1912, 32
        %v1948 = vpop.permute.xlu0 %1947
        %1949 = vrot.lane.b32.xlu0 %v1924, 32
        %v1950 = vpop.permute.xlu0 %1949
        %1951 = vrot.lane.b32.xlu0 %v1936, 32
        %v1952 = vpop.permute.xlu0 %1951
        %1961 = vst.msk [vmem:[#allocation4 + $0x8] sm:$0xff] %vm1236, %v1938
        %1962 = vst.msk [vmem:[#allocation4 + $0x20] sm:$0xff] %vm1236, %v1940
        %1963 = vst.msk [vmem:[#allocation4 + $0x38] sm:$0xff] %vm1236, %v1942
        %1964 = vst.msk [vmem:[#allocation4 + $0x50] sm:$0xff] %vm1236, %v1944
        %1965 = vst.msk [vmem:[#allocation4 + $0x68] sm:$0xff] %vm1236, %v1946
        %1966 = vst.msk [vmem:[#allocation4 + $0x80] sm:$0xff] %vm1236, %v1948
        %1967 = vst.msk [vmem:[#allocation4 + $0x98] sm:$0xff] %vm1236, %v1950
        %1968 = vst.msk [vmem:[#allocation4 + $0xb0] sm:$0xff] %vm1236, %v1952
        %v1969 = vld [vmem:[#allocation2] sm:$0xe]
        %v1970 = vld [vmem:[#allocation2 + $0x4] sm:$0xf]
        %v1971 = vld [vmem:[#allocation2 + $0x8] sm:$0x1]
        %v1972 = vld [vmem:[#allocation2 + $0xc] sm:$0xe]
        %v1973 = vld [vmem:[#allocation2 + $0x10] sm:$0xf]
        %v1974 = vld [vmem:[#allocation2 + $0x14] sm:$0x1]
        %v1975 = vld [vmem:[#allocation2 + $0x18] sm:$0xe]
        %v1976 = vld [vmem:[#allocation2 + $0x1c] sm:$0xf]
        %v1977 = vld [vmem:[#allocation2 + $0x20] sm:$0x1]
        %v1978 = vld [vmem:[#allocation2 + $0x24] sm:$0xe]
        %v1979 = vld [vmem:[#allocation2 + $0x28] sm:$0xf]
        %v1980 = vld [vmem:[#allocation2 + $0x2c] sm:$0x1]
        %v1981 = vld [vmem:[#allocation2 + $0x30] sm:$0xe]
        %v1982 = vld [vmem:[#allocation2 + $0x34] sm:$0xf]
        %v1983 = vld [vmem:[#allocation2 + $0x38] sm:$0x1]
        %v1984 = vld [vmem:[#allocation2 + $0x3c] sm:$0xe]
        %v1985 = vld [vmem:[#allocation2 + $0x40] sm:$0xf]
        %v1986 = vld [vmem:[#allocation2 + $0x44] sm:$0x1]
        %v1987 = vld [vmem:[#allocation2 + $0x48] sm:$0xe]
        %v1988 = vld [vmem:[#allocation2 + $0x4c] sm:$0xf]
        %v1989 = vld [vmem:[#allocation2 + $0x50] sm:$0x1]
        %v1990 = vld [vmem:[#allocation2 + $0x54] sm:$0xe]
        %v1991 = vld [vmem:[#allocation2 + $0x58] sm:$0xf]
        %v1992 = vld [vmem:[#allocation2 + $0x5c] sm:$0x1]
        %v2017 = vunpack.c.l.b16 %v1969
        %v2018 = vunpack.c.l.b16 %v1970
        %v2019 = vunpack.c.l.b16 %v1971
        %v2020 = vunpack.c.l.b16 %v1972
        %v2021 = vunpack.c.l.b16 %v1973
        %v2022 = vunpack.c.l.b16 %v1974
        %v2023 = vunpack.c.l.b16 %v1975
        %v2024 = vunpack.c.l.b16 %v1976
        %v2025 = vunpack.c.l.b16 %v1977
        %v2026 = vunpack.c.l.b16 %v1978
        %v2027 = vunpack.c.l.b16 %v1979
        %v2028 = vunpack.c.l.b16 %v1980
        %v2029 = vunpack.c.l.b16 %v1981
        %v2030 = vunpack.c.l.b16 %v1982
        %v2031 = vunpack.c.l.b16 %v1983
        %v2032 = vunpack.c.l.b16 %v1984
        %v2033 = vunpack.c.l.b16 %v1985
        %v2034 = vunpack.c.l.b16 %v1986
        %v2035 = vunpack.c.l.b16 %v1987
        %v2036 = vunpack.c.l.b16 %v1988
        %v2037 = vunpack.c.l.b16 %v1989
        %v2038 = vunpack.c.l.b16 %v1990
        %v2039 = vunpack.c.l.b16 %v1991
        %v2040 = vunpack.c.l.b16 %v1992
        %v2041 = vpack.c.b16 %v2018, %v2017
        %v2042 = vpack.c.b16 %v2019, %v2019
        %v2043 = vpack.c.b16 %v2021, %v2020
        %v2044 = vpack.c.b16 %v2022, %v2022
        %v2045 = vpack.c.b16 %v2024, %v2023
        %v2046 = vpack.c.b16 %v2025, %v2025
        %v2047 = vpack.c.b16 %v2027, %v2026
        %v2048 = vpack.c.b16 %v2028, %v2028
        %v2049 = vpack.c.b16 %v2030, %v2029
        %v2050 = vpack.c.b16 %v2031, %v2031
        %v2051 = vpack.c.b16 %v2033, %v2032
        %v2052 = vpack.c.b16 %v2034, %v2034
        %v2053 = vpack.c.b16 %v2036, %v2035
        %v2054 = vpack.c.b16 %v2037, %v2037
        %v2055 = vpack.c.b16 %v2039, %v2038
        %v2056 = vpack.c.b16 %v2040, %v2040
        %vm2057 = vcmask 1046528
        %v2058 = vrot.slane %v2041, 1
        %v2059 = vrot.slane %v2042, 1
        %v2060 = vsel %vm2057, %v2058, %v2059
        %v2061 = vrot.slane %v2043, 1
        %v2062 = vrot.slane %v2044, 1
        %v2063 = vsel %vm2057, %v2061, %v2062
        %v2064 = vrot.slane %v2045, 1
        %v2065 = vrot.slane %v2046, 1
        %v2066 = vsel %vm2057, %v2064, %v2065
        %v2067 = vrot.slane %v2047, 1
        %v2068 = vrot.slane %v2048, 1
        %v2069 = vsel %vm2057, %v2067, %v2068
        %v2070 = vrot.slane %v2049, 1
        %v2071 = vrot.slane %v2050, 1
        %v2072 = vsel %vm2057, %v2070, %v2071
        %v2073 = vrot.slane %v2051, 1
        %v2074 = vrot.slane %v2052, 1
        %v2075 = vsel %vm2057, %v2073, %v2074
        %v2076 = vrot.slane %v2053, 1
        %v2077 = vrot.slane %v2054, 1
        %v2078 = vsel %vm2057, %v2076, %v2077
        %v2079 = vrot.slane %v2055, 1
        %v2080 = vrot.slane %v2056, 1
        %v2081 = vsel %vm2057, %v2079, %v2080
        %2082 = vrot.lane.b32.xlu0 %v2060, 64
        %v2083 = vpop.permute.xlu0 %2082
        %2084 = vrot.lane.b32.xlu0 %v2063, 64
        %v2085 = vpop.permute.xlu0 %2084
        %2086 = vrot.lane.b32.xlu0 %v2066, 64
        %v2087 = vpop.permute.xlu0 %2086
        %2088 = vrot.lane.b32.xlu0 %v2069, 64
        %v2089 = vpop.permute.xlu0 %2088
        %2090 = vrot.lane.b32.xlu0 %v2072, 64
        %v2091 = vpop.permute.xlu0 %2090
        %2092 = vrot.lane.b32.xlu0 %v2075, 64
        %v2093 = vpop.permute.xlu0 %2092
        %2094 = vrot.lane.b32.xlu0 %v2078, 64
        %v2095 = vpop.permute.xlu0 %2094
        %2096 = vrot.lane.b32.xlu0 %v2081, 64
        %v2097 = vpop.permute.xlu0 %2096
        %2106 = vst.msk [vmem:[#allocation4 + $0x8] sm:$0xff] %vm1326, %v2083
        %2107 = vst.msk [vmem:[#allocation4 + $0x20] sm:$0xff] %vm1326, %v2085
        %2108 = vst.msk [vmem:[#allocation4 + $0x38] sm:$0xff] %vm1326, %v2087
        %2109 = vst.msk [vmem:[#allocation4 + $0x50] sm:$0xff] %vm1326, %v2089
        %2110 = vst.msk [vmem:[#allocation4 + $0x68] sm:$0xff] %vm1326, %v2091
        %2111 = vst.msk [vmem:[#allocation4 + $0x80] sm:$0xff] %vm1326, %v2093
        %2112 = vst.msk [vmem:[#allocation4 + $0x98] sm:$0xff] %vm1326, %v2095
        %2113 = vst.msk [vmem:[#allocation4 + $0xb0] sm:$0xff] %vm1326, %v2097
        %v2114 = vld [vmem:[%s895] sm:$0xe]
        %v2115 = vld [vmem:[%s895 + $0x4] sm:$0xf]
        %v2116 = vld [vmem:[%s895 + $0x8] sm:$0x1]
        %v2117 = vld [vmem:[%s895 + $0xc] sm:$0xe]
        %v2118 = vld [vmem:[%s895 + $0x10] sm:$0xf]
        %v2119 = vld [vmem:[%s895 + $0x14] sm:$0x1]
        %v2120 = vld [vmem:[%s895 + $0x18] sm:$0xe]
        %v2121 = vld [vmem:[%s895 + $0x1c] sm:$0xf]
        %v2122 = vld [vmem:[%s895 + $0x20] sm:$0x1]
        %v2123 = vld [vmem:[%s895 + $0x24] sm:$0xe]
        %v2124 = vld [vmem:[%s895 + $0x28] sm:$0xf]
        %v2125 = vld [vmem:[%s895 + $0x2c] sm:$0x1]
        %v2126 = vld [vmem:[%s895 + $0x30] sm:$0xe]
        %v2127 = vld [vmem:[%s895 + $0x34] sm:$0xf]
        %v2128 = vld [vmem:[%s895 + $0x38] sm:$0x1]
        %v2129 = vld [vmem:[%s895 + $0x3c] sm:$0xe]
        %v2130 = vld [vmem:[%s895 + $0x40] sm:$0xf]
        %v2131 = vld [vmem:[%s895 + $0x44] sm:$0x1]
        %v2132 = vld [vmem:[%s895 + $0x48] sm:$0xe]
        %v2133 = vld [vmem:[%s895 + $0x4c] sm:$0xf]
        %v2134 = vld [vmem:[%s895 + $0x50] sm:$0x1]
        %v2135 = vld [vmem:[%s895 + $0x54] sm:$0xe]
        %v2136 = vld [vmem:[%s895 + $0x58] sm:$0xf]
        %v2137 = vld [vmem:[%s895 + $0x5c] sm:$0x1]
        %v2162 = vunpack.c.l.b16 %v2114
        %v2163 = vunpack.c.l.b16 %v2115
        %v2164 = vunpack.c.l.b16 %v2116
        %v2165 = vunpack.c.l.b16 %v2117
        %v2166 = vunpack.c.l.b16 %v2118
        %v2167 = vunpack.c.l.b16 %v2119
        %v2168 = vunpack.c.l.b16 %v2120
        %v2169 = vunpack.c.l.b16 %v2121
        %v2170 = vunpack.c.l.b16 %v2122
        %v2171 = vunpack.c.l.b16 %v2123
        %v2172 = vunpack.c.l.b16 %v2124
        %v2173 = vunpack.c.l.b16 %v2125
        %v2174 = vunpack.c.l.b16 %v2126
        %v2175 = vunpack.c.l.b16 %v2127
        %v2176 = vunpack.c.l.b16 %v2128
        %v2177 = vunpack.c.l.b16 %v2129
        %v2178 = vunpack.c.l.b16 %v2130
        %v2179 = vunpack.c.l.b16 %v2131
        %v2180 = vunpack.c.l.b16 %v2132
        %v2181 = vunpack.c.l.b16 %v2133
        %v2182 = vunpack.c.l.b16 %v2134
        %v2183 = vunpack.c.l.b16 %v2135
        %v2184 = vunpack.c.l.b16 %v2136
        %v2185 = vunpack.c.l.b16 %v2137
        %v2186 = vpack.c.b16 %v2163, %v2162
        %v2187 = vpack.c.b16 %v2164, %v2164
        %v2188 = vpack.c.b16 %v2166, %v2165
        %v2189 = vpack.c.b16 %v2167, %v2167
        %v2190 = vpack.c.b16 %v2169, %v2168
        %v2191 = vpack.c.b16 %v2170, %v2170
        %v2192 = vpack.c.b16 %v2172, %v2171
        %v2193 = vpack.c.b16 %v2173, %v2173
        %v2194 = vpack.c.b16 %v2175, %v2174
        %v2195 = vpack.c.b16 %v2176, %v2176
        %v2196 = vpack.c.b16 %v2178, %v2177
        %v2197 = vpack.c.b16 %v2179, %v2179
        %v2198 = vpack.c.b16 %v2181, %v2180
        %v2199 = vpack.c.b16 %v2182, %v2182
        %v2200 = vpack.c.b16 %v2184, %v2183
        %v2201 = vpack.c.b16 %v2185, %v2185
        %v2202 = vrot.slane %v2186, 1
        %v2203 = vrot.slane %v2187, 1
        %v2204 = vsel %vm2057, %v2202, %v2203
        %v2205 = vrot.slane %v2188, 1
        %v2206 = vrot.slane %v2189, 1
        %v2207 = vsel %vm2057, %v2205, %v2206
        %v2208 = vrot.slane %v2190, 1
        %v2209 = vrot.slane %v2191, 1
        %v2210 = vsel %vm2057, %v2208, %v2209
        %v2211 = vrot.slane %v2192, 1
        %v2212 = vrot.slane %v2193, 1
        %v2213 = vsel %vm2057, %v2211, %v2212
        %v2214 = vrot.slane %v2194, 1
        %v2215 = vrot.slane %v2195, 1
        %v2216 = vsel %vm2057, %v2214, %v2215
        %v2217 = vrot.slane %v2196, 1
        %v2218 = vrot.slane %v2197, 1
        %v2219 = vsel %vm2057, %v2217, %v2218
        %v2220 = vrot.slane %v2198, 1
        %v2221 = vrot.slane %v2199, 1
        %v2222 = vsel %vm2057, %v2220, %v2221
        %v2223 = vrot.slane %v2200, 1
        %v2224 = vrot.slane %v2201, 1
        %v2225 = vsel %vm2057, %v2223, %v2224
        %2226 = vrot.lane.b32.xlu0 %v2204, 96
        %v2227 = vpop.permute.xlu0 %2226
        %2228 = vrot.lane.b32.xlu0 %v2207, 96
        %v2229 = vpop.permute.xlu0 %2228
        %2230 = vrot.lane.b32.xlu0 %v2210, 96
        %v2231 = vpop.permute.xlu0 %2230
        %2232 = vrot.lane.b32.xlu0 %v2213, 96
        %v2233 = vpop.permute.xlu0 %2232
        %2234 = vrot.lane.b32.xlu0 %v2216, 96
        %v2235 = vpop.permute.xlu0 %2234
        %2236 = vrot.lane.b32.xlu0 %v2219, 96
        %v2237 = vpop.permute.xlu0 %2236
        %2238 = vrot.lane.b32.xlu0 %v2222, 96
        %v2239 = vpop.permute.xlu0 %2238
        %2240 = vrot.lane.b32.xlu0 %v2225, 96
        %v2241 = vpop.permute.xlu0 %2240
        %2250 = vst.msk [vmem:[#allocation4 + $0x8] sm:$0xff] %vm1544, %v2227
        %2251 = vst.msk [vmem:[#allocation4 + $0x20] sm:$0xff] %vm1544, %v2229
        %2252 = vst.msk [vmem:[#allocation4 + $0x38] sm:$0xff] %vm1544, %v2231
        %2253 = vst.msk [vmem:[#allocation4 + $0x50] sm:$0xff] %vm1544, %v2233
        %2254 = vst.msk [vmem:[#allocation4 + $0x68] sm:$0xff] %vm1544, %v2235
        %2255 = vst.msk [vmem:[#allocation4 + $0x80] sm:$0xff] %vm1544, %v2237
        %2256 = vst.msk [vmem:[#allocation4 + $0x98] sm:$0xff] %vm1544, %v2239
        %2257 = vst.msk [vmem:[#allocation4 + $0xb0] sm:$0xff] %vm1544, %v2241
        %v2258 = vld [vmem:[%s1245] sm:$0xe]
        %v2259 = vld [vmem:[%s1245 + $0x4] sm:$0xf]
        %v2260 = vld [vmem:[%s1245 + $0x8] sm:$0x1]
        %v2261 = vld [vmem:[%s1245 + $0xc] sm:$0xe]
        %v2262 = vld [vmem:[%s1245 + $0x10] sm:$0xf]
        %v2263 = vld [vmem:[%s1245 + $0x14] sm:$0x1]
        %v2264 = vld [vmem:[%s1245 + $0x18] sm:$0xe]
        %v2265 = vld [vmem:[%s1245 + $0x1c] sm:$0xf]
        %v2266 = vld [vmem:[%s1245 + $0x20] sm:$0x1]
        %v2267 = vld [vmem:[%s1245 + $0x24] sm:$0xe]
        %v2268 = vld [vmem:[%s1245 + $0x28] sm:$0xf]
        %v2269 = vld [vmem:[%s1245 + $0x2c] sm:$0x1]
        %v2270 = vld [vmem:[%s1245 + $0x30] sm:$0xe]
        %v2271 = vld [vmem:[%s1245 + $0x34] sm:$0xf]
        %v2272 = vld [vmem:[%s1245 + $0x38] sm:$0x1]
        %v2273 = vld [vmem:[%s1245 + $0x3c] sm:$0xe]
        %v2274 = vld [vmem:[%s1245 + $0x40] sm:$0xf]
        %v2275 = vld [vmem:[%s1245 + $0x44] sm:$0x1]
        %v2276 = vld [vmem:[%s1245 + $0x48] sm:$0xe]
        %v2277 = vld [vmem:[%s1245 + $0x4c] sm:$0xf]
        %v2278 = vld [vmem:[%s1245 + $0x50] sm:$0x1]
        %v2279 = vld [vmem:[%s1245 + $0x54] sm:$0xe]
        %v2280 = vld [vmem:[%s1245 + $0x58] sm:$0xf]
        %v2281 = vld [vmem:[%s1245 + $0x5c] sm:$0x1]
        %v2306 = vunpack.c.l.b16 %v2258
        %v2307 = vunpack.c.l.b16 %v2259
        %v2308 = vunpack.c.l.b16 %v2260
        %v2309 = vunpack.c.l.b16 %v2261
        %v2310 = vunpack.c.l.b16 %v2262
        %v2311 = vunpack.c.l.b16 %v2263
        %v2312 = vunpack.c.l.b16 %v2264
        %v2313 = vunpack.c.l.b16 %v2265
        %v2314 = vunpack.c.l.b16 %v2266
        %v2315 = vunpack.c.l.b16 %v2267
        %v2316 = vunpack.c.l.b16 %v2268
        %v2317 = vunpack.c.l.b16 %v2269
        %v2318 = vunpack.c.l.b16 %v2270
        %v2319 = vunpack.c.l.b16 %v2271
        %v2320 = vunpack.c.l.b16 %v2272
        %v2321 = vunpack.c.l.b16 %v2273
        %v2322 = vunpack.c.l.b16 %v2274
        %v2323 = vunpack.c.l.b16 %v2275
        %v2324 = vunpack.c.l.b16 %v2276
        %v2325 = vunpack.c.l.b16 %v2277
        %v2326 = vunpack.c.l.b16 %v2278
        %v2327 = vunpack.c.l.b16 %v2279
        %v2328 = vunpack.c.l.b16 %v2280
        %v2329 = vunpack.c.l.b16 %v2281
        %v2330 = vpack.c.b16 %v2307, %v2306
        %v2331 = vpack.c.b16 %v2308, %v2308
        %v2332 = vpack.c.b16 %v2310, %v2309
        %v2333 = vpack.c.b16 %v2311, %v2311
        %v2334 = vpack.c.b16 %v2313, %v2312
        %v2335 = vpack.c.b16 %v2314, %v2314
        %v2336 = vpack.c.b16 %v2316, %v2315
        %v2337 = vpack.c.b16 %v2317, %v2317
        %v2338 = vpack.c.b16 %v2319, %v2318
        %v2339 = vpack.c.b16 %v2320, %v2320
        %v2340 = vpack.c.b16 %v2322, %v2321
        %v2341 = vpack.c.b16 %v2323, %v2323
        %v2342 = vpack.c.b16 %v2325, %v2324
        %v2343 = vpack.c.b16 %v2326, %v2326
        %v2344 = vpack.c.b16 %v2328, %v2327
        %v2345 = vpack.c.b16 %v2329, %v2329
        %v2346 = vrot.slane %v2330, 1
        %v2347 = vrot.slane %v2331, 1
        %v2348 = vsel %vm2057, %v2346, %v2347
        %v2349 = vrot.slane %v2332, 1
        %v2350 = vrot.slane %v2333, 1
        %v2351 = vsel %vm2057, %v2349, %v2350
        %v2352 = vrot.slane %v2334, 1
        %v2353 = vrot.slane %v2335, 1
        %v2354 = vsel %vm2057, %v2352, %v2353
        %v2355 = vrot.slane %v2336, 1
        %v2356 = vrot.slane %v2337, 1
        %v2357 = vsel %vm2057, %v2355, %v2356
        %v2358 = vrot.slane %v2338, 1
        %v2359 = vrot.slane %v2339, 1
        %v2360 = vsel %vm2057, %v2358, %v2359
        %v2361 = vrot.slane %v2340, 1
        %v2362 = vrot.slane %v2341, 1
        %v2363 = vsel %vm2057, %v2361, %v2362
        %v2364 = vrot.slane %v2342, 1
        %v2365 = vrot.slane %v2343, 1
        %v2366 = vsel %vm2057, %v2364, %v2365
        %v2367 = vrot.slane %v2344, 1
        %v2368 = vrot.slane %v2345, 1
        %v2369 = vsel %vm2057, %v2367, %v2368
        %2378 = vst.msk [vmem:[#allocation4 + $0x10] sm:$0xff] %vm1147, %v2348
        %2379 = vst.msk [vmem:[#allocation4 + $0x28] sm:$0xff] %vm1147, %v2351
        %2380 = vst.msk [vmem:[#allocation4 + $0x40] sm:$0xff] %vm1147, %v2354
        %2381 = vst.msk [vmem:[#allocation4 + $0x58] sm:$0xff] %vm1147, %v2357
        %2382 = vst.msk [vmem:[#allocation4 + $0x70] sm:$0xff] %vm1147, %v2360
        %2383 = vst.msk [vmem:[#allocation4 + $0x88] sm:$0xff] %vm1147, %v2363
        %2384 = vst.msk [vmem:[#allocation4 + $0xa0] sm:$0xff] %vm1147, %v2366
        %2385 = vst.msk [vmem:[#allocation4 + $0xb8] sm:$0xff] %vm1147, %v2369
        %v2386 = vld [vmem:[#allocation4] sm:$0xff]
        %v2387 = vld [vmem:[#allocation4 + $0x8] sm:$0xff]
        %v2388 = vld [vmem:[#allocation4 + $0x10] sm:$0xff]
        %v2389 = vld [vmem:[#allocation4 + $0x18] sm:$0xff]
        %v2390 = vld [vmem:[#allocation4 + $0x20] sm:$0xff]
        %v2391 = vld [vmem:[#allocation4 + $0x28] sm:$0xff]
        %v2392 = vld [vmem:[#allocation4 + $0x30] sm:$0xff]
        %v2393 = vld [vmem:[#allocation4 + $0x38] sm:$0xff]
        %v2394 = vld [vmem:[#allocation4 + $0x40] sm:$0xff]
        %v2395 = vld [vmem:[#allocation4 + $0x48] sm:$0xff]
        %v2396 = vld [vmem:[#allocation4 + $0x50] sm:$0xff]
        %v2397 = vld [vmem:[#allocation4 + $0x58] sm:$0xff]
        %v2398 = vld [vmem:[#allocation4 + $0x60] sm:$0xff]
        %v2399 = vld [vmem:[#allocation4 + $0x68] sm:$0xff]
        %v2400 = vld [vmem:[#allocation4 + $0x70] sm:$0xff]
        %v2401 = vld [vmem:[#allocation4 + $0x78] sm:$0xff]
        %v2402 = vld [vmem:[#allocation4 + $0x80] sm:$0xff]
        %v2403 = vld [vmem:[#allocation4 + $0x88] sm:$0xff]
        %v2404 = vld [vmem:[#allocation4 + $0x90] sm:$0xff]
        %v2405 = vld [vmem:[#allocation4 + $0x98] sm:$0xff]
        %v2406 = vld [vmem:[#allocation4 + $0xa0] sm:$0xff]
        %v2407 = vld [vmem:[#allocation4 + $0xa8] sm:$0xff]
        %v2408 = vld [vmem:[#allocation4 + $0xb0] sm:$0xff]
        %v2409 = vld [vmem:[#allocation4 + $0xb8] sm:$0xff]
        %v2410 = vld [vmem:[%s1] sm:$0xf]
        %v2411 = vld [vmem:[%s1 + $0x4] sm:$0xf]
        %v2412 = vld [vmem:[%s1 + $0x8] sm:$0xf]
        %v2413 = vld [vmem:[%s1 + $0xc] sm:$0xf]
        %v2414 = vld [vmem:[%s1 + $0x10] sm:$0xf]
        %v2415 = vld [vmem:[%s1 + $0x14] sm:$0xf]
        %v2416 = vld [vmem:[%s1 + $0x18] sm:$0xf]
        %v2417 = vld [vmem:[%s1 + $0x1c] sm:$0xf]
        %v2418 = vld [vmem:[%s1 + $0x20] sm:$0xf]
        %v2419 = vld [vmem:[%s1 + $0x24] sm:$0xf]
        %v2420 = vld [vmem:[%s1 + $0x28] sm:$0xf]
        %v2421 = vld [vmem:[%s1 + $0x2c] sm:$0xf]
        %v2422 = vld [vmem:[%s1 + $0x30] sm:$0xf]
        %v2423 = vld [vmem:[%s1 + $0x34] sm:$0xf]
        %v2424 = vld [vmem:[%s1 + $0x38] sm:$0xf]
        %v2425 = vld [vmem:[%s1 + $0x3c] sm:$0xf]
        %v2426 = vld [vmem:[%s1 + $0x40] sm:$0xf]
        %v2427 = vld [vmem:[%s1 + $0x44] sm:$0xf]
        %v2428 = vld [vmem:[%s1 + $0x48] sm:$0xf]
        %v2429 = vld [vmem:[%s1 + $0x4c] sm:$0xf]
        %v2430 = vld [vmem:[%s1 + $0x50] sm:$0xf]
        %v2431 = vld [vmem:[%s1 + $0x54] sm:$0xf]
        %v2432 = vld [vmem:[%s1 + $0x58] sm:$0xf]
        %v2433 = vld [vmem:[%s1 + $0x5c] sm:$0xf]
        %v2434 = vld [vmem:[%s1 + $0x60] sm:$0xf]
        %v2435 = vld [vmem:[%s1 + $0x64] sm:$0xf]
        %v2436 = vld [vmem:[%s1 + $0x68] sm:$0xf]
        %v2437 = vld [vmem:[%s1 + $0x6c] sm:$0xf]
        %v2438 = vld [vmem:[%s1 + $0x70] sm:$0xf]
        %v2439 = vld [vmem:[%s1 + $0x74] sm:$0xf]
        %v2440 = vld [vmem:[%s1 + $0x78] sm:$0xf]
        %v2441 = vld [vmem:[%s1 + $0x7c] sm:$0xf]
        %v2442 = vld [vmem:[%s1 + $0x80] sm:$0xf]
        %v2443 = vld [vmem:[%s1 + $0x84] sm:$0xf]
        %v2444 = vld [vmem:[%s1 + $0x88] sm:$0xf]
        %v2445 = vld [vmem:[%s1 + $0x8c] sm:$0xf]
        %v2446 = vld [vmem:[%s2] sm:$0x1]
        %v2448 = vlaneseq
        %v2449 = vshrl.u32 %v2448, 7
        %v2450 = vsub.s32 0, %v2449
        %v2451 = vrot.slane %v2446, %v2450
        %v2489 = vunpack.c.l.b16 %v2410
        %v2490 = vunpack.c.l.b16 %v2411
        %v2491 = vunpack.c.l.b16 %v2412
        %v2492 = vunpack.c.l.b16 %v2413
        %v2493 = vunpack.c.l.b16 %v2414
        %v2494 = vunpack.c.l.b16 %v2415
        %v2495 = vunpack.c.l.b16 %v2416
        %v2496 = vunpack.c.l.b16 %v2417
        %v2497 = vunpack.c.l.b16 %v2418
        %v2498 = vunpack.c.l.b16 %v2419
        %v2499 = vunpack.c.l.b16 %v2420
        %v2500 = vunpack.c.l.b16 %v2421
        %v2501 = vunpack.c.l.b16 %v2422
        %v2502 = vunpack.c.l.b16 %v2423
        %v2503 = vunpack.c.l.b16 %v2424
        %v2504 = vunpack.c.l.b16 %v2425
        %v2505 = vunpack.c.l.b16 %v2426
        %v2506 = vunpack.c.l.b16 %v2427
        %v2507 = vunpack.c.l.b16 %v2428
        %v2508 = vunpack.c.l.b16 %v2429
        %v2509 = vunpack.c.l.b16 %v2430
        %v2510 = vunpack.c.l.b16 %v2431
        %v2511 = vunpack.c.l.b16 %v2432
        %v2512 = vunpack.c.l.b16 %v2433
        %v2513 = vunpack.c.l.b16 %v2434
        %v2514 = vunpack.c.l.b16 %v2435
        %v2515 = vunpack.c.l.b16 %v2436
        %v2516 = vunpack.c.l.b16 %v2437
        %v2517 = vunpack.c.l.b16 %v2438
        %v2518 = vunpack.c.l.b16 %v2439
        %v2519 = vunpack.c.l.b16 %v2440
        %v2520 = vunpack.c.l.b16 %v2441
        %v2521 = vunpack.c.l.b16 %v2442
        %v2522 = vunpack.c.l.b16 %v2443
        %v2523 = vunpack.c.l.b16 %v2444
        %v2524 = vunpack.c.l.b16 %v2445
        %v2525 = vpack.c.b16 %v2490, %v2489
        %v2526 = vpack.c.b16 %v2492, %v2491
        %v2527 = vpack.c.b16 %v2494, %v2493
        %v2528 = vpack.c.b16 %v2496, %v2495
        %v2529 = vpack.c.b16 %v2498, %v2497
        %v2530 = vpack.c.b16 %v2500, %v2499
        %v2531 = vpack.c.b16 %v2502, %v2501
        %v2532 = vpack.c.b16 %v2504, %v2503
        %v2533 = vpack.c.b16 %v2506, %v2505
        %v2534 = vpack.c.b16 %v2508, %v2507
        %v2535 = vpack.c.b16 %v2510, %v2509
        %v2536 = vpack.c.b16 %v2512, %v2511
        %v2537 = vpack.c.b16 %v2514, %v2513
        %v2538 = vpack.c.b16 %v2516, %v2515
        %v2539 = vpack.c.b16 %v2518, %v2517
        %v2540 = vpack.c.b16 %v2520, %v2519
        %v2541 = vpack.c.b16 %v2522, %v2521
        %v2542 = vpack.c.b16 %v2524, %v2523
        %v2562 = vsel %vm1147, %v2388, 0
        %v2565 = vsel %vm1147, %v2391, 0
        %v2568 = vsel %vm1147, %v2394, 0
        %v2571 = vsel %vm1147, %v2397, 0
        %v2574 = vsel %vm1147, %v2400, 0
        %v2577 = vsel %vm1147, %v2403, 0
        %v2580 = vsel %vm1147, %v2406, 0
        %v2583 = vsel %vm1147, %v2409, 0
        %2585 = vmatprep.subr.bf16.mxu0 0
        %2586 = vmatpush1.bf16.msra.mxu0 %v2525
        %2587 = vmatprep.subr.bf16.mxu0 0
        %2588 = vmatpush1.bf16.msra.mxu0 %v2526
        %2589 = vmatprep.subr.bf16.mxu0 0
        %2590 = vmatpush1.bf16.msra.mxu0 %v2527
        %2591 = vmatprep.subr.bf16.mxu0 0
        %2592 = vmatpush1.bf16.msra.mxu0 %v2528
        %2593 = vmatprep.subr.bf16.mxu0 0
        %2594 = vmatpush1.bf16.msra.mxu0 %v2529
        %2595 = vmatprep.subr.bf16.mxu0 0
        %2596 = vmatpush1.bf16.msra.mxu0 %v2530
        %2597 = vmatprep.subr.bf16.mxu0 0
        %2598 = vmatpush1.bf16.msra.mxu0 %v2531
        %2599 = vmatprep.subr.bf16.mxu0 0
        %2600 = vmatpush1.bf16.msra.mxu0 %v2532
        %2601 = vmatprep.subr.bf16.mxu0 0
        %2602 = vmatpush1.bf16.msra.mxu0 %v2533
        %2603 = vmatprep.subr.bf16.mxu0 0
        %2604 = vmatpush1.bf16.msra.mxu0 %v2534
        %2605 = vmatprep.subr.bf16.mxu0 0
        %2606 = vmatpush1.bf16.msra.mxu0 %v2535
        %2607 = vmatprep.subr.bf16.mxu0 0
        %2608 = vmatpush1.bf16.msra.mxu0 %v2536
        %2609 = vmatprep.subr.bf16.mxu0 0
        %2610 = vmatpush1.bf16.msra.mxu0 %v2537
        %2611 = vmatprep.subr.bf16.mxu0 0
        %2612 = vmatpush1.bf16.msra.mxu0 %v2538
        %2613 = vmatprep.subr.bf16.mxu0 0
        %2614 = vmatpush1.bf16.msra.mxu0 %v2539
        %2615 = vmatprep.subr.bf16.mxu0 0
        %2616 = vmatpush1.bf16.msra.mxu0 %v2540
        %2617 = vmatprep.mubr.bf16.mxu0 %v2387
        %2618 = vmatmul.mubr.bf16.gmra.mrb[0].mxu0 %v2386
        %v2619 = vpop.f32.mrb[0].mxu0
        %v2620 = vadd.f32 %v2451, %v2619
        %v2621 = vpop.f32.mrb[0].mxu0
        %v2622 = vpop.f32.mrb[0].mxu0
        %v2623 = vadd.f32 %v2451, %v2622
        %v2624 = vpop.f32.mrb[0].mxu0
        %2625 = vmatprep.mubr.bf16.mxu0 %v2390
        %2626 = vmatmul.mubr.bf16.gmra.mrb[0].mxu0 %v2389
        %v2627 = vpop.f32.mrb[0].mxu0
        %v2628 = vadd.f32 %v2451, %v2627
        %v2629 = vpop.f32.mrb[0].mxu0
        %v2630 = vpop.f32.mrb[0].mxu0
        %v2631 = vadd.f32 %v2451, %v2630
        %v2632 = vpop.f32.mrb[0].mxu0
        %2633 = vmatprep.mubr.bf16.mxu0 %v2393
        %2634 = vmatmul.mubr.bf16.gmra.mrb[0].mxu0 %v2392
        %v2635 = vpop.f32.mrb[0].mxu0
        %v2636 = vadd.f32 %v2451, %v2635
        %v2637 = vpop.f32.mrb[0].mxu0
        %v2638 = vpop.f32.mrb[0].mxu0
        %v2639 = vadd.f32 %v2451, %v2638
        %v2640 = vpop.f32.mrb[0].mxu0
        %2641 = vmatprep.mubr.bf16.mxu0 %v2396
        %2642 = vmatmul.mubr.bf16.gmra.mrb[0].mxu0 %v2395
        %v2643 = vpop.f32.mrb[0].mxu0
        %v2644 = vadd.f32 %v2451, %v2643
        %v2645 = vpop.f32.mrb[0].mxu0
        %v2646 = vpop.f32.mrb[0].mxu0
        %v2647 = vadd.f32 %v2451, %v2646
        %v2648 = vpop.f32.mrb[0].mxu0
        %2649 = vmatprep.mubr.bf16.mxu0 %v2399
        %2650 = vmatmul.mubr.bf16.gmra.mrb[0].mxu0 %v2398
        %v2651 = vpop.f32.mrb[0].mxu0
        %v2652 = vadd.f32 %v2451, %v2651
        %v2653 = vpop.f32.mrb[0].mxu0
        %v2654 = vpop.f32.mrb[0].mxu0
        %v2655 = vadd.f32 %v2451, %v2654
        %v2656 = vpop.f32.mrb[0].mxu0
        %2657 = vmatprep.mubr.bf16.mxu0 %v2402
        %2658 = vmatmul.mubr.bf16.gmra.mrb[0].mxu0 %v2401
        %v2659 = vpop.f32.mrb[0].mxu0
        %v2660 = vadd.f32 %v2451, %v2659
        %v2661 = vpop.f32.mrb[0].mxu0
        %v2662 = vpop.f32.mrb[0].mxu0
        %v2663 = vadd.f32 %v2451, %v2662
        %v2664 = vpop.f32.mrb[0].mxu0
        %2665 = vmatprep.mubr.bf16.mxu0 %v2405
        %2666 = vmatmul.mubr.bf16.gmra.mrb[0].mxu0 %v2404
        %v2667 = vpop.f32.mrb[0].mxu0
        %v2668 = vadd.f32 %v2451, %v2667
        %v2669 = vpop.f32.mrb[0].mxu0
        %v2670 = vpop.f32.mrb[0].mxu0
        %v2671 = vadd.f32 %v2451, %v2670
        %v2672 = vpop.f32.mrb[0].mxu0
        %2673 = vmatprep.mubr.bf16.mxu0 %v2408
        %2674 = vmatmul.mubr.bf16.gmra.mrb[0].mxu0 %v2407
        %v2675 = vpop.f32.mrb[0].mxu0
        %v2676 = vadd.f32 %v2451, %v2675
        %v2677 = vpop.f32.mrb[0].mxu0
        %v2678 = vpop.f32.mrb[0].mxu0
        %v2679 = vadd.f32 %v2451, %v2678
        %v2680 = vpop.f32.mrb[0].mxu0
        %2681 = vdwg.mxu0
        %2682 = vmatprep.subr.bf16.mxu0 0
        %2683 = vmatpush1.bf16.msra.mxu0 %v2541
        %2684 = vmatprep.subr.bf16.mxu0 0
        %2685 = vmatpush1.bf16.msra.mxu0 %v2542
        %2686 = vmatprep.subr.bf16.mxu0 0
        %2687 = vmatpush1.bf16.msra.mxu0 0
        %2688 = vmatprep.subr.bf16.mxu0 0
        %2689 = vmatpush1.bf16.msra.mxu0 0
        %2690 = vmatprep.subr.bf16.mxu0 0
        %2691 = vmatpush1.bf16.msra.mxu0 0
        %2692 = vmatprep.subr.bf16.mxu0 0
        %2693 = vmatpush1.bf16.msra.mxu0 0
        %2694 = vmatprep.subr.bf16.mxu0 0
        %2695 = vmatpush1.bf16.msra.mxu0 0
        %2696 = vmatprep.subr.bf16.mxu0 0
        %2697 = vmatpush1.bf16.msra.mxu0 0
        %2698 = vmatprep.subr.bf16.mxu0 0
        %2699 = vmatpush1.bf16.msra.mxu0 0
        %2700 = vmatprep.subr.bf16.mxu0 0
        %2701 = vmatpush1.bf16.msra.mxu0 0
        %2702 = vmatprep.subr.bf16.mxu0 0
        %2703 = vmatpush1.bf16.msra.mxu0 0
        %2704 = vmatprep.subr.bf16.mxu0 0
        %2705 = vmatpush1.bf16.msra.mxu0 0
        %2706 = vmatprep.subr.bf16.mxu0 0
        %2707 = vmatpush1.bf16.msra.mxu0 0
        %2708 = vmatprep.subr.bf16.mxu0 0
        %2709 = vmatpush1.bf16.msra.mxu0 0
        %2710 = vmatprep.subr.bf16.mxu0 0
        %2711 = vmatpush1.bf16.msra.mxu0 0
        %2712 = vmatprep.subr.bf16.mxu0 0
        %2713 = vmatpush1.bf16.msra.mxu0 0
        %2714 = vmatprep.mubr.bf16.mxu0 0
        %2715 = vmatmul.mubr.bf16.gmra.mrb[0].mxu0 %v2562
        %v2716 = vpop.f32.mrb[0].mxu0
        %v2717 = vadd.f32 %v2620, %v2716
        %v2718 = vpop.f32.mrb[0].mxu0
        %v2719 = vpop.f32.mrb[0].mxu0
        %v2720 = vadd.f32 %v2623, %v2719
        %v2721 = vpop.f32.mrb[0].mxu0
        %2722 = vmatprep.mubr.bf16.mxu0 0
        %2723 = vmatmul.mubr.bf16.gmra.mrb[0].mxu0 %v2565
        %v2724 = vpop.f32.mrb[0].mxu0
        %v2725 = vadd.f32 %v2628, %v2724
        %v2726 = vpop.f32.mrb[0].mxu0
        %v2727 = vpop.f32.mrb[0].mxu0
        %v2728 = vadd.f32 %v2631, %v2727
        %v2729 = vpop.f32.mrb[0].mxu0
        %2730 = vmatprep.mubr.bf16.mxu0 0
        %2731 = vmatmul.mubr.bf16.gmra.mrb[0].mxu0 %v2568
        %v2732 = vpop.f32.mrb[0].mxu0
        %v2733 = vadd.f32 %v2636, %v2732
        %v2734 = vpop.f32.mrb[0].mxu0
        %v2735 = vpop.f32.mrb[0].mxu0
        %v2736 = vadd.f32 %v2639, %v2735
        %v2737 = vpop.f32.mrb[0].mxu0
        %2738 = vmatprep.mubr.bf16.mxu0 0
        %2739 = vmatmul.mubr.bf16.gmra.mrb[0].mxu0 %v2571
        %v2740 = vpop.f32.mrb[0].mxu0
        %v2741 = vadd.f32 %v2644, %v2740
        %v2742 = vpop.f32.mrb[0].mxu0
        %v2743 = vpop.f32.mrb[0].mxu0
        %v2744 = vadd.f32 %v2647, %v2743
        %v2745 = vpop.f32.mrb[0].mxu0
        %2746 = vmatprep.mubr.bf16.mxu0 0
        %2747 = vmatmul.mubr.bf16.gmra.mrb[0].mxu0 %v2574
        %v2748 = vpop.f32.mrb[0].mxu0
        %v2749 = vadd.f32 %v2652, %v2748
        %v2750 = vpop.f32.mrb[0].mxu0
        %v2751 = vpop.f32.mrb[0].mxu0
        %v2752 = vadd.f32 %v2655, %v2751
        %v2753 = vpop.f32.mrb[0].mxu0
        %2754 = vmatprep.mubr.bf16.mxu0 0
        %2755 = vmatmul.mubr.bf16.gmra.mrb[0].mxu0 %v2577
        %v2756 = vpop.f32.mrb[0].mxu0
        %v2757 = vadd.f32 %v2660, %v2756
        %v2758 = vpop.f32.mrb[0].mxu0
        %v2759 = vpop.f32.mrb[0].mxu0
        %v2760 = vadd.f32 %v2663, %v2759
        %v2761 = vpop.f32.mrb[0].mxu0
        %2762 = vmatprep.mubr.bf16.mxu0 0
        %2763 = vmatmul.mubr.bf16.gmra.mrb[0].mxu0 %v2580
        %v2764 = vpop.f32.mrb[0].mxu0
        %v2765 = vadd.f32 %v2668, %v2764
        %v2766 = vpop.f32.mrb[0].mxu0
        %v2767 = vpop.f32.mrb[0].mxu0
        %v2768 = vadd.f32 %v2671, %v2767
        %v2769 = vpop.f32.mrb[0].mxu0
        %2770 = vmatprep.mubr.bf16.mxu0 0
        %2771 = vmatmul.mubr.bf16.gmra.mrb[0].mxu0 %v2583
        %v2772 = vpop.f32.mrb[0].mxu0
        %v2773 = vadd.f32 %v2676, %v2772
        %v2774 = vpop.f32.mrb[0].mxu0
        %v2775 = vpop.f32.mrb[0].mxu0
        %v2776 = vadd.f32 %v2679, %v2775
        %v2777 = vpop.f32.mrb[0].mxu0
        %2778 = vdwg.mxu0
        %v2779 = vmax.f32 %v2717, 0.0
        %v2780 = vmax.f32 %v2720, 0.0
        %v2781 = vmax.f32 %v2725, 0.0
        %v2782 = vmax.f32 %v2728, 0.0
        %v2783 = vmax.f32 %v2733, 0.0
        %v2784 = vmax.f32 %v2736, 0.0
        %v2785 = vmax.f32 %v2741, 0.0
        %v2786 = vmax.f32 %v2744, 0.0
        %v2787 = vmax.f32 %v2749, 0.0
        %v2788 = vmax.f32 %v2752, 0.0
        %v2789 = vmax.f32 %v2757, 0.0
        %v2790 = vmax.f32 %v2760, 0.0
        %v2791 = vmax.f32 %v2765, 0.0
        %v2792 = vmax.f32 %v2768, 0.0
        %v2793 = vmax.f32 %v2773, 0.0
        %v2794 = vmax.f32 %v2776, 0.0
        %v2795 = vpack.c.bf16 %v2780, %v2779
        %v2796 = vpack.c.bf16 %v2782, %v2781
        %v2797 = vpack.c.bf16 %v2784, %v2783
        %v2798 = vpack.c.bf16 %v2786, %v2785
        %v2799 = vpack.c.bf16 %v2788, %v2787
        %v2800 = vpack.c.bf16 %v2790, %v2789
        %v2801 = vpack.c.bf16 %v2792, %v2791
        %v2802 = vpack.c.bf16 %v2794, %v2793
        %v2811 = vunpack.c.l.b16 %v2795
        %v2812 = vunpack.c.h.b16 %v2795
        %v2813 = vunpack.c.l.b16 %v2796
        %v2814 = vunpack.c.h.b16 %v2796
        %v2815 = vunpack.c.l.b16 %v2797
        %v2816 = vunpack.c.h.b16 %v2797
        %v2817 = vunpack.c.l.b16 %v2798
        %v2818 = vunpack.c.h.b16 %v2798
        %v2819 = vunpack.c.l.b16 %v2799
        %v2820 = vunpack.c.h.b16 %v2799
        %v2821 = vunpack.c.l.b16 %v2800
        %v2822 = vunpack.c.h.b16 %v2800
        %v2823 = vunpack.c.l.b16 %v2801
        %v2824 = vunpack.c.h.b16 %v2801
        %v2825 = vunpack.c.l.b16 %v2802
        %v2826 = vunpack.c.h.b16 %v2802
        %v2827 = vpack.c.b16 %v2811, %v2811
        %v2828 = vpack.c.b16 %v2812, %v2812
        %v2829 = vpack.c.b16 %v2813, %v2813
        %v2830 = vpack.c.b16 %v2814, %v2814
        %v2831 = vpack.c.b16 %v2815, %v2815
        %v2832 = vpack.c.b16 %v2816, %v2816
        %v2833 = vpack.c.b16 %v2817, %v2817
        %v2834 = vpack.c.b16 %v2818, %v2818
        %v2835 = vpack.c.b16 %v2819, %v2819
        %v2836 = vpack.c.b16 %v2820, %v2820
        %v2837 = vpack.c.b16 %v2821, %v2821
        %v2838 = vpack.c.b16 %v2822, %v2822
        %v2839 = vpack.c.b16 %v2823, %v2823
        %v2840 = vpack.c.b16 %v2824, %v2824
        %v2841 = vpack.c.b16 %v2825, %v2825
        %v2842 = vpack.c.b16 %v2826, %v2826
        %v2844 = vshrl.u32 %v2827, 16
        %v2846 = vrot.slane %v2844, 7
        %v2847 = vshll.u32 %v2827, 16
        %v2849 = vor.u32 %v2846, %v2847
        %v2850 = vrot.slane %v2846, 4
        %v2852 = vshrl.u32 %v2828, 16
        %v2854 = vrot.slane %v2852, 7
        %v2855 = vshll.u32 %v2828, 16
        %v2857 = vor.u32 %v2854, %v2855
        %v2858 = vsel %vm574, %v2850, %v2857
        %v2859 = vrot.slane %v2854, 4
        %v2861 = vshrl.u32 %v2829, 16
        %v2863 = vrot.slane %v2861, 7
        %v2864 = vshll.u32 %v2829, 16
        %v2866 = vor.u32 %v2863, %v2864
        %v2867 = vrot.slane %v2863, 4
        %v2869 = vshrl.u32 %v2830, 16
        %v2871 = vrot.slane %v2869, 7
        %v2872 = vshll.u32 %v2830, 16
        %v2874 = vor.u32 %v2871, %v2872
        %v2875 = vsel %vm574, %v2867, %v2874
        %v2876 = vrot.slane %v2871, 4
        %v2878 = vshrl.u32 %v2831, 16
        %v2880 = vrot.slane %v2878, 7
        %v2881 = vshll.u32 %v2831, 16
        %v2883 = vor.u32 %v2880, %v2881
        %v2884 = vrot.slane %v2880, 4
        %v2886 = vshrl.u32 %v2832, 16
        %v2888 = vrot.slane %v2886, 7
        %v2889 = vshll.u32 %v2832, 16
        %v2891 = vor.u32 %v2888, %v2889
        %v2892 = vsel %vm574, %v2884, %v2891
        %v2893 = vrot.slane %v2888, 4
        %v2895 = vshrl.u32 %v2833, 16
        %v2897 = vrot.slane %v2895, 7
        %v2898 = vshll.u32 %v2833, 16
        %v2900 = vor.u32 %v2897, %v2898
        %v2901 = vrot.slane %v2897, 4
        %v2903 = vshrl.u32 %v2834, 16
        %v2905 = vrot.slane %v2903, 7
        %v2906 = vshll.u32 %v2834, 16
        %v2908 = vor.u32 %v2905, %v2906
        %v2909 = vsel %vm574, %v2901, %v2908
        %v2910 = vrot.slane %v2905, 4
        %v2912 = vshrl.u32 %v2835, 16
        %v2914 = vrot.slane %v2912, 7
        %v2915 = vshll.u32 %v2835, 16
        %v2917 = vor.u32 %v2914, %v2915
        %v2918 = vrot.slane %v2914, 4
        %v2920 = vshrl.u32 %v2836, 16
        %v2922 = vrot.slane %v2920, 7
        %v2923 = vshll.u32 %v2836, 16
        %v2925 = vor.u32 %v2922, %v2923
        %v2926 = vsel %vm574, %v2918, %v2925
        %v2927 = vrot.slane %v2922, 4
        %v2929 = vshrl.u32 %v2837, 16
        %v2931 = vrot.slane %v2929, 7
        %v2932 = vshll.u32 %v2837, 16
        %v2934 = vor.u32 %v2931, %v2932
        %v2935 = vrot.slane %v2931, 4
        %v2937 = vshrl.u32 %v2838, 16
        %v2939 = vrot.slane %v2937, 7
        %v2940 = vshll.u32 %v2838, 16
        %v2942 = vor.u32 %v2939, %v2940
        %v2943 = vsel %vm574, %v2935, %v2942
        %v2944 = vrot.slane %v2939, 4
        %v2946 = vshrl.u32 %v2839, 16
        %v2948 = vrot.slane %v2946, 7
        %v2949 = vshll.u32 %v2839, 16
        %v2951 = vor.u32 %v2948, %v2949
        %v2952 = vrot.slane %v2948, 4
        %v2954 = vshrl.u32 %v2840, 16
        %v2956 = vrot.slane %v2954, 7
        %v2957 = vshll.u32 %v2840, 16
        %v2959 = vor.u32 %v2956, %v2957
        %v2960 = vsel %vm574, %v2952, %v2959
        %v2961 = vrot.slane %v2956, 4
        %v2963 = vshrl.u32 %v2841, 16
        %v2965 = vrot.slane %v2963, 7
        %v2966 = vshll.u32 %v2841, 16
        %v2968 = vor.u32 %v2965, %v2966
        %v2969 = vrot.slane %v2965, 4
        %v2971 = vshrl.u32 %v2842, 16
        %v2973 = vrot.slane %v2971, 7
        %v2974 = vshll.u32 %v2842, 16
        %v2976 = vor.u32 %v2973, %v2974
        %v2977 = vsel %vm574, %v2969, %v2976
        %v2978 = vrot.slane %v2973, 4
        %s3003 = scalar_lea.vmem [#allocation3], 12
        %v3004 = vld [vmem:[%s3003] sm:$0xf]
        %v3005 = vsel %vm897, %v2849, %v3004
        %3006 = vst [vmem:[%s3003] sm:$0xf] %v3005
        %3007 = vst.msk [vmem:[%s3003 + $0x4] sm:$0xf] %vm901, %v2858
        %v3008 = vld [vmem:[%s3003 + $0x8] sm:$0x1]
        %v3009 = vsel %vm226, %v2859, %v3008
        %3010 = vst [vmem:[%s3003 + $0x8] sm:$0x1] %v3009
        %v3011 = vld [vmem:[%s3003 + $0xc] sm:$0xf]
        %v3012 = vsel %vm897, %v2866, %v3011
        %3013 = vst [vmem:[%s3003 + $0xc] sm:$0xf] %v3012
        %3014 = vst.msk [vmem:[%s3003 + $0x10] sm:$0xf] %vm901, %v2875
        %v3015 = vld [vmem:[%s3003 + $0x14] sm:$0x1]
        %v3016 = vsel %vm226, %v2876, %v3015
        %3017 = vst [vmem:[%s3003 + $0x14] sm:$0x1] %v3016
        %v3018 = vld [vmem:[%s3003 + $0x18] sm:$0xf]
        %v3019 = vsel %vm897, %v2883, %v3018
        %3020 = vst [vmem:[%s3003 + $0x18] sm:$0xf] %v3019
        %3021 = vst.msk [vmem:[%s3003 + $0x1c] sm:$0xf] %vm901, %v2892
        %v3022 = vld [vmem:[%s3003 + $0x20] sm:$0x1]
        %v3023 = vsel %vm226, %v2893, %v3022
        %3024 = vst [vmem:[%s3003 + $0x20] sm:$0x1] %v3023
        %v3025 = vld [vmem:[%s3003 + $0x24] sm:$0xf]
        %v3026 = vsel %vm897, %v2900, %v3025
        %3027 = vst [vmem:[%s3003 + $0x24] sm:$0xf] %v3026
        %3028 = vst.msk [vmem:[%s3003 + $0x28] sm:$0xf] %vm901, %v2909
        %v3029 = vld [vmem:[%s3003 + $0x2c] sm:$0x1]
        %v3030 = vsel %vm226, %v2910, %v3029
        %3031 = vst [vmem:[%s3003 + $0x2c] sm:$0x1] %v3030
        %v3032 = vld [vmem:[%s3003 + $0x30] sm:$0xf]
        %v3033 = vsel %vm897, %v2917, %v3032
        %3034 = vst [vmem:[%s3003 + $0x30] sm:$0xf] %v3033
        %3035 = vst.msk [vmem:[%s3003 + $0x34] sm:$0xf] %vm901, %v2926
        %v3036 = vld [vmem:[%s3003 + $0x38] sm:$0x1]
        %v3037 = vsel %vm226, %v2927, %v3036
        %3038 = vst [vmem:[%s3003 + $0x38] sm:$0x1] %v3037
        %v3039 = vld [vmem:[%s3003 + $0x3c] sm:$0xf]
        %v3040 = vsel %vm897, %v2934, %v3039
        %3041 = vst [vmem:[%s3003 + $0x3c] sm:$0xf] %v3040
        %3042 = vst.msk [vmem:[%s3003 + $0x40] sm:$0xf] %vm901, %v2943
        %v3043 = vld [vmem:[%s3003 + $0x44] sm:$0x1]
        %v3044 = vsel %vm226, %v2944, %v3043
        %3045 = vst [vmem:[%s3003 + $0x44] sm:$0x1] %v3044
        %v3046 = vld [vmem:[%s3003 + $0x48] sm:$0xf]
        %v3047 = vsel %vm897, %v2951, %v3046
        %3048 = vst [vmem:[%s3003 + $0x48] sm:$0xf] %v3047
        %3049 = vst.msk [vmem:[%s3003 + $0x4c] sm:$0xf] %vm901, %v2960
        %v3050 = vld [vmem:[%s3003 + $0x50] sm:$0x1]
        %v3051 = vsel %vm226, %v2961, %v3050
        %3052 = vst [vmem:[%s3003 + $0x50] sm:$0x1] %v3051
        %v3053 = vld [vmem:[%s3003 + $0x54] sm:$0xf]
        %v3054 = vsel %vm897, %v2968, %v3053
        %3055 = vst [vmem:[%s3003 + $0x54] sm:$0xf] %v3054
        %3056 = vst.msk [vmem:[%s3003 + $0x58] sm:$0xf] %vm901, %v2977
        %v3057 = vld [vmem:[%s3003 + $0x5c] sm:$0x1]
        %v3058 = vsel %vm226, %v2978, %v3057
        %3059 = vst [vmem:[%s3003 + $0x5c] sm:$0x1] %v3058
        %s3060 = scalar_lea.vmem [#allocation2], 96
        %v3061 = vld [vmem:[%s3060] sm:$0xf]
        %v3062 = vld [vmem:[%s3060 + $0x4] sm:$0xf]
        %v3063 = vld [vmem:[%s3060 + $0xc] sm:$0xf]
        %v3064 = vld [vmem:[%s3060 + $0x10] sm:$0xf]
        %v3065 = vld [vmem:[%s3060 + $0x18] sm:$0xf]
        %v3066 = vld [vmem:[%s3060 + $0x1c] sm:$0xf]
        %v3067 = vld [vmem:[%s3060 + $0x24] sm:$0xf]
        %v3068 = vld [vmem:[%s3060 + $0x28] sm:$0xf]
        %v3069 = vld [vmem:[%s3060 + $0x30] sm:$0xf]
        %v3070 = vld [vmem:[%s3060 + $0x34] sm:$0xf]
        %v3071 = vld [vmem:[%s3060 + $0x3c] sm:$0xf]
        %v3072 = vld [vmem:[%s3060 + $0x40] sm:$0xf]
        %v3073 = vld [vmem:[%s3060 + $0x48] sm:$0xf]
        %v3074 = vld [vmem:[%s3060 + $0x4c] sm:$0xf]
        %v3075 = vld [vmem:[%s3060 + $0x54] sm:$0xf]
        %v3076 = vld [vmem:[%s3060 + $0x58] sm:$0xf]
        %v3093 = vunpack.c.l.b16 %v3061
        %v3094 = vunpack.c.l.b16 %v3062
        %v3095 = vunpack.c.l.b16 %v3063
        %v3096 = vunpack.c.l.b16 %v3064
        %v3097 = vunpack.c.l.b16 %v3065
        %v3098 = vunpack.c.l.b16 %v3066
        %v3099 = vunpack.c.l.b16 %v3067
        %v3100 = vunpack.c.l.b16 %v3068
        %v3101 = vunpack.c.l.b16 %v3069
        %v3102 = vunpack.c.l.b16 %v3070
        %v3103 = vunpack.c.l.b16 %v3071
        %v3104 = vunpack.c.l.b16 %v3072
        %v3105 = vunpack.c.l.b16 %v3073
        %v3106 = vunpack.c.l.b16 %v3074
        %v3107 = vunpack.c.l.b16 %v3075
        %v3108 = vunpack.c.l.b16 %v3076
        %v3109 = vpack.c.b16 %v3094, %v3093
        %v3110 = vpack.c.b16 %v3096, %v3095
        %v3111 = vpack.c.b16 %v3098, %v3097
        %v3112 = vpack.c.b16 %v3100, %v3099
        %v3113 = vpack.c.b16 %v3102, %v3101
        %v3114 = vpack.c.b16 %v3104, %v3103
        %v3115 = vpack.c.b16 %v3106, %v3105
        %v3116 = vpack.c.b16 %v3108, %v3107
        %s3125 = scalar_lea.vmem [#allocation4], 192
        %3126 = vst.msk [vmem:[%s3125] sm:$0xff] %vm1147, %v3109
        %3127 = vst.msk [vmem:[%s3125 + $0x18] sm:$0xff] %vm1147, %v3110
        %3128 = vst.msk [vmem:[%s3125 + $0x30] sm:$0xff] %vm1147, %v3111
        %3129 = vst.msk [vmem:[%s3125 + $0x48] sm:$0xff] %vm1147, %v3112
        %3130 = vst.msk [vmem:[%s3125 + $0x60] sm:$0xff] %vm1147, %v3113
        %3131 = vst.msk [vmem:[%s3125 + $0x78] sm:$0xff] %vm1147, %v3114
        %3132 = vst.msk [vmem:[%s3125 + $0x90] sm:$0xff] %vm1147, %v3115
        %3133 = vst.msk [vmem:[%s3125 + $0xa8] sm:$0xff] %vm1147, %v3116
        %s3134 = scalar_lea.vmem [#allocation2], 108
        %v3135 = vld [vmem:[%s3134] sm:$0xf]
        %v3136 = vld [vmem:[%s3134 + $0x4] sm:$0xf]
        %v3137 = vld [vmem:[%s3134 + $0xc] sm:$0xf]
        %v3138 = vld [vmem:[%s3134 + $0x10] sm:$0xf]
        %v3139 = vld [vmem:[%s3134 + $0x18] sm:$0xf]
        %v3140 = vld [vmem:[%s3134 + $0x1c] sm:$0xf]
        %v3141 = vld [vmem:[%s3134 + $0x24] sm:$0xf]
        %v3142 = vld [vmem:[%s3134 + $0x28] sm:$0xf]
        %v3143 = vld [vmem:[%s3134 + $0x30] sm:$0xf]
        %v3144 = vld [vmem:[%s3134 + $0x34] sm:$0xf]
        %v3145 = vld [vmem:[%s3134 + $0x3c] sm:$0xf]
        %v3146 = vld [vmem:[%s3134 + $0x40] sm:$0xf]
        %v3147 = vld [vmem:[%s3134 + $0x48] sm:$0xf]
        %v3148 = vld [vmem:[%s3134 + $0x4c] sm:$0xf]
        %v3149 = vld [vmem:[%s3134 + $0x54] sm:$0xf]
        %v3150 = vld [vmem:[%s3134 + $0x58] sm:$0xf]
        %v3167 = vunpack.c.l.b16 %v3135
        %v3168 = vunpack.c.l.b16 %v3136
        %v3169 = vunpack.c.l.b16 %v3137
        %v3170 = vunpack.c.l.b16 %v3138
        %v3171 = vunpack.c.l.b16 %v3139
        %v3172 = vunpack.c.l.b16 %v3140
        %v3173 = vunpack.c.l.b16 %v3141
        %v3174 = vunpack.c.l.b16 %v3142
        %v3175 = vunpack.c.l.b16 %v3143
        %v3176 = vunpack.c.l.b16 %v3144
        %v3177 = vunpack.c.l.b16 %v3145
        %v3178 = vunpack.c.l.b16 %v3146
        %v3179 = vunpack.c.l.b16 %v3147
        %v3180 = vunpack.c.l.b16 %v3148
        %v3181 = vunpack.c.l.b16 %v3149
        %v3182 = vunpack.c.l.b16 %v3150
        %v3183 = vpack.c.b16 %v3168, %v3167
        %v3184 = vpack.c.b16 %v3170, %v3169
        %v3185 = vpack.c.b16 %v3172, %v3171
        %v3186 = vpack.c.b16 %v3174, %v3173
        %v3187 = vpack.c.b16 %v3176, %v3175
        %v3188 = vpack.c.b16 %v3178, %v3177
        %v3189 = vpack.c.b16 %v3180, %v3179
        %v3190 = vpack.c.b16 %v3182, %v3181
        %3191 = vrot.lane.b32.xlu0 %v3183, 32
        %v3192 = vpop.permute.xlu0 %3191
        %3193 = vrot.lane.b32.xlu0 %v3184, 32
        %v3194 = vpop.permute.xlu0 %3193
        %3195 = vrot.lane.b32.xlu0 %v3185, 32
        %v3196 = vpop.permute.xlu0 %3195
        %3197 = vrot.lane.b32.xlu0 %v3186, 32
        %v3198 = vpop.permute.xlu0 %3197
        %3199 = vrot.lane.b32.xlu0 %v3187, 32
        %v3200 = vpop.permute.xlu0 %3199
        %3201 = vrot.lane.b32.xlu0 %v3188, 32
        %v3202 = vpop.permute.xlu0 %3201
        %3203 = vrot.lane.b32.xlu0 %v3189, 32
        %v3204 = vpop.permute.xlu0 %3203
        %3205 = vrot.lane.b32.xlu0 %v3190, 32
        %v3206 = vpop.permute.xlu0 %3205
        %3215 = vst.msk [vmem:[%s3125] sm:$0xff] %vm1236, %v3192
        %3216 = vst.msk [vmem:[%s3125 + $0x18] sm:$0xff] %vm1236, %v3194
        %3217 = vst.msk [vmem:[%s3125 + $0x30] sm:$0xff] %vm1236, %v3196
        %3218 = vst.msk [vmem:[%s3125 + $0x48] sm:$0xff] %vm1236, %v3198
        %3219 = vst.msk [vmem:[%s3125 + $0x60] sm:$0xff] %vm1236, %v3200
        %3220 = vst.msk [vmem:[%s3125 + $0x78] sm:$0xff] %vm1236, %v3202
        %3221 = vst.msk [vmem:[%s3125 + $0x90] sm:$0xff] %vm1236, %v3204
        %3222 = vst.msk [vmem:[%s3125 + $0xa8] sm:$0xff] %vm1236, %v3206
        %s3223 = scalar_lea.vmem [#allocation2], 120
        %v3224 = vld [vmem:[%s3223] sm:$0xf]
        %v3225 = vld [vmem:[%s3223 + $0x4] sm:$0xf]
        %v3226 = vld [vmem:[%s3223 + $0xc] sm:$0xf]
        %v3227 = vld [vmem:[%s3223 + $0x10] sm:$0xf]
        %v3228 = vld [vmem:[%s3223 + $0x18] sm:$0xf]
        %v3229 = vld [vmem:[%s3223 + $0x1c] sm:$0xf]
        %v3230 = vld [vmem:[%s3223 + $0x24] sm:$0xf]
        %v3231 = vld [vmem:[%s3223 + $0x28] sm:$0xf]
        %v3232 = vld [vmem:[%s3223 + $0x30] sm:$0xf]
        %v3233 = vld [vmem:[%s3223 + $0x34] sm:$0xf]
        %v3234 = vld [vmem:[%s3223 + $0x3c] sm:$0xf]
        %v3235 = vld [vmem:[%s3223 + $0x40] sm:$0xf]
        %v3236 = vld [vmem:[%s3223 + $0x48] sm:$0xf]
        %v3237 = vld [vmem:[%s3223 + $0x4c] sm:$0xf]
        %v3238 = vld [vmem:[%s3223 + $0x54] sm:$0xf]
        %v3239 = vld [vmem:[%s3223 + $0x58] sm:$0xf]
        %v3256 = vunpack.c.l.b16 %v3224
        %v3257 = vunpack.c.l.b16 %v3225
        %v3258 = vunpack.c.l.b16 %v3226
        %v3259 = vunpack.c.l.b16 %v3227
        %v3260 = vunpack.c.l.b16 %v3228
        %v3261 = vunpack.c.l.b16 %v3229
        %v3262 = vunpack.c.l.b16 %v3230
        %v3263 = vunpack.c.l.b16 %v3231
        %v3264 = vunpack.c.l.b16 %v3232
        %v3265 = vunpack.c.l.b16 %v3233
        %v3266 = vunpack.c.l.b16 %v3234
        %v3267 = vunpack.c.l.b16 %v3235
        %v3268 = vunpack.c.l.b16 %v3236
        %v3269 = vunpack.c.l.b16 %v3237
        %v3270 = vunpack.c.l.b16 %v3238
        %v3271 = vunpack.c.l.b16 %v3239
        %v3272 = vpack.c.b16 %v3257, %v3256
        %v3273 = vpack.c.b16 %v3259, %v3258
        %v3274 = vpack.c.b16 %v3261, %v3260
        %v3275 = vpack.c.b16 %v3263, %v3262
        %v3276 = vpack.c.b16 %v3265, %v3264
        %v3277 = vpack.c.b16 %v3267, %v3266
        %v3278 = vpack.c.b16 %v3269, %v3268
        %v3279 = vpack.c.b16 %v3271, %v3270
        %3280 = vrot.lane.b32.xlu0 %v3272, 64
        %v3281 = vpop.permute.xlu0 %3280
        %3282 = vrot.lane.b32.xlu0 %v3273, 64
        %v3283 = vpop.permute.xlu0 %3282
        %3284 = vrot.lane.b32.xlu0 %v3274, 64
        %v3285 = vpop.permute.xlu0 %3284
        %3286 = vrot.lane.b32.xlu0 %v3275, 64
        %v3287 = vpop.permute.xlu0 %3286
        %3288 = vrot.lane.b32.xlu0 %v3276, 64
        %v3289 = vpop.permute.xlu0 %3288
        %3290 = vrot.lane.b32.xlu0 %v3277, 64
        %v3291 = vpop.permute.xlu0 %3290
        %3292 = vrot.lane.b32.xlu0 %v3278, 64
        %v3293 = vpop.permute.xlu0 %3292
        %3294 = vrot.lane.b32.xlu0 %v3279, 64
        %v3295 = vpop.permute.xlu0 %3294
        %3304 = vst.msk [vmem:[%s3125] sm:$0xff] %vm1326, %v3281
        %3305 = vst.msk [vmem:[%s3125 + $0x18] sm:$0xff] %vm1326, %v3283
        %3306 = vst.msk [vmem:[%s3125 + $0x30] sm:$0xff] %vm1326, %v3285
        %3307 = vst.msk [vmem:[%s3125 + $0x48] sm:$0xff] %vm1326, %v3287
        %3308 = vst.msk [vmem:[%s3125 + $0x60] sm:$0xff] %vm1326, %v3289
        %3309 = vst.msk [vmem:[%s3125 + $0x78] sm:$0xff] %vm1326, %v3291
        %3310 = vst.msk [vmem:[%s3125 + $0x90] sm:$0xff] %vm1326, %v3293
        %3311 = vst.msk [vmem:[%s3125 + $0xa8] sm:$0xff] %vm1326, %v3295
        %v3312 = vld [vmem:[%s3060] sm:$0xf]
        %v3313 = vld [vmem:[%s3060 + $0x4] sm:$0xf]
        %v3314 = vld [vmem:[%s3060 + $0x8] sm:$0x1]
        %v3315 = vld [vmem:[%s3060 + $0xc] sm:$0xf]
        %v3316 = vld [vmem:[%s3060 + $0x10] sm:$0xf]
        %v3317 = vld [vmem:[%s3060 + $0x14] sm:$0x1]
        %v3318 = vld [vmem:[%s3060 + $0x18] sm:$0xf]
        %v3319 = vld [vmem:[%s3060 + $0x1c] sm:$0xf]
        %v3320 = vld [vmem:[%s3060 + $0x20] sm:$0x1]
        %v3321 = vld [vmem:[%s3060 + $0x24] sm:$0xf]
        %v3322 = vld [vmem:[%s3060 + $0x28] sm:$0xf]
        %v3323 = vld [vmem:[%s3060 + $0x2c] sm:$0x1]
        %v3324 = vld [vmem:[%s3060 + $0x30] sm:$0xf]
        %v3325 = vld [vmem:[%s3060 + $0x34] sm:$0xf]
        %v3326 = vld [vmem:[%s3060 + $0x38] sm:$0x1]
        %v3327 = vld [vmem:[%s3060 + $0x3c] sm:$0xf]
        %v3328 = vld [vmem:[%s3060 + $0x40] sm:$0xf]
        %v3329 = vld [vmem:[%s3060 + $0x44] sm:$0x1]
        %v3330 = vld [vmem:[%s3060 + $0x48] sm:$0xf]
        %v3331 = vld [vmem:[%s3060 + $0x4c] sm:$0xf]
        %v3332 = vld [vmem:[%s3060 + $0x50] sm:$0x1]
        %v3333 = vld [vmem:[%s3060 + $0x54] sm:$0xf]
        %v3334 = vld [vmem:[%s3060 + $0x58] sm:$0xf]
        %v3335 = vld [vmem:[%s3060 + $0x5c] sm:$0x1]
        %v3360 = vunpack.c.l.b16 %v3312
        %v3361 = vunpack.c.l.b16 %v3313
        %v3362 = vunpack.c.l.b16 %v3314
        %v3363 = vunpack.c.l.b16 %v3315
        %v3364 = vunpack.c.l.b16 %v3316
        %v3365 = vunpack.c.l.b16 %v3317
        %v3366 = vunpack.c.l.b16 %v3318
        %v3367 = vunpack.c.l.b16 %v3319
        %v3368 = vunpack.c.l.b16 %v3320
        %v3369 = vunpack.c.l.b16 %v3321
        %v3370 = vunpack.c.l.b16 %v3322
        %v3371 = vunpack.c.l.b16 %v3323
        %v3372 = vunpack.c.l.b16 %v3324
        %v3373 = vunpack.c.l.b16 %v3325
        %v3374 = vunpack.c.l.b16 %v3326
        %v3375 = vunpack.c.l.b16 %v3327
        %v3376 = vunpack.c.l.b16 %v3328
        %v3377 = vunpack.c.l.b16 %v3329
        %v3378 = vunpack.c.l.b16 %v3330
        %v3379 = vunpack.c.l.b16 %v3331
        %v3380 = vunpack.c.l.b16 %v3332
        %v3381 = vunpack.c.l.b16 %v3333
        %v3382 = vunpack.c.l.b16 %v3334
        %v3383 = vunpack.c.l.b16 %v3335
        %v3384 = vpack.c.b16 %v3361, %v3360
        %v3385 = vpack.c.b16 %v3362, %v3362
        %v3386 = vpack.c.b16 %v3364, %v3363
        %v3387 = vpack.c.b16 %v3365, %v3365
        %v3388 = vpack.c.b16 %v3367, %v3366
        %v3389 = vpack.c.b16 %v3368, %v3368
        %v3390 = vpack.c.b16 %v3370, %v3369
        %v3391 = vpack.c.b16 %v3371, %v3371
        %v3392 = vpack.c.b16 %v3373, %v3372
        %v3393 = vpack.c.b16 %v3374, %v3374
        %v3394 = vpack.c.b16 %v3376, %v3375
        %v3395 = vpack.c.b16 %v3377, %v3377
        %v3396 = vpack.c.b16 %v3379, %v3378
        %v3397 = vpack.c.b16 %v3380, %v3380
        %v3398 = vpack.c.b16 %v3382, %v3381
        %v3399 = vpack.c.b16 %v3383, %v3383
        %v3401 = vshrl.u32 %v3384, 16
        %v3403 = vshll.u32 %v3384, 16
        %v3405 = vrot.slane %v3403, 1
        %v3406 = vor.u32 %v3401, %v3405
        %v3408 = vshll.u32 %v3385, 16
        %v3410 = vrot.slane %v3408, 1
        %v3411 = vsel %vm1423, %v3406, %v3410
        %v3413 = vshrl.u32 %v3386, 16
        %v3415 = vshll.u32 %v3386, 16
        %v3417 = vrot.slane %v3415, 1
        %v3418 = vor.u32 %v3413, %v3417
        %v3420 = vshll.u32 %v3387, 16
        %v3422 = vrot.slane %v3420, 1
        %v3423 = vsel %vm1423, %v3418, %v3422
        %v3425 = vshrl.u32 %v3388, 16
        %v3427 = vshll.u32 %v3388, 16
        %v3429 = vrot.slane %v3427, 1
        %v3430 = vor.u32 %v3425, %v3429
        %v3432 = vshll.u32 %v3389, 16
        %v3434 = vrot.slane %v3432, 1
        %v3435 = vsel %vm1423, %v3430, %v3434
        %v3437 = vshrl.u32 %v3390, 16
        %v3439 = vshll.u32 %v3390, 16
        %v3441 = vrot.slane %v3439, 1
        %v3442 = vor.u32 %v3437, %v3441
        %v3444 = vshll.u32 %v3391, 16
        %v3446 = vrot.slane %v3444, 1
        %v3447 = vsel %vm1423, %v3442, %v3446
        %v3449 = vshrl.u32 %v3392, 16
        %v3451 = vshll.u32 %v3392, 16
        %v3453 = vrot.slane %v3451, 1
        %v3454 = vor.u32 %v3449, %v3453
        %v3456 = vshll.u32 %v3393, 16
        %v3458 = vrot.slane %v3456, 1
        %v3459 = vsel %vm1423, %v3454, %v3458
        %v3461 = vshrl.u32 %v3394, 16
        %v3463 = vshll.u32 %v3394, 16
        %v3465 = vrot.slane %v3463, 1
        %v3466 = vor.u32 %v3461, %v3465
        %v3468 = vshll.u32 %v3395, 16
        %v3470 = vrot.slane %v3468, 1
        %v3471 = vsel %vm1423, %v3466, %v3470
        %v3473 = vshrl.u32 %v3396, 16
        %v3475 = vshll.u32 %v3396, 16
        %v3477 = vrot.slane %v3475, 1
        %v3478 = vor.u32 %v3473, %v3477
        %v3480 = vshll.u32 %v3397, 16
        %v3482 = vrot.slane %v3480, 1
        %v3483 = vsel %vm1423, %v3478, %v3482
        %v3485 = vshrl.u32 %v3398, 16
        %v3487 = vshll.u32 %v3398, 16
        %v3489 = vrot.slane %v3487, 1
        %v3490 = vor.u32 %v3485, %v3489
        %v3492 = vshll.u32 %v3399, 16
        %v3494 = vrot.slane %v3492, 1
        %v3495 = vsel %vm1423, %v3490, %v3494
        %3496 = vrot.lane.b32.xlu0 %v3411, 96
        %v3497 = vpop.permute.xlu0 %3496
        %3498 = vrot.lane.b32.xlu0 %v3423, 96
        %v3499 = vpop.permute.xlu0 %3498
        %3500 = vrot.lane.b32.xlu0 %v3435, 96
        %v3501 = vpop.permute.xlu0 %3500
        %3502 = vrot.lane.b32.xlu0 %v3447, 96
        %v3503 = vpop.permute.xlu0 %3502
        %3504 = vrot.lane.b32.xlu0 %v3459, 96
        %v3505 = vpop.permute.xlu0 %3504
        %3506 = vrot.lane.b32.xlu0 %v3471, 96
        %v3507 = vpop.permute.xlu0 %3506
        %3508 = vrot.lane.b32.xlu0 %v3483, 96
        %v3509 = vpop.permute.xlu0 %3508
        %3510 = vrot.lane.b32.xlu0 %v3495, 96
        %v3511 = vpop.permute.xlu0 %3510
        %3520 = vst.msk [vmem:[%s3125] sm:$0xff] %vm1544, %v3497
        %3521 = vst.msk [vmem:[%s3125 + $0x18] sm:$0xff] %vm1544, %v3499
        %3522 = vst.msk [vmem:[%s3125 + $0x30] sm:$0xff] %vm1544, %v3501
        %3523 = vst.msk [vmem:[%s3125 + $0x48] sm:$0xff] %vm1544, %v3503
        %3524 = vst.msk [vmem:[%s3125 + $0x60] sm:$0xff] %vm1544, %v3505
        %3525 = vst.msk [vmem:[%s3125 + $0x78] sm:$0xff] %vm1544, %v3507
        %3526 = vst.msk [vmem:[%s3125 + $0x90] sm:$0xff] %vm1544, %v3509
        %3527 = vst.msk [vmem:[%s3125 + $0xa8] sm:$0xff] %vm1544, %v3511
        %v3528 = vld [vmem:[%s3134] sm:$0xf]
        %v3529 = vld [vmem:[%s3134 + $0x4] sm:$0xf]
        %v3530 = vld [vmem:[%s3134 + $0x8] sm:$0x1]
        %v3531 = vld [vmem:[%s3134 + $0xc] sm:$0xf]
        %v3532 = vld [vmem:[%s3134 + $0x10] sm:$0xf]
        %v3533 = vld [vmem:[%s3134 + $0x14] sm:$0x1]
        %v3534 = vld [vmem:[%s3134 + $0x18] sm:$0xf]
        %v3535 = vld [vmem:[%s3134 + $0x1c] sm:$0xf]
        %v3536 = vld [vmem:[%s3134 + $0x20] sm:$0x1]
        %v3537 = vld [vmem:[%s3134 + $0x24] sm:$0xf]
        %v3538 = vld [vmem:[%s3134 + $0x28] sm:$0xf]
        %v3539 = vld [vmem:[%s3134 + $0x2c] sm:$0x1]
        %v3540 = vld [vmem:[%s3134 + $0x30] sm:$0xf]
        %v3541 = vld [vmem:[%s3134 + $0x34] sm:$0xf]
        %v3542 = vld [vmem:[%s3134 + $0x38] sm:$0x1]
        %v3543 = vld [vmem:[%s3134 + $0x3c] sm:$0xf]
        %v3544 = vld [vmem:[%s3134 + $0x40] sm:$0xf]
        %v3545 = vld [vmem:[%s3134 + $0x44] sm:$0x1]
        %v3546 = vld [vmem:[%s3134 + $0x48] sm:$0xf]
        %v3547 = vld [vmem:[%s3134 + $0x4c] sm:$0xf]
        %v3548 = vld [vmem:[%s3134 + $0x50] sm:$0x1]
        %v3549 = vld [vmem:[%s3134 + $0x54] sm:$0xf]
        %v3550 = vld [vmem:[%s3134 + $0x58] sm:$0xf]
        %v3551 = vld [vmem:[%s3134 + $0x5c] sm:$0x1]
        %v3576 = vunpack.c.l.b16 %v3528
        %v3577 = vunpack.c.l.b16 %v3529
        %v3578 = vunpack.c.l.b16 %v3530
        %v3579 = vunpack.c.l.b16 %v3531
        %v3580 = vunpack.c.l.b16 %v3532
        %v3581 = vunpack.c.l.b16 %v3533
        %v3582 = vunpack.c.l.b16 %v3534
        %v3583 = vunpack.c.l.b16 %v3535
        %v3584 = vunpack.c.l.b16 %v3536
        %v3585 = vunpack.c.l.b16 %v3537
        %v3586 = vunpack.c.l.b16 %v3538
        %v3587 = vunpack.c.l.b16 %v3539
        %v3588 = vunpack.c.l.b16 %v3540
        %v3589 = vunpack.c.l.b16 %v3541
        %v3590 = vunpack.c.l.b16 %v3542
        %v3591 = vunpack.c.l.b16 %v3543
        %v3592 = vunpack.c.l.b16 %v3544
        %v3593 = vunpack.c.l.b16 %v3545
        %v3594 = vunpack.c.l.b16 %v3546
        %v3595 = vunpack.c.l.b16 %v3547
        %v3596 = vunpack.c.l.b16 %v3548
        %v3597 = vunpack.c.l.b16 %v3549
        %v3598 = vunpack.c.l.b16 %v3550
        %v3599 = vunpack.c.l.b16 %v3551
        %v3600 = vpack.c.b16 %v3577, %v3576
        %v3601 = vpack.c.b16 %v3578, %v3578
        %v3602 = vpack.c.b16 %v3580, %v3579
        %v3603 = vpack.c.b16 %v3581, %v3581
        %v3604 = vpack.c.b16 %v3583, %v3582
        %v3605 = vpack.c.b16 %v3584, %v3584
        %v3606 = vpack.c.b16 %v3586, %v3585
        %v3607 = vpack.c.b16 %v3587, %v3587
        %v3608 = vpack.c.b16 %v3589, %v3588
        %v3609 = vpack.c.b16 %v3590, %v3590
        %v3610 = vpack.c.b16 %v3592, %v3591
        %v3611 = vpack.c.b16 %v3593, %v3593
        %v3612 = vpack.c.b16 %v3595, %v3594
        %v3613 = vpack.c.b16 %v3596, %v3596
        %v3614 = vpack.c.b16 %v3598, %v3597
        %v3615 = vpack.c.b16 %v3599, %v3599
        %v3617 = vshrl.u32 %v3600, 16
        %v3619 = vshll.u32 %v3600, 16
        %v3621 = vrot.slane %v3619, 1
        %v3622 = vor.u32 %v3617, %v3621
        %v3624 = vshll.u32 %v3601, 16
        %v3626 = vrot.slane %v3624, 1
        %v3627 = vsel %vm1423, %v3622, %v3626
        %v3629 = vshrl.u32 %v3602, 16
        %v3631 = vshll.u32 %v3602, 16
        %v3633 = vrot.slane %v3631, 1
        %v3634 = vor.u32 %v3629, %v3633
        %v3636 = vshll.u32 %v3603, 16
        %v3638 = vrot.slane %v3636, 1
        %v3639 = vsel %vm1423, %v3634, %v3638
        %v3641 = vshrl.u32 %v3604, 16
        %v3643 = vshll.u32 %v3604, 16
        %v3645 = vrot.slane %v3643, 1
        %v3646 = vor.u32 %v3641, %v3645
        %v3648 = vshll.u32 %v3605, 16
        %v3650 = vrot.slane %v3648, 1
        %v3651 = vsel %vm1423, %v3646, %v3650
        %v3653 = vshrl.u32 %v3606, 16
        %v3655 = vshll.u32 %v3606, 16
        %v3657 = vrot.slane %v3655, 1
        %v3658 = vor.u32 %v3653, %v3657
        %v3660 = vshll.u32 %v3607, 16
        %v3662 = vrot.slane %v3660, 1
        %v3663 = vsel %vm1423, %v3658, %v3662
        %v3665 = vshrl.u32 %v3608, 16
        %v3667 = vshll.u32 %v3608, 16
        %v3669 = vrot.slane %v3667, 1
        %v3670 = vor.u32 %v3665, %v3669
        %v3672 = vshll.u32 %v3609, 16
        %v3674 = vrot.slane %v3672, 1
        %v3675 = vsel %vm1423, %v3670, %v3674
        %v3677 = vshrl.u32 %v3610, 16
        %v3679 = vshll.u32 %v3610, 16
        %v3681 = vrot.slane %v3679, 1
        %v3682 = vor.u32 %v3677, %v3681
        %v3684 = vshll.u32 %v3611, 16
        %v3686 = vrot.slane %v3684, 1
        %v3687 = vsel %vm1423, %v3682, %v3686
        %v3689 = vshrl.u32 %v3612, 16
        %v3691 = vshll.u32 %v3612, 16
        %v3693 = vrot.slane %v3691, 1
        %v3694 = vor.u32 %v3689, %v3693
        %v3696 = vshll.u32 %v3613, 16
        %v3698 = vrot.slane %v3696, 1
        %v3699 = vsel %vm1423, %v3694, %v3698
        %v3701 = vshrl.u32 %v3614, 16
        %v3703 = vshll.u32 %v3614, 16
        %v3705 = vrot.slane %v3703, 1
        %v3706 = vor.u32 %v3701, %v3705
        %v3708 = vshll.u32 %v3615, 16
        %v3710 = vrot.slane %v3708, 1
        %v3711 = vsel %vm1423, %v3706, %v3710
        %3720 = vst.msk [vmem:[%s3125 + $0x8] sm:$0xff] %vm1147, %v3627
        %3721 = vst.msk [vmem:[%s3125 + $0x20] sm:$0xff] %vm1147, %v3639
        %3722 = vst.msk [vmem:[%s3125 + $0x38] sm:$0xff] %vm1147, %v3651
        %3723 = vst.msk [vmem:[%s3125 + $0x50] sm:$0xff] %vm1147, %v3663
        %3724 = vst.msk [vmem:[%s3125 + $0x68] sm:$0xff] %vm1147, %v3675
        %3725 = vst.msk [vmem:[%s3125 + $0x80] sm:$0xff] %vm1147, %v3687
        %3726 = vst.msk [vmem:[%s3125 + $0x98] sm:$0xff] %vm1147, %v3699
        %3727 = vst.msk [vmem:[%s3125 + $0xb0] sm:$0xff] %vm1147, %v3711
        %v3728 = vld [vmem:[%s3223] sm:$0xf]
        %v3729 = vld [vmem:[%s3223 + $0x4] sm:$0xf]
        %v3730 = vld [vmem:[%s3223 + $0x8] sm:$0x1]
        %v3731 = vld [vmem:[%s3223 + $0xc] sm:$0xf]
        %v3732 = vld [vmem:[%s3223 + $0x10] sm:$0xf]
        %v3733 = vld [vmem:[%s3223 + $0x14] sm:$0x1]
        %v3734 = vld [vmem:[%s3223 + $0x18] sm:$0xf]
        %v3735 = vld [vmem:[%s3223 + $0x1c] sm:$0xf]
        %v3736 = vld [vmem:[%s3223 + $0x20] sm:$0x1]
        %v3737 = vld [vmem:[%s3223 + $0x24] sm:$0xf]
        %v3738 = vld [vmem:[%s3223 + $0x28] sm:$0xf]
        %v3739 = vld [vmem:[%s3223 + $0x2c] sm:$0x1]
        %v3740 = vld [vmem:[%s3223 + $0x30] sm:$0xf]
        %v3741 = vld [vmem:[%s3223 + $0x34] sm:$0xf]
        %v3742 = vld [vmem:[%s3223 + $0x38] sm:$0x1]
        %v3743 = vld [vmem:[%s3223 + $0x3c] sm:$0xf]
        %v3744 = vld [vmem:[%s3223 + $0x40] sm:$0xf]
        %v3745 = vld [vmem:[%s3223 + $0x44] sm:$0x1]
        %v3746 = vld [vmem:[%s3223 + $0x48] sm:$0xf]
        %v3747 = vld [vmem:[%s3223 + $0x4c] sm:$0xf]
        %v3748 = vld [vmem:[%s3223 + $0x50] sm:$0x1]
        %v3749 = vld [vmem:[%s3223 + $0x54] sm:$0xf]
        %v3750 = vld [vmem:[%s3223 + $0x58] sm:$0xf]
        %v3751 = vld [vmem:[%s3223 + $0x5c] sm:$0x1]
        %v3776 = vunpack.c.l.b16 %v3728
        %v3777 = vunpack.c.l.b16 %v3729
        %v3778 = vunpack.c.l.b16 %v3730
        %v3779 = vunpack.c.l.b16 %v3731
        %v3780 = vunpack.c.l.b16 %v3732
        %v3781 = vunpack.c.l.b16 %v3733
        %v3782 = vunpack.c.l.b16 %v3734
        %v3783 = vunpack.c.l.b16 %v3735
        %v3784 = vunpack.c.l.b16 %v3736
        %v3785 = vunpack.c.l.b16 %v3737
        %v3786 = vunpack.c.l.b16 %v3738
        %v3787 = vunpack.c.l.b16 %v3739
        %v3788 = vunpack.c.l.b16 %v3740
        %v3789 = vunpack.c.l.b16 %v3741
        %v3790 = vunpack.c.l.b16 %v3742
        %v3791 = vunpack.c.l.b16 %v3743
        %v3792 = vunpack.c.l.b16 %v3744
        %v3793 = vunpack.c.l.b16 %v3745
        %v3794 = vunpack.c.l.b16 %v3746
        %v3795 = vunpack.c.l.b16 %v3747
        %v3796 = vunpack.c.l.b16 %v3748
        %v3797 = vunpack.c.l.b16 %v3749
        %v3798 = vunpack.c.l.b16 %v3750
        %v3799 = vunpack.c.l.b16 %v3751
        %v3800 = vpack.c.b16 %v3777, %v3776
        %v3801 = vpack.c.b16 %v3778, %v3778
        %v3802 = vpack.c.b16 %v3780, %v3779
        %v3803 = vpack.c.b16 %v3781, %v3781
        %v3804 = vpack.c.b16 %v3783, %v3782
        %v3805 = vpack.c.b16 %v3784, %v3784
        %v3806 = vpack.c.b16 %v3786, %v3785
        %v3807 = vpack.c.b16 %v3787, %v3787
        %v3808 = vpack.c.b16 %v3789, %v3788
        %v3809 = vpack.c.b16 %v3790, %v3790
        %v3810 = vpack.c.b16 %v3792, %v3791
        %v3811 = vpack.c.b16 %v3793, %v3793
        %v3812 = vpack.c.b16 %v3795, %v3794
        %v3813 = vpack.c.b16 %v3796, %v3796
        %v3814 = vpack.c.b16 %v3798, %v3797
        %v3815 = vpack.c.b16 %v3799, %v3799
        %v3817 = vshrl.u32 %v3800, 16
        %v3819 = vshll.u32 %v3800, 16
        %v3821 = vrot.slane %v3819, 1
        %v3822 = vor.u32 %v3817, %v3821
        %v3824 = vshll.u32 %v3801, 16
        %v3826 = vrot.slane %v3824, 1
        %v3827 = vsel %vm1423, %v3822, %v3826
        %v3829 = vshrl.u32 %v3802, 16
        %v3831 = vshll.u32 %v3802, 16
        %v3833 = vrot.slane %v3831, 1
        %v3834 = vor.u32 %v3829, %v3833
        %v3836 = vshll.u32 %v3803, 16
        %v3838 = vrot.slane %v3836, 1
        %v3839 = vsel %vm1423, %v3834, %v3838
        %v3841 = vshrl.u32 %v3804, 16
        %v3843 = vshll.u32 %v3804, 16
        %v3845 = vrot.slane %v3843, 1
        %v3846 = vor.u32 %v3841, %v3845
        %v3848 = vshll.u32 %v3805, 16
        %v3850 = vrot.slane %v3848, 1
        %v3851 = vsel %vm1423, %v3846, %v3850
        %v3853 = vshrl.u32 %v3806, 16
        %v3855 = vshll.u32 %v3806, 16
        %v3857 = vrot.slane %v3855, 1
        %v3858 = vor.u32 %v3853, %v3857
        %v3860 = vshll.u32 %v3807, 16
        %v3862 = vrot.slane %v3860, 1
        %v3863 = vsel %vm1423, %v3858, %v3862
        %v3865 = vshrl.u32 %v3808, 16
        %v3867 = vshll.u32 %v3808, 16
        %v3869 = vrot.slane %v3867, 1
        %v3870 = vor.u32 %v3865, %v3869
        %v3872 = vshll.u32 %v3809, 16
        %v3874 = vrot.slane %v3872, 1
        %v3875 = vsel %vm1423, %v3870, %v3874
        %v3877 = vshrl.u32 %v3810, 16
        %v3879 = vshll.u32 %v3810, 16
        %v3881 = vrot.slane %v3879, 1
        %v3882 = vor.u32 %v3877, %v3881
        %v3884 = vshll.u32 %v3811, 16
        %v3886 = vrot.slane %v3884, 1
        %v3887 = vsel %vm1423, %v3882, %v3886
        %v3889 = vshrl.u32 %v3812, 16
        %v3891 = vshll.u32 %v3812, 16
        %v3893 = vrot.slane %v3891, 1
        %v3894 = vor.u32 %v3889, %v3893
        %v3896 = vshll.u32 %v3813, 16
        %v3898 = vrot.slane %v3896, 1
        %v3899 = vsel %vm1423, %v3894, %v3898
        %v3901 = vshrl.u32 %v3814, 16
        %v3903 = vshll.u32 %v3814, 16
        %v3905 = vrot.slane %v3903, 1
        %v3906 = vor.u32 %v3901, %v3905
        %v3908 = vshll.u32 %v3815, 16
        %v3910 = vrot.slane %v3908, 1
        %v3911 = vsel %vm1423, %v3906, %v3910
        %3912 = vrot.lane.b32.xlu0 %v3827, 32
        %v3913 = vpop.permute.xlu0 %3912
        %3914 = vrot.lane.b32.xlu0 %v3839, 32
        %v3915 = vpop.permute.xlu0 %3914
        %3916 = vrot.lane.b32.xlu0 %v3851, 32
        %v3917 = vpop.permute.xlu0 %3916
        %3918 = vrot.lane.b32.xlu0 %v3863, 32
        %v3919 = vpop.permute.xlu0 %3918
        %3920 = vrot.lane.b32.xlu0 %v3875, 32
        %v3921 = vpop.permute.xlu0 %3920
        %3922 = vrot.lane.b32.xlu0 %v3887, 32
        %v3923 = vpop.permute.xlu0 %3922
        %3924 = vrot.lane.b32.xlu0 %v3899, 32
        %v3925 = vpop.permute.xlu0 %3924
        %3926 = vrot.lane.b32.xlu0 %v3911, 32
        %v3927 = vpop.permute.xlu0 %3926
        %3936 = vst.msk [vmem:[%s3125 + $0x8] sm:$0xff] %vm1236, %v3913
        %3937 = vst.msk [vmem:[%s3125 + $0x20] sm:$0xff] %vm1236, %v3915
        %3938 = vst.msk [vmem:[%s3125 + $0x38] sm:$0xff] %vm1236, %v3917
        %3939 = vst.msk [vmem:[%s3125 + $0x50] sm:$0xff] %vm1236, %v3919
        %3940 = vst.msk [vmem:[%s3125 + $0x68] sm:$0xff] %vm1236, %v3921
        %3941 = vst.msk [vmem:[%s3125 + $0x80] sm:$0xff] %vm1236, %v3923
        %3942 = vst.msk [vmem:[%s3125 + $0x98] sm:$0xff] %vm1236, %v3925
        %3943 = vst.msk [vmem:[%s3125 + $0xb0] sm:$0xff] %vm1236, %v3927
        %v3944 = vld [vmem:[%s3060] sm:$0xe]
        %v3945 = vld [vmem:[%s3060 + $0x4] sm:$0xf]
        %v3946 = vld [vmem:[%s3060 + $0x8] sm:$0x1]
        %v3947 = vld [vmem:[%s3060 + $0xc] sm:$0xe]
        %v3948 = vld [vmem:[%s3060 + $0x10] sm:$0xf]
        %v3949 = vld [vmem:[%s3060 + $0x14] sm:$0x1]
        %v3950 = vld [vmem:[%s3060 + $0x18] sm:$0xe]
        %v3951 = vld [vmem:[%s3060 + $0x1c] sm:$0xf]
        %v3952 = vld [vmem:[%s3060 + $0x20] sm:$0x1]
        %v3953 = vld [vmem:[%s3060 + $0x24] sm:$0xe]
        %v3954 = vld [vmem:[%s3060 + $0x28] sm:$0xf]
        %v3955 = vld [vmem:[%s3060 + $0x2c] sm:$0x1]
        %v3956 = vld [vmem:[%s3060 + $0x30] sm:$0xe]
        %v3957 = vld [vmem:[%s3060 + $0x34] sm:$0xf]
        %v3958 = vld [vmem:[%s3060 + $0x38] sm:$0x1]
        %v3959 = vld [vmem:[%s3060 + $0x3c] sm:$0xe]
        %v3960 = vld [vmem:[%s3060 + $0x40] sm:$0xf]
        %v3961 = vld [vmem:[%s3060 + $0x44] sm:$0x1]
        %v3962 = vld [vmem:[%s3060 + $0x48] sm:$0xe]
        %v3963 = vld [vmem:[%s3060 + $0x4c] sm:$0xf]
        %v3964 = vld [vmem:[%s3060 + $0x50] sm:$0x1]
        %v3965 = vld [vmem:[%s3060 + $0x54] sm:$0xe]
        %v3966 = vld [vmem:[%s3060 + $0x58] sm:$0xf]
        %v3967 = vld [vmem:[%s3060 + $0x5c] sm:$0x1]
        %v3992 = vunpack.c.l.b16 %v3944
        %v3993 = vunpack.c.l.b16 %v3945
        %v3994 = vunpack.c.l.b16 %v3946
        %v3995 = vunpack.c.l.b16 %v3947
        %v3996 = vunpack.c.l.b16 %v3948
        %v3997 = vunpack.c.l.b16 %v3949
        %v3998 = vunpack.c.l.b16 %v3950
        %v3999 = vunpack.c.l.b16 %v3951
        %v4000 = vunpack.c.l.b16 %v3952
        %v4001 = vunpack.c.l.b16 %v3953
        %v4002 = vunpack.c.l.b16 %v3954
        %v4003 = vunpack.c.l.b16 %v3955
        %v4004 = vunpack.c.l.b16 %v3956
        %v4005 = vunpack.c.l.b16 %v3957
        %v4006 = vunpack.c.l.b16 %v3958
        %v4007 = vunpack.c.l.b16 %v3959
        %v4008 = vunpack.c.l.b16 %v3960
        %v4009 = vunpack.c.l.b16 %v3961
        %v4010 = vunpack.c.l.b16 %v3962
        %v4011 = vunpack.c.l.b16 %v3963
        %v4012 = vunpack.c.l.b16 %v3964
        %v4013 = vunpack.c.l.b16 %v3965
        %v4014 = vunpack.c.l.b16 %v3966
        %v4015 = vunpack.c.l.b16 %v3967
        %v4016 = vpack.c.b16 %v3993, %v3992
        %v4017 = vpack.c.b16 %v3994, %v3994
        %v4018 = vpack.c.b16 %v3996, %v3995
        %v4019 = vpack.c.b16 %v3997, %v3997
        %v4020 = vpack.c.b16 %v3999, %v3998
        %v4021 = vpack.c.b16 %v4000, %v4000
        %v4022 = vpack.c.b16 %v4002, %v4001
        %v4023 = vpack.c.b16 %v4003, %v4003
        %v4024 = vpack.c.b16 %v4005, %v4004
        %v4025 = vpack.c.b16 %v4006, %v4006
        %v4026 = vpack.c.b16 %v4008, %v4007
        %v4027 = vpack.c.b16 %v4009, %v4009
        %v4028 = vpack.c.b16 %v4011, %v4010
        %v4029 = vpack.c.b16 %v4012, %v4012
        %v4030 = vpack.c.b16 %v4014, %v4013
        %v4031 = vpack.c.b16 %v4015, %v4015
        %v4032 = vrot.slane %v4016, 1
        %v4033 = vrot.slane %v4017, 1
        %v4034 = vsel %vm2057, %v4032, %v4033
        %v4035 = vrot.slane %v4018, 1
        %v4036 = vrot.slane %v4019, 1
        %v4037 = vsel %vm2057, %v4035, %v4036
        %v4038 = vrot.slane %v4020, 1
        %v4039 = vrot.slane %v4021, 1
        %v4040 = vsel %vm2057, %v4038, %v4039
        %v4041 = vrot.slane %v4022, 1
        %v4042 = vrot.slane %v4023, 1
        %v4043 = vsel %vm2057, %v4041, %v4042
        %v4044 = vrot.slane %v4024, 1
        %v4045 = vrot.slane %v4025, 1
        %v4046 = vsel %vm2057, %v4044, %v4045
        %v4047 = vrot.slane %v4026, 1
        %v4048 = vrot.slane %v4027, 1
        %v4049 = vsel %vm2057, %v4047, %v4048
        %v4050 = vrot.slane %v4028, 1
        %v4051 = vrot.slane %v4029, 1
        %v4052 = vsel %vm2057, %v4050, %v4051
        %v4053 = vrot.slane %v4030, 1
        %v4054 = vrot.slane %v4031, 1
        %v4055 = vsel %vm2057, %v4053, %v4054
        %4056 = vrot.lane.b32.xlu0 %v4034, 64
        %v4057 = vpop.permute.xlu0 %4056
        %4058 = vrot.lane.b32.xlu0 %v4037, 64
        %v4059 = vpop.permute.xlu0 %4058
        %4060 = vrot.lane.b32.xlu0 %v4040, 64
        %v4061 = vpop.permute.xlu0 %4060
        %4062 = vrot.lane.b32.xlu0 %v4043, 64
        %v4063 = vpop.permute.xlu0 %4062
        %4064 = vrot.lane.b32.xlu0 %v4046, 64
        %v4065 = vpop.permute.xlu0 %4064
        %4066 = vrot.lane.b32.xlu0 %v4049, 64
        %v4067 = vpop.permute.xlu0 %4066
        %4068 = vrot.lane.b32.xlu0 %v4052, 64
        %v4069 = vpop.permute.xlu0 %4068
        %4070 = vrot.lane.b32.xlu0 %v4055, 64
        %v4071 = vpop.permute.xlu0 %4070
        %4080 = vst.msk [vmem:[%s3125 + $0x8] sm:$0xff] %vm1326, %v4057
        %4081 = vst.msk [vmem:[%s3125 + $0x20] sm:$0xff] %vm1326, %v4059
        %4082 = vst.msk [vmem:[%s3125 + $0x38] sm:$0xff] %vm1326, %v4061
        %4083 = vst.msk [vmem:[%s3125 + $0x50] sm:$0xff] %vm1326, %v4063
        %4084 = vst.msk [vmem:[%s3125 + $0x68] sm:$0xff] %vm1326, %v4065
        %4085 = vst.msk [vmem:[%s3125 + $0x80] sm:$0xff] %vm1326, %v4067
        %4086 = vst.msk [vmem:[%s3125 + $0x98] sm:$0xff] %vm1326, %v4069
        %4087 = vst.msk [vmem:[%s3125 + $0xb0] sm:$0xff] %vm1326, %v4071
        %v4088 = vld [vmem:[%s3134] sm:$0xe]
        %v4089 = vld [vmem:[%s3134 + $0x4] sm:$0xf]
        %v4090 = vld [vmem:[%s3134 + $0x8] sm:$0x1]
        %v4091 = vld [vmem:[%s3134 + $0xc] sm:$0xe]
        %v4092 = vld [vmem:[%s3134 + $0x10] sm:$0xf]
        %v4093 = vld [vmem:[%s3134 + $0x14] sm:$0x1]
        %v4094 = vld [vmem:[%s3134 + $0x18] sm:$0xe]
        %v4095 = vld [vmem:[%s3134 + $0x1c] sm:$0xf]
        %v4096 = vld [vmem:[%s3134 + $0x20] sm:$0x1]
        %v4097 = vld [vmem:[%s3134 + $0x24] sm:$0xe]
        %v4098 = vld [vmem:[%s3134 + $0x28] sm:$0xf]
        %v4099 = vld [vmem:[%s3134 + $0x2c] sm:$0x1]
        %v4100 = vld [vmem:[%s3134 + $0x30] sm:$0xe]
        %v4101 = vld [vmem:[%s3134 + $0x34] sm:$0xf]
        %v4102 = vld [vmem:[%s3134 + $0x38] sm:$0x1]
        %v4103 = vld [vmem:[%s3134 + $0x3c] sm:$0xe]
        %v4104 = vld [vmem:[%s3134 + $0x40] sm:$0xf]
        %v4105 = vld [vmem:[%s3134 + $0x44] sm:$0x1]
        %v4106 = vld [vmem:[%s3134 + $0x48] sm:$0xe]
        %v4107 = vld [vmem:[%s3134 + $0x4c] sm:$0xf]
        %v4108 = vld [vmem:[%s3134 + $0x50] sm:$0x1]
        %v4109 = vld [vmem:[%s3134 + $0x54] sm:$0xe]
        %v4110 = vld [vmem:[%s3134 + $0x58] sm:$0xf]
        %v4111 = vld [vmem:[%s3134 + $0x5c] sm:$0x1]
        %v4136 = vunpack.c.l.b16 %v4088
        %v4137 = vunpack.c.l.b16 %v4089
        %v4138 = vunpack.c.l.b16 %v4090
        %v4139 = vunpack.c.l.b16 %v4091
        %v4140 = vunpack.c.l.b16 %v4092
        %v4141 = vunpack.c.l.b16 %v4093
        %v4142 = vunpack.c.l.b16 %v4094
        %v4143 = vunpack.c.l.b16 %v4095
        %v4144 = vunpack.c.l.b16 %v4096
        %v4145 = vunpack.c.l.b16 %v4097
        %v4146 = vunpack.c.l.b16 %v4098
        %v4147 = vunpack.c.l.b16 %v4099
        %v4148 = vunpack.c.l.b16 %v4100
        %v4149 = vunpack.c.l.b16 %v4101
        %v4150 = vunpack.c.l.b16 %v4102
        %v4151 = vunpack.c.l.b16 %v4103
        %v4152 = vunpack.c.l.b16 %v4104
        %v4153 = vunpack.c.l.b16 %v4105
        %v4154 = vunpack.c.l.b16 %v4106
        %v4155 = vunpack.c.l.b16 %v4107
        %v4156 = vunpack.c.l.b16 %v4108
        %v4157 = vunpack.c.l.b16 %v4109
        %v4158 = vunpack.c.l.b16 %v4110
        %v4159 = vunpack.c.l.b16 %v4111
        %v4160 = vpack.c.b16 %v4137, %v4136
        %v4161 = vpack.c.b16 %v4138, %v4138
        %v4162 = vpack.c.b16 %v4140, %v4139
        %v4163 = vpack.c.b16 %v4141, %v4141
        %v4164 = vpack.c.b16 %v4143, %v4142
        %v4165 = vpack.c.b16 %v4144, %v4144
        %v4166 = vpack.c.b16 %v4146, %v4145
        %v4167 = vpack.c.b16 %v4147, %v4147
        %v4168 = vpack.c.b16 %v4149, %v4148
        %v4169 = vpack.c.b16 %v4150, %v4150
        %v4170 = vpack.c.b16 %v4152, %v4151
        %v4171 = vpack.c.b16 %v4153, %v4153
        %v4172 = vpack.c.b16 %v4155, %v4154
        %v4173 = vpack.c.b16 %v4156, %v4156
        %v4174 = vpack.c.b16 %v4158, %v4157
        %v4175 = vpack.c.b16 %v4159, %v4159
        %v4176 = vrot.slane %v4160, 1
        %v4177 = vrot.slane %v4161, 1
        %v4178 = vsel %vm2057, %v4176, %v4177
        %v4179 = vrot.slane %v4162, 1
        %v4180 = vrot.slane %v4163, 1
        %v4181 = vsel %vm2057, %v4179, %v4180
        %v4182 = vrot.slane %v4164, 1
        %v4183 = vrot.slane %v4165, 1
        %v4184 = vsel %vm2057, %v4182, %v4183
        %v4185 = vrot.slane %v4166, 1
        %v4186 = vrot.slane %v4167, 1
        %v4187 = vsel %vm2057, %v4185, %v4186
        %v4188 = vrot.slane %v4168, 1
        %v4189 = vrot.slane %v4169, 1
        %v4190 = vsel %vm2057, %v4188, %v4189
        %v4191 = vrot.slane %v4170, 1
        %v4192 = vrot.slane %v4171, 1
        %v4193 = vsel %vm2057, %v4191, %v4192
        %v4194 = vrot.slane %v4172, 1
        %v4195 = vrot.slane %v4173, 1
        %v4196 = vsel %vm2057, %v4194, %v4195
        %v4197 = vrot.slane %v4174, 1
        %v4198 = vrot.slane %v4175, 1
        %v4199 = vsel %vm2057, %v4197, %v4198
        %4200 = vrot.lane.b32.xlu0 %v4178, 96
        %v4201 = vpop.permute.xlu0 %4200
        %4202 = vrot.lane.b32.xlu0 %v4181, 96
        %v4203 = vpop.permute.xlu0 %4202
        %4204 = vrot.lane.b32.xlu0 %v4184, 96
        %v4205 = vpop.permute.xlu0 %4204
        %4206 = vrot.lane.b32.xlu0 %v4187, 96
        %v4207 = vpop.permute.xlu0 %4206
        %4208 = vrot.lane.b32.xlu0 %v4190, 96
        %v4209 = vpop.permute.xlu0 %4208
        %4210 = vrot.lane.b32.xlu0 %v4193, 96
        %v4211 = vpop.permute.xlu0 %4210
        %4212 = vrot.lane.b32.xlu0 %v4196, 96
        %v4213 = vpop.permute.xlu0 %4212
        %4214 = vrot.lane.b32.xlu0 %v4199, 96
        %v4215 = vpop.permute.xlu0 %4214
        %4224 = vst.msk [vmem:[%s3125 + $0x8] sm:$0xff] %vm1544, %v4201
        %4225 = vst.msk [vmem:[%s3125 + $0x20] sm:$0xff] %vm1544, %v4203
        %4226 = vst.msk [vmem:[%s3125 + $0x38] sm:$0xff] %vm1544, %v4205
        %4227 = vst.msk [vmem:[%s3125 + $0x50] sm:$0xff] %vm1544, %v4207
        %4228 = vst.msk [vmem:[%s3125 + $0x68] sm:$0xff] %vm1544, %v4209
        %4229 = vst.msk [vmem:[%s3125 + $0x80] sm:$0xff] %vm1544, %v4211
        %4230 = vst.msk [vmem:[%s3125 + $0x98] sm:$0xff] %vm1544, %v4213
        %4231 = vst.msk [vmem:[%s3125 + $0xb0] sm:$0xff] %vm1544, %v4215
        %v4232 = vld [vmem:[%s3223] sm:$0xe]
        %v4233 = vld [vmem:[%s3223 + $0x4] sm:$0xf]
        %v4234 = vld [vmem:[%s3223 + $0x8] sm:$0x1]
        %v4235 = vld [vmem:[%s3223 + $0xc] sm:$0xe]
        %v4236 = vld [vmem:[%s3223 + $0x10] sm:$0xf]
        %v4237 = vld [vmem:[%s3223 + $0x14] sm:$0x1]
        %v4238 = vld [vmem:[%s3223 + $0x18] sm:$0xe]
        %v4239 = vld [vmem:[%s3223 + $0x1c] sm:$0xf]
        %v4240 = vld [vmem:[%s3223 + $0x20] sm:$0x1]
        %v4241 = vld [vmem:[%s3223 + $0x24] sm:$0xe]
        %v4242 = vld [vmem:[%s3223 + $0x28] sm:$0xf]
        %v4243 = vld [vmem:[%s3223 + $0x2c] sm:$0x1]
        %v4244 = vld [vmem:[%s3223 + $0x30] sm:$0xe]
        %v4245 = vld [vmem:[%s3223 + $0x34] sm:$0xf]
        %v4246 = vld [vmem:[%s3223 + $0x38] sm:$0x1]
        %v4247 = vld [vmem:[%s3223 + $0x3c] sm:$0xe]
        %v4248 = vld [vmem:[%s3223 + $0x40] sm:$0xf]
        %v4249 = vld [vmem:[%s3223 + $0x44] sm:$0x1]
        %v4250 = vld [vmem:[%s3223 + $0x48] sm:$0xe]
        %v4251 = vld [vmem:[%s3223 + $0x4c] sm:$0xf]
        %v4252 = vld [vmem:[%s3223 + $0x50] sm:$0x1]
        %v4253 = vld [vmem:[%s3223 + $0x54] sm:$0xe]
        %v4254 = vld [vmem:[%s3223 + $0x58] sm:$0xf]
        %v4255 = vld [vmem:[%s3223 + $0x5c] sm:$0x1]
        %v4280 = vunpack.c.l.b16 %v4232
        %v4281 = vunpack.c.l.b16 %v4233
        %v4282 = vunpack.c.l.b16 %v4234
        %v4283 = vunpack.c.l.b16 %v4235
        %v4284 = vunpack.c.l.b16 %v4236
        %v4285 = vunpack.c.l.b16 %v4237
        %v4286 = vunpack.c.l.b16 %v4238
        %v4287 = vunpack.c.l.b16 %v4239
        %v4288 = vunpack.c.l.b16 %v4240
        %v4289 = vunpack.c.l.b16 %v4241
        %v4290 = vunpack.c.l.b16 %v4242
        %v4291 = vunpack.c.l.b16 %v4243
        %v4292 = vunpack.c.l.b16 %v4244
        %v4293 = vunpack.c.l.b16 %v4245
        %v4294 = vunpack.c.l.b16 %v4246
        %v4295 = vunpack.c.l.b16 %v4247
        %v4296 = vunpack.c.l.b16 %v4248
        %v4297 = vunpack.c.l.b16 %v4249
        %v4298 = vunpack.c.l.b16 %v4250
        %v4299 = vunpack.c.l.b16 %v4251
        %v4300 = vunpack.c.l.b16 %v4252
        %v4301 = vunpack.c.l.b16 %v4253
        %v4302 = vunpack.c.l.b16 %v4254
        %v4303 = vunpack.c.l.b16 %v4255
        %v4304 = vpack.c.b16 %v4281, %v4280
        %v4305 = vpack.c.b16 %v4282, %v4282
        %v4306 = vpack.c.b16 %v4284, %v4283
        %v4307 = vpack.c.b16 %v4285, %v4285
        %v4308 = vpack.c.b16 %v4287, %v4286
        %v4309 = vpack.c.b16 %v4288, %v4288
        %v4310 = vpack.c.b16 %v4290, %v4289
        %v4311 = vpack.c.b16 %v4291, %v4291
        %v4312 = vpack.c.b16 %v4293, %v4292
        %v4313 = vpack.c.b16 %v4294, %v4294
        %v4314 = vpack.c.b16 %v4296, %v4295
        %v4315 = vpack.c.b16 %v4297, %v4297
        %v4316 = vpack.c.b16 %v4299, %v4298
        %v4317 = vpack.c.b16 %v4300, %v4300
        %v4318 = vpack.c.b16 %v4302, %v4301
        %v4319 = vpack.c.b16 %v4303, %v4303
        %v4320 = vrot.slane %v4304, 1
        %v4321 = vrot.slane %v4305, 1
        %v4322 = vsel %vm2057, %v4320, %v4321
        %v4323 = vrot.slane %v4306, 1
        %v4324 = vrot.slane %v4307, 1
        %v4325 = vsel %vm2057, %v4323, %v4324
        %v4326 = vrot.slane %v4308, 1
        %v4327 = vrot.slane %v4309, 1
        %v4328 = vsel %vm2057, %v4326, %v4327
        %v4329 = vrot.slane %v4310, 1
        %v4330 = vrot.slane %v4311, 1
        %v4331 = vsel %vm2057, %v4329, %v4330
        %v4332 = vrot.slane %v4312, 1
        %v4333 = vrot.slane %v4313, 1
        %v4334 = vsel %vm2057, %v4332, %v4333
        %v4335 = vrot.slane %v4314, 1
        %v4336 = vrot.slane %v4315, 1
        %v4337 = vsel %vm2057, %v4335, %v4336
        %v4338 = vrot.slane %v4316, 1
        %v4339 = vrot.slane %v4317, 1
        %v4340 = vsel %vm2057, %v4338, %v4339
        %v4341 = vrot.slane %v4318, 1
        %v4342 = vrot.slane %v4319, 1
        %v4343 = vsel %vm2057, %v4341, %v4342
        %4352 = vst.msk [vmem:[%s3125 + $0x10] sm:$0xff] %vm1147, %v4322
        %4353 = vst.msk [vmem:[%s3125 + $0x28] sm:$0xff] %vm1147, %v4325
        %4354 = vst.msk [vmem:[%s3125 + $0x40] sm:$0xff] %vm1147, %v4328
        %4355 = vst.msk [vmem:[%s3125 + $0x58] sm:$0xff] %vm1147, %v4331
        %4356 = vst.msk [vmem:[%s3125 + $0x70] sm:$0xff] %vm1147, %v4334
        %4357 = vst.msk [vmem:[%s3125 + $0x88] sm:$0xff] %vm1147, %v4337
        %4358 = vst.msk [vmem:[%s3125 + $0xa0] sm:$0xff] %vm1147, %v4340
        %4359 = vst.msk [vmem:[%s3125 + $0xb8] sm:$0xff] %vm1147, %v4343
        %v4360 = vld [vmem:[%s3125] sm:$0xff]
        %v4361 = vld [vmem:[%s3125 + $0x8] sm:$0xff]
        %v4362 = vld [vmem:[%s3125 + $0x10] sm:$0xff]
        %v4363 = vld [vmem:[%s3125 + $0x18] sm:$0xff]
        %v4364 = vld [vmem:[%s3125 + $0x20] sm:$0xff]
        %v4365 = vld [vmem:[%s3125 + $0x28] sm:$0xff]
        %v4366 = vld [vmem:[%s3125 + $0x30] sm:$0xff]
        %v4367 = vld [vmem:[%s3125 + $0x38] sm:$0xff]
        %v4368 = vld [vmem:[%s3125 + $0x40] sm:$0xff]
        %v4369 = vld [vmem:[%s3125 + $0x48] sm:$0xff]
        %v4370 = vld [vmem:[%s3125 + $0x50] sm:$0xff]
        %v4371 = vld [vmem:[%s3125 + $0x58] sm:$0xff]
        %v4372 = vld [vmem:[%s3125 + $0x60] sm:$0xff]
        %v4373 = vld [vmem:[%s3125 + $0x68] sm:$0xff]
        %v4374 = vld [vmem:[%s3125 + $0x70] sm:$0xff]
        %v4375 = vld [vmem:[%s3125 + $0x78] sm:$0xff]
        %v4376 = vld [vmem:[%s3125 + $0x80] sm:$0xff]
        %v4377 = vld [vmem:[%s3125 + $0x88] sm:$0xff]
        %v4378 = vld [vmem:[%s3125 + $0x90] sm:$0xff]
        %v4379 = vld [vmem:[%s3125 + $0x98] sm:$0xff]
        %v4380 = vld [vmem:[%s3125 + $0xa0] sm:$0xff]
        %v4381 = vld [vmem:[%s3125 + $0xa8] sm:$0xff]
        %v4382 = vld [vmem:[%s3125 + $0xb0] sm:$0xff]
        %v4383 = vld [vmem:[%s3125 + $0xb8] sm:$0xff]
        %v4384 = vld [vmem:[%s1] sm:$0xf]
        %v4385 = vld [vmem:[%s1 + $0x4] sm:$0xf]
        %v4386 = vld [vmem:[%s1 + $0x8] sm:$0xf]
        %v4387 = vld [vmem:[%s1 + $0xc] sm:$0xf]
        %v4388 = vld [vmem:[%s1 + $0x10] sm:$0xf]
        %v4389 = vld [vmem:[%s1 + $0x14] sm:$0xf]
        %v4390 = vld [vmem:[%s1 + $0x18] sm:$0xf]
        %v4391 = vld [vmem:[%s1 + $0x1c] sm:$0xf]
        %v4392 = vld [vmem:[%s1 + $0x20] sm:$0xf]
        %v4393 = vld [vmem:[%s1 + $0x24] sm:$0xf]
        %v4394 = vld [vmem:[%s1 + $0x28] sm:$0xf]
        %v4395 = vld [vmem:[%s1 + $0x2c] sm:$0xf]
        %v4396 = vld [vmem:[%s1 + $0x30] sm:$0xf]
        %v4397 = vld [vmem:[%s1 + $0x34] sm:$0xf]
        %v4398 = vld [vmem:[%s1 + $0x38] sm:$0xf]
        %v4399 = vld [vmem:[%s1 + $0x3c] sm:$0xf]
        %v4400 = vld [vmem:[%s1 + $0x40] sm:$0xf]
        %v4401 = vld [vmem:[%s1 + $0x44] sm:$0xf]
        %v4402 = vld [vmem:[%s1 + $0x48] sm:$0xf]
        %v4403 = vld [vmem:[%s1 + $0x4c] sm:$0xf]
        %v4404 = vld [vmem:[%s1 + $0x50] sm:$0xf]
        %v4405 = vld [vmem:[%s1 + $0x54] sm:$0xf]
        %v4406 = vld [vmem:[%s1 + $0x58] sm:$0xf]
        %v4407 = vld [vmem:[%s1 + $0x5c] sm:$0xf]
        %v4408 = vld [vmem:[%s1 + $0x60] sm:$0xf]
        %v4409 = vld [vmem:[%s1 + $0x64] sm:$0xf]
        %v4410 = vld [vmem:[%s1 + $0x68] sm:$0xf]
        %v4411 = vld [vmem:[%s1 + $0x6c] sm:$0xf]
        %v4412 = vld [vmem:[%s1 + $0x70] sm:$0xf]
        %v4413 = vld [vmem:[%s1 + $0x74] sm:$0xf]
        %v4414 = vld [vmem:[%s1 + $0x78] sm:$0xf]
        %v4415 = vld [vmem:[%s1 + $0x7c] sm:$0xf]
        %v4416 = vld [vmem:[%s1 + $0x80] sm:$0xf]
        %v4417 = vld [vmem:[%s1 + $0x84] sm:$0xf]
        %v4418 = vld [vmem:[%s1 + $0x88] sm:$0xf]
        %v4419 = vld [vmem:[%s1 + $0x8c] sm:$0xf]
        %v4420 = vld [vmem:[%s2] sm:$0x1]
        %v4422 = vlaneseq
        %v4423 = vshrl.u32 %v4422, 7
        %v4424 = vsub.s32 0, %v4423
        %v4425 = vrot.slane %v4420, %v4424
        %v4463 = vunpack.c.l.b16 %v4384
        %v4464 = vunpack.c.l.b16 %v4385
        %v4465 = vunpack.c.l.b16 %v4386
        %v4466 = vunpack.c.l.b16 %v4387
        %v4467 = vunpack.c.l.b16 %v4388
        %v4468 = vunpack.c.l.b16 %v4389
        %v4469 = vunpack.c.l.b16 %v4390
        %v4470 = vunpack.c.l.b16 %v4391
        %v4471 = vunpack.c.l.b16 %v4392
        %v4472 = vunpack.c.l.b16 %v4393
        %v4473 = vunpack.c.l.b16 %v4394
        %v4474 = vunpack.c.l.b16 %v4395
        %v4475 = vunpack.c.l.b16 %v4396
        %v4476 = vunpack.c.l.b16 %v4397
        %v4477 = vunpack.c.l.b16 %v4398
        %v4478 = vunpack.c.l.b16 %v4399
        %v4479 = vunpack.c.l.b16 %v4400
        %v4480 = vunpack.c.l.b16 %v4401
        %v4481 = vunpack.c.l.b16 %v4402
        %v4482 = vunpack.c.l.b16 %v4403
        %v4483 = vunpack.c.l.b16 %v4404
        %v4484 = vunpack.c.l.b16 %v4405
        %v4485 = vunpack.c.l.b16 %v4406
        %v4486 = vunpack.c.l.b16 %v4407
        %v4487 = vunpack.c.l.b16 %v4408
        %v4488 = vunpack.c.l.b16 %v4409
        %v4489 = vunpack.c.l.b16 %v4410
        %v4490 = vunpack.c.l.b16 %v4411
        %v4491 = vunpack.c.l.b16 %v4412
        %v4492 = vunpack.c.l.b16 %v4413
        %v4493 = vunpack.c.l.b16 %v4414
        %v4494 = vunpack.c.l.b16 %v4415
        %v4495 = vunpack.c.l.b16 %v4416
        %v4496 = vunpack.c.l.b16 %v4417
        %v4497 = vunpack.c.l.b16 %v4418
        %v4498 = vunpack.c.l.b16 %v4419
        %v4499 = vpack.c.b16 %v4464, %v4463
        %v4500 = vpack.c.b16 %v4466, %v4465
        %v4501 = vpack.c.b16 %v4468, %v4467
        %v4502 = vpack.c.b16 %v4470, %v4469
        %v4503 = vpack.c.b16 %v4472, %v4471
        %v4504 = vpack.c.b16 %v4474, %v4473
        %v4505 = vpack.c.b16 %v4476, %v4475
        %v4506 = vpack.c.b16 %v4478, %v4477
        %v4507 = vpack.c.b16 %v4480, %v4479
        %v4508 = vpack.c.b16 %v4482, %v4481
        %v4509 = vpack.c.b16 %v4484, %v4483
        %v4510 = vpack.c.b16 %v4486, %v4485
        %v4511 = vpack.c.b16 %v4488, %v4487
        %v4512 = vpack.c.b16 %v4490, %v4489
        %v4513 = vpack.c.b16 %v4492, %v4491
        %v4514 = vpack.c.b16 %v4494, %v4493
        %v4515 = vpack.c.b16 %v4496, %v4495
        %v4516 = vpack.c.b16 %v4498, %v4497
        %v4536 = vsel %vm1147, %v4362, 0
        %v4539 = vsel %vm1147, %v4365, 0
        %v4542 = vsel %vm1147, %v4368, 0
        %v4545 = vsel %vm1147, %v4371, 0
        %v4548 = vsel %vm1147, %v4374, 0
        %v4551 = vsel %vm1147, %v4377, 0
        %v4554 = vsel %vm1147, %v4380, 0
        %v4557 = vsel %vm1147, %v4383, 0
        %4559 = vmatprep.subr.bf16.mxu0 0
        %4560 = vmatpush1.bf16.msra.mxu0 %v4499
        %4561 = vmatprep.subr.bf16.mxu0 0
        %4562 = vmatpush1.bf16.msra.mxu0 %v4500
        %4563 = vmatprep.subr.bf16.mxu0 0
        %4564 = vmatpush1.bf16.msra.mxu0 %v4501
        %4565 = vmatprep.subr.bf16.mxu0 0
        %4566 = vmatpush1.bf16.msra.mxu0 %v4502
        %4567 = vmatprep.subr.bf16.mxu0 0
        %4568 = vmatpush1.bf16.msra.mxu0 %v4503
        %4569 = vmatprep.subr.bf16.mxu0 0
        %4570 = vmatpush1.bf16.msra.mxu0 %v4504
        %4571 = vmatprep.subr.bf16.mxu0 0
        %4572 = vmatpush1.bf16.msra.mxu0 %v4505
        %4573 = vmatprep.subr.bf16.mxu0 0
        %4574 = vmatpush1.bf16.msra.mxu0 %v4506
        %4575 = vmatprep.subr.bf16.mxu0 0
        %4576 = vmatpush1.bf16.msra.mxu0 %v4507
        %4577 = vmatprep.subr.bf16.mxu0 0
        %4578 = vmatpush1.bf16.msra.mxu0 %v4508
        %4579 = vmatprep.subr.bf16.mxu0 0
        %4580 = vmatpush1.bf16.msra.mxu0 %v4509
        %4581 = vmatprep.subr.bf16.mxu0 0
        %4582 = vmatpush1.bf16.msra.mxu0 %v4510
        %4583 = vmatprep.subr.bf16.mxu0 0
        %4584 = vmatpush1.bf16.msra.mxu0 %v4511
        %4585 = vmatprep.subr.bf16.mxu0 0
        %4586 = vmatpush1.bf16.msra.mxu0 %v4512
        %4587 = vmatprep.subr.bf16.mxu0 0
        %4588 = vmatpush1.bf16.msra.mxu0 %v4513
        %4589 = vmatprep.subr.bf16.mxu0 0
        %4590 = vmatpush1.bf16.msra.mxu0 %v4514
        %4591 = vmatprep.mubr.bf16.mxu0 %v4361
        %4592 = vmatmul.mubr.bf16.gmra.mrb[0].mxu0 %v4360
        %v4593 = vpop.f32.mrb[0].mxu0
        %v4594 = vadd.f32 %v4425, %v4593
        %v4595 = vpop.f32.mrb[0].mxu0
        %v4596 = vpop.f32.mrb[0].mxu0
        %v4597 = vadd.f32 %v4425, %v4596
        %v4598 = vpop.f32.mrb[0].mxu0
        %4599 = vmatprep.mubr.bf16.mxu0 %v4364
        %4600 = vmatmul.mubr.bf16.gmra.mrb[0].mxu0 %v4363
        %v4601 = vpop.f32.mrb[0].mxu0
        %v4602 = vadd.f32 %v4425, %v4601
        %v4603 = vpop.f32.mrb[0].mxu0
        %v4604 = vpop.f32.mrb[0].mxu0
        %v4605 = vadd.f32 %v4425, %v4604
        %v4606 = vpop.f32.mrb[0].mxu0
        %4607 = vmatprep.mubr.bf16.mxu0 %v4367
        %4608 = vmatmul.mubr.bf16.gmra.mrb[0].mxu0 %v4366
        %v4609 = vpop.f32.mrb[0].mxu0
        %v4610 = vadd.f32 %v4425, %v4609
        %v4611 = vpop.f32.mrb[0].mxu0
        %v4612 = vpop.f32.mrb[0].mxu0
        %v4613 = vadd.f32 %v4425, %v4612
        %v4614 = vpop.f32.mrb[0].mxu0
        %4615 = vmatprep.mubr.bf16.mxu0 %v4370
        %4616 = vmatmul.mubr.bf16.gmra.mrb[0].mxu0 %v4369
        %v4617 = vpop.f32.mrb[0].mxu0
        %v4618 = vadd.f32 %v4425, %v4617
        %v4619 = vpop.f32.mrb[0].mxu0
        %v4620 = vpop.f32.mrb[0].mxu0
        %v4621 = vadd.f32 %v4425, %v4620
        %v4622 = vpop.f32.mrb[0].mxu0
        %4623 = vmatprep.mubr.bf16.mxu0 %v4373
        %4624 = vmatmul.mubr.bf16.gmra.mrb[0].mxu0 %v4372
        %v4625 = vpop.f32.mrb[0].mxu0
        %v4626 = vadd.f32 %v4425, %v4625
        %v4627 = vpop.f32.mrb[0].mxu0
        %v4628 = vpop.f32.mrb[0].mxu0
        %v4629 = vadd.f32 %v4425, %v4628
        %v4630 = vpop.f32.mrb[0].mxu0
        %4631 = vmatprep.mubr.bf16.mxu0 %v4376
        %4632 = vmatmul.mubr.bf16.gmra.mrb[0].mxu0 %v4375
        %v4633 = vpop.f32.mrb[0].mxu0
        %v4634 = vadd.f32 %v4425, %v4633
        %v4635 = vpop.f32.mrb[0].mxu0
        %v4636 = vpop.f32.mrb[0].mxu0
        %v4637 = vadd.f32 %v4425, %v4636
        %v4638 = vpop.f32.mrb[0].mxu0
        %4639 = vmatprep.mubr.bf16.mxu0 %v4379
        %4640 = vmatmul.mubr.bf16.gmra.mrb[0].mxu0 %v4378
        %v4641 = vpop.f32.mrb[0].mxu0
        %v4642 = vadd.f32 %v4425, %v4641
        %v4643 = vpop.f32.mrb[0].mxu0
        %v4644 = vpop.f32.mrb[0].mxu0
        %v4645 = vadd.f32 %v4425, %v4644
        %v4646 = vpop.f32.mrb[0].mxu0
        %4647 = vmatprep.mubr.bf16.mxu0 %v4382
        %4648 = vmatmul.mubr.bf16.gmra.mrb[0].mxu0 %v4381
        %v4649 = vpop.f32.mrb[0].mxu0
        %v4650 = vadd.f32 %v4425, %v4649
        %v4651 = vpop.f32.mrb[0].mxu0
        %v4652 = vpop.f32.mrb[0].mxu0
        %v4653 = vadd.f32 %v4425, %v4652
        %v4654 = vpop.f32.mrb[0].mxu0
        %4655 = vdwg.mxu0
        %4656 = vmatprep.subr.bf16.mxu0 0
        %4657 = vmatpush1.bf16.msra.mxu0 %v4515
        %4658 = vmatprep.subr.bf16.mxu0 0
        %4659 = vmatpush1.bf16.msra.mxu0 %v4516
        %4660 = vmatprep.subr.bf16.mxu0 0
        %4661 = vmatpush1.bf16.msra.mxu0 0
        %4662 = vmatprep.subr.bf16.mxu0 0
        %4663 = vmatpush1.bf16.msra.mxu0 0
        %4664 = vmatprep.subr.bf16.mxu0 0
        %4665 = vmatpush1.bf16.msra.mxu0 0
        %4666 = vmatprep.subr.bf16.mxu0 0
        %4667 = vmatpush1.bf16.msra.mxu0 0
        %4668 = vmatprep.subr.bf16.mxu0 0
        %4669 = vmatpush1.bf16.msra.mxu0 0
        %4670 = vmatprep.subr.bf16.mxu0 0
        %4671 = vmatpush1.bf16.msra.mxu0 0
        %4672 = vmatprep.subr.bf16.mxu0 0
        %4673 = vmatpush1.bf16.msra.mxu0 0
        %4674 = vmatprep.subr.bf16.mxu0 0
        %4675 = vmatpush1.bf16.msra.mxu0 0
        %4676 = vmatprep.subr.bf16.mxu0 0
        %4677 = vmatpush1.bf16.msra.mxu0 0
        %4678 = vmatprep.subr.bf16.mxu0 0
        %4679 = vmatpush1.bf16.msra.mxu0 0
        %4680 = vmatprep.subr.bf16.mxu0 0
        %4681 = vmatpush1.bf16.msra.mxu0 0
        %4682 = vmatprep.subr.bf16.mxu0 0
        %4683 = vmatpush1.bf16.msra.mxu0 0
        %4684 = vmatprep.subr.bf16.mxu0 0
        %4685 = vmatpush1.bf16.msra.mxu0 0
        %4686 = vmatprep.subr.bf16.mxu0 0
        %4687 = vmatpush1.bf16.msra.mxu0 0
        %4688 = vmatprep.mubr.bf16.mxu0 0
        %4689 = vmatmul.mubr.bf16.gmra.mrb[0].mxu0 %v4536
        %v4690 = vpop.f32.mrb[0].mxu0
        %v4691 = vadd.f32 %v4594, %v4690
        %v4692 = vpop.f32.mrb[0].mxu0
        %v4693 = vpop.f32.mrb[0].mxu0
        %v4694 = vadd.f32 %v4597, %v4693
        %v4695 = vpop.f32.mrb[0].mxu0
        %4696 = vmatprep.mubr.bf16.mxu0 0
        %4697 = vmatmul.mubr.bf16.gmra.mrb[0].mxu0 %v4539
        %v4698 = vpop.f32.mrb[0].mxu0
        %v4699 = vadd.f32 %v4602, %v4698
        %v4700 = vpop.f32.mrb[0].mxu0
        %v4701 = vpop.f32.mrb[0].mxu0
        %v4702 = vadd.f32 %v4605, %v4701
        %v4703 = vpop.f32.mrb[0].mxu0
        %4704 = vmatprep.mubr.bf16.mxu0 0
        %4705 = vmatmul.mubr.bf16.gmra.mrb[0].mxu0 %v4542
        %v4706 = vpop.f32.mrb[0].mxu0
        %v4707 = vadd.f32 %v4610, %v4706
        %v4708 = vpop.f32.mrb[0].mxu0
        %v4709 = vpop.f32.mrb[0].mxu0
        %v4710 = vadd.f32 %v4613, %v4709
        %v4711 = vpop.f32.mrb[0].mxu0
        %4712 = vmatprep.mubr.bf16.mxu0 0
        %4713 = vmatmul.mubr.bf16.gmra.mrb[0].mxu0 %v4545
        %v4714 = vpop.f32.mrb[0].mxu0
        %v4715 = vadd.f32 %v4618, %v4714
        %v4716 = vpop.f32.mrb[0].mxu0
        %v4717 = vpop.f32.mrb[0].mxu0
        %v4718 = vadd.f32 %v4621, %v4717
        %v4719 = vpop.f32.mrb[0].mxu0
        %4720 = vmatprep.mubr.bf16.mxu0 0
        %4721 = vmatmul.mubr.bf16.gmra.mrb[0].mxu0 %v4548
        %v4722 = vpop.f32.mrb[0].mxu0
        %v4723 = vadd.f32 %v4626, %v4722
        %v4724 = vpop.f32.mrb[0].mxu0
        %v4725 = vpop.f32.mrb[0].mxu0
        %v4726 = vadd.f32 %v4629, %v4725
        %v4727 = vpop.f32.mrb[0].mxu0
        %4728 = vmatprep.mubr.bf16.mxu0 0
        %4729 = vmatmul.mubr.bf16.gmra.mrb[0].mxu0 %v4551
        %v4730 = vpop.f32.mrb[0].mxu0
        %v4731 = vadd.f32 %v4634, %v4730
        %v4732 = vpop.f32.mrb[0].mxu0
        %v4733 = vpop.f32.mrb[0].mxu0
        %v4734 = vadd.f32 %v4637, %v4733
        %v4735 = vpop.f32.mrb[0].mxu0
        %4736 = vmatprep.mubr.bf16.mxu0 0
        %4737 = vmatmul.mubr.bf16.gmra.mrb[0].mxu0 %v4554
        %v4738 = vpop.f32.mrb[0].mxu0
        %v4739 = vadd.f32 %v4642, %v4738
        %v4740 = vpop.f32.mrb[0].mxu0
        %v4741 = vpop.f32.mrb[0].mxu0
        %v4742 = vadd.f32 %v4645, %v4741
        %v4743 = vpop.f32.mrb[0].mxu0
        %4744 = vmatprep.mubr.bf16.mxu0 0
        %4745 = vmatmul.mubr.bf16.gmra.mrb[0].mxu0 %v4557
        %v4746 = vpop.f32.mrb[0].mxu0
        %v4747 = vadd.f32 %v4650, %v4746
        %v4748 = vpop.f32.mrb[0].mxu0
        %v4749 = vpop.f32.mrb[0].mxu0
        %v4750 = vadd.f32 %v4653, %v4749
        %v4751 = vpop.f32.mrb[0].mxu0
        %4752 = vdwg.mxu0
        %v4753 = vmax.f32 %v4691, 0.0
        %v4754 = vmax.f32 %v4694, 0.0
        %v4755 = vmax.f32 %v4699, 0.0
        %v4756 = vmax.f32 %v4702, 0.0
        %v4757 = vmax.f32 %v4707, 0.0
        %v4758 = vmax.f32 %v4710, 0.0
        %v4759 = vmax.f32 %v4715, 0.0
        %v4760 = vmax.f32 %v4718, 0.0
        %v4761 = vmax.f32 %v4723, 0.0
        %v4762 = vmax.f32 %v4726, 0.0
        %v4763 = vmax.f32 %v4731, 0.0
        %v4764 = vmax.f32 %v4734, 0.0
        %v4765 = vmax.f32 %v4739, 0.0
        %v4766 = vmax.f32 %v4742, 0.0
        %v4767 = vmax.f32 %v4747, 0.0
        %v4768 = vmax.f32 %v4750, 0.0
        %v4769 = vpack.c.bf16 %v4754, %v4753
        %v4770 = vpack.c.bf16 %v4756, %v4755
        %v4771 = vpack.c.bf16 %v4758, %v4757
        %v4772 = vpack.c.bf16 %v4760, %v4759
        %v4773 = vpack.c.bf16 %v4762, %v4761
        %v4774 = vpack.c.bf16 %v4764, %v4763
        %v4775 = vpack.c.bf16 %v4766, %v4765
        %v4776 = vpack.c.bf16 %v4768, %v4767
        %v4785 = vunpack.c.l.b16 %v4769
        %v4786 = vunpack.c.h.b16 %v4769
        %v4787 = vunpack.c.l.b16 %v4770
        %v4788 = vunpack.c.h.b16 %v4770
        %v4789 = vunpack.c.l.b16 %v4771
        %v4790 = vunpack.c.h.b16 %v4771
        %v4791 = vunpack.c.l.b16 %v4772
        %v4792 = vunpack.c.h.b16 %v4772
        %v4793 = vunpack.c.l.b16 %v4773
        %v4794 = vunpack.c.h.b16 %v4773
        %v4795 = vunpack.c.l.b16 %v4774
        %v4796 = vunpack.c.h.b16 %v4774
        %v4797 = vunpack.c.l.b16 %v4775
        %v4798 = vunpack.c.h.b16 %v4775
        %v4799 = vunpack.c.l.b16 %v4776
        %v4800 = vunpack.c.h.b16 %v4776
        %v4801 = vpack.c.b16 %v4785, %v4785
        %v4802 = vpack.c.b16 %v4786, %v4786
        %v4803 = vpack.c.b16 %v4787, %v4787
        %v4804 = vpack.c.b16 %v4788, %v4788
        %v4805 = vpack.c.b16 %v4789, %v4789
        %v4806 = vpack.c.b16 %v4790, %v4790
        %v4807 = vpack.c.b16 %v4791, %v4791
        %v4808 = vpack.c.b16 %v4792, %v4792
        %v4809 = vpack.c.b16 %v4793, %v4793
        %v4810 = vpack.c.b16 %v4794, %v4794
        %v4811 = vpack.c.b16 %v4795, %v4795
        %v4812 = vpack.c.b16 %v4796, %v4796
        %v4813 = vpack.c.b16 %v4797, %v4797
        %v4814 = vpack.c.b16 %v4798, %v4798
        %v4815 = vpack.c.b16 %v4799, %v4799
        %v4816 = vpack.c.b16 %v4800, %v4800
        %v4818 = vshrl.u32 %v4801, 16
        %v4820 = vrot.slane %v4818, 7
        %v4821 = vshll.u32 %v4801, 16
        %v4823 = vor.u32 %v4820, %v4821
        %v4824 = vrot.slane %v4820, 4
        %v4826 = vshrl.u32 %v4802, 16
        %v4828 = vrot.slane %v4826, 7
        %v4829 = vshll.u32 %v4802, 16
        %v4831 = vor.u32 %v4828, %v4829
        %v4832 = vsel %vm574, %v4824, %v4831
        %v4833 = vrot.slane %v4828, 4
        %v4835 = vshrl.u32 %v4803, 16
        %v4837 = vrot.slane %v4835, 7
        %v4838 = vshll.u32 %v4803, 16
        %v4840 = vor.u32 %v4837, %v4838
        %v4841 = vrot.slane %v4837, 4
        %v4843 = vshrl.u32 %v4804, 16
        %v4845 = vrot.slane %v4843, 7
        %v4846 = vshll.u32 %v4804, 16
        %v4848 = vor.u32 %v4845, %v4846
        %v4849 = vsel %vm574, %v4841, %v4848
        %v4850 = vrot.slane %v4845, 4
        %v4852 = vshrl.u32 %v4805, 16
        %v4854 = vrot.slane %v4852, 7
        %v4855 = vshll.u32 %v4805, 16
        %v4857 = vor.u32 %v4854, %v4855
        %v4858 = vrot.slane %v4854, 4
        %v4860 = vshrl.u32 %v4806, 16
        %v4862 = vrot.slane %v4860, 7
        %v4863 = vshll.u32 %v4806, 16
        %v4865 = vor.u32 %v4862, %v4863
        %v4866 = vsel %vm574, %v4858, %v4865
        %v4867 = vrot.slane %v4862, 4
        %v4869 = vshrl.u32 %v4807, 16
        %v4871 = vrot.slane %v4869, 7
        %v4872 = vshll.u32 %v4807, 16
        %v4874 = vor.u32 %v4871, %v4872
        %v4875 = vrot.slane %v4871, 4
        %v4877 = vshrl.u32 %v4808, 16
        %v4879 = vrot.slane %v4877, 7
        %v4880 = vshll.u32 %v4808, 16
        %v4882 = vor.u32 %v4879, %v4880
        %v4883 = vsel %vm574, %v4875, %v4882
        %v4884 = vrot.slane %v4879, 4
        %v4886 = vshrl.u32 %v4809, 16
        %v4888 = vrot.slane %v4886, 7
        %v4889 = vshll.u32 %v4809, 16
        %v4891 = vor.u32 %v4888, %v4889
        %v4892 = vrot.slane %v4888, 4
        %v4894 = vshrl.u32 %v4810, 16
        %v4896 = vrot.slane %v4894, 7
        %v4897 = vshll.u32 %v4810, 16
        %v4899 = vor.u32 %v4896, %v4897
        %v4900 = vsel %vm574, %v4892, %v4899
        %v4901 = vrot.slane %v4896, 4
        %v4903 = vshrl.u32 %v4811, 16
        %v4905 = vrot.slane %v4903, 7
        %v4906 = vshll.u32 %v4811, 16
        %v4908 = vor.u32 %v4905, %v4906
        %v4909 = vrot.slane %v4905, 4
        %v4911 = vshrl.u32 %v4812, 16
        %v4913 = vrot.slane %v4911, 7
        %v4914 = vshll.u32 %v4812, 16
        %v4916 = vor.u32 %v4913, %v4914
        %v4917 = vsel %vm574, %v4909, %v4916
        %v4918 = vrot.slane %v4913, 4
        %v4920 = vshrl.u32 %v4813, 16
        %v4922 = vrot.slane %v4920, 7
        %v4923 = vshll.u32 %v4813, 16
        %v4925 = vor.u32 %v4922, %v4923
        %v4926 = vrot.slane %v4922, 4
        %v4928 = vshrl.u32 %v4814, 16
        %v4930 = vrot.slane %v4928, 7
        %v4931 = vshll.u32 %v4814, 16
        %v4933 = vor.u32 %v4930, %v4931
        %v4934 = vsel %vm574, %v4926, %v4933
        %v4935 = vrot.slane %v4930, 4
        %v4937 = vshrl.u32 %v4815, 16
        %v4939 = vrot.slane %v4937, 7
        %v4940 = vshll.u32 %v4815, 16
        %v4942 = vor.u32 %v4939, %v4940
        %v4943 = vrot.slane %v4939, 4
        %v4945 = vshrl.u32 %v4816, 16
        %v4947 = vrot.slane %v4945, 7
        %v4948 = vshll.u32 %v4816, 16
        %v4950 = vor.u32 %v4947, %v4948
        %v4951 = vsel %vm574, %v4943, %v4950
        %v4952 = vrot.slane %v4947, 4
        %s4977 = scalar_lea.vmem [#allocation3], 108
        %v4978 = vld [vmem:[%s4977] sm:$0xf]
        %v4979 = vsel %vm897, %v4823, %v4978
        %4980 = vst [vmem:[%s4977] sm:$0xf] %v4979
        %4981 = vst.msk [vmem:[%s4977 + $0x4] sm:$0xf] %vm901, %v4832
        %v4982 = vld [vmem:[%s4977 + $0x8] sm:$0x1]
        %v4983 = vsel %vm226, %v4833, %v4982
        %4984 = vst [vmem:[%s4977 + $0x8] sm:$0x1] %v4983
        %v4985 = vld [vmem:[%s4977 + $0xc] sm:$0xf]
        %v4986 = vsel %vm897, %v4840, %v4985
        %4987 = vst [vmem:[%s4977 + $0xc] sm:$0xf] %v4986
        %4988 = vst.msk [vmem:[%s4977 + $0x10] sm:$0xf] %vm901, %v4849
        %v4989 = vld [vmem:[%s4977 + $0x14] sm:$0x1]
        %v4990 = vsel %vm226, %v4850, %v4989
        %4991 = vst [vmem:[%s4977 + $0x14] sm:$0x1] %v4990
        %v4992 = vld [vmem:[%s4977 + $0x18] sm:$0xf]
        %v4993 = vsel %vm897, %v4857, %v4992
        %4994 = vst [vmem:[%s4977 + $0x18] sm:$0xf] %v4993
        %4995 = vst.msk [vmem:[%s4977 + $0x1c] sm:$0xf] %vm901, %v4866
        %v4996 = vld [vmem:[%s4977 + $0x20] sm:$0x1]
        %v4997 = vsel %vm226, %v4867, %v4996
        %4998 = vst [vmem:[%s4977 + $0x20] sm:$0x1] %v4997
        %v4999 = vld [vmem:[%s4977 + $0x24] sm:$0xf]
        %v5000 = vsel %vm897, %v4874, %v4999
        %5001 = vst [vmem:[%s4977 + $0x24] sm:$0xf] %v5000
        %5002 = vst.msk [vmem:[%s4977 + $0x28] sm:$0xf] %vm901, %v4883
        %v5003 = vld [vmem:[%s4977 + $0x2c] sm:$0x1]
        %v5004 = vsel %vm226, %v4884, %v5003
        %5005 = vst [vmem:[%s4977 + $0x2c] sm:$0x1] %v5004
        %v5006 = vld [vmem:[%s4977 + $0x30] sm:$0xf]
        %v5007 = vsel %vm897, %v4891, %v5006
        %5008 = vst [vmem:[%s4977 + $0x30] sm:$0xf] %v5007
        %5009 = vst.msk [vmem:[%s4977 + $0x34] sm:$0xf] %vm901, %v4900
        %v5010 = vld [vmem:[%s4977 + $0x38] sm:$0x1]
        %v5011 = vsel %vm226, %v4901, %v5010
        %5012 = vst [vmem:[%s4977 + $0x38] sm:$0x1] %v5011
        %v5013 = vld [vmem:[%s4977 + $0x3c] sm:$0xf]
        %v5014 = vsel %vm897, %v4908, %v5013
        %5015 = vst [vmem:[%s4977 + $0x3c] sm:$0xf] %v5014
        %5016 = vst.msk [vmem:[%s4977 + $0x40] sm:$0xf] %vm901, %v4917
        %v5017 = vld [vmem:[%s4977 + $0x44] sm:$0x1]
        %v5018 = vsel %vm226, %v4918, %v5017
        %5019 = vst [vmem:[%s4977 + $0x44] sm:$0x1] %v5018
        %v5020 = vld [vmem:[%s4977 + $0x48] sm:$0xf]
        %v5021 = vsel %vm897, %v4925, %v5020
        %5022 = vst [vmem:[%s4977 + $0x48] sm:$0xf] %v5021
        %5023 = vst.msk [vmem:[%s4977 + $0x4c] sm:$0xf] %vm901, %v4934
        %v5024 = vld [vmem:[%s4977 + $0x50] sm:$0x1]
        %v5025 = vsel %vm226, %v4935, %v5024
        %5026 = vst [vmem:[%s4977 + $0x50] sm:$0x1] %v5025
        %v5027 = vld [vmem:[%s4977 + $0x54] sm:$0xf]
        %v5028 = vsel %vm897, %v4942, %v5027
        %5029 = vst [vmem:[%s4977 + $0x54] sm:$0xf] %v5028
        %5030 = vst.msk [vmem:[%s4977 + $0x58] sm:$0xf] %vm901, %v4951
        %v5031 = vld [vmem:[%s4977 + $0x5c] sm:$0x1]
        %v5032 = vsel %vm226, %v4952, %v5031
        %5033 = vst [vmem:[%s4977 + $0x5c] sm:$0x1] %v5032
        %s5034 = scalar_lea.vmem [#allocation3], 192
        %v5035 = vld [vmem:[%s5034] sm:$0xf]
        %v5036 = vld [vmem:[%s5034 + $0x4] sm:$0xf]
        %v5037 = vld [vmem:[%s5034 + $0x8] sm:$0x1]
        %5038 = vst.msk [vmem:[#allocation3] sm:$0xf] %vm901, %v5035
        %5039 = vst.msk [vmem:[#allocation3 + $0x4] sm:$0xf] %vm901, %v5036
        %vm5040 = vcmask 253952
        %5041 = vst.msk [vmem:[#allocation3 + $0x8] sm:$0x1] %vm5040, %v5037
        %v5042 = vld [vmem:[%s3003] sm:$0xf]
        %v5043 = vld [vmem:[%s3003 + $0x4] sm:$0xf]
        %v5044 = vld [vmem:[%s3003 + $0x8] sm:$0x1]
        %s5045 = scalar_lea.vmem [#allocation3], 204
        %5046 = vst.msk [vmem:[%s5045] sm:$0xf] %vm901, %v5042
        %5047 = vst.msk [vmem:[%s5045 + $0x4] sm:$0xf] %vm901, %v5043
        %5048 = vst.msk [vmem:[%s5045 + $0x8] sm:$0x1] %vm5040, %v5044
        %v5049 = vld [vmem:[#allocation3] sm:$0xf]
        %v5050 = vld [vmem:[#allocation3 + $0x4] sm:$0xf]
        %v5051 = vld [vmem:[#allocation3 + $0xc] sm:$0xf]
        %v5052 = vld [vmem:[#allocation3 + $0x10] sm:$0xf]
        %v5053 = vld [vmem:[#allocation3 + $0x18] sm:$0xf]
        %v5054 = vld [vmem:[#allocation3 + $0x1c] sm:$0xf]
        %v5055 = vld [vmem:[#allocation3 + $0x24] sm:$0xf]
        %v5056 = vld [vmem:[#allocation3 + $0x28] sm:$0xf]
        %v5057 = vld [vmem:[#allocation3 + $0x30] sm:$0xf]
        %v5058 = vld [vmem:[#allocation3 + $0x34] sm:$0xf]
        %v5059 = vld [vmem:[#allocation3 + $0x3c] sm:$0xf]
        %v5060 = vld [vmem:[#allocation3 + $0x40] sm:$0xf]
        %v5061 = vld [vmem:[#allocation3 + $0x48] sm:$0xf]
        %v5062 = vld [vmem:[#allocation3 + $0x4c] sm:$0xf]
        %v5063 = vld [vmem:[#allocation3 + $0x54] sm:$0xf]
        %v5064 = vld [vmem:[#allocation3 + $0x58] sm:$0xf]
        %v5081 = vunpack.c.l.b16 %v5049
        %v5082 = vunpack.c.l.b16 %v5050
        %v5083 = vunpack.c.l.b16 %v5051
        %v5084 = vunpack.c.l.b16 %v5052
        %v5085 = vunpack.c.l.b16 %v5053
        %v5086 = vunpack.c.l.b16 %v5054
        %v5087 = vunpack.c.l.b16 %v5055
        %v5088 = vunpack.c.l.b16 %v5056
        %v5089 = vunpack.c.l.b16 %v5057
        %v5090 = vunpack.c.l.b16 %v5058
        %v5091 = vunpack.c.l.b16 %v5059
        %v5092 = vunpack.c.l.b16 %v5060
        %v5093 = vunpack.c.l.b16 %v5061
        %v5094 = vunpack.c.l.b16 %v5062
        %v5095 = vunpack.c.l.b16 %v5063
        %v5096 = vunpack.c.l.b16 %v5064
        %v5097 = vpack.c.b16 %v5082, %v5081
        %v5098 = vpack.c.b16 %v5084, %v5083
        %v5099 = vpack.c.b16 %v5086, %v5085
        %v5100 = vpack.c.b16 %v5088, %v5087
        %v5101 = vpack.c.b16 %v5090, %v5089
        %v5102 = vpack.c.b16 %v5092, %v5091
        %v5103 = vpack.c.b16 %v5094, %v5093
        %v5104 = vpack.c.b16 %v5096, %v5095
        %5113 = vst.msk [vmem:[#allocation4] sm:$0xff] %vm1147, %v5097
        %5114 = vst.msk [vmem:[#allocation4 + $0x18] sm:$0xff] %vm1147, %v5098
        %5115 = vst.msk [vmem:[#allocation4 + $0x30] sm:$0xff] %vm1147, %v5099
        %5116 = vst.msk [vmem:[#allocation4 + $0x48] sm:$0xff] %vm1147, %v5100
        %5117 = vst.msk [vmem:[#allocation4 + $0x60] sm:$0xff] %vm1147, %v5101
        %5118 = vst.msk [vmem:[#allocation4 + $0x78] sm:$0xff] %vm1147, %v5102
        %5119 = vst.msk [vmem:[#allocation4 + $0x90] sm:$0xff] %vm1147, %v5103
        %5120 = vst.msk [vmem:[#allocation4 + $0xa8] sm:$0xff] %vm1147, %v5104
        %v5121 = vld [vmem:[%s3003] sm:$0xf]
        %v5122 = vld [vmem:[%s3003 + $0x4] sm:$0xf]
        %v5123 = vld [vmem:[%s3003 + $0xc] sm:$0xf]
        %v5124 = vld [vmem:[%s3003 + $0x10] sm:$0xf]
        %v5125 = vld [vmem:[%s3003 + $0x18] sm:$0xf]
        %v5126 = vld [vmem:[%s3003 + $0x1c] sm:$0xf]
        %v5127 = vld [vmem:[%s3003 + $0x24] sm:$0xf]
        %v5128 = vld [vmem:[%s3003 + $0x28] sm:$0xf]
        %v5129 = vld [vmem:[%s3003 + $0x30] sm:$0xf]
        %v5130 = vld [vmem:[%s3003 + $0x34] sm:$0xf]
        %v5131 = vld [vmem:[%s3003 + $0x3c] sm:$0xf]
        %v5132 = vld [vmem:[%s3003 + $0x40] sm:$0xf]
        %v5133 = vld [vmem:[%s3003 + $0x48] sm:$0xf]
        %v5134 = vld [vmem:[%s3003 + $0x4c] sm:$0xf]
        %v5135 = vld [vmem:[%s3003 + $0x54] sm:$0xf]
        %v5136 = vld [vmem:[%s3003 + $0x58] sm:$0xf]
        %v5153 = vunpack.c.l.b16 %v5121
        %v5154 = vunpack.c.l.b16 %v5122
        %v5155 = vunpack.c.l.b16 %v5123
        %v5156 = vunpack.c.l.b16 %v5124
        %v5157 = vunpack.c.l.b16 %v5125
        %v5158 = vunpack.c.l.b16 %v5126
        %v5159 = vunpack.c.l.b16 %v5127
        %v5160 = vunpack.c.l.b16 %v5128
        %v5161 = vunpack.c.l.b16 %v5129
        %v5162 = vunpack.c.l.b16 %v5130
        %v5163 = vunpack.c.l.b16 %v5131
        %v5164 = vunpack.c.l.b16 %v5132
        %v5165 = vunpack.c.l.b16 %v5133
        %v5166 = vunpack.c.l.b16 %v5134
        %v5167 = vunpack.c.l.b16 %v5135
        %v5168 = vunpack.c.l.b16 %v5136
        %v5169 = vpack.c.b16 %v5154, %v5153
        %v5170 = vpack.c.b16 %v5156, %v5155
        %v5171 = vpack.c.b16 %v5158, %v5157
        %v5172 = vpack.c.b16 %v5160, %v5159
        %v5173 = vpack.c.b16 %v5162, %v5161
        %v5174 = vpack.c.b16 %v5164, %v5163
        %v5175 = vpack.c.b16 %v5166, %v5165
        %v5176 = vpack.c.b16 %v5168, %v5167
        %5177 = vrot.lane.b32.xlu0 %v5169, 32
        %v5178 = vpop.permute.xlu0 %5177
        %5179 = vrot.lane.b32.xlu0 %v5170, 32
        %v5180 = vpop.permute.xlu0 %5179
        %5181 = vrot.lane.b32.xlu0 %v5171, 32
        %v5182 = vpop.permute.xlu0 %5181
        %5183 = vrot.lane.b32.xlu0 %v5172, 32
        %v5184 = vpop.permute.xlu0 %5183
        %5185 = vrot.lane.b32.xlu0 %v5173, 32
        %v5186 = vpop.permute.xlu0 %5185
        %5187 = vrot.lane.b32.xlu0 %v5174, 32
        %v5188 = vpop.permute.xlu0 %5187
        %5189 = vrot.lane.b32.xlu0 %v5175, 32
        %v5190 = vpop.permute.xlu0 %5189
        %5191 = vrot.lane.b32.xlu0 %v5176, 32
        %v5192 = vpop.permute.xlu0 %5191
        %5201 = vst.msk [vmem:[#allocation4] sm:$0xff] %vm1236, %v5178
        %5202 = vst.msk [vmem:[#allocation4 + $0x18] sm:$0xff] %vm1236, %v5180
        %5203 = vst.msk [vmem:[#allocation4 + $0x30] sm:$0xff] %vm1236, %v5182
        %5204 = vst.msk [vmem:[#allocation4 + $0x48] sm:$0xff] %vm1236, %v5184
        %5205 = vst.msk [vmem:[#allocation4 + $0x60] sm:$0xff] %vm1236, %v5186
        %5206 = vst.msk [vmem:[#allocation4 + $0x78] sm:$0xff] %vm1236, %v5188
        %5207 = vst.msk [vmem:[#allocation4 + $0x90] sm:$0xff] %vm1236, %v5190
        %5208 = vst.msk [vmem:[#allocation4 + $0xa8] sm:$0xff] %vm1236, %v5192
        %s5209 = scalar_lea.vmem [#allocation3], 24
        %v5210 = vld [vmem:[%s5209] sm:$0xf]
        %v5211 = vld [vmem:[%s5209 + $0x4] sm:$0xf]
        %v5212 = vld [vmem:[%s5209 + $0xc] sm:$0xf]
        %v5213 = vld [vmem:[%s5209 + $0x10] sm:$0xf]
        %v5214 = vld [vmem:[%s5209 + $0x18] sm:$0xf]
        %v5215 = vld [vmem:[%s5209 + $0x1c] sm:$0xf]
        %v5216 = vld [vmem:[%s5209 + $0x24] sm:$0xf]
        %v5217 = vld [vmem:[%s5209 + $0x28] sm:$0xf]
        %v5218 = vld [vmem:[%s5209 + $0x30] sm:$0xf]
        %v5219 = vld [vmem:[%s5209 + $0x34] sm:$0xf]
        %v5220 = vld [vmem:[%s5209 + $0x3c] sm:$0xf]
        %v5221 = vld [vmem:[%s5209 + $0x40] sm:$0xf]
        %v5222 = vld [vmem:[%s5209 + $0x48] sm:$0xf]
        %v5223 = vld [vmem:[%s5209 + $0x4c] sm:$0xf]
        %v5224 = vld [vmem:[%s5209 + $0x54] sm:$0xf]
        %v5225 = vld [vmem:[%s5209 + $0x58] sm:$0xf]
        %v5242 = vunpack.c.l.b16 %v5210
        %v5243 = vunpack.c.l.b16 %v5211
        %v5244 = vunpack.c.l.b16 %v5212
        %v5245 = vunpack.c.l.b16 %v5213
        %v5246 = vunpack.c.l.b16 %v5214
        %v5247 = vunpack.c.l.b16 %v5215
        %v5248 = vunpack.c.l.b16 %v5216
        %v5249 = vunpack.c.l.b16 %v5217
        %v5250 = vunpack.c.l.b16 %v5218
        %v5251 = vunpack.c.l.b16 %v5219
        %v5252 = vunpack.c.l.b16 %v5220
        %v5253 = vunpack.c.l.b16 %v5221
        %v5254 = vunpack.c.l.b16 %v5222
        %v5255 = vunpack.c.l.b16 %v5223
        %v5256 = vunpack.c.l.b16 %v5224
        %v5257 = vunpack.c.l.b16 %v5225
        %v5258 = vpack.c.b16 %v5243, %v5242
        %v5259 = vpack.c.b16 %v5245, %v5244
        %v5260 = vpack.c.b16 %v5247, %v5246
        %v5261 = vpack.c.b16 %v5249, %v5248
        %v5262 = vpack.c.b16 %v5251, %v5250
        %v5263 = vpack.c.b16 %v5253, %v5252
        %v5264 = vpack.c.b16 %v5255, %v5254
        %v5265 = vpack.c.b16 %v5257, %v5256
        %5266 = vrot.lane.b32.xlu0 %v5258, 64
        %v5267 = vpop.permute.xlu0 %5266
        %5268 = vrot.lane.b32.xlu0 %v5259, 64
        %v5269 = vpop.permute.xlu0 %5268
        %5270 = vrot.lane.b32.xlu0 %v5260, 64
        %v5271 = vpop.permute.xlu0 %5270
        %5272 = vrot.lane.b32.xlu0 %v5261, 64
        %v5273 = vpop.permute.xlu0 %5272
        %5274 = vrot.lane.b32.xlu0 %v5262, 64
        %v5275 = vpop.permute.xlu0 %5274
        %5276 = vrot.lane.b32.xlu0 %v5263, 64
        %v5277 = vpop.permute.xlu0 %5276
        %5278 = vrot.lane.b32.xlu0 %v5264, 64
        %v5279 = vpop.permute.xlu0 %5278
        %5280 = vrot.lane.b32.xlu0 %v5265, 64
        %v5281 = vpop.permute.xlu0 %5280
        %5290 = vst.msk [vmem:[#allocation4] sm:$0xff] %vm1326, %v5267
        %5291 = vst.msk [vmem:[#allocation4 + $0x18] sm:$0xff] %vm1326, %v5269
        %5292 = vst.msk [vmem:[#allocation4 + $0x30] sm:$0xff] %vm1326, %v5271
        %5293 = vst.msk [vmem:[#allocation4 + $0x48] sm:$0xff] %vm1326, %v5273
        %5294 = vst.msk [vmem:[#allocation4 + $0x60] sm:$0xff] %vm1326, %v5275
        %5295 = vst.msk [vmem:[#allocation4 + $0x78] sm:$0xff] %vm1326, %v5277
        %5296 = vst.msk [vmem:[#allocation4 + $0x90] sm:$0xff] %vm1326, %v5279
        %5297 = vst.msk [vmem:[#allocation4 + $0xa8] sm:$0xff] %vm1326, %v5281
        %v5298 = vld [vmem:[#allocation3] sm:$0xf]
        %v5299 = vld [vmem:[#allocation3 + $0x4] sm:$0xf]
        %v5300 = vld [vmem:[#allocation3 + $0x8] sm:$0x1]
        %v5301 = vld [vmem:[#allocation3 + $0xc] sm:$0xf]
        %v5302 = vld [vmem:[#allocation3 + $0x10] sm:$0xf]
        %v5303 = vld [vmem:[#allocation3 + $0x14] sm:$0x1]
        %v5304 = vld [vmem:[#allocation3 + $0x18] sm:$0xf]
        %v5305 = vld [vmem:[#allocation3 + $0x1c] sm:$0xf]
        %v5306 = vld [vmem:[#allocation3 + $0x20] sm:$0x1]
        %v5307 = vld [vmem:[#allocation3 + $0x24] sm:$0xf]
        %v5308 = vld [vmem:[#allocation3 + $0x28] sm:$0xf]
        %v5309 = vld [vmem:[#allocation3 + $0x2c] sm:$0x1]
        %v5310 = vld [vmem:[#allocation3 + $0x30] sm:$0xf]
        %v5311 = vld [vmem:[#allocation3 + $0x34] sm:$0xf]
        %v5312 = vld [vmem:[#allocation3 + $0x38] sm:$0x1]
        %v5313 = vld [vmem:[#allocation3 + $0x3c] sm:$0xf]
        %v5314 = vld [vmem:[#allocation3 + $0x40] sm:$0xf]
        %v5315 = vld [vmem:[#allocation3 + $0x44] sm:$0x1]
        %v5316 = vld [vmem:[#allocation3 + $0x48] sm:$0xf]
        %v5317 = vld [vmem:[#allocation3 + $0x4c] sm:$0xf]
        %v5318 = vld [vmem:[#allocation3 + $0x50] sm:$0x1]
        %v5319 = vld [vmem:[#allocation3 + $0x54] sm:$0xf]
        %v5320 = vld [vmem:[#allocation3 + $0x58] sm:$0xf]
        %v5321 = vld [vmem:[#allocation3 + $0x5c] sm:$0x1]
        %v5346 = vunpack.c.l.b16 %v5298
        %v5347 = vunpack.c.l.b16 %v5299
        %v5348 = vunpack.c.l.b16 %v5300
        %v5349 = vunpack.c.l.b16 %v5301
        %v5350 = vunpack.c.l.b16 %v5302
        %v5351 = vunpack.c.l.b16 %v5303
        %v5352 = vunpack.c.l.b16 %v5304
        %v5353 = vunpack.c.l.b16 %v5305
        %v5354 = vunpack.c.l.b16 %v5306
        %v5355 = vunpack.c.l.b16 %v5307
        %v5356 = vunpack.c.l.b16 %v5308
        %v5357 = vunpack.c.l.b16 %v5309
        %v5358 = vunpack.c.l.b16 %v5310
        %v5359 = vunpack.c.l.b16 %v5311
        %v5360 = vunpack.c.l.b16 %v5312
        %v5361 = vunpack.c.l.b16 %v5313
        %v5362 = vunpack.c.l.b16 %v5314
        %v5363 = vunpack.c.l.b16 %v5315
        %v5364 = vunpack.c.l.b16 %v5316
        %v5365 = vunpack.c.l.b16 %v5317
        %v5366 = vunpack.c.l.b16 %v5318
        %v5367 = vunpack.c.l.b16 %v5319
        %v5368 = vunpack.c.l.b16 %v5320
        %v5369 = vunpack.c.l.b16 %v5321
        %v5370 = vpack.c.b16 %v5347, %v5346
        %v5371 = vpack.c.b16 %v5348, %v5348
        %v5372 = vpack.c.b16 %v5350, %v5349
        %v5373 = vpack.c.b16 %v5351, %v5351
        %v5374 = vpack.c.b16 %v5353, %v5352
        %v5375 = vpack.c.b16 %v5354, %v5354
        %v5376 = vpack.c.b16 %v5356, %v5355
        %v5377 = vpack.c.b16 %v5357, %v5357
        %v5378 = vpack.c.b16 %v5359, %v5358
        %v5379 = vpack.c.b16 %v5360, %v5360
        %v5380 = vpack.c.b16 %v5362, %v5361
        %v5381 = vpack.c.b16 %v5363, %v5363
        %v5382 = vpack.c.b16 %v5365, %v5364
        %v5383 = vpack.c.b16 %v5366, %v5366
        %v5384 = vpack.c.b16 %v5368, %v5367
        %v5385 = vpack.c.b16 %v5369, %v5369
        %v5387 = vshrl.u32 %v5370, 16
        %v5389 = vshll.u32 %v5370, 16
        %v5391 = vrot.slane %v5389, 1
        %v5392 = vor.u32 %v5387, %v5391
        %v5394 = vshll.u32 %v5371, 16
        %v5396 = vrot.slane %v5394, 1
        %v5397 = vsel %vm1423, %v5392, %v5396
        %v5399 = vshrl.u32 %v5372, 16
        %v5401 = vshll.u32 %v5372, 16
        %v5403 = vrot.slane %v5401, 1
        %v5404 = vor.u32 %v5399, %v5403
        %v5406 = vshll.u32 %v5373, 16
        %v5408 = vrot.slane %v5406, 1
        %v5409 = vsel %vm1423, %v5404, %v5408
        %v5411 = vshrl.u32 %v5374, 16
        %v5413 = vshll.u32 %v5374, 16
        %v5415 = vrot.slane %v5413, 1
        %v5416 = vor.u32 %v5411, %v5415
        %v5418 = vshll.u32 %v5375, 16
        %v5420 = vrot.slane %v5418, 1
        %v5421 = vsel %vm1423, %v5416, %v5420
        %v5423 = vshrl.u32 %v5376, 16
        %v5425 = vshll.u32 %v5376, 16
        %v5427 = vrot.slane %v5425, 1
        %v5428 = vor.u32 %v5423, %v5427
        %v5430 = vshll.u32 %v5377, 16
        %v5432 = vrot.slane %v5430, 1
        %v5433 = vsel %vm1423, %v5428, %v5432
        %v5435 = vshrl.u32 %v5378, 16
        %v5437 = vshll.u32 %v5378, 16
        %v5439 = vrot.slane %v5437, 1
        %v5440 = vor.u32 %v5435, %v5439
        %v5442 = vshll.u32 %v5379, 16
        %v5444 = vrot.slane %v5442, 1
        %v5445 = vsel %vm1423, %v5440, %v5444
        %v5447 = vshrl.u32 %v5380, 16
        %v5449 = vshll.u32 %v5380, 16
        %v5451 = vrot.slane %v5449, 1
        %v5452 = vor.u32 %v5447, %v5451
        %v5454 = vshll.u32 %v5381, 16
        %v5456 = vrot.slane %v5454, 1
        %v5457 = vsel %vm1423, %v5452, %v5456
        %v5459 = vshrl.u32 %v5382, 16
        %v5461 = vshll.u32 %v5382, 16
        %v5463 = vrot.slane %v5461, 1
        %v5464 = vor.u32 %v5459, %v5463
        %v5466 = vshll.u32 %v5383, 16
        %v5468 = vrot.slane %v5466, 1
        %v5469 = vsel %vm1423, %v5464, %v5468
        %v5471 = vshrl.u32 %v5384, 16
        %v5473 = vshll.u32 %v5384, 16
        %v5475 = vrot.slane %v5473, 1
        %v5476 = vor.u32 %v5471, %v5475
        %v5478 = vshll.u32 %v5385, 16
        %v5480 = vrot.slane %v5478, 1
        %v5481 = vsel %vm1423, %v5476, %v5480
        %5482 = vrot.lane.b32.xlu0 %v5397, 96
        %v5483 = vpop.permute.xlu0 %5482
        %5484 = vrot.lane.b32.xlu0 %v5409, 96
        %v5485 = vpop.permute.xlu0 %5484
        %5486 = vrot.lane.b32.xlu0 %v5421, 96
        %v5487 = vpop.permute.xlu0 %5486
        %5488 = vrot.lane.b32.xlu0 %v5433, 96
        %v5489 = vpop.permute.xlu0 %5488
        %5490 = vrot.lane.b32.xlu0 %v5445, 96
        %v5491 = vpop.permute.xlu0 %5490
        %5492 = vrot.lane.b32.xlu0 %v5457, 96
        %v5493 = vpop.permute.xlu0 %5492
        %5494 = vrot.lane.b32.xlu0 %v5469, 96
        %v5495 = vpop.permute.xlu0 %5494
        %5496 = vrot.lane.b32.xlu0 %v5481, 96
        %v5497 = vpop.permute.xlu0 %5496
        %5506 = vst.msk [vmem:[#allocation4] sm:$0xff] %vm1544, %v5483
        %5507 = vst.msk [vmem:[#allocation4 + $0x18] sm:$0xff] %vm1544, %v5485
        %5508 = vst.msk [vmem:[#allocation4 + $0x30] sm:$0xff] %vm1544, %v5487
        %5509 = vst.msk [vmem:[#allocation4 + $0x48] sm:$0xff] %vm1544, %v5489
        %5510 = vst.msk [vmem:[#allocation4 + $0x60] sm:$0xff] %vm1544, %v5491
        %5511 = vst.msk [vmem:[#allocation4 + $0x78] sm:$0xff] %vm1544, %v5493
        %5512 = vst.msk [vmem:[#allocation4 + $0x90] sm:$0xff] %vm1544, %v5495
        %5513 = vst.msk [vmem:[#allocation4 + $0xa8] sm:$0xff] %vm1544, %v5497
        %v5514 = vld [vmem:[%s3003] sm:$0xf]
        %v5515 = vld [vmem:[%s3003 + $0x4] sm:$0xf]
        %v5516 = vld [vmem:[%s3003 + $0x8] sm:$0x1]
        %v5517 = vld [vmem:[%s3003 + $0xc] sm:$0xf]
        %v5518 = vld [vmem:[%s3003 + $0x10] sm:$0xf]
        %v5519 = vld [vmem:[%s3003 + $0x14] sm:$0x1]
        %v5520 = vld [vmem:[%s3003 + $0x18] sm:$0xf]
        %v5521 = vld [vmem:[%s3003 + $0x1c] sm:$0xf]
        %v5522 = vld [vmem:[%s3003 + $0x20] sm:$0x1]
        %v5523 = vld [vmem:[%s3003 + $0x24] sm:$0xf]
        %v5524 = vld [vmem:[%s3003 + $0x28] sm:$0xf]
        %v5525 = vld [vmem:[%s3003 + $0x2c] sm:$0x1]
        %v5526 = vld [vmem:[%s3003 + $0x30] sm:$0xf]
        %v5527 = vld [vmem:[%s3003 + $0x34] sm:$0xf]
        %v5528 = vld [vmem:[%s3003 + $0x38] sm:$0x1]
        %v5529 = vld [vmem:[%s3003 + $0x3c] sm:$0xf]
        %v5530 = vld [vmem:[%s3003 + $0x40] sm:$0xf]
        %v5531 = vld [vmem:[%s3003 + $0x44] sm:$0x1]
        %v5532 = vld [vmem:[%s3003 + $0x48] sm:$0xf]
        %v5533 = vld [vmem:[%s3003 + $0x4c] sm:$0xf]
        %v5534 = vld [vmem:[%s3003 + $0x50] sm:$0x1]
        %v5535 = vld [vmem:[%s3003 + $0x54] sm:$0xf]
        %v5536 = vld [vmem:[%s3003 + $0x58] sm:$0xf]
        %v5537 = vld [vmem:[%s3003 + $0x5c] sm:$0x1]
        %v5562 = vunpack.c.l.b16 %v5514
        %v5563 = vunpack.c.l.b16 %v5515
        %v5564 = vunpack.c.l.b16 %v5516
        %v5565 = vunpack.c.l.b16 %v5517
        %v5566 = vunpack.c.l.b16 %v5518
        %v5567 = vunpack.c.l.b16 %v5519
        %v5568 = vunpack.c.l.b16 %v5520
        %v5569 = vunpack.c.l.b16 %v5521
        %v5570 = vunpack.c.l.b16 %v5522
        %v5571 = vunpack.c.l.b16 %v5523
        %v5572 = vunpack.c.l.b16 %v5524
        %v5573 = vunpack.c.l.b16 %v5525
        %v5574 = vunpack.c.l.b16 %v5526
        %v5575 = vunpack.c.l.b16 %v5527
        %v5576 = vunpack.c.l.b16 %v5528
        %v5577 = vunpack.c.l.b16 %v5529
        %v5578 = vunpack.c.l.b16 %v5530
        %v5579 = vunpack.c.l.b16 %v5531
        %v5580 = vunpack.c.l.b16 %v5532
        %v5581 = vunpack.c.l.b16 %v5533
        %v5582 = vunpack.c.l.b16 %v5534
        %v5583 = vunpack.c.l.b16 %v5535
        %v5584 = vunpack.c.l.b16 %v5536
        %v5585 = vunpack.c.l.b16 %v5537
        %v5586 = vpack.c.b16 %v5563, %v5562
        %v5587 = vpack.c.b16 %v5564, %v5564
        %v5588 = vpack.c.b16 %v5566, %v5565
        %v5589 = vpack.c.b16 %v5567, %v5567
        %v5590 = vpack.c.b16 %v5569, %v5568
        %v5591 = vpack.c.b16 %v5570, %v5570
        %v5592 = vpack.c.b16 %v5572, %v5571
        %v5593 = vpack.c.b16 %v5573, %v5573
        %v5594 = vpack.c.b16 %v5575, %v5574
        %v5595 = vpack.c.b16 %v5576, %v5576
        %v5596 = vpack.c.b16 %v5578, %v5577
        %v5597 = vpack.c.b16 %v5579, %v5579
        %v5598 = vpack.c.b16 %v5581, %v5580
        %v5599 = vpack.c.b16 %v5582, %v5582
        %v5600 = vpack.c.b16 %v5584, %v5583
        %v5601 = vpack.c.b16 %v5585, %v5585
        %v5603 = vshrl.u32 %v5586, 16
        %v5605 = vshll.u32 %v5586, 16
        %v5607 = vrot.slane %v5605, 1
        %v5608 = vor.u32 %v5603, %v5607
        %v5610 = vshll.u32 %v5587, 16
        %v5612 = vrot.slane %v5610, 1
        %v5613 = vsel %vm1423, %v5608, %v5612
        %v5615 = vshrl.u32 %v5588, 16
        %v5617 = vshll.u32 %v5588, 16
        %v5619 = vrot.slane %v5617, 1
        %v5620 = vor.u32 %v5615, %v5619
        %v5622 = vshll.u32 %v5589, 16
        %v5624 = vrot.slane %v5622, 1
        %v5625 = vsel %vm1423, %v5620, %v5624
        %v5627 = vshrl.u32 %v5590, 16
        %v5629 = vshll.u32 %v5590, 16
        %v5631 = vrot.slane %v5629, 1
        %v5632 = vor.u32 %v5627, %v5631
        %v5634 = vshll.u32 %v5591, 16
        %v5636 = vrot.slane %v5634, 1
        %v5637 = vsel %vm1423, %v5632, %v5636
        %v5639 = vshrl.u32 %v5592, 16
        %v5641 = vshll.u32 %v5592, 16
        %v5643 = vrot.slane %v5641, 1
        %v5644 = vor.u32 %v5639, %v5643
        %v5646 = vshll.u32 %v5593, 16
        %v5648 = vrot.slane %v5646, 1
        %v5649 = vsel %vm1423, %v5644, %v5648
        %v5651 = vshrl.u32 %v5594, 16
        %v5653 = vshll.u32 %v5594, 16
        %v5655 = vrot.slane %v5653, 1
        %v5656 = vor.u32 %v5651, %v5655
        %v5658 = vshll.u32 %v5595, 16
        %v5660 = vrot.slane %v5658, 1
        %v5661 = vsel %vm1423, %v5656, %v5660
        %v5663 = vshrl.u32 %v5596, 16
        %v5665 = vshll.u32 %v5596, 16
        %v5667 = vrot.slane %v5665, 1
        %v5668 = vor.u32 %v5663, %v5667
        %v5670 = vshll.u32 %v5597, 16
        %v5672 = vrot.slane %v5670, 1
        %v5673 = vsel %vm1423, %v5668, %v5672
        %v5675 = vshrl.u32 %v5598, 16
        %v5677 = vshll.u32 %v5598, 16
        %v5679 = vrot.slane %v5677, 1
        %v5680 = vor.u32 %v5675, %v5679
        %v5682 = vshll.u32 %v5599, 16
        %v5684 = vrot.slane %v5682, 1
        %v5685 = vsel %vm1423, %v5680, %v5684
        %v5687 = vshrl.u32 %v5600, 16
        %v5689 = vshll.u32 %v5600, 16
        %v5691 = vrot.slane %v5689, 1
        %v5692 = vor.u32 %v5687, %v5691
        %v5694 = vshll.u32 %v5601, 16
        %v5696 = vrot.slane %v5694, 1
        %v5697 = vsel %vm1423, %v5692, %v5696
        %5706 = vst.msk [vmem:[#allocation4 + $0x8] sm:$0xff] %vm1147, %v5613
        %5707 = vst.msk [vmem:[#allocation4 + $0x20] sm:$0xff] %vm1147, %v5625
        %5708 = vst.msk [vmem:[#allocation4 + $0x38] sm:$0xff] %vm1147, %v5637
        %5709 = vst.msk [vmem:[#allocation4 + $0x50] sm:$0xff] %vm1147, %v5649
        %5710 = vst.msk [vmem:[#allocation4 + $0x68] sm:$0xff] %vm1147, %v5661
        %5711 = vst.msk [vmem:[#allocation4 + $0x80] sm:$0xff] %vm1147, %v5673
        %5712 = vst.msk [vmem:[#allocation4 + $0x98] sm:$0xff] %vm1147, %v5685
        %5713 = vst.msk [vmem:[#allocation4 + $0xb0] sm:$0xff] %vm1147, %v5697
        %v5714 = vld [vmem:[%s5209] sm:$0xf]
        %v5715 = vld [vmem:[%s5209 + $0x4] sm:$0xf]
        %v5716 = vld [vmem:[%s5209 + $0x8] sm:$0x1]
        %v5717 = vld [vmem:[%s5209 + $0xc] sm:$0xf]
        %v5718 = vld [vmem:[%s5209 + $0x10] sm:$0xf]
        %v5719 = vld [vmem:[%s5209 + $0x14] sm:$0x1]
        %v5720 = vld [vmem:[%s5209 + $0x18] sm:$0xf]
        %v5721 = vld [vmem:[%s5209 + $0x1c] sm:$0xf]
        %v5722 = vld [vmem:[%s5209 + $0x20] sm:$0x1]
        %v5723 = vld [vmem:[%s5209 + $0x24] sm:$0xf]
        %v5724 = vld [vmem:[%s5209 + $0x28] sm:$0xf]
        %v5725 = vld [vmem:[%s5209 + $0x2c] sm:$0x1]
        %v5726 = vld [vmem:[%s5209 + $0x30] sm:$0xf]
        %v5727 = vld [vmem:[%s5209 + $0x34] sm:$0xf]
        %v5728 = vld [vmem:[%s5209 + $0x38] sm:$0x1]
        %v5729 = vld [vmem:[%s5209 + $0x3c] sm:$0xf]
        %v5730 = vld [vmem:[%s5209 + $0x40] sm:$0xf]
        %v5731 = vld [vmem:[%s5209 + $0x44] sm:$0x1]
        %v5732 = vld [vmem:[%s5209 + $0x48] sm:$0xf]
        %v5733 = vld [vmem:[%s5209 + $0x4c] sm:$0xf]
        %v5734 = vld [vmem:[%s5209 + $0x50] sm:$0x1]
        %v5735 = vld [vmem:[%s5209 + $0x54] sm:$0xf]
        %v5736 = vld [vmem:[%s5209 + $0x58] sm:$0xf]
        %v5737 = vld [vmem:[%s5209 + $0x5c] sm:$0x1]
        %v5762 = vunpack.c.l.b16 %v5714
        %v5763 = vunpack.c.l.b16 %v5715
        %v5764 = vunpack.c.l.b16 %v5716
        %v5765 = vunpack.c.l.b16 %v5717
        %v5766 = vunpack.c.l.b16 %v5718
        %v5767 = vunpack.c.l.b16 %v5719
        %v5768 = vunpack.c.l.b16 %v5720
        %v5769 = vunpack.c.l.b16 %v5721
        %v5770 = vunpack.c.l.b16 %v5722
        %v5771 = vunpack.c.l.b16 %v5723
        %v5772 = vunpack.c.l.b16 %v5724
        %v5773 = vunpack.c.l.b16 %v5725
        %v5774 = vunpack.c.l.b16 %v5726
        %v5775 = vunpack.c.l.b16 %v5727
        %v5776 = vunpack.c.l.b16 %v5728
        %v5777 = vunpack.c.l.b16 %v5729
        %v5778 = vunpack.c.l.b16 %v5730
        %v5779 = vunpack.c.l.b16 %v5731
        %v5780 = vunpack.c.l.b16 %v5732
        %v5781 = vunpack.c.l.b16 %v5733
        %v5782 = vunpack.c.l.b16 %v5734
        %v5783 = vunpack.c.l.b16 %v5735
        %v5784 = vunpack.c.l.b16 %v5736
        %v5785 = vunpack.c.l.b16 %v5737
        %v5786 = vpack.c.b16 %v5763, %v5762
        %v5787 = vpack.c.b16 %v5764, %v5764
        %v5788 = vpack.c.b16 %v5766, %v5765
        %v5789 = vpack.c.b16 %v5767, %v5767
        %v5790 = vpack.c.b16 %v5769, %v5768
        %v5791 = vpack.c.b16 %v5770, %v5770
        %v5792 = vpack.c.b16 %v5772, %v5771
        %v5793 = vpack.c.b16 %v5773, %v5773
        %v5794 = vpack.c.b16 %v5775, %v5774
        %v5795 = vpack.c.b16 %v5776, %v5776
        %v5796 = vpack.c.b16 %v5778, %v5777
        %v5797 = vpack.c.b16 %v5779, %v5779
        %v5798 = vpack.c.b16 %v5781, %v5780
        %v5799 = vpack.c.b16 %v5782, %v5782
        %v5800 = vpack.c.b16 %v5784, %v5783
        %v5801 = vpack.c.b16 %v5785, %v5785
        %v5803 = vshrl.u32 %v5786, 16
        %v5805 = vshll.u32 %v5786, 16
        %v5807 = vrot.slane %v5805, 1
        %v5808 = vor.u32 %v5803, %v5807
        %v5810 = vshll.u32 %v5787, 16
        %v5812 = vrot.slane %v5810, 1
        %v5813 = vsel %vm1423, %v5808, %v5812
        %v5815 = vshrl.u32 %v5788, 16
        %v5817 = vshll.u32 %v5788, 16
        %v5819 = vrot.slane %v5817, 1
        %v5820 = vor.u32 %v5815, %v5819
        %v5822 = vshll.u32 %v5789, 16
        %v5824 = vrot.slane %v5822, 1
        %v5825 = vsel %vm1423, %v5820, %v5824
        %v5827 = vshrl.u32 %v5790, 16
        %v5829 = vshll.u32 %v5790, 16
        %v5831 = vrot.slane %v5829, 1
        %v5832 = vor.u32 %v5827, %v5831
        %v5834 = vshll.u32 %v5791, 16
        %v5836 = vrot.slane %v5834, 1
        %v5837 = vsel %vm1423, %v5832, %v5836
        %v5839 = vshrl.u32 %v5792, 16
        %v5841 = vshll.u32 %v5792, 16
        %v5843 = vrot.slane %v5841, 1
        %v5844 = vor.u32 %v5839, %v5843
        %v5846 = vshll.u32 %v5793, 16
        %v5848 = vrot.slane %v5846, 1
        %v5849 = vsel %vm1423, %v5844, %v5848
        %v5851 = vshrl.u32 %v5794, 16
        %v5853 = vshll.u32 %v5794, 16
        %v5855 = vrot.slane %v5853, 1
        %v5856 = vor.u32 %v5851, %v5855
        %v5858 = vshll.u32 %v5795, 16
        %v5860 = vrot.slane %v5858, 1
        %v5861 = vsel %vm1423, %v5856, %v5860
        %v5863 = vshrl.u32 %v5796, 16
        %v5865 = vshll.u32 %v5796, 16
        %v5867 = vrot.slane %v5865, 1
        %v5868 = vor.u32 %v5863, %v5867
        %v5870 = vshll.u32 %v5797, 16
        %v5872 = vrot.slane %v5870, 1
        %v5873 = vsel %vm1423, %v5868, %v5872
        %v5875 = vshrl.u32 %v5798, 16
        %v5877 = vshll.u32 %v5798, 16
        %v5879 = vrot.slane %v5877, 1
        %v5880 = vor.u32 %v5875, %v5879
        %v5882 = vshll.u32 %v5799, 16
        %v5884 = vrot.slane %v5882, 1
        %v5885 = vsel %vm1423, %v5880, %v5884
        %v5887 = vshrl.u32 %v5800, 16
        %v5889 = vshll.u32 %v5800, 16
        %v5891 = vrot.slane %v5889, 1
        %v5892 = vor.u32 %v5887, %v5891
        %v5894 = vshll.u32 %v5801, 16
        %v5896 = vrot.slane %v5894, 1
        %v5897 = vsel %vm1423, %v5892, %v5896
        %5898 = vrot.lane.b32.xlu0 %v5813, 32
        %v5899 = vpop.permute.xlu0 %5898
        %5900 = vrot.lane.b32.xlu0 %v5825, 32
        %v5901 = vpop.permute.xlu0 %5900
        %5902 = vrot.lane.b32.xlu0 %v5837, 32
        %v5903 = vpop.permute.xlu0 %5902
        %5904 = vrot.lane.b32.xlu0 %v5849, 32
        %v5905 = vpop.permute.xlu0 %5904
        %5906 = vrot.lane.b32.xlu0 %v5861, 32
        %v5907 = vpop.permute.xlu0 %5906
        %5908 = vrot.lane.b32.xlu0 %v5873, 32
        %v5909 = vpop.permute.xlu0 %5908
        %5910 = vrot.lane.b32.xlu0 %v5885, 32
        %v5911 = vpop.permute.xlu0 %5910
        %5912 = vrot.lane.b32.xlu0 %v5897, 32
        %v5913 = vpop.permute.xlu0 %5912
        %5922 = vst.msk [vmem:[#allocation4 + $0x8] sm:$0xff] %vm1236, %v5899
        %5923 = vst.msk [vmem:[#allocation4 + $0x20] sm:$0xff] %vm1236, %v5901
        %5924 = vst.msk [vmem:[#allocation4 + $0x38] sm:$0xff] %vm1236, %v5903
        %5925 = vst.msk [vmem:[#allocation4 + $0x50] sm:$0xff] %vm1236, %v5905
        %5926 = vst.msk [vmem:[#allocation4 + $0x68] sm:$0xff] %vm1236, %v5907
        %5927 = vst.msk [vmem:[#allocation4 + $0x80] sm:$0xff] %vm1236, %v5909
        %5928 = vst.msk [vmem:[#allocation4 + $0x98] sm:$0xff] %vm1236, %v5911
        %5929 = vst.msk [vmem:[#allocation4 + $0xb0] sm:$0xff] %vm1236, %v5913
        %v5930 = vld [vmem:[#allocation3] sm:$0xe]
        %v5931 = vld [vmem:[#allocation3 + $0x4] sm:$0xf]
        %v5932 = vld [vmem:[#allocation3 + $0x8] sm:$0x1]
        %v5933 = vld [vmem:[#allocation3 + $0xc] sm:$0xe]
        %v5934 = vld [vmem:[#allocation3 + $0x10] sm:$0xf]
        %v5935 = vld [vmem:[#allocation3 + $0x14] sm:$0x1]
        %v5936 = vld [vmem:[#allocation3 + $0x18] sm:$0xe]
        %v5937 = vld [vmem:[#allocation3 + $0x1c] sm:$0xf]
        %v5938 = vld [vmem:[#allocation3 + $0x20] sm:$0x1]
        %v5939 = vld [vmem:[#allocation3 + $0x24] sm:$0xe]
        %v5940 = vld [vmem:[#allocation3 + $0x28] sm:$0xf]
        %v5941 = vld [vmem:[#allocation3 + $0x2c] sm:$0x1]
        %v5942 = vld [vmem:[#allocation3 + $0x30] sm:$0xe]
        %v5943 = vld [vmem:[#allocation3 + $0x34] sm:$0xf]
        %v5944 = vld [vmem:[#allocation3 + $0x38] sm:$0x1]
        %v5945 = vld [vmem:[#allocation3 + $0x3c] sm:$0xe]
        %v5946 = vld [vmem:[#allocation3 + $0x40] sm:$0xf]
        %v5947 = vld [vmem:[#allocation3 + $0x44] sm:$0x1]
        %v5948 = vld [vmem:[#allocation3 + $0x48] sm:$0xe]
        %v5949 = vld [vmem:[#allocation3 + $0x4c] sm:$0xf]
        %v5950 = vld [vmem:[#allocation3 + $0x50] sm:$0x1]
        %v5951 = vld [vmem:[#allocation3 + $0x54] sm:$0xe]
        %v5952 = vld [vmem:[#allocation3 + $0x58] sm:$0xf]
        %v5953 = vld [vmem:[#allocation3 + $0x5c] sm:$0x1]
        %v5978 = vunpack.c.l.b16 %v5930
        %v5979 = vunpack.c.l.b16 %v5931
        %v5980 = vunpack.c.l.b16 %v5932
        %v5981 = vunpack.c.l.b16 %v5933
        %v5982 = vunpack.c.l.b16 %v5934
        %v5983 = vunpack.c.l.b16 %v5935
        %v5984 = vunpack.c.l.b16 %v5936
        %v5985 = vunpack.c.l.b16 %v5937
        %v5986 = vunpack.c.l.b16 %v5938
        %v5987 = vunpack.c.l.b16 %v5939
        %v5988 = vunpack.c.l.b16 %v5940
        %v5989 = vunpack.c.l.b16 %v5941
        %v5990 = vunpack.c.l.b16 %v5942
        %v5991 = vunpack.c.l.b16 %v5943
        %v5992 = vunpack.c.l.b16 %v5944
        %v5993 = vunpack.c.l.b16 %v5945
        %v5994 = vunpack.c.l.b16 %v5946
        %v5995 = vunpack.c.l.b16 %v5947
        %v5996 = vunpack.c.l.b16 %v5948
        %v5997 = vunpack.c.l.b16 %v5949
        %v5998 = vunpack.c.l.b16 %v5950
        %v5999 = vunpack.c.l.b16 %v5951
        %v6000 = vunpack.c.l.b16 %v5952
        %v6001 = vunpack.c.l.b16 %v5953
        %v6002 = vpack.c.b16 %v5979, %v5978
        %v6003 = vpack.c.b16 %v5980, %v5980
        %v6004 = vpack.c.b16 %v5982, %v5981
        %v6005 = vpack.c.b16 %v5983, %v5983
        %v6006 = vpack.c.b16 %v5985, %v5984
        %v6007 = vpack.c.b16 %v5986, %v5986
        %v6008 = vpack.c.b16 %v5988, %v5987
        %v6009 = vpack.c.b16 %v5989, %v5989
        %v6010 = vpack.c.b16 %v5991, %v5990
        %v6011 = vpack.c.b16 %v5992, %v5992
        %v6012 = vpack.c.b16 %v5994, %v5993
        %v6013 = vpack.c.b16 %v5995, %v5995
        %v6014 = vpack.c.b16 %v5997, %v5996
        %v6015 = vpack.c.b16 %v5998, %v5998
        %v6016 = vpack.c.b16 %v6000, %v5999
        %v6017 = vpack.c.b16 %v6001, %v6001
        %v6018 = vrot.slane %v6002, 1
        %v6019 = vrot.slane %v6003, 1
        %v6020 = vsel %vm2057, %v6018, %v6019
        %v6021 = vrot.slane %v6004, 1
        %v6022 = vrot.slane %v6005, 1
        %v6023 = vsel %vm2057, %v6021, %v6022
        %v6024 = vrot.slane %v6006, 1
        %v6025 = vrot.slane %v6007, 1
        %v6026 = vsel %vm2057, %v6024, %v6025
        %v6027 = vrot.slane %v6008, 1
        %v6028 = vrot.slane %v6009, 1
        %v6029 = vsel %vm2057, %v6027, %v6028
        %v6030 = vrot.slane %v6010, 1
        %v6031 = vrot.slane %v6011, 1
        %v6032 = vsel %vm2057, %v6030, %v6031
        %v6033 = vrot.slane %v6012, 1
        %v6034 = vrot.slane %v6013, 1
        %v6035 = vsel %vm2057, %v6033, %v6034
        %v6036 = vrot.slane %v6014, 1
        %v6037 = vrot.slane %v6015, 1
        %v6038 = vsel %vm2057, %v6036, %v6037
        %v6039 = vrot.slane %v6016, 1
        %v6040 = vrot.slane %v6017, 1
        %v6041 = vsel %vm2057, %v6039, %v6040
        %6042 = vrot.lane.b32.xlu0 %v6020, 64
        %v6043 = vpop.permute.xlu0 %6042
        %6044 = vrot.lane.b32.xlu0 %v6023, 64
        %v6045 = vpop.permute.xlu0 %6044
        %6046 = vrot.lane.b32.xlu0 %v6026, 64
        %v6047 = vpop.permute.xlu0 %6046
        %6048 = vrot.lane.b32.xlu0 %v6029, 64
        %v6049 = vpop.permute.xlu0 %6048
        %6050 = vrot.lane.b32.xlu0 %v6032, 64
        %v6051 = vpop.permute.xlu0 %6050
        %6052 = vrot.lane.b32.xlu0 %v6035, 64
        %v6053 = vpop.permute.xlu0 %6052
        %6054 = vrot.lane.b32.xlu0 %v6038, 64
        %v6055 = vpop.permute.xlu0 %6054
        %6056 = vrot.lane.b32.xlu0 %v6041, 64
        %v6057 = vpop.permute.xlu0 %6056
        %6066 = vst.msk [vmem:[#allocation4 + $0x8] sm:$0xff] %vm1326, %v6043
        %6067 = vst.msk [vmem:[#allocation4 + $0x20] sm:$0xff] %vm1326, %v6045
        %6068 = vst.msk [vmem:[#allocation4 + $0x38] sm:$0xff] %vm1326, %v6047
        %6069 = vst.msk [vmem:[#allocation4 + $0x50] sm:$0xff] %vm1326, %v6049
        %6070 = vst.msk [vmem:[#allocation4 + $0x68] sm:$0xff] %vm1326, %v6051
        %6071 = vst.msk [vmem:[#allocation4 + $0x80] sm:$0xff] %vm1326, %v6053
        %6072 = vst.msk [vmem:[#allocation4 + $0x98] sm:$0xff] %vm1326, %v6055
        %6073 = vst.msk [vmem:[#allocation4 + $0xb0] sm:$0xff] %vm1326, %v6057
        %v6074 = vld [vmem:[%s3003] sm:$0xe]
        %v6075 = vld [vmem:[%s3003 + $0x4] sm:$0xf]
        %v6076 = vld [vmem:[%s3003 + $0x8] sm:$0x1]
        %v6077 = vld [vmem:[%s3003 + $0xc] sm:$0xe]
        %v6078 = vld [vmem:[%s3003 + $0x10] sm:$0xf]
        %v6079 = vld [vmem:[%s3003 + $0x14] sm:$0x1]
        %v6080 = vld [vmem:[%s3003 + $0x18] sm:$0xe]
        %v6081 = vld [vmem:[%s3003 + $0x1c] sm:$0xf]
        %v6082 = vld [vmem:[%s3003 + $0x20] sm:$0x1]
        %v6083 = vld [vmem:[%s3003 + $0x24] sm:$0xe]
        %v6084 = vld [vmem:[%s3003 + $0x28] sm:$0xf]
        %v6085 = vld [vmem:[%s3003 + $0x2c] sm:$0x1]
        %v6086 = vld [vmem:[%s3003 + $0x30] sm:$0xe]
        %v6087 = vld [vmem:[%s3003 + $0x34] sm:$0xf]
        %v6088 = vld [vmem:[%s3003 + $0x38] sm:$0x1]
        %v6089 = vld [vmem:[%s3003 + $0x3c] sm:$0xe]
        %v6090 = vld [vmem:[%s3003 + $0x40] sm:$0xf]
        %v6091 = vld [vmem:[%s3003 + $0x44] sm:$0x1]
        %v6092 = vld [vmem:[%s3003 + $0x48] sm:$0xe]
        %v6093 = vld [vmem:[%s3003 + $0x4c] sm:$0xf]
        %v6094 = vld [vmem:[%s3003 + $0x50] sm:$0x1]
        %v6095 = vld [vmem:[%s3003 + $0x54] sm:$0xe]
        %v6096 = vld [vmem:[%s3003 + $0x58] sm:$0xf]
        %v6097 = vld [vmem:[%s3003 + $0x5c] sm:$0x1]
        %v6122 = vunpack.c.l.b16 %v6074
        %v6123 = vunpack.c.l.b16 %v6075
        %v6124 = vunpack.c.l.b16 %v6076
        %v6125 = vunpack.c.l.b16 %v6077
        %v6126 = vunpack.c.l.b16 %v6078
        %v6127 = vunpack.c.l.b16 %v6079
        %v6128 = vunpack.c.l.b16 %v6080
        %v6129 = vunpack.c.l.b16 %v6081
        %v6130 = vunpack.c.l.b16 %v6082
        %v6131 = vunpack.c.l.b16 %v6083
        %v6132 = vunpack.c.l.b16 %v6084
        %v6133 = vunpack.c.l.b16 %v6085
        %v6134 = vunpack.c.l.b16 %v6086
        %v6135 = vunpack.c.l.b16 %v6087
        %v6136 = vunpack.c.l.b16 %v6088
        %v6137 = vunpack.c.l.b16 %v6089
        %v6138 = vunpack.c.l.b16 %v6090
        %v6139 = vunpack.c.l.b16 %v6091
        %v6140 = vunpack.c.l.b16 %v6092
        %v6141 = vunpack.c.l.b16 %v6093
        %v6142 = vunpack.c.l.b16 %v6094
        %v6143 = vunpack.c.l.b16 %v6095
        %v6144 = vunpack.c.l.b16 %v6096
        %v6145 = vunpack.c.l.b16 %v6097
        %v6146 = vpack.c.b16 %v6123, %v6122
        %v6147 = vpack.c.b16 %v6124, %v6124
        %v6148 = vpack.c.b16 %v6126, %v6125
        %v6149 = vpack.c.b16 %v6127, %v6127
        %v6150 = vpack.c.b16 %v6129, %v6128
        %v6151 = vpack.c.b16 %v6130, %v6130
        %v6152 = vpack.c.b16 %v6132, %v6131
        %v6153 = vpack.c.b16 %v6133, %v6133
        %v6154 = vpack.c.b16 %v6135, %v6134
        %v6155 = vpack.c.b16 %v6136, %v6136
        %v6156 = vpack.c.b16 %v6138, %v6137
        %v6157 = vpack.c.b16 %v6139, %v6139
        %v6158 = vpack.c.b16 %v6141, %v6140
        %v6159 = vpack.c.b16 %v6142, %v6142
        %v6160 = vpack.c.b16 %v6144, %v6143
        %v6161 = vpack.c.b16 %v6145, %v6145
        %v6162 = vrot.slane %v6146, 1
        %v6163 = vrot.slane %v6147, 1
        %v6164 = vsel %vm2057, %v6162, %v6163
        %v6165 = vrot.slane %v6148, 1
        %v6166 = vrot.slane %v6149, 1
        %v6167 = vsel %vm2057, %v6165, %v6166
        %v6168 = vrot.slane %v6150, 1
        %v6169 = vrot.slane %v6151, 1
        %v6170 = vsel %vm2057, %v6168, %v6169
        %v6171 = vrot.slane %v6152, 1
        %v6172 = vrot.slane %v6153, 1
        %v6173 = vsel %vm2057, %v6171, %v6172
        %v6174 = vrot.slane %v6154, 1
        %v6175 = vrot.slane %v6155, 1
        %v6176 = vsel %vm2057, %v6174, %v6175
        %v6177 = vrot.slane %v6156, 1
        %v6178 = vrot.slane %v6157, 1
        %v6179 = vsel %vm2057, %v6177, %v6178
        %v6180 = vrot.slane %v6158, 1
        %v6181 = vrot.slane %v6159, 1
        %v6182 = vsel %vm2057, %v6180, %v6181
        %v6183 = vrot.slane %v6160, 1
        %v6184 = vrot.slane %v6161, 1
        %v6185 = vsel %vm2057, %v6183, %v6184
        %6186 = vrot.lane.b32.xlu0 %v6164, 96
        %v6187 = vpop.permute.xlu0 %6186
        %6188 = vrot.lane.b32.xlu0 %v6167, 96
        %v6189 = vpop.permute.xlu0 %6188
        %6190 = vrot.lane.b32.xlu0 %v6170, 96
        %v6191 = vpop.permute.xlu0 %6190
        %6192 = vrot.lane.b32.xlu0 %v6173, 96
        %v6193 = vpop.permute.xlu0 %6192
        %6194 = vrot.lane.b32.xlu0 %v6176, 96
        %v6195 = vpop.permute.xlu0 %6194
        %6196 = vrot.lane.b32.xlu0 %v6179, 96
        %v6197 = vpop.permute.xlu0 %6196
        %6198 = vrot.lane.b32.xlu0 %v6182, 96
        %v6199 = vpop.permute.xlu0 %6198
        %6200 = vrot.lane.b32.xlu0 %v6185, 96
        %v6201 = vpop.permute.xlu0 %6200
        %6210 = vst.msk [vmem:[#allocation4 + $0x8] sm:$0xff] %vm1544, %v6187
        %6211 = vst.msk [vmem:[#allocation4 + $0x20] sm:$0xff] %vm1544, %v6189
        %6212 = vst.msk [vmem:[#allocation4 + $0x38] sm:$0xff] %vm1544, %v6191
        %6213 = vst.msk [vmem:[#allocation4 + $0x50] sm:$0xff] %vm1544, %v6193
        %6214 = vst.msk [vmem:[#allocation4 + $0x68] sm:$0xff] %vm1544, %v6195
        %6215 = vst.msk [vmem:[#allocation4 + $0x80] sm:$0xff] %vm1544, %v6197
        %6216 = vst.msk [vmem:[#allocation4 + $0x98] sm:$0xff] %vm1544, %v6199
        %6217 = vst.msk [vmem:[#allocation4 + $0xb0] sm:$0xff] %vm1544, %v6201
        %v6218 = vld [vmem:[%s5209] sm:$0xe]
        %v6219 = vld [vmem:[%s5209 + $0x4] sm:$0xf]
        %v6220 = vld [vmem:[%s5209 + $0x8] sm:$0x1]
        %v6221 = vld [vmem:[%s5209 + $0xc] sm:$0xe]
        %v6222 = vld [vmem:[%s5209 + $0x10] sm:$0xf]
        %v6223 = vld [vmem:[%s5209 + $0x14] sm:$0x1]
        %v6224 = vld [vmem:[%s5209 + $0x18] sm:$0xe]
        %v6225 = vld [vmem:[%s5209 + $0x1c] sm:$0xf]
        %v6226 = vld [vmem:[%s5209 + $0x20] sm:$0x1]
        %v6227 = vld [vmem:[%s5209 + $0x24] sm:$0xe]
        %v6228 = vld [vmem:[%s5209 + $0x28] sm:$0xf]
        %v6229 = vld [vmem:[%s5209 + $0x2c] sm:$0x1]
        %v6230 = vld [vmem:[%s5209 + $0x30] sm:$0xe]
        %v6231 = vld [vmem:[%s5209 + $0x34] sm:$0xf]
        %v6232 = vld [vmem:[%s5209 + $0x38] sm:$0x1]
        %v6233 = vld [vmem:[%s5209 + $0x3c] sm:$0xe]
        %v6234 = vld [vmem:[%s5209 + $0x40] sm:$0xf]
        %v6235 = vld [vmem:[%s5209 + $0x44] sm:$0x1]
        %v6236 = vld [vmem:[%s5209 + $0x48] sm:$0xe]
        %v6237 = vld [vmem:[%s5209 + $0x4c] sm:$0xf]
        %v6238 = vld [vmem:[%s5209 + $0x50] sm:$0x1]
        %v6239 = vld [vmem:[%s5209 + $0x54] sm:$0xe]
        %v6240 = vld [vmem:[%s5209 + $0x58] sm:$0xf]
        %v6241 = vld [vmem:[%s5209 + $0x5c] sm:$0x1]
        %v6266 = vunpack.c.l.b16 %v6218
        %v6267 = vunpack.c.l.b16 %v6219
        %v6268 = vunpack.c.l.b16 %v6220
        %v6269 = vunpack.c.l.b16 %v6221
        %v6270 = vunpack.c.l.b16 %v6222
        %v6271 = vunpack.c.l.b16 %v6223
        %v6272 = vunpack.c.l.b16 %v6224
        %v6273 = vunpack.c.l.b16 %v6225
        %v6274 = vunpack.c.l.b16 %v6226
        %v6275 = vunpack.c.l.b16 %v6227
        %v6276 = vunpack.c.l.b16 %v6228
        %v6277 = vunpack.c.l.b16 %v6229
        %v6278 = vunpack.c.l.b16 %v6230
        %v6279 = vunpack.c.l.b16 %v6231
        %v6280 = vunpack.c.l.b16 %v6232
        %v6281 = vunpack.c.l.b16 %v6233
        %v6282 = vunpack.c.l.b16 %v6234
        %v6283 = vunpack.c.l.b16 %v6235
        %v6284 = vunpack.c.l.b16 %v6236
        %v6285 = vunpack.c.l.b16 %v6237
        %v6286 = vunpack.c.l.b16 %v6238
        %v6287 = vunpack.c.l.b16 %v6239
        %v6288 = vunpack.c.l.b16 %v6240
        %v6289 = vunpack.c.l.b16 %v6241
        %v6290 = vpack.c.b16 %v6267, %v6266
        %v6291 = vpack.c.b16 %v6268, %v6268
        %v6292 = vpack.c.b16 %v6270, %v6269
        %v6293 = vpack.c.b16 %v6271, %v6271
        %v6294 = vpack.c.b16 %v6273, %v6272
        %v6295 = vpack.c.b16 %v6274, %v6274
        %v6296 = vpack.c.b16 %v6276, %v6275
        %v6297 = vpack.c.b16 %v6277, %v6277
        %v6298 = vpack.c.b16 %v6279, %v6278
        %v6299 = vpack.c.b16 %v6280, %v6280
        %v6300 = vpack.c.b16 %v6282, %v6281
        %v6301 = vpack.c.b16 %v6283, %v6283
        %v6302 = vpack.c.b16 %v6285, %v6284
        %v6303 = vpack.c.b16 %v6286, %v6286
        %v6304 = vpack.c.b16 %v6288, %v6287
        %v6305 = vpack.c.b16 %v6289, %v6289
        %v6306 = vrot.slane %v6290, 1
        %v6307 = vrot.slane %v6291, 1
        %v6308 = vsel %vm2057, %v6306, %v6307
        %v6309 = vrot.slane %v6292, 1
        %v6310 = vrot.slane %v6293, 1
        %v6311 = vsel %vm2057, %v6309, %v6310
        %v6312 = vrot.slane %v6294, 1
        %v6313 = vrot.slane %v6295, 1
        %v6314 = vsel %vm2057, %v6312, %v6313
        %v6315 = vrot.slane %v6296, 1
        %v6316 = vrot.slane %v6297, 1
        %v6317 = vsel %vm2057, %v6315, %v6316
        %v6318 = vrot.slane %v6298, 1
        %v6319 = vrot.slane %v6299, 1
        %v6320 = vsel %vm2057, %v6318, %v6319
        %v6321 = vrot.slane %v6300, 1
        %v6322 = vrot.slane %v6301, 1
        %v6323 = vsel %vm2057, %v6321, %v6322
        %v6324 = vrot.slane %v6302, 1
        %v6325 = vrot.slane %v6303, 1
        %v6326 = vsel %vm2057, %v6324, %v6325
        %v6327 = vrot.slane %v6304, 1
        %v6328 = vrot.slane %v6305, 1
        %v6329 = vsel %vm2057, %v6327, %v6328
        %6338 = vst.msk [vmem:[#allocation4 + $0x10] sm:$0xff] %vm1147, %v6308
        %6339 = vst.msk [vmem:[#allocation4 + $0x28] sm:$0xff] %vm1147, %v6311
        %6340 = vst.msk [vmem:[#allocation4 + $0x40] sm:$0xff] %vm1147, %v6314
        %6341 = vst.msk [vmem:[#allocation4 + $0x58] sm:$0xff] %vm1147, %v6317
        %6342 = vst.msk [vmem:[#allocation4 + $0x70] sm:$0xff] %vm1147, %v6320
        %6343 = vst.msk [vmem:[#allocation4 + $0x88] sm:$0xff] %vm1147, %v6323
        %6344 = vst.msk [vmem:[#allocation4 + $0xa0] sm:$0xff] %vm1147, %v6326
        %6345 = vst.msk [vmem:[#allocation4 + $0xb8] sm:$0xff] %vm1147, %v6329
        %v6346 = vld [vmem:[#allocation4] sm:$0xff]
        %v6347 = vld [vmem:[#allocation4 + $0x8] sm:$0xff]
        %v6348 = vld [vmem:[#allocation4 + $0x10] sm:$0xff]
        %v6349 = vld [vmem:[#allocation4 + $0x18] sm:$0xff]
        %v6350 = vld [vmem:[#allocation4 + $0x20] sm:$0xff]
        %v6351 = vld [vmem:[#allocation4 + $0x28] sm:$0xff]
        %v6352 = vld [vmem:[#allocation4 + $0x30] sm:$0xff]
        %v6353 = vld [vmem:[#allocation4 + $0x38] sm:$0xff]
        %v6354 = vld [vmem:[#allocation4 + $0x40] sm:$0xff]
        %v6355 = vld [vmem:[#allocation4 + $0x48] sm:$0xff]
        %v6356 = vld [vmem:[#allocation4 + $0x50] sm:$0xff]
        %v6357 = vld [vmem:[#allocation4 + $0x58] sm:$0xff]
        %v6358 = vld [vmem:[#allocation4 + $0x60] sm:$0xff]
        %v6359 = vld [vmem:[#allocation4 + $0x68] sm:$0xff]
        %v6360 = vld [vmem:[#allocation4 + $0x70] sm:$0xff]
        %v6361 = vld [vmem:[#allocation4 + $0x78] sm:$0xff]
        %v6362 = vld [vmem:[#allocation4 + $0x80] sm:$0xff]
        %v6363 = vld [vmem:[#allocation4 + $0x88] sm:$0xff]
        %v6364 = vld [vmem:[#allocation4 + $0x90] sm:$0xff]
        %v6365 = vld [vmem:[#allocation4 + $0x98] sm:$0xff]
        %v6366 = vld [vmem:[#allocation4 + $0xa0] sm:$0xff]
        %v6367 = vld [vmem:[#allocation4 + $0xa8] sm:$0xff]
        %v6368 = vld [vmem:[#allocation4 + $0xb0] sm:$0xff]
        %v6369 = vld [vmem:[#allocation4 + $0xb8] sm:$0xff]
        %v6370 = vld [vmem:[%s3] sm:$0xf]
        %v6371 = vld [vmem:[%s3 + $0x4] sm:$0xf]
        %v6372 = vld [vmem:[%s3 + $0x8] sm:$0xf]
        %v6373 = vld [vmem:[%s3 + $0xc] sm:$0xf]
        %v6374 = vld [vmem:[%s3 + $0x10] sm:$0xf]
        %v6375 = vld [vmem:[%s3 + $0x14] sm:$0xf]
        %v6376 = vld [vmem:[%s3 + $0x18] sm:$0xf]
        %v6377 = vld [vmem:[%s3 + $0x1c] sm:$0xf]
        %v6378 = vld [vmem:[%s3 + $0x20] sm:$0xf]
        %v6379 = vld [vmem:[%s3 + $0x24] sm:$0xf]
        %v6380 = vld [vmem:[%s3 + $0x28] sm:$0xf]
        %v6381 = vld [vmem:[%s3 + $0x2c] sm:$0xf]
        %v6382 = vld [vmem:[%s3 + $0x30] sm:$0xf]
        %v6383 = vld [vmem:[%s3 + $0x34] sm:$0xf]
        %v6384 = vld [vmem:[%s3 + $0x38] sm:$0xf]
        %v6385 = vld [vmem:[%s3 + $0x3c] sm:$0xf]
        %v6386 = vld [vmem:[%s3 + $0x40] sm:$0xf]
        %v6387 = vld [vmem:[%s3 + $0x44] sm:$0xf]
        %v6388 = vld [vmem:[%s3 + $0x48] sm:$0xf]
        %v6389 = vld [vmem:[%s3 + $0x4c] sm:$0xf]
        %v6390 = vld [vmem:[%s3 + $0x50] sm:$0xf]
        %v6391 = vld [vmem:[%s3 + $0x54] sm:$0xf]
        %v6392 = vld [vmem:[%s3 + $0x58] sm:$0xf]
        %v6393 = vld [vmem:[%s3 + $0x5c] sm:$0xf]
        %v6394 = vld [vmem:[%s3 + $0x60] sm:$0xf]
        %v6395 = vld [vmem:[%s3 + $0x64] sm:$0xf]
        %v6396 = vld [vmem:[%s3 + $0x68] sm:$0xf]
        %v6397 = vld [vmem:[%s3 + $0x6c] sm:$0xf]
        %v6398 = vld [vmem:[%s3 + $0x70] sm:$0xf]
        %v6399 = vld [vmem:[%s3 + $0x74] sm:$0xf]
        %v6400 = vld [vmem:[%s3 + $0x78] sm:$0xf]
        %v6401 = vld [vmem:[%s3 + $0x7c] sm:$0xf]
        %v6402 = vld [vmem:[%s3 + $0x80] sm:$0xf]
        %v6403 = vld [vmem:[%s3 + $0x84] sm:$0xf]
        %v6404 = vld [vmem:[%s3 + $0x88] sm:$0xf]
        %v6405 = vld [vmem:[%s3 + $0x8c] sm:$0xf]
        %v6406 = vld [vmem:[%s4] sm:$0x1]
        %v6408 = vlaneseq
        %v6409 = vshrl.u32 %v6408, 7
        %v6410 = vsub.s32 0, %v6409
        %v6411 = vrot.slane %v6406, %v6410
        %v6449 = vunpack.c.l.b16 %v6370
        %v6450 = vunpack.c.l.b16 %v6371
        %v6451 = vunpack.c.l.b16 %v6372
        %v6452 = vunpack.c.l.b16 %v6373
        %v6453 = vunpack.c.l.b16 %v6374
        %v6454 = vunpack.c.l.b16 %v6375
        %v6455 = vunpack.c.l.b16 %v6376
        %v6456 = vunpack.c.l.b16 %v6377
        %v6457 = vunpack.c.l.b16 %v6378
        %v6458 = vunpack.c.l.b16 %v6379
        %v6459 = vunpack.c.l.b16 %v6380
        %v6460 = vunpack.c.l.b16 %v6381
        %v6461 = vunpack.c.l.b16 %v6382
        %v6462 = vunpack.c.l.b16 %v6383
        %v6463 = vunpack.c.l.b16 %v6384
        %v6464 = vunpack.c.l.b16 %v6385
        %v6465 = vunpack.c.l.b16 %v6386
        %v6466 = vunpack.c.l.b16 %v6387
        %v6467 = vunpack.c.l.b16 %v6388
        %v6468 = vunpack.c.l.b16 %v6389
        %v6469 = vunpack.c.l.b16 %v6390
        %v6470 = vunpack.c.l.b16 %v6391
        %v6471 = vunpack.c.l.b16 %v6392
        %v6472 = vunpack.c.l.b16 %v6393
        %v6473 = vunpack.c.l.b16 %v6394
        %v6474 = vunpack.c.l.b16 %v6395
        %v6475 = vunpack.c.l.b16 %v6396
        %v6476 = vunpack.c.l.b16 %v6397
        %v6477 = vunpack.c.l.b16 %v6398
        %v6478 = vunpack.c.l.b16 %v6399
        %v6479 = vunpack.c.l.b16 %v6400
        %v6480 = vunpack.c.l.b16 %v6401
        %v6481 = vunpack.c.l.b16 %v6402
        %v6482 = vunpack.c.l.b16 %v6403
        %v6483 = vunpack.c.l.b16 %v6404
        %v6484 = vunpack.c.l.b16 %v6405
        %v6485 = vpack.c.b16 %v6450, %v6449
        %v6486 = vpack.c.b16 %v6452, %v6451
        %v6487 = vpack.c.b16 %v6454, %v6453
        %v6488 = vpack.c.b16 %v6456, %v6455
        %v6489 = vpack.c.b16 %v6458, %v6457
        %v6490 = vpack.c.b16 %v6460, %v6459
        %v6491 = vpack.c.b16 %v6462, %v6461
        %v6492 = vpack.c.b16 %v6464, %v6463
        %v6493 = vpack.c.b16 %v6466, %v6465
        %v6494 = vpack.c.b16 %v6468, %v6467
        %v6495 = vpack.c.b16 %v6470, %v6469
        %v6496 = vpack.c.b16 %v6472, %v6471
        %v6497 = vpack.c.b16 %v6474, %v6473
        %v6498 = vpack.c.b16 %v6476, %v6475
        %v6499 = vpack.c.b16 %v6478, %v6477
        %v6500 = vpack.c.b16 %v6480, %v6479
        %v6501 = vpack.c.b16 %v6482, %v6481
        %v6502 = vpack.c.b16 %v6484, %v6483
        %v6522 = vsel %vm1147, %v6348, 0
        %v6525 = vsel %vm1147, %v6351, 0
        %v6528 = vsel %vm1147, %v6354, 0
        %v6531 = vsel %vm1147, %v6357, 0
        %v6534 = vsel %vm1147, %v6360, 0
        %v6537 = vsel %vm1147, %v6363, 0
        %v6540 = vsel %vm1147, %v6366, 0
        %v6543 = vsel %vm1147, %v6369, 0
        %6545 = vmatprep.subr.bf16.mxu0 0
        %6546 = vmatpush1.bf16.msra.mxu0 %v6485
        %6547 = vmatprep.subr.bf16.mxu0 0
        %6548 = vmatpush1.bf16.msra.mxu0 %v6486
        %6549 = vmatprep.subr.bf16.mxu0 0
        %6550 = vmatpush1.bf16.msra.mxu0 %v6487
        %6551 = vmatprep.subr.bf16.mxu0 0
        %6552 = vmatpush1.bf16.msra.mxu0 %v6488
        %6553 = vmatprep.subr.bf16.mxu0 0
        %6554 = vmatpush1.bf16.msra.mxu0 %v6489
        %6555 = vmatprep.subr.bf16.mxu0 0
        %6556 = vmatpush1.bf16.msra.mxu0 %v6490
        %6557 = vmatprep.subr.bf16.mxu0 0
        %6558 = vmatpush1.bf16.msra.mxu0 %v6491
        %6559 = vmatprep.subr.bf16.mxu0 0
        %6560 = vmatpush1.bf16.msra.mxu0 %v6492
        %6561 = vmatprep.subr.bf16.mxu0 0
        %6562 = vmatpush1.bf16.msra.mxu0 %v6493
        %6563 = vmatprep.subr.bf16.mxu0 0
        %6564 = vmatpush1.bf16.msra.mxu0 %v6494
        %6565 = vmatprep.subr.bf16.mxu0 0
        %6566 = vmatpush1.bf16.msra.mxu0 %v6495
        %6567 = vmatprep.subr.bf16.mxu0 0
        %6568 = vmatpush1.bf16.msra.mxu0 %v6496
        %6569 = vmatprep.subr.bf16.mxu0 0
        %6570 = vmatpush1.bf16.msra.mxu0 %v6497
        %6571 = vmatprep.subr.bf16.mxu0 0
        %6572 = vmatpush1.bf16.msra.mxu0 %v6498
        %6573 = vmatprep.subr.bf16.mxu0 0
        %6574 = vmatpush1.bf16.msra.mxu0 %v6499
        %6575 = vmatprep.subr.bf16.mxu0 0
        %6576 = vmatpush1.bf16.msra.mxu0 %v6500
        %6577 = vmatprep.mubr.bf16.mxu0 %v6347
        %6578 = vmatmul.mubr.bf16.gmra.mrb[0].mxu0 %v6346
        %v6579 = vpop.f32.mrb[0].mxu0
        %v6580 = vadd.f32 %v6411, %v6579
        %v6581 = vpop.f32.mrb[0].mxu0
        %v6582 = vpop.f32.mrb[0].mxu0
        %v6583 = vadd.f32 %v6411, %v6582
        %v6584 = vpop.f32.mrb[0].mxu0
        %6585 = vmatprep.mubr.bf16.mxu0 %v6350
        %6586 = vmatmul.mubr.bf16.gmra.mrb[0].mxu0 %v6349
        %v6587 = vpop.f32.mrb[0].mxu0
        %v6588 = vadd.f32 %v6411, %v6587
        %v6589 = vpop.f32.mrb[0].mxu0
        %v6590 = vpop.f32.mrb[0].mxu0
        %v6591 = vadd.f32 %v6411, %v6590
        %v6592 = vpop.f32.mrb[0].mxu0
        %6593 = vmatprep.mubr.bf16.mxu0 %v6353
        %6594 = vmatmul.mubr.bf16.gmra.mrb[0].mxu0 %v6352
        %v6595 = vpop.f32.mrb[0].mxu0
        %v6596 = vadd.f32 %v6411, %v6595
        %v6597 = vpop.f32.mrb[0].mxu0
        %v6598 = vpop.f32.mrb[0].mxu0
        %v6599 = vadd.f32 %v6411, %v6598
        %v6600 = vpop.f32.mrb[0].mxu0
        %6601 = vmatprep.mubr.bf16.mxu0 %v6356
        %6602 = vmatmul.mubr.bf16.gmra.mrb[0].mxu0 %v6355
        %v6603 = vpop.f32.mrb[0].mxu0
        %v6604 = vadd.f32 %v6411, %v6603
        %v6605 = vpop.f32.mrb[0].mxu0
        %v6606 = vpop.f32.mrb[0].mxu0
        %v6607 = vadd.f32 %v6411, %v6606
        %v6608 = vpop.f32.mrb[0].mxu0
        %6609 = vmatprep.mubr.bf16.mxu0 %v6359
        %6610 = vmatmul.mubr.bf16.gmra.mrb[0].mxu0 %v6358
        %v6611 = vpop.f32.mrb[0].mxu0
        %v6612 = vadd.f32 %v6411, %v6611
        %v6613 = vpop.f32.mrb[0].mxu0
        %v6614 = vpop.f32.mrb[0].mxu0
        %v6615 = vadd.f32 %v6411, %v6614
        %v6616 = vpop.f32.mrb[0].mxu0
        %6617 = vmatprep.mubr.bf16.mxu0 %v6362
        %6618 = vmatmul.mubr.bf16.gmra.mrb[0].mxu0 %v6361
        %v6619 = vpop.f32.mrb[0].mxu0
        %v6620 = vadd.f32 %v6411, %v6619
        %v6621 = vpop.f32.mrb[0].mxu0
        %v6622 = vpop.f32.mrb[0].mxu0
        %v6623 = vadd.f32 %v6411, %v6622
        %v6624 = vpop.f32.mrb[0].mxu0
        %6625 = vmatprep.mubr.bf16.mxu0 %v6365
        %6626 = vmatmul.mubr.bf16.gmra.mrb[0].mxu0 %v6364
        %v6627 = vpop.f32.mrb[0].mxu0
        %v6628 = vadd.f32 %v6411, %v6627
        %v6629 = vpop.f32.mrb[0].mxu0
        %v6630 = vpop.f32.mrb[0].mxu0
        %v6631 = vadd.f32 %v6411, %v6630
        %v6632 = vpop.f32.mrb[0].mxu0
        %6633 = vmatprep.mubr.bf16.mxu0 %v6368
        %6634 = vmatmul.mubr.bf16.gmra.mrb[0].mxu0 %v6367
        %v6635 = vpop.f32.mrb[0].mxu0
        %v6636 = vadd.f32 %v6411, %v6635
        %v6637 = vpop.f32.mrb[0].mxu0
        %v6638 = vpop.f32.mrb[0].mxu0
        %v6639 = vadd.f32 %v6411, %v6638
        %v6640 = vpop.f32.mrb[0].mxu0
        %6641 = vdwg.mxu0
        %6642 = vmatprep.subr.bf16.mxu0 0
        %6643 = vmatpush1.bf16.msra.mxu0 %v6501
        %6644 = vmatprep.subr.bf16.mxu0 0
        %6645 = vmatpush1.bf16.msra.mxu0 %v6502
        %6646 = vmatprep.subr.bf16.mxu0 0
        %6647 = vmatpush1.bf16.msra.mxu0 0
        %6648 = vmatprep.subr.bf16.mxu0 0
        %6649 = vmatpush1.bf16.msra.mxu0 0
        %6650 = vmatprep.subr.bf16.mxu0 0
        %6651 = vmatpush1.bf16.msra.mxu0 0
        %6652 = vmatprep.subr.bf16.mxu0 0
        %6653 = vmatpush1.bf16.msra.mxu0 0
        %6654 = vmatprep.subr.bf16.mxu0 0
        %6655 = vmatpush1.bf16.msra.mxu0 0
        %6656 = vmatprep.subr.bf16.mxu0 0
        %6657 = vmatpush1.bf16.msra.mxu0 0
        %6658 = vmatprep.subr.bf16.mxu0 0
        %6659 = vmatpush1.bf16.msra.mxu0 0
        %6660 = vmatprep.subr.bf16.mxu0 0
        %6661 = vmatpush1.bf16.msra.mxu0 0
        %6662 = vmatprep.subr.bf16.mxu0 0
        %6663 = vmatpush1.bf16.msra.mxu0 0
        %6664 = vmatprep.subr.bf16.mxu0 0
        %6665 = vmatpush1.bf16.msra.mxu0 0
        %6666 = vmatprep.subr.bf16.mxu0 0
        %6667 = vmatpush1.bf16.msra.mxu0 0
        %6668 = vmatprep.subr.bf16.mxu0 0
        %6669 = vmatpush1.bf16.msra.mxu0 0
        %6670 = vmatprep.subr.bf16.mxu0 0
        %6671 = vmatpush1.bf16.msra.mxu0 0
        %6672 = vmatprep.subr.bf16.mxu0 0
        %6673 = vmatpush1.bf16.msra.mxu0 0
        %6674 = vmatprep.mubr.bf16.mxu0 0
        %6675 = vmatmul.mubr.bf16.gmra.mrb[0].mxu0 %v6522
        %v6676 = vpop.f32.mrb[0].mxu0
        %v6677 = vadd.f32 %v6580, %v6676
        %v6678 = vpop.f32.mrb[0].mxu0
        %v6679 = vpop.f32.mrb[0].mxu0
        %v6680 = vadd.f32 %v6583, %v6679
        %v6681 = vpop.f32.mrb[0].mxu0
        %6682 = vmatprep.mubr.bf16.mxu0 0
        %6683 = vmatmul.mubr.bf16.gmra.mrb[0].mxu0 %v6525
        %v6684 = vpop.f32.mrb[0].mxu0
        %v6685 = vadd.f32 %v6588, %v6684
        %v6686 = vpop.f32.mrb[0].mxu0
        %v6687 = vpop.f32.mrb[0].mxu0
        %v6688 = vadd.f32 %v6591, %v6687
        %v6689 = vpop.f32.mrb[0].mxu0
        %6690 = vmatprep.mubr.bf16.mxu0 0
        %6691 = vmatmul.mubr.bf16.gmra.mrb[0].mxu0 %v6528
        %v6692 = vpop.f32.mrb[0].mxu0
        %v6693 = vadd.f32 %v6596, %v6692
        %v6694 = vpop.f32.mrb[0].mxu0
        %v6695 = vpop.f32.mrb[0].mxu0
        %v6696 = vadd.f32 %v6599, %v6695
        %v6697 = vpop.f32.mrb[0].mxu0
        %6698 = vmatprep.mubr.bf16.mxu0 0
        %6699 = vmatmul.mubr.bf16.gmra.mrb[0].mxu0 %v6531
        %v6700 = vpop.f32.mrb[0].mxu0
        %v6701 = vadd.f32 %v6604, %v6700
        %v6702 = vpop.f32.mrb[0].mxu0
        %v6703 = vpop.f32.mrb[0].mxu0
        %v6704 = vadd.f32 %v6607, %v6703
        %v6705 = vpop.f32.mrb[0].mxu0
        %6706 = vmatprep.mubr.bf16.mxu0 0
        %6707 = vmatmul.mubr.bf16.gmra.mrb[0].mxu0 %v6534
        %v6708 = vpop.f32.mrb[0].mxu0
        %v6709 = vadd.f32 %v6612, %v6708
        %v6710 = vpop.f32.mrb[0].mxu0
        %v6711 = vpop.f32.mrb[0].mxu0
        %v6712 = vadd.f32 %v6615, %v6711
        %v6713 = vpop.f32.mrb[0].mxu0
        %6714 = vmatprep.mubr.bf16.mxu0 0
        %6715 = vmatmul.mubr.bf16.gmra.mrb[0].mxu0 %v6537
        %v6716 = vpop.f32.mrb[0].mxu0
        %v6717 = vadd.f32 %v6620, %v6716
        %v6718 = vpop.f32.mrb[0].mxu0
        %v6719 = vpop.f32.mrb[0].mxu0
        %v6720 = vadd.f32 %v6623, %v6719
        %v6721 = vpop.f32.mrb[0].mxu0
        %6722 = vmatprep.mubr.bf16.mxu0 0
        %6723 = vmatmul.mubr.bf16.gmra.mrb[0].mxu0 %v6540
        %v6724 = vpop.f32.mrb[0].mxu0
        %v6725 = vadd.f32 %v6628, %v6724
        %v6726 = vpop.f32.mrb[0].mxu0
        %v6727 = vpop.f32.mrb[0].mxu0
        %v6728 = vadd.f32 %v6631, %v6727
        %v6729 = vpop.f32.mrb[0].mxu0
        %6730 = vmatprep.mubr.bf16.mxu0 0
        %6731 = vmatmul.mubr.bf16.gmra.mrb[0].mxu0 %v6543
        %v6732 = vpop.f32.mrb[0].mxu0
        %v6733 = vadd.f32 %v6636, %v6732
        %v6734 = vpop.f32.mrb[0].mxu0
        %v6735 = vpop.f32.mrb[0].mxu0
        %v6736 = vadd.f32 %v6639, %v6735
        %v6737 = vpop.f32.mrb[0].mxu0
        %6738 = vdwg.mxu0
        %v6739 = vld [vmem:[%s222] sm:$0xff]
        %v6740 = vld [vmem:[%s222 + $0x8] sm:$0xff]
        %v6741 = vld [vmem:[%s222 + $0x10] sm:$0xff]
        %v6742 = vld [vmem:[%s222 + $0x18] sm:$0xff]
        %v6743 = vld [vmem:[%s222 + $0x20] sm:$0xff]
        %v6744 = vld [vmem:[%s222 + $0x28] sm:$0xff]
        %v6745 = vld [vmem:[%s222 + $0x30] sm:$0xff]
        %v6746 = vld [vmem:[%s222 + $0x38] sm:$0xff]
        %v6747 = vld [vmem:[%s222 + $0x40] sm:$0xff]
        %v6748 = vld [vmem:[%s222 + $0x48] sm:$0xff]
        %v6749 = vld [vmem:[%s222 + $0x50] sm:$0xff]
        %v6750 = vld [vmem:[%s222 + $0x58] sm:$0xff]
        %v6751 = vld [vmem:[%s222 + $0x60] sm:$0xff]
        %v6752 = vld [vmem:[%s222 + $0x68] sm:$0xff]
        %v6753 = vld [vmem:[%s222 + $0x70] sm:$0xff]
        %v6754 = vld [vmem:[%s222 + $0x78] sm:$0xff]
        %v6755 = vadd.f32 %v6677, %v6739
        %v6756 = vadd.f32 %v6680, %v6740
        %v6757 = vadd.f32 %v6685, %v6741
        %v6758 = vadd.f32 %v6688, %v6742
        %v6759 = vadd.f32 %v6693, %v6743
        %v6760 = vadd.f32 %v6696, %v6744
        %v6761 = vadd.f32 %v6701, %v6745
        %v6762 = vadd.f32 %v6704, %v6746
        %v6763 = vadd.f32 %v6709, %v6747
        %v6764 = vadd.f32 %v6712, %v6748
        %v6765 = vadd.f32 %v6717, %v6749
        %v6766 = vadd.f32 %v6720, %v6750
        %v6767 = vadd.f32 %v6725, %v6751
        %v6768 = vadd.f32 %v6728, %v6752
        %v6769 = vadd.f32 %v6733, %v6753
        %v6770 = vadd.f32 %v6736, %v6754
        %v6771 = vmax.f32 %v6755, 0.0
        %v6772 = vmax.f32 %v6756, 0.0
        %v6773 = vmax.f32 %v6757, 0.0
        %v6774 = vmax.f32 %v6758, 0.0
        %v6775 = vmax.f32 %v6759, 0.0
        %v6776 = vmax.f32 %v6760, 0.0
        %v6777 = vmax.f32 %v6761, 0.0
        %v6778 = vmax.f32 %v6762, 0.0
        %v6779 = vmax.f32 %v6763, 0.0
        %v6780 = vmax.f32 %v6764, 0.0
        %v6781 = vmax.f32 %v6765, 0.0
        %v6782 = vmax.f32 %v6766, 0.0
        %v6783 = vmax.f32 %v6767, 0.0
        %v6784 = vmax.f32 %v6768, 0.0
        %v6785 = vmax.f32 %v6769, 0.0
        %v6786 = vmax.f32 %v6770, 0.0
        %6787 = vst.msk [vmem:[%s217] sm:$0xff] %vm1147, %v6771
        %6788 = vst.msk [vmem:[%s217 + $0x8] sm:$0xff] %vm1147, %v6772
        %6789 = vst.msk [vmem:[%s217 + $0x10] sm:$0xff] %vm1147, %v6773
        %6790 = vst.msk [vmem:[%s217 + $0x18] sm:$0xff] %vm1147, %v6774
        %6791 = vst.msk [vmem:[%s217 + $0x20] sm:$0xff] %vm1147, %v6775
        %6792 = vst.msk [vmem:[%s217 + $0x28] sm:$0xff] %vm1147, %v6776
        %6793 = vst.msk [vmem:[%s217 + $0x30] sm:$0xff] %vm1147, %v6777
        %6794 = vst.msk [vmem:[%s217 + $0x38] sm:$0xff] %vm1147, %v6778
        %6795 = vst.msk [vmem:[%s217 + $0x40] sm:$0xff] %vm1147, %v6779
        %6796 = vst.msk [vmem:[%s217 + $0x48] sm:$0xff] %vm1147, %v6780
        %6797 = vst.msk [vmem:[%s217 + $0x50] sm:$0xff] %vm1147, %v6781
        %6798 = vst.msk [vmem:[%s217 + $0x58] sm:$0xff] %vm1147, %v6782
        %6799 = vst.msk [vmem:[%s217 + $0x60] sm:$0xff] %vm1147, %v6783
        %6800 = vst.msk [vmem:[%s217 + $0x68] sm:$0xff] %vm1147, %v6784
        %6801 = vst.msk [vmem:[%s217 + $0x70] sm:$0xff] %vm1147, %v6785
        %6802 = vst.msk [vmem:[%s217 + $0x78] sm:$0xff] %vm1147, %v6786
        %s6803 = scalar_lea.vmem [#allocation3], 96
        %v6804 = vld [vmem:[%s6803] sm:$0xf]
        %v6805 = vld [vmem:[%s6803 + $0x4] sm:$0xf]
        %v6806 = vld [vmem:[%s6803 + $0xc] sm:$0xf]
        %v6807 = vld [vmem:[%s6803 + $0x10] sm:$0xf]
        %v6808 = vld [vmem:[%s6803 + $0x18] sm:$0xf]
        %v6809 = vld [vmem:[%s6803 + $0x1c] sm:$0xf]
        %v6810 = vld [vmem:[%s6803 + $0x24] sm:$0xf]
        %v6811 = vld [vmem:[%s6803 + $0x28] sm:$0xf]
        %v6812 = vld [vmem:[%s6803 + $0x30] sm:$0xf]
        %v6813 = vld [vmem:[%s6803 + $0x34] sm:$0xf]
        %v6814 = vld [vmem:[%s6803 + $0x3c] sm:$0xf]
        %v6815 = vld [vmem:[%s6803 + $0x40] sm:$0xf]
        %v6816 = vld [vmem:[%s6803 + $0x48] sm:$0xf]
        %v6817 = vld [vmem:[%s6803 + $0x4c] sm:$0xf]
        %v6818 = vld [vmem:[%s6803 + $0x54] sm:$0xf]
        %v6819 = vld [vmem:[%s6803 + $0x58] sm:$0xf]
        %v6836 = vunpack.c.l.b16 %v6804
        %v6837 = vunpack.c.l.b16 %v6805
        %v6838 = vunpack.c.l.b16 %v6806
        %v6839 = vunpack.c.l.b16 %v6807
        %v6840 = vunpack.c.l.b16 %v6808
        %v6841 = vunpack.c.l.b16 %v6809
        %v6842 = vunpack.c.l.b16 %v6810
        %v6843 = vunpack.c.l.b16 %v6811
        %v6844 = vunpack.c.l.b16 %v6812
        %v6845 = vunpack.c.l.b16 %v6813
        %v6846 = vunpack.c.l.b16 %v6814
        %v6847 = vunpack.c.l.b16 %v6815
        %v6848 = vunpack.c.l.b16 %v6816
        %v6849 = vunpack.c.l.b16 %v6817
        %v6850 = vunpack.c.l.b16 %v6818
        %v6851 = vunpack.c.l.b16 %v6819
        %v6852 = vpack.c.b16 %v6837, %v6836
        %v6853 = vpack.c.b16 %v6839, %v6838
        %v6854 = vpack.c.b16 %v6841, %v6840
        %v6855 = vpack.c.b16 %v6843, %v6842
        %v6856 = vpack.c.b16 %v6845, %v6844
        %v6857 = vpack.c.b16 %v6847, %v6846
        %v6858 = vpack.c.b16 %v6849, %v6848
        %v6859 = vpack.c.b16 %v6851, %v6850
        %6868 = vst.msk [vmem:[%s3125] sm:$0xff] %vm1147, %v6852
        %6869 = vst.msk [vmem:[%s3125 + $0x18] sm:$0xff] %vm1147, %v6853
        %6870 = vst.msk [vmem:[%s3125 + $0x30] sm:$0xff] %vm1147, %v6854
        %6871 = vst.msk [vmem:[%s3125 + $0x48] sm:$0xff] %vm1147, %v6855
        %6872 = vst.msk [vmem:[%s3125 + $0x60] sm:$0xff] %vm1147, %v6856
        %6873 = vst.msk [vmem:[%s3125 + $0x78] sm:$0xff] %vm1147, %v6857
        %6874 = vst.msk [vmem:[%s3125 + $0x90] sm:$0xff] %vm1147, %v6858
        %6875 = vst.msk [vmem:[%s3125 + $0xa8] sm:$0xff] %vm1147, %v6859
        %v6876 = vld [vmem:[%s4977] sm:$0xf]
        %v6877 = vld [vmem:[%s4977 + $0x4] sm:$0xf]
        %v6878 = vld [vmem:[%s4977 + $0xc] sm:$0xf]
        %v6879 = vld [vmem:[%s4977 + $0x10] sm:$0xf]
        %v6880 = vld [vmem:[%s4977 + $0x18] sm:$0xf]
        %v6881 = vld [vmem:[%s4977 + $0x1c] sm:$0xf]
        %v6882 = vld [vmem:[%s4977 + $0x24] sm:$0xf]
        %v6883 = vld [vmem:[%s4977 + $0x28] sm:$0xf]
        %v6884 = vld [vmem:[%s4977 + $0x30] sm:$0xf]
        %v6885 = vld [vmem:[%s4977 + $0x34] sm:$0xf]
        %v6886 = vld [vmem:[%s4977 + $0x3c] sm:$0xf]
        %v6887 = vld [vmem:[%s4977 + $0x40] sm:$0xf]
        %v6888 = vld [vmem:[%s4977 + $0x48] sm:$0xf]
        %v6889 = vld [vmem:[%s4977 + $0x4c] sm:$0xf]
        %v6890 = vld [vmem:[%s4977 + $0x54] sm:$0xf]
        %v6891 = vld [vmem:[%s4977 + $0x58] sm:$0xf]
        %v6908 = vunpack.c.l.b16 %v6876
        %v6909 = vunpack.c.l.b16 %v6877
        %v6910 = vunpack.c.l.b16 %v6878
        %v6911 = vunpack.c.l.b16 %v6879
        %v6912 = vunpack.c.l.b16 %v6880
        %v6913 = vunpack.c.l.b16 %v6881
        %v6914 = vunpack.c.l.b16 %v6882
        %v6915 = vunpack.c.l.b16 %v6883
        %v6916 = vunpack.c.l.b16 %v6884
        %v6917 = vunpack.c.l.b16 %v6885
        %v6918 = vunpack.c.l.b16 %v6886
        %v6919 = vunpack.c.l.b16 %v6887
        %v6920 = vunpack.c.l.b16 %v6888
        %v6921 = vunpack.c.l.b16 %v6889
        %v6922 = vunpack.c.l.b16 %v6890
        %v6923 = vunpack.c.l.b16 %v6891
        %v6924 = vpack.c.b16 %v6909, %v6908
        %v6925 = vpack.c.b16 %v6911, %v6910
        %v6926 = vpack.c.b16 %v6913, %v6912
        %v6927 = vpack.c.b16 %v6915, %v6914
        %v6928 = vpack.c.b16 %v6917, %v6916
        %v6929 = vpack.c.b16 %v6919, %v6918
        %v6930 = vpack.c.b16 %v6921, %v6920
        %v6931 = vpack.c.b16 %v6923, %v6922
        %6932 = vrot.lane.b32.xlu0 %v6924, 32
        %v6933 = vpop.permute.xlu0 %6932
        %6934 = vrot.lane.b32.xlu0 %v6925, 32
        %v6935 = vpop.permute.xlu0 %6934
        %6936 = vrot.lane.b32.xlu0 %v6926, 32
        %v6937 = vpop.permute.xlu0 %6936
        %6938 = vrot.lane.b32.xlu0 %v6927, 32
        %v6939 = vpop.permute.xlu0 %6938
        %6940 = vrot.lane.b32.xlu0 %v6928, 32
        %v6941 = vpop.permute.xlu0 %6940
        %6942 = vrot.lane.b32.xlu0 %v6929, 32
        %v6943 = vpop.permute.xlu0 %6942
        %6944 = vrot.lane.b32.xlu0 %v6930, 32
        %v6945 = vpop.permute.xlu0 %6944
        %6946 = vrot.lane.b32.xlu0 %v6931, 32
        %v6947 = vpop.permute.xlu0 %6946
        %6956 = vst.msk [vmem:[%s3125] sm:$0xff] %vm1236, %v6933
        %6957 = vst.msk [vmem:[%s3125 + $0x18] sm:$0xff] %vm1236, %v6935
        %6958 = vst.msk [vmem:[%s3125 + $0x30] sm:$0xff] %vm1236, %v6937
        %6959 = vst.msk [vmem:[%s3125 + $0x48] sm:$0xff] %vm1236, %v6939
        %6960 = vst.msk [vmem:[%s3125 + $0x60] sm:$0xff] %vm1236, %v6941
        %6961 = vst.msk [vmem:[%s3125 + $0x78] sm:$0xff] %vm1236, %v6943
        %6962 = vst.msk [vmem:[%s3125 + $0x90] sm:$0xff] %vm1236, %v6945
        %6963 = vst.msk [vmem:[%s3125 + $0xa8] sm:$0xff] %vm1236, %v6947
        %s6964 = scalar_lea.vmem [#allocation3], 120
        %v6965 = vld [vmem:[%s6964] sm:$0xf]
        %v6966 = vld [vmem:[%s6964 + $0x4] sm:$0xf]
        %v6967 = vld [vmem:[%s6964 + $0xc] sm:$0xf]
        %v6968 = vld [vmem:[%s6964 + $0x10] sm:$0xf]
        %v6969 = vld [vmem:[%s6964 + $0x18] sm:$0xf]
        %v6970 = vld [vmem:[%s6964 + $0x1c] sm:$0xf]
        %v6971 = vld [vmem:[%s6964 + $0x24] sm:$0xf]
        %v6972 = vld [vmem:[%s6964 + $0x28] sm:$0xf]
        %v6973 = vld [vmem:[%s6964 + $0x30] sm:$0xf]
        %v6974 = vld [vmem:[%s6964 + $0x34] sm:$0xf]
        %v6975 = vld [vmem:[%s6964 + $0x3c] sm:$0xf]
        %v6976 = vld [vmem:[%s6964 + $0x40] sm:$0xf]
        %v6977 = vld [vmem:[%s6964 + $0x48] sm:$0xf]
        %v6978 = vld [vmem:[%s6964 + $0x4c] sm:$0xf]
        %v6979 = vld [vmem:[%s6964 + $0x54] sm:$0xf]
        %v6980 = vld [vmem:[%s6964 + $0x58] sm:$0xf]
        %v6997 = vunpack.c.l.b16 %v6965
        %v6998 = vunpack.c.l.b16 %v6966
        %v6999 = vunpack.c.l.b16 %v6967
        %v7000 = vunpack.c.l.b16 %v6968
        %v7001 = vunpack.c.l.b16 %v6969
        %v7002 = vunpack.c.l.b16 %v6970
        %v7003 = vunpack.c.l.b16 %v6971
        %v7004 = vunpack.c.l.b16 %v6972
        %v7005 = vunpack.c.l.b16 %v6973
        %v7006 = vunpack.c.l.b16 %v6974
        %v7007 = vunpack.c.l.b16 %v6975
        %v7008 = vunpack.c.l.b16 %v6976
        %v7009 = vunpack.c.l.b16 %v6977
        %v7010 = vunpack.c.l.b16 %v6978
        %v7011 = vunpack.c.l.b16 %v6979
        %v7012 = vunpack.c.l.b16 %v6980
        %v7013 = vpack.c.b16 %v6998, %v6997
        %v7014 = vpack.c.b16 %v7000, %v6999
        %v7015 = vpack.c.b16 %v7002, %v7001
        %v7016 = vpack.c.b16 %v7004, %v7003
        %v7017 = vpack.c.b16 %v7006, %v7005
        %v7018 = vpack.c.b16 %v7008, %v7007
        %v7019 = vpack.c.b16 %v7010, %v7009
        %v7020 = vpack.c.b16 %v7012, %v7011
        %7021 = vrot.lane.b32.xlu0 %v7013, 64
        %v7022 = vpop.permute.xlu0 %7021
        %7023 = vrot.lane.b32.xlu0 %v7014, 64
        %v7024 = vpop.permute.xlu0 %7023
        %7025 = vrot.lane.b32.xlu0 %v7015, 64
        %v7026 = vpop.permute.xlu0 %7025
        %7027 = vrot.lane.b32.xlu0 %v7016, 64
        %v7028 = vpop.permute.xlu0 %7027
        %7029 = vrot.lane.b32.xlu0 %v7017, 64
        %v7030 = vpop.permute.xlu0 %7029
        %7031 = vrot.lane.b32.xlu0 %v7018, 64
        %v7032 = vpop.permute.xlu0 %7031
        %7033 = vrot.lane.b32.xlu0 %v7019, 64
        %v7034 = vpop.permute.xlu0 %7033
        %7035 = vrot.lane.b32.xlu0 %v7020, 64
        %v7036 = vpop.permute.xlu0 %7035
        %7045 = vst.msk [vmem:[%s3125] sm:$0xff] %vm1326, %v7022
        %7046 = vst.msk [vmem:[%s3125 + $0x18] sm:$0xff] %vm1326, %v7024
        %7047 = vst.msk [vmem:[%s3125 + $0x30] sm:$0xff] %vm1326, %v7026
        %7048 = vst.msk [vmem:[%s3125 + $0x48] sm:$0xff] %vm1326, %v7028
        %7049 = vst.msk [vmem:[%s3125 + $0x60] sm:$0xff] %vm1326, %v7030
        %7050 = vst.msk [vmem:[%s3125 + $0x78] sm:$0xff] %vm1326, %v7032
        %7051 = vst.msk [vmem:[%s3125 + $0x90] sm:$0xff] %vm1326, %v7034
        %7052 = vst.msk [vmem:[%s3125 + $0xa8] sm:$0xff] %vm1326, %v7036
        %v7053 = vld [vmem:[%s6803] sm:$0xf]
        %v7054 = vld [vmem:[%s6803 + $0x4] sm:$0xf]
        %v7055 = vld [vmem:[%s6803 + $0x8] sm:$0x1]
        %v7056 = vld [vmem:[%s6803 + $0xc] sm:$0xf]
        %v7057 = vld [vmem:[%s6803 + $0x10] sm:$0xf]
        %v7058 = vld [vmem:[%s6803 + $0x14] sm:$0x1]
        %v7059 = vld [vmem:[%s6803 + $0x18] sm:$0xf]
        %v7060 = vld [vmem:[%s6803 + $0x1c] sm:$0xf]
        %v7061 = vld [vmem:[%s6803 + $0x20] sm:$0x1]
        %v7062 = vld [vmem:[%s6803 + $0x24] sm:$0xf]
        %v7063 = vld [vmem:[%s6803 + $0x28] sm:$0xf]
        %v7064 = vld [vmem:[%s6803 + $0x2c] sm:$0x1]
        %v7065 = vld [vmem:[%s6803 + $0x30] sm:$0xf]
        %v7066 = vld [vmem:[%s6803 + $0x34] sm:$0xf]
        %v7067 = vld [vmem:[%s6803 + $0x38] sm:$0x1]
        %v7068 = vld [vmem:[%s6803 + $0x3c] sm:$0xf]
        %v7069 = vld [vmem:[%s6803 + $0x40] sm:$0xf]
        %v7070 = vld [vmem:[%s6803 + $0x44] sm:$0x1]
        %v7071 = vld [vmem:[%s6803 + $0x48] sm:$0xf]
        %v7072 = vld [vmem:[%s6803 + $0x4c] sm:$0xf]
        %v7073 = vld [vmem:[%s6803 + $0x50] sm:$0x1]
        %v7074 = vld [vmem:[%s6803 + $0x54] sm:$0xf]
        %v7075 = vld [vmem:[%s6803 + $0x58] sm:$0xf]
        %v7076 = vld [vmem:[%s6803 + $0x5c] sm:$0x1]
        %v7101 = vunpack.c.l.b16 %v7053
        %v7102 = vunpack.c.l.b16 %v7054
        %v7103 = vunpack.c.l.b16 %v7055
        %v7104 = vunpack.c.l.b16 %v7056
        %v7105 = vunpack.c.l.b16 %v7057
        %v7106 = vunpack.c.l.b16 %v7058
        %v7107 = vunpack.c.l.b16 %v7059
        %v7108 = vunpack.c.l.b16 %v7060
        %v7109 = vunpack.c.l.b16 %v7061
        %v7110 = vunpack.c.l.b16 %v7062
        %v7111 = vunpack.c.l.b16 %v7063
        %v7112 = vunpack.c.l.b16 %v7064
        %v7113 = vunpack.c.l.b16 %v7065
        %v7114 = vunpack.c.l.b16 %v7066
        %v7115 = vunpack.c.l.b16 %v7067
        %v7116 = vunpack.c.l.b16 %v7068
        %v7117 = vunpack.c.l.b16 %v7069
        %v7118 = vunpack.c.l.b16 %v7070
        %v7119 = vunpack.c.l.b16 %v7071
        %v7120 = vunpack.c.l.b16 %v7072
        %v7121 = vunpack.c.l.b16 %v7073
        %v7122 = vunpack.c.l.b16 %v7074
        %v7123 = vunpack.c.l.b16 %v7075
        %v7124 = vunpack.c.l.b16 %v7076
        %v7125 = vpack.c.b16 %v7102, %v7101
        %v7126 = vpack.c.b16 %v7103, %v7103
        %v7127 = vpack.c.b16 %v7105, %v7104
        %v7128 = vpack.c.b16 %v7106, %v7106
        %v7129 = vpack.c.b16 %v7108, %v7107
        %v7130 = vpack.c.b16 %v7109, %v7109
        %v7131 = vpack.c.b16 %v7111, %v7110
        %v7132 = vpack.c.b16 %v7112, %v7112
        %v7133 = vpack.c.b16 %v7114, %v7113
        %v7134 = vpack.c.b16 %v7115, %v7115
        %v7135 = vpack.c.b16 %v7117, %v7116
        %v7136 = vpack.c.b16 %v7118, %v7118
        %v7137 = vpack.c.b16 %v7120, %v7119
        %v7138 = vpack.c.b16 %v7121, %v7121
        %v7139 = vpack.c.b16 %v7123, %v7122
        %v7140 = vpack.c.b16 %v7124, %v7124
        %v7142 = vshrl.u32 %v7125, 16
        %v7144 = vshll.u32 %v7125, 16
        %v7146 = vrot.slane %v7144, 1
        %v7147 = vor.u32 %v7142, %v7146
        %v7149 = vshll.u32 %v7126, 16
        %v7151 = vrot.slane %v7149, 1
        %v7152 = vsel %vm1423, %v7147, %v7151
        %v7154 = vshrl.u32 %v7127, 16
        %v7156 = vshll.u32 %v7127, 16
        %v7158 = vrot.slane %v7156, 1
        %v7159 = vor.u32 %v7154, %v7158
        %v7161 = vshll.u32 %v7128, 16
        %v7163 = vrot.slane %v7161, 1
        %v7164 = vsel %vm1423, %v7159, %v7163
        %v7166 = vshrl.u32 %v7129, 16
        %v7168 = vshll.u32 %v7129, 16
        %v7170 = vrot.slane %v7168, 1
        %v7171 = vor.u32 %v7166, %v7170
        %v7173 = vshll.u32 %v7130, 16
        %v7175 = vrot.slane %v7173, 1
        %v7176 = vsel %vm1423, %v7171, %v7175
        %v7178 = vshrl.u32 %v7131, 16
        %v7180 = vshll.u32 %v7131, 16
        %v7182 = vrot.slane %v7180, 1
        %v7183 = vor.u32 %v7178, %v7182
        %v7185 = vshll.u32 %v7132, 16
        %v7187 = vrot.slane %v7185, 1
        %v7188 = vsel %vm1423, %v7183, %v7187
        %v7190 = vshrl.u32 %v7133, 16
        %v7192 = vshll.u32 %v7133, 16
        %v7194 = vrot.slane %v7192, 1
        %v7195 = vor.u32 %v7190, %v7194
        %v7197 = vshll.u32 %v7134, 16
        %v7199 = vrot.slane %v7197, 1
        %v7200 = vsel %vm1423, %v7195, %v7199
        %v7202 = vshrl.u32 %v7135, 16
        %v7204 = vshll.u32 %v7135, 16
        %v7206 = vrot.slane %v7204, 1
        %v7207 = vor.u32 %v7202, %v7206
        %v7209 = vshll.u32 %v7136, 16
        %v7211 = vrot.slane %v7209, 1
        %v7212 = vsel %vm1423, %v7207, %v7211
        %v7214 = vshrl.u32 %v7137, 16
        %v7216 = vshll.u32 %v7137, 16
        %v7218 = vrot.slane %v7216, 1
        %v7219 = vor.u32 %v7214, %v7218
        %v7221 = vshll.u32 %v7138, 16
        %v7223 = vrot.slane %v7221, 1
        %v7224 = vsel %vm1423, %v7219, %v7223
        %v7226 = vshrl.u32 %v7139, 16
        %v7228 = vshll.u32 %v7139, 16
        %v7230 = vrot.slane %v7228, 1
        %v7231 = vor.u32 %v7226, %v7230
        %v7233 = vshll.u32 %v7140, 16
        %v7235 = vrot.slane %v7233, 1
        %v7236 = vsel %vm1423, %v7231, %v7235
        %7237 = vrot.lane.b32.xlu0 %v7152, 96
        %v7238 = vpop.permute.xlu0 %7237
        %7239 = vrot.lane.b32.xlu0 %v7164, 96
        %v7240 = vpop.permute.xlu0 %7239
        %7241 = vrot.lane.b32.xlu0 %v7176, 96
        %v7242 = vpop.permute.xlu0 %7241
        %7243 = vrot.lane.b32.xlu0 %v7188, 96
        %v7244 = vpop.permute.xlu0 %7243
        %7245 = vrot.lane.b32.xlu0 %v7200, 96
        %v7246 = vpop.permute.xlu0 %7245
        %7247 = vrot.lane.b32.xlu0 %v7212, 96
        %v7248 = vpop.permute.xlu0 %7247
        %7249 = vrot.lane.b32.xlu0 %v7224, 96
        %v7250 = vpop.permute.xlu0 %7249
        %7251 = vrot.lane.b32.xlu0 %v7236, 96
        %v7252 = vpop.permute.xlu0 %7251
        %7261 = vst.msk [vmem:[%s3125] sm:$0xff] %vm1544, %v7238
        %7262 = vst.msk [vmem:[%s3125 + $0x18] sm:$0xff] %vm1544, %v7240
        %7263 = vst.msk [vmem:[%s3125 + $0x30] sm:$0xff] %vm1544, %v7242
        %7264 = vst.msk [vmem:[%s3125 + $0x48] sm:$0xff] %vm1544, %v7244
        %7265 = vst.msk [vmem:[%s3125 + $0x60] sm:$0xff] %vm1544, %v7246
        %7266 = vst.msk [vmem:[%s3125 + $0x78] sm:$0xff] %vm1544, %v7248
        %7267 = vst.msk [vmem:[%s3125 + $0x90] sm:$0xff] %vm1544, %v7250
        %7268 = vst.msk [vmem:[%s3125 + $0xa8] sm:$0xff] %vm1544, %v7252
        %v7269 = vld [vmem:[%s4977] sm:$0xf]
        %v7270 = vld [vmem:[%s4977 + $0x4] sm:$0xf]
        %v7271 = vld [vmem:[%s4977 + $0x8] sm:$0x1]
        %v7272 = vld [vmem:[%s4977 + $0xc] sm:$0xf]
        %v7273 = vld [vmem:[%s4977 + $0x10] sm:$0xf]
        %v7274 = vld [vmem:[%s4977 + $0x14] sm:$0x1]
        %v7275 = vld [vmem:[%s4977 + $0x18] sm:$0xf]
        %v7276 = vld [vmem:[%s4977 + $0x1c] sm:$0xf]
        %v7277 = vld [vmem:[%s4977 + $0x20] sm:$0x1]
        %v7278 = vld [vmem:[%s4977 + $0x24] sm:$0xf]
        %v7279 = vld [vmem:[%s4977 + $0x28] sm:$0xf]
        %v7280 = vld [vmem:[%s4977 + $0x2c] sm:$0x1]
        %v7281 = vld [vmem:[%s4977 + $0x30] sm:$0xf]
        %v7282 = vld [vmem:[%s4977 + $0x34] sm:$0xf]
        %v7283 = vld [vmem:[%s4977 + $0x38] sm:$0x1]
        %v7284 = vld [vmem:[%s4977 + $0x3c] sm:$0xf]
        %v7285 = vld [vmem:[%s4977 + $0x40] sm:$0xf]
        %v7286 = vld [vmem:[%s4977 + $0x44] sm:$0x1]
        %v7287 = vld [vmem:[%s4977 + $0x48] sm:$0xf]
        %v7288 = vld [vmem:[%s4977 + $0x4c] sm:$0xf]
        %v7289 = vld [vmem:[%s4977 + $0x50] sm:$0x1]
        %v7290 = vld [vmem:[%s4977 + $0x54] sm:$0xf]
        %v7291 = vld [vmem:[%s4977 + $0x58] sm:$0xf]
        %v7292 = vld [vmem:[%s4977 + $0x5c] sm:$0x1]
        %v7317 = vunpack.c.l.b16 %v7269
        %v7318 = vunpack.c.l.b16 %v7270
        %v7319 = vunpack.c.l.b16 %v7271
        %v7320 = vunpack.c.l.b16 %v7272
        %v7321 = vunpack.c.l.b16 %v7273
        %v7322 = vunpack.c.l.b16 %v7274
        %v7323 = vunpack.c.l.b16 %v7275
        %v7324 = vunpack.c.l.b16 %v7276
        %v7325 = vunpack.c.l.b16 %v7277
        %v7326 = vunpack.c.l.b16 %v7278
        %v7327 = vunpack.c.l.b16 %v7279
        %v7328 = vunpack.c.l.b16 %v7280
        %v7329 = vunpack.c.l.b16 %v7281
        %v7330 = vunpack.c.l.b16 %v7282
        %v7331 = vunpack.c.l.b16 %v7283
        %v7332 = vunpack.c.l.b16 %v7284
        %v7333 = vunpack.c.l.b16 %v7285
        %v7334 = vunpack.c.l.b16 %v7286
        %v7335 = vunpack.c.l.b16 %v7287
        %v7336 = vunpack.c.l.b16 %v7288
        %v7337 = vunpack.c.l.b16 %v7289
        %v7338 = vunpack.c.l.b16 %v7290
        %v7339 = vunpack.c.l.b16 %v7291
        %v7340 = vunpack.c.l.b16 %v7292
        %v7341 = vpack.c.b16 %v7318, %v7317
        %v7342 = vpack.c.b16 %v7319, %v7319
        %v7343 = vpack.c.b16 %v7321, %v7320
        %v7344 = vpack.c.b16 %v7322, %v7322
        %v7345 = vpack.c.b16 %v7324, %v7323
        %v7346 = vpack.c.b16 %v7325, %v7325
        %v7347 = vpack.c.b16 %v7327, %v7326
        %v7348 = vpack.c.b16 %v7328, %v7328
        %v7349 = vpack.c.b16 %v7330, %v7329
        %v7350 = vpack.c.b16 %v7331, %v7331
        %v7351 = vpack.c.b16 %v7333, %v7332
        %v7352 = vpack.c.b16 %v7334, %v7334
        %v7353 = vpack.c.b16 %v7336, %v7335
        %v7354 = vpack.c.b16 %v7337, %v7337
        %v7355 = vpack.c.b16 %v7339, %v7338
        %v7356 = vpack.c.b16 %v7340, %v7340
        %v7358 = vshrl.u32 %v7341, 16
        %v7360 = vshll.u32 %v7341, 16
        %v7362 = vrot.slane %v7360, 1
        %v7363 = vor.u32 %v7358, %v7362
        %v7365 = vshll.u32 %v7342, 16
        %v7367 = vrot.slane %v7365, 1
        %v7368 = vsel %vm1423, %v7363, %v7367
        %v7370 = vshrl.u32 %v7343, 16
        %v7372 = vshll.u32 %v7343, 16
        %v7374 = vrot.slane %v7372, 1
        %v7375 = vor.u32 %v7370, %v7374
        %v7377 = vshll.u32 %v7344, 16
        %v7379 = vrot.slane %v7377, 1
        %v7380 = vsel %vm1423, %v7375, %v7379
        %v7382 = vshrl.u32 %v7345, 16
        %v7384 = vshll.u32 %v7345, 16
        %v7386 = vrot.slane %v7384, 1
        %v7387 = vor.u32 %v7382, %v7386
        %v7389 = vshll.u32 %v7346, 16
        %v7391 = vrot.slane %v7389, 1
        %v7392 = vsel %vm1423, %v7387, %v7391
        %v7394 = vshrl.u32 %v7347, 16
        %v7396 = vshll.u32 %v7347, 16
        %v7398 = vrot.slane %v7396, 1
        %v7399 = vor.u32 %v7394, %v7398
        %v7401 = vshll.u32 %v7348, 16
        %v7403 = vrot.slane %v7401, 1
        %v7404 = vsel %vm1423, %v7399, %v7403
        %v7406 = vshrl.u32 %v7349, 16
        %v7408 = vshll.u32 %v7349, 16
        %v7410 = vrot.slane %v7408, 1
        %v7411 = vor.u32 %v7406, %v7410
        %v7413 = vshll.u32 %v7350, 16
        %v7415 = vrot.slane %v7413, 1
        %v7416 = vsel %vm1423, %v7411, %v7415
        %v7418 = vshrl.u32 %v7351, 16
        %v7420 = vshll.u32 %v7351, 16
        %v7422 = vrot.slane %v7420, 1
        %v7423 = vor.u32 %v7418, %v7422
        %v7425 = vshll.u32 %v7352, 16
        %v7427 = vrot.slane %v7425, 1
        %v7428 = vsel %vm1423, %v7423, %v7427
        %v7430 = vshrl.u32 %v7353, 16
        %v7432 = vshll.u32 %v7353, 16
        %v7434 = vrot.slane %v7432, 1
        %v7435 = vor.u32 %v7430, %v7434
        %v7437 = vshll.u32 %v7354, 16
        %v7439 = vrot.slane %v7437, 1
        %v7440 = vsel %vm1423, %v7435, %v7439
        %v7442 = vshrl.u32 %v7355, 16
        %v7444 = vshll.u32 %v7355, 16
        %v7446 = vrot.slane %v7444, 1
        %v7447 = vor.u32 %v7442, %v7446
        %v7449 = vshll.u32 %v7356, 16
        %v7451 = vrot.slane %v7449, 1
        %v7452 = vsel %vm1423, %v7447, %v7451
        %7461 = vst.msk [vmem:[%s3125 + $0x8] sm:$0xff] %vm1147, %v7368
        %7462 = vst.msk [vmem:[%s3125 + $0x20] sm:$0xff] %vm1147, %v7380
        %7463 = vst.msk [vmem:[%s3125 + $0x38] sm:$0xff] %vm1147, %v7392
        %7464 = vst.msk [vmem:[%s3125 + $0x50] sm:$0xff] %vm1147, %v7404
        %7465 = vst.msk [vmem:[%s3125 + $0x68] sm:$0xff] %vm1147, %v7416
        %7466 = vst.msk [vmem:[%s3125 + $0x80] sm:$0xff] %vm1147, %v7428
        %7467 = vst.msk [vmem:[%s3125 + $0x98] sm:$0xff] %vm1147, %v7440
        %7468 = vst.msk [vmem:[%s3125 + $0xb0] sm:$0xff] %vm1147, %v7452
        %v7469 = vld [vmem:[%s6964] sm:$0xf]
        %v7470 = vld [vmem:[%s6964 + $0x4] sm:$0xf]
        %v7471 = vld [vmem:[%s6964 + $0x8] sm:$0x1]
        %v7472 = vld [vmem:[%s6964 + $0xc] sm:$0xf]
        %v7473 = vld [vmem:[%s6964 + $0x10] sm:$0xf]
        %v7474 = vld [vmem:[%s6964 + $0x14] sm:$0x1]
        %v7475 = vld [vmem:[%s6964 + $0x18] sm:$0xf]
        %v7476 = vld [vmem:[%s6964 + $0x1c] sm:$0xf]
        %v7477 = vld [vmem:[%s6964 + $0x20] sm:$0x1]
        %v7478 = vld [vmem:[%s6964 + $0x24] sm:$0xf]
        %v7479 = vld [vmem:[%s6964 + $0x28] sm:$0xf]
        %v7480 = vld [vmem:[%s6964 + $0x2c] sm:$0x1]
        %v7481 = vld [vmem:[%s6964 + $0x30] sm:$0xf]
        %v7482 = vld [vmem:[%s6964 + $0x34] sm:$0xf]
        %v7483 = vld [vmem:[%s6964 + $0x38] sm:$0x1]
        %v7484 = vld [vmem:[%s6964 + $0x3c] sm:$0xf]
        %v7485 = vld [vmem:[%s6964 + $0x40] sm:$0xf]
        %v7486 = vld [vmem:[%s6964 + $0x44] sm:$0x1]
        %v7487 = vld [vmem:[%s6964 + $0x48] sm:$0xf]
        %v7488 = vld [vmem:[%s6964 + $0x4c] sm:$0xf]
        %v7489 = vld [vmem:[%s6964 + $0x50] sm:$0x1]
        %v7490 = vld [vmem:[%s6964 + $0x54] sm:$0xf]
        %v7491 = vld [vmem:[%s6964 + $0x58] sm:$0xf]
        %v7492 = vld [vmem:[%s6964 + $0x5c] sm:$0x1]
        %v7517 = vunpack.c.l.b16 %v7469
        %v7518 = vunpack.c.l.b16 %v7470
        %v7519 = vunpack.c.l.b16 %v7471
        %v7520 = vunpack.c.l.b16 %v7472
        %v7521 = vunpack.c.l.b16 %v7473
        %v7522 = vunpack.c.l.b16 %v7474
        %v7523 = vunpack.c.l.b16 %v7475
        %v7524 = vunpack.c.l.b16 %v7476
        %v7525 = vunpack.c.l.b16 %v7477
        %v7526 = vunpack.c.l.b16 %v7478
        %v7527 = vunpack.c.l.b16 %v7479
        %v7528 = vunpack.c.l.b16 %v7480
        %v7529 = vunpack.c.l.b16 %v7481
        %v7530 = vunpack.c.l.b16 %v7482
        %v7531 = vunpack.c.l.b16 %v7483
        %v7532 = vunpack.c.l.b16 %v7484
        %v7533 = vunpack.c.l.b16 %v7485
        %v7534 = vunpack.c.l.b16 %v7486
        %v7535 = vunpack.c.l.b16 %v7487
        %v7536 = vunpack.c.l.b16 %v7488
        %v7537 = vunpack.c.l.b16 %v7489
        %v7538 = vunpack.c.l.b16 %v7490
        %v7539 = vunpack.c.l.b16 %v7491
        %v7540 = vunpack.c.l.b16 %v7492
        %v7541 = vpack.c.b16 %v7518, %v7517
        %v7542 = vpack.c.b16 %v7519, %v7519
        %v7543 = vpack.c.b16 %v7521, %v7520
        %v7544 = vpack.c.b16 %v7522, %v7522
        %v7545 = vpack.c.b16 %v7524, %v7523
        %v7546 = vpack.c.b16 %v7525, %v7525
        %v7547 = vpack.c.b16 %v7527, %v7526
        %v7548 = vpack.c.b16 %v7528, %v7528
        %v7549 = vpack.c.b16 %v7530, %v7529
        %v7550 = vpack.c.b16 %v7531, %v7531
        %v7551 = vpack.c.b16 %v7533, %v7532
        %v7552 = vpack.c.b16 %v7534, %v7534
        %v7553 = vpack.c.b16 %v7536, %v7535
        %v7554 = vpack.c.b16 %v7537, %v7537
        %v7555 = vpack.c.b16 %v7539, %v7538
        %v7556 = vpack.c.b16 %v7540, %v7540
        %v7558 = vshrl.u32 %v7541, 16
        %v7560 = vshll.u32 %v7541, 16
        %v7562 = vrot.slane %v7560, 1
        %v7563 = vor.u32 %v7558, %v7562
        %v7565 = vshll.u32 %v7542, 16
        %v7567 = vrot.slane %v7565, 1
        %v7568 = vsel %vm1423, %v7563, %v7567
        %v7570 = vshrl.u32 %v7543, 16
        %v7572 = vshll.u32 %v7543, 16
        %v7574 = vrot.slane %v7572, 1
        %v7575 = vor.u32 %v7570, %v7574
        %v7577 = vshll.u32 %v7544, 16
        %v7579 = vrot.slane %v7577, 1
        %v7580 = vsel %vm1423, %v7575, %v7579
        %v7582 = vshrl.u32 %v7545, 16
        %v7584 = vshll.u32 %v7545, 16
        %v7586 = vrot.slane %v7584, 1
        %v7587 = vor.u32 %v7582, %v7586
        %v7589 = vshll.u32 %v7546, 16
        %v7591 = vrot.slane %v7589, 1
        %v7592 = vsel %vm1423, %v7587, %v7591
        %v7594 = vshrl.u32 %v7547, 16
        %v7596 = vshll.u32 %v7547, 16
        %v7598 = vrot.slane %v7596, 1
        %v7599 = vor.u32 %v7594, %v7598
        %v7601 = vshll.u32 %v7548, 16
        %v7603 = vrot.slane %v7601, 1
        %v7604 = vsel %vm1423, %v7599, %v7603
        %v7606 = vshrl.u32 %v7549, 16
        %v7608 = vshll.u32 %v7549, 16
        %v7610 = vrot.slane %v7608, 1
        %v7611 = vor.u32 %v7606, %v7610
        %v7613 = vshll.u32 %v7550, 16
        %v7615 = vrot.slane %v7613, 1
        %v7616 = vsel %vm1423, %v7611, %v7615
        %v7618 = vshrl.u32 %v7551, 16
        %v7620 = vshll.u32 %v7551, 16
        %v7622 = vrot.slane %v7620, 1
        %v7623 = vor.u32 %v7618, %v7622
        %v7625 = vshll.u32 %v7552, 16
        %v7627 = vrot.slane %v7625, 1
        %v7628 = vsel %vm1423, %v7623, %v7627
        %v7630 = vshrl.u32 %v7553, 16
        %v7632 = vshll.u32 %v7553, 16
        %v7634 = vrot.slane %v7632, 1
        %v7635 = vor.u32 %v7630, %v7634
        %v7637 = vshll.u32 %v7554, 16
        %v7639 = vrot.slane %v7637, 1
        %v7640 = vsel %vm1423, %v7635, %v7639
        %v7642 = vshrl.u32 %v7555, 16
        %v7644 = vshll.u32 %v7555, 16
        %v7646 = vrot.slane %v7644, 1
        %v7647 = vor.u32 %v7642, %v7646
        %v7649 = vshll.u32 %v7556, 16
        %v7651 = vrot.slane %v7649, 1
        %v7652 = vsel %vm1423, %v7647, %v7651
        %7653 = vrot.lane.b32.xlu0 %v7568, 32
        %v7654 = vpop.permute.xlu0 %7653
        %7655 = vrot.lane.b32.xlu0 %v7580, 32
        %v7656 = vpop.permute.xlu0 %7655
        %7657 = vrot.lane.b32.xlu0 %v7592, 32
        %v7658 = vpop.permute.xlu0 %7657
        %7659 = vrot.lane.b32.xlu0 %v7604, 32
        %v7660 = vpop.permute.xlu0 %7659
        %7661 = vrot.lane.b32.xlu0 %v7616, 32
        %v7662 = vpop.permute.xlu0 %7661
        %7663 = vrot.lane.b32.xlu0 %v7628, 32
        %v7664 = vpop.permute.xlu0 %7663
        %7665 = vrot.lane.b32.xlu0 %v7640, 32
        %v7666 = vpop.permute.xlu0 %7665
        %7667 = vrot.lane.b32.xlu0 %v7652, 32
        %v7668 = vpop.permute.xlu0 %7667
        %7677 = vst.msk [vmem:[%s3125 + $0x8] sm:$0xff] %vm1236, %v7654
        %7678 = vst.msk [vmem:[%s3125 + $0x20] sm:$0xff] %vm1236, %v7656
        %7679 = vst.msk [vmem:[%s3125 + $0x38] sm:$0xff] %vm1236, %v7658
        %7680 = vst.msk [vmem:[%s3125 + $0x50] sm:$0xff] %vm1236, %v7660
        %7681 = vst.msk [vmem:[%s3125 + $0x68] sm:$0xff] %vm1236, %v7662
        %7682 = vst.msk [vmem:[%s3125 + $0x80] sm:$0xff] %vm1236, %v7664
        %7683 = vst.msk [vmem:[%s3125 + $0x98] sm:$0xff] %vm1236, %v7666
        %7684 = vst.msk [vmem:[%s3125 + $0xb0] sm:$0xff] %vm1236, %v7668
        %v7685 = vld [vmem:[%s6803] sm:$0xe]
        %v7686 = vld [vmem:[%s6803 + $0x4] sm:$0xf]
        %v7687 = vld [vmem:[%s6803 + $0x8] sm:$0x1]
        %v7688 = vld [vmem:[%s6803 + $0xc] sm:$0xe]
        %v7689 = vld [vmem:[%s6803 + $0x10] sm:$0xf]
        %v7690 = vld [vmem:[%s6803 + $0x14] sm:$0x1]
        %v7691 = vld [vmem:[%s6803 + $0x18] sm:$0xe]
        %v7692 = vld [vmem:[%s6803 + $0x1c] sm:$0xf]
        %v7693 = vld [vmem:[%s6803 + $0x20] sm:$0x1]
        %v7694 = vld [vmem:[%s6803 + $0x24] sm:$0xe]
        %v7695 = vld [vmem:[%s6803 + $0x28] sm:$0xf]
        %v7696 = vld [vmem:[%s6803 + $0x2c] sm:$0x1]
        %v7697 = vld [vmem:[%s6803 + $0x30] sm:$0xe]
        %v7698 = vld [vmem:[%s6803 + $0x34] sm:$0xf]
        %v7699 = vld [vmem:[%s6803 + $0x38] sm:$0x1]
        %v7700 = vld [vmem:[%s6803 + $0x3c] sm:$0xe]
        %v7701 = vld [vmem:[%s6803 + $0x40] sm:$0xf]
        %v7702 = vld [vmem:[%s6803 + $0x44] sm:$0x1]
        %v7703 = vld [vmem:[%s6803 + $0x48] sm:$0xe]
        %v7704 = vld [vmem:[%s6803 + $0x4c] sm:$0xf]
        %v7705 = vld [vmem:[%s6803 + $0x50] sm:$0x1]
        %v7706 = vld [vmem:[%s6803 + $0x54] sm:$0xe]
        %v7707 = vld [vmem:[%s6803 + $0x58] sm:$0xf]
        %v7708 = vld [vmem:[%s6803 + $0x5c] sm:$0x1]
        %v7733 = vunpack.c.l.b16 %v7685
        %v7734 = vunpack.c.l.b16 %v7686
        %v7735 = vunpack.c.l.b16 %v7687
        %v7736 = vunpack.c.l.b16 %v7688
        %v7737 = vunpack.c.l.b16 %v7689
        %v7738 = vunpack.c.l.b16 %v7690
        %v7739 = vunpack.c.l.b16 %v7691
        %v7740 = vunpack.c.l.b16 %v7692
        %v7741 = vunpack.c.l.b16 %v7693
        %v7742 = vunpack.c.l.b16 %v7694
        %v7743 = vunpack.c.l.b16 %v7695
        %v7744 = vunpack.c.l.b16 %v7696
        %v7745 = vunpack.c.l.b16 %v7697
        %v7746 = vunpack.c.l.b16 %v7698
        %v7747 = vunpack.c.l.b16 %v7699
        %v7748 = vunpack.c.l.b16 %v7700
        %v7749 = vunpack.c.l.b16 %v7701
        %v7750 = vunpack.c.l.b16 %v7702
        %v7751 = vunpack.c.l.b16 %v7703
        %v7752 = vunpack.c.l.b16 %v7704
        %v7753 = vunpack.c.l.b16 %v7705
        %v7754 = vunpack.c.l.b16 %v7706
        %v7755 = vunpack.c.l.b16 %v7707
        %v7756 = vunpack.c.l.b16 %v7708
        %v7757 = vpack.c.b16 %v7734, %v7733
        %v7758 = vpack.c.b16 %v7735, %v7735
        %v7759 = vpack.c.b16 %v7737, %v7736
        %v7760 = vpack.c.b16 %v7738, %v7738
        %v7761 = vpack.c.b16 %v7740, %v7739
        %v7762 = vpack.c.b16 %v7741, %v7741
        %v7763 = vpack.c.b16 %v7743, %v7742
        %v7764 = vpack.c.b16 %v7744, %v7744
        %v7765 = vpack.c.b16 %v7746, %v7745
        %v7766 = vpack.c.b16 %v7747, %v7747
        %v7767 = vpack.c.b16 %v7749, %v7748
        %v7768 = vpack.c.b16 %v7750, %v7750
        %v7769 = vpack.c.b16 %v7752, %v7751
        %v7770 = vpack.c.b16 %v7753, %v7753
        %v7771 = vpack.c.b16 %v7755, %v7754
        %v7772 = vpack.c.b16 %v7756, %v7756
        %v7773 = vrot.slane %v7757, 1
        %v7774 = vrot.slane %v7758, 1
        %v7775 = vsel %vm2057, %v7773, %v7774
        %v7776 = vrot.slane %v7759, 1
        %v7777 = vrot.slane %v7760, 1
        %v7778 = vsel %vm2057, %v7776, %v7777
        %v7779 = vrot.slane %v7761, 1
        %v7780 = vrot.slane %v7762, 1
        %v7781 = vsel %vm2057, %v7779, %v7780
        %v7782 = vrot.slane %v7763, 1
        %v7783 = vrot.slane %v7764, 1
        %v7784 = vsel %vm2057, %v7782, %v7783
        %v7785 = vrot.slane %v7765, 1
        %v7786 = vrot.slane %v7766, 1
        %v7787 = vsel %vm2057, %v7785, %v7786
        %v7788 = vrot.slane %v7767, 1
        %v7789 = vrot.slane %v7768, 1
        %v7790 = vsel %vm2057, %v7788, %v7789
        %v7791 = vrot.slane %v7769, 1
        %v7792 = vrot.slane %v7770, 1
        %v7793 = vsel %vm2057, %v7791, %v7792
        %v7794 = vrot.slane %v7771, 1
        %v7795 = vrot.slane %v7772, 1
        %v7796 = vsel %vm2057, %v7794, %v7795
        %7797 = vrot.lane.b32.xlu0 %v7775, 64
        %v7798 = vpop.permute.xlu0 %7797
        %7799 = vrot.lane.b32.xlu0 %v7778, 64
        %v7800 = vpop.permute.xlu0 %7799
        %7801 = vrot.lane.b32.xlu0 %v7781, 64
        %v7802 = vpop.permute.xlu0 %7801
        %7803 = vrot.lane.b32.xlu0 %v7784, 64
        %v7804 = vpop.permute.xlu0 %7803
        %7805 = vrot.lane.b32.xlu0 %v7787, 64
        %v7806 = vpop.permute.xlu0 %7805
        %7807 = vrot.lane.b32.xlu0 %v7790, 64
        %v7808 = vpop.permute.xlu0 %7807
        %7809 = vrot.lane.b32.xlu0 %v7793, 64
        %v7810 = vpop.permute.xlu0 %7809
        %7811 = vrot.lane.b32.xlu0 %v7796, 64
        %v7812 = vpop.permute.xlu0 %7811
        %7821 = vst.msk [vmem:[%s3125 + $0x8] sm:$0xff] %vm1326, %v7798
        %7822 = vst.msk [vmem:[%s3125 + $0x20] sm:$0xff] %vm1326, %v7800
        %7823 = vst.msk [vmem:[%s3125 + $0x38] sm:$0xff] %vm1326, %v7802
        %7824 = vst.msk [vmem:[%s3125 + $0x50] sm:$0xff] %vm1326, %v7804
        %7825 = vst.msk [vmem:[%s3125 + $0x68] sm:$0xff] %vm1326, %v7806
        %7826 = vst.msk [vmem:[%s3125 + $0x80] sm:$0xff] %vm1326, %v7808
        %7827 = vst.msk [vmem:[%s3125 + $0x98] sm:$0xff] %vm1326, %v7810
        %7828 = vst.msk [vmem:[%s3125 + $0xb0] sm:$0xff] %vm1326, %v7812
        %v7829 = vld [vmem:[%s4977] sm:$0xe]
        %v7830 = vld [vmem:[%s4977 + $0x4] sm:$0xf]
        %v7831 = vld [vmem:[%s4977 + $0x8] sm:$0x1]
        %v7832 = vld [vmem:[%s4977 + $0xc] sm:$0xe]
        %v7833 = vld [vmem:[%s4977 + $0x10] sm:$0xf]
        %v7834 = vld [vmem:[%s4977 + $0x14] sm:$0x1]
        %v7835 = vld [vmem:[%s4977 + $0x18] sm:$0xe]
        %v7836 = vld [vmem:[%s4977 + $0x1c] sm:$0xf]
        %v7837 = vld [vmem:[%s4977 + $0x20] sm:$0x1]
        %v7838 = vld [vmem:[%s4977 + $0x24] sm:$0xe]
        %v7839 = vld [vmem:[%s4977 + $0x28] sm:$0xf]
        %v7840 = vld [vmem:[%s4977 + $0x2c] sm:$0x1]
        %v7841 = vld [vmem:[%s4977 + $0x30] sm:$0xe]
        %v7842 = vld [vmem:[%s4977 + $0x34] sm:$0xf]
        %v7843 = vld [vmem:[%s4977 + $0x38] sm:$0x1]
        %v7844 = vld [vmem:[%s4977 + $0x3c] sm:$0xe]
        %v7845 = vld [vmem:[%s4977 + $0x40] sm:$0xf]
        %v7846 = vld [vmem:[%s4977 + $0x44] sm:$0x1]
        %v7847 = vld [vmem:[%s4977 + $0x48] sm:$0xe]
        %v7848 = vld [vmem:[%s4977 + $0x4c] sm:$0xf]
        %v7849 = vld [vmem:[%s4977 + $0x50] sm:$0x1]
        %v7850 = vld [vmem:[%s4977 + $0x54] sm:$0xe]
        %v7851 = vld [vmem:[%s4977 + $0x58] sm:$0xf]
        %v7852 = vld [vmem:[%s4977 + $0x5c] sm:$0x1]
        %v7877 = vunpack.c.l.b16 %v7829
        %v7878 = vunpack.c.l.b16 %v7830
        %v7879 = vunpack.c.l.b16 %v7831
        %v7880 = vunpack.c.l.b16 %v7832
        %v7881 = vunpack.c.l.b16 %v7833
        %v7882 = vunpack.c.l.b16 %v7834
        %v7883 = vunpack.c.l.b16 %v7835
        %v7884 = vunpack.c.l.b16 %v7836
        %v7885 = vunpack.c.l.b16 %v7837
        %v7886 = vunpack.c.l.b16 %v7838
        %v7887 = vunpack.c.l.b16 %v7839
        %v7888 = vunpack.c.l.b16 %v7840
        %v7889 = vunpack.c.l.b16 %v7841
        %v7890 = vunpack.c.l.b16 %v7842
        %v7891 = vunpack.c.l.b16 %v7843
        %v7892 = vunpack.c.l.b16 %v7844
        %v7893 = vunpack.c.l.b16 %v7845
        %v7894 = vunpack.c.l.b16 %v7846
        %v7895 = vunpack.c.l.b16 %v7847
        %v7896 = vunpack.c.l.b16 %v7848
        %v7897 = vunpack.c.l.b16 %v7849
        %v7898 = vunpack.c.l.b16 %v7850
        %v7899 = vunpack.c.l.b16 %v7851
        %v7900 = vunpack.c.l.b16 %v7852
        %v7901 = vpack.c.b16 %v7878, %v7877
        %v7902 = vpack.c.b16 %v7879, %v7879
        %v7903 = vpack.c.b16 %v7881, %v7880
        %v7904 = vpack.c.b16 %v7882, %v7882
        %v7905 = vpack.c.b16 %v7884, %v7883
        %v7906 = vpack.c.b16 %v7885, %v7885
        %v7907 = vpack.c.b16 %v7887, %v7886
        %v7908 = vpack.c.b16 %v7888, %v7888
        %v7909 = vpack.c.b16 %v7890, %v7889
        %v7910 = vpack.c.b16 %v7891, %v7891
        %v7911 = vpack.c.b16 %v7893, %v7892
        %v7912 = vpack.c.b16 %v7894, %v7894
        %v7913 = vpack.c.b16 %v7896, %v7895
        %v7914 = vpack.c.b16 %v7897, %v7897
        %v7915 = vpack.c.b16 %v7899, %v7898
        %v7916 = vpack.c.b16 %v7900, %v7900
        %v7917 = vrot.slane %v7901, 1
        %v7918 = vrot.slane %v7902, 1
        %v7919 = vsel %vm2057, %v7917, %v7918
        %v7920 = vrot.slane %v7903, 1
        %v7921 = vrot.slane %v7904, 1
        %v7922 = vsel %vm2057, %v7920, %v7921
        %v7923 = vrot.slane %v7905, 1
        %v7924 = vrot.slane %v7906, 1
        %v7925 = vsel %vm2057, %v7923, %v7924
        %v7926 = vrot.slane %v7907, 1
        %v7927 = vrot.slane %v7908, 1
        %v7928 = vsel %vm2057, %v7926, %v7927
        %v7929 = vrot.slane %v7909, 1
        %v7930 = vrot.slane %v7910, 1
        %v7931 = vsel %vm2057, %v7929, %v7930
        %v7932 = vrot.slane %v7911, 1
        %v7933 = vrot.slane %v7912, 1
        %v7934 = vsel %vm2057, %v7932, %v7933
        %v7935 = vrot.slane %v7913, 1
        %v7936 = vrot.slane %v7914, 1
        %v7937 = vsel %vm2057, %v7935, %v7936
        %v7938 = vrot.slane %v7915, 1
        %v7939 = vrot.slane %v7916, 1
        %v7940 = vsel %vm2057, %v7938, %v7939
        %7941 = vrot.lane.b32.xlu0 %v7919, 96
        %v7942 = vpop.permute.xlu0 %7941
        %7943 = vrot.lane.b32.xlu0 %v7922, 96
        %v7944 = vpop.permute.xlu0 %7943
        %7945 = vrot.lane.b32.xlu0 %v7925, 96
        %v7946 = vpop.permute.xlu0 %7945
        %7947 = vrot.lane.b32.xlu0 %v7928, 96
        %v7948 = vpop.permute.xlu0 %7947
        %7949 = vrot.lane.b32.xlu0 %v7931, 96
        %v7950 = vpop.permute.xlu0 %7949
        %7951 = vrot.lane.b32.xlu0 %v7934, 96
        %v7952 = vpop.permute.xlu0 %7951
        %7953 = vrot.lane.b32.xlu0 %v7937, 96
        %v7954 = vpop.permute.xlu0 %7953
        %7955 = vrot.lane.b32.xlu0 %v7940, 96
        %v7956 = vpop.permute.xlu0 %7955
        %7965 = vst.msk [vmem:[%s3125 + $0x8] sm:$0xff] %vm1544, %v7942
        %7966 = vst.msk [vmem:[%s3125 + $0x20] sm:$0xff] %vm1544, %v7944
        %7967 = vst.msk [vmem:[%s3125 + $0x38] sm:$0xff] %vm1544, %v7946
        %7968 = vst.msk [vmem:[%s3125 + $0x50] sm:$0xff] %vm1544, %v7948
        %7969 = vst.msk [vmem:[%s3125 + $0x68] sm:$0xff] %vm1544, %v7950
        %7970 = vst.msk [vmem:[%s3125 + $0x80] sm:$0xff] %vm1544, %v7952
        %7971 = vst.msk [vmem:[%s3125 + $0x98] sm:$0xff] %vm1544, %v7954
        %7972 = vst.msk [vmem:[%s3125 + $0xb0] sm:$0xff] %vm1544, %v7956
        %v7973 = vld [vmem:[%s6964] sm:$0xe]
        %v7974 = vld [vmem:[%s6964 + $0x4] sm:$0xf]
        %v7975 = vld [vmem:[%s6964 + $0x8] sm:$0x1]
        %v7976 = vld [vmem:[%s6964 + $0xc] sm:$0xe]
        %v7977 = vld [vmem:[%s6964 + $0x10] sm:$0xf]
        %v7978 = vld [vmem:[%s6964 + $0x14] sm:$0x1]
        %v7979 = vld [vmem:[%s6964 + $0x18] sm:$0xe]
        %v7980 = vld [vmem:[%s6964 + $0x1c] sm:$0xf]
        %v7981 = vld [vmem:[%s6964 + $0x20] sm:$0x1]
        %v7982 = vld [vmem:[%s6964 + $0x24] sm:$0xe]
        %v7983 = vld [vmem:[%s6964 + $0x28] sm:$0xf]
        %v7984 = vld [vmem:[%s6964 + $0x2c] sm:$0x1]
        %v7985 = vld [vmem:[%s6964 + $0x30] sm:$0xe]
        %v7986 = vld [vmem:[%s6964 + $0x34] sm:$0xf]
        %v7987 = vld [vmem:[%s6964 + $0x38] sm:$0x1]
        %v7988 = vld [vmem:[%s6964 + $0x3c] sm:$0xe]
        %v7989 = vld [vmem:[%s6964 + $0x40] sm:$0xf]
        %v7990 = vld [vmem:[%s6964 + $0x44] sm:$0x1]
        %v7991 = vld [vmem:[%s6964 + $0x48] sm:$0xe]
        %v7992 = vld [vmem:[%s6964 + $0x4c] sm:$0xf]
        %v7993 = vld [vmem:[%s6964 + $0x50] sm:$0x1]
        %v7994 = vld [vmem:[%s6964 + $0x54] sm:$0xe]
        %v7995 = vld [vmem:[%s6964 + $0x58] sm:$0xf]
        %v7996 = vld [vmem:[%s6964 + $0x5c] sm:$0x1]
        %v8021 = vunpack.c.l.b16 %v7973
        %v8022 = vunpack.c.l.b16 %v7974
        %v8023 = vunpack.c.l.b16 %v7975
        %v8024 = vunpack.c.l.b16 %v7976
        %v8025 = vunpack.c.l.b16 %v7977
        %v8026 = vunpack.c.l.b16 %v7978
        %v8027 = vunpack.c.l.b16 %v7979
        %v8028 = vunpack.c.l.b16 %v7980
        %v8029 = vunpack.c.l.b16 %v7981
        %v8030 = vunpack.c.l.b16 %v7982
        %v8031 = vunpack.c.l.b16 %v7983
        %v8032 = vunpack.c.l.b16 %v7984
        %v8033 = vunpack.c.l.b16 %v7985
        %v8034 = vunpack.c.l.b16 %v7986
        %v8035 = vunpack.c.l.b16 %v7987
        %v8036 = vunpack.c.l.b16 %v7988
        %v8037 = vunpack.c.l.b16 %v7989
        %v8038 = vunpack.c.l.b16 %v7990
        %v8039 = vunpack.c.l.b16 %v7991
        %v8040 = vunpack.c.l.b16 %v7992
        %v8041 = vunpack.c.l.b16 %v7993
        %v8042 = vunpack.c.l.b16 %v7994
        %v8043 = vunpack.c.l.b16 %v7995
        %v8044 = vunpack.c.l.b16 %v7996
        %v8045 = vpack.c.b16 %v8022, %v8021
        %v8046 = vpack.c.b16 %v8023, %v8023
        %v8047 = vpack.c.b16 %v8025, %v8024
        %v8048 = vpack.c.b16 %v8026, %v8026
        %v8049 = vpack.c.b16 %v8028, %v8027
        %v8050 = vpack.c.b16 %v8029, %v8029
        %v8051 = vpack.c.b16 %v8031, %v8030
        %v8052 = vpack.c.b16 %v8032, %v8032
        %v8053 = vpack.c.b16 %v8034, %v8033
        %v8054 = vpack.c.b16 %v8035, %v8035
        %v8055 = vpack.c.b16 %v8037, %v8036
        %v8056 = vpack.c.b16 %v8038, %v8038
        %v8057 = vpack.c.b16 %v8040, %v8039
        %v8058 = vpack.c.b16 %v8041, %v8041
        %v8059 = vpack.c.b16 %v8043, %v8042
        %v8060 = vpack.c.b16 %v8044, %v8044
        %v8061 = vrot.slane %v8045, 1
        %v8062 = vrot.slane %v8046, 1
        %v8063 = vsel %vm2057, %v8061, %v8062
        %v8064 = vrot.slane %v8047, 1
        %v8065 = vrot.slane %v8048, 1
        %v8066 = vsel %vm2057, %v8064, %v8065
        %v8067 = vrot.slane %v8049, 1
        %v8068 = vrot.slane %v8050, 1
        %v8069 = vsel %vm2057, %v8067, %v8068
        %v8070 = vrot.slane %v8051, 1
        %v8071 = vrot.slane %v8052, 1
        %v8072 = vsel %vm2057, %v8070, %v8071
        %v8073 = vrot.slane %v8053, 1
        %v8074 = vrot.slane %v8054, 1
        %v8075 = vsel %vm2057, %v8073, %v8074
        %v8076 = vrot.slane %v8055, 1
        %v8077 = vrot.slane %v8056, 1
        %v8078 = vsel %vm2057, %v8076, %v8077
        %v8079 = vrot.slane %v8057, 1
        %v8080 = vrot.slane %v8058, 1
        %v8081 = vsel %vm2057, %v8079, %v8080
        %v8082 = vrot.slane %v8059, 1
        %v8083 = vrot.slane %v8060, 1
        %v8084 = vsel %vm2057, %v8082, %v8083
        %8093 = vst.msk [vmem:[%s3125 + $0x10] sm:$0xff] %vm1147, %v8063
        %8094 = vst.msk [vmem:[%s3125 + $0x28] sm:$0xff] %vm1147, %v8066
        %8095 = vst.msk [vmem:[%s3125 + $0x40] sm:$0xff] %vm1147, %v8069
        %8096 = vst.msk [vmem:[%s3125 + $0x58] sm:$0xff] %vm1147, %v8072
        %8097 = vst.msk [vmem:[%s3125 + $0x70] sm:$0xff] %vm1147, %v8075
        %8098 = vst.msk [vmem:[%s3125 + $0x88] sm:$0xff] %vm1147, %v8078
        %8099 = vst.msk [vmem:[%s3125 + $0xa0] sm:$0xff] %vm1147, %v8081
        %8100 = vst.msk [vmem:[%s3125 + $0xb8] sm:$0xff] %vm1147, %v8084
        %v8101 = vld [vmem:[%s3125] sm:$0xff]
        %v8102 = vld [vmem:[%s3125 + $0x8] sm:$0xff]
        %v8103 = vld [vmem:[%s3125 + $0x10] sm:$0xff]
        %v8104 = vld [vmem:[%s3125 + $0x18] sm:$0xff]
        %v8105 = vld [vmem:[%s3125 + $0x20] sm:$0xff]
        %v8106 = vld [vmem:[%s3125 + $0x28] sm:$0xff]
        %v8107 = vld [vmem:[%s3125 + $0x30] sm:$0xff]
        %v8108 = vld [vmem:[%s3125 + $0x38] sm:$0xff]
        %v8109 = vld [vmem:[%s3125 + $0x40] sm:$0xff]
        %v8110 = vld [vmem:[%s3125 + $0x48] sm:$0xff]
        %v8111 = vld [vmem:[%s3125 + $0x50] sm:$0xff]
        %v8112 = vld [vmem:[%s3125 + $0x58] sm:$0xff]
        %v8113 = vld [vmem:[%s3125 + $0x60] sm:$0xff]
        %v8114 = vld [vmem:[%s3125 + $0x68] sm:$0xff]
        %v8115 = vld [vmem:[%s3125 + $0x70] sm:$0xff]
        %v8116 = vld [vmem:[%s3125 + $0x78] sm:$0xff]
        %v8117 = vld [vmem:[%s3125 + $0x80] sm:$0xff]
        %v8118 = vld [vmem:[%s3125 + $0x88] sm:$0xff]
        %v8119 = vld [vmem:[%s3125 + $0x90] sm:$0xff]
        %v8120 = vld [vmem:[%s3125 + $0x98] sm:$0xff]
        %v8121 = vld [vmem:[%s3125 + $0xa0] sm:$0xff]
        %v8122 = vld [vmem:[%s3125 + $0xa8] sm:$0xff]
        %v8123 = vld [vmem:[%s3125 + $0xb0] sm:$0xff]
        %v8124 = vld [vmem:[%s3125 + $0xb8] sm:$0xff]
        %v8125 = vld [vmem:[%s3] sm:$0xf]
        %v8126 = vld [vmem:[%s3 + $0x4] sm:$0xf]
        %v8127 = vld [vmem:[%s3 + $0x8] sm:$0xf]
        %v8128 = vld [vmem:[%s3 + $0xc] sm:$0xf]
        %v8129 = vld [vmem:[%s3 + $0x10] sm:$0xf]
        %v8130 = vld [vmem:[%s3 + $0x14] sm:$0xf]
        %v8131 = vld [vmem:[%s3 + $0x18] sm:$0xf]
        %v8132 = vld [vmem:[%s3 + $0x1c] sm:$0xf]
        %v8133 = vld [vmem:[%s3 + $0x20] sm:$0xf]
        %v8134 = vld [vmem:[%s3 + $0x24] sm:$0xf]
        %v8135 = vld [vmem:[%s3 + $0x28] sm:$0xf]
        %v8136 = vld [vmem:[%s3 + $0x2c] sm:$0xf]
        %v8137 = vld [vmem:[%s3 + $0x30] sm:$0xf]
        %v8138 = vld [vmem:[%s3 + $0x34] sm:$0xf]
        %v8139 = vld [vmem:[%s3 + $0x38] sm:$0xf]
        %v8140 = vld [vmem:[%s3 + $0x3c] sm:$0xf]
        %v8141 = vld [vmem:[%s3 + $0x40] sm:$0xf]
        %v8142 = vld [vmem:[%s3 + $0x44] sm:$0xf]
        %v8143 = vld [vmem:[%s3 + $0x48] sm:$0xf]
        %v8144 = vld [vmem:[%s3 + $0x4c] sm:$0xf]
        %v8145 = vld [vmem:[%s3 + $0x50] sm:$0xf]
        %v8146 = vld [vmem:[%s3 + $0x54] sm:$0xf]
        %v8147 = vld [vmem:[%s3 + $0x58] sm:$0xf]
        %v8148 = vld [vmem:[%s3 + $0x5c] sm:$0xf]
        %v8149 = vld [vmem:[%s3 + $0x60] sm:$0xf]
        %v8150 = vld [vmem:[%s3 + $0x64] sm:$0xf]
        %v8151 = vld [vmem:[%s3 + $0x68] sm:$0xf]
        %v8152 = vld [vmem:[%s3 + $0x6c] sm:$0xf]
        %v8153 = vld [vmem:[%s3 + $0x70] sm:$0xf]
        %v8154 = vld [vmem:[%s3 + $0x74] sm:$0xf]
        %v8155 = vld [vmem:[%s3 + $0x78] sm:$0xf]
        %v8156 = vld [vmem:[%s3 + $0x7c] sm:$0xf]
        %v8157 = vld [vmem:[%s3 + $0x80] sm:$0xf]
        %v8158 = vld [vmem:[%s3 + $0x84] sm:$0xf]
        %v8159 = vld [vmem:[%s3 + $0x88] sm:$0xf]
        %v8160 = vld [vmem:[%s3 + $0x8c] sm:$0xf]
        %v8161 = vld [vmem:[%s4] sm:$0x1]
        %v8163 = vlaneseq
        %v8164 = vshrl.u32 %v8163, 7
        %v8165 = vsub.s32 0, %v8164
        %v8166 = vrot.slane %v8161, %v8165
        %v8204 = vunpack.c.l.b16 %v8125
        %v8205 = vunpack.c.l.b16 %v8126
        %v8206 = vunpack.c.l.b16 %v8127
        %v8207 = vunpack.c.l.b16 %v8128
        %v8208 = vunpack.c.l.b16 %v8129
        %v8209 = vunpack.c.l.b16 %v8130
        %v8210 = vunpack.c.l.b16 %v8131
        %v8211 = vunpack.c.l.b16 %v8132
        %v8212 = vunpack.c.l.b16 %v8133
        %v8213 = vunpack.c.l.b16 %v8134
        %v8214 = vunpack.c.l.b16 %v8135
        %v8215 = vunpack.c.l.b16 %v8136
        %v8216 = vunpack.c.l.b16 %v8137
        %v8217 = vunpack.c.l.b16 %v8138
        %v8218 = vunpack.c.l.b16 %v8139
        %v8219 = vunpack.c.l.b16 %v8140
        %v8220 = vunpack.c.l.b16 %v8141
        %v8221 = vunpack.c.l.b16 %v8142
        %v8222 = vunpack.c.l.b16 %v8143
        %v8223 = vunpack.c.l.b16 %v8144
        %v8224 = vunpack.c.l.b16 %v8145
        %v8225 = vunpack.c.l.b16 %v8146
        %v8226 = vunpack.c.l.b16 %v8147
        %v8227 = vunpack.c.l.b16 %v8148
        %v8228 = vunpack.c.l.b16 %v8149
        %v8229 = vunpack.c.l.b16 %v8150
        %v8230 = vunpack.c.l.b16 %v8151
        %v8231 = vunpack.c.l.b16 %v8152
        %v8232 = vunpack.c.l.b16 %v8153
        %v8233 = vunpack.c.l.b16 %v8154
        %v8234 = vunpack.c.l.b16 %v8155
        %v8235 = vunpack.c.l.b16 %v8156
        %v8236 = vunpack.c.l.b16 %v8157
        %v8237 = vunpack.c.l.b16 %v8158
        %v8238 = vunpack.c.l.b16 %v8159
        %v8239 = vunpack.c.l.b16 %v8160
        %v8240 = vpack.c.b16 %v8205, %v8204
        %v8241 = vpack.c.b16 %v8207, %v8206
        %v8242 = vpack.c.b16 %v8209, %v8208
        %v8243 = vpack.c.b16 %v8211, %v8210
        %v8244 = vpack.c.b16 %v8213, %v8212
        %v8245 = vpack.c.b16 %v8215, %v8214
        %v8246 = vpack.c.b16 %v8217, %v8216
        %v8247 = vpack.c.b16 %v8219, %v8218
        %v8248 = vpack.c.b16 %v8221, %v8220
        %v8249 = vpack.c.b16 %v8223, %v8222
        %v8250 = vpack.c.b16 %v8225, %v8224
        %v8251 = vpack.c.b16 %v8227, %v8226
        %v8252 = vpack.c.b16 %v8229, %v8228
        %v8253 = vpack.c.b16 %v8231, %v8230
        %v8254 = vpack.c.b16 %v8233, %v8232
        %v8255 = vpack.c.b16 %v8235, %v8234
        %v8256 = vpack.c.b16 %v8237, %v8236
        %v8257 = vpack.c.b16 %v8239, %v8238
        %v8277 = vsel %vm1147, %v8103, 0
        %v8280 = vsel %vm1147, %v8106, 0
        %v8283 = vsel %vm1147, %v8109, 0
        %v8286 = vsel %vm1147, %v8112, 0
        %v8289 = vsel %vm1147, %v8115, 0
        %v8292 = vsel %vm1147, %v8118, 0
        %v8295 = vsel %vm1147, %v8121, 0
        %v8298 = vsel %vm1147, %v8124, 0
        %8300 = vmatprep.subr.bf16.mxu0 0
        %8301 = vmatpush1.bf16.msra.mxu0 %v8240
        %8302 = vmatprep.subr.bf16.mxu0 0
        %8303 = vmatpush1.bf16.msra.mxu0 %v8241
        %8304 = vmatprep.subr.bf16.mxu0 0
        %8305 = vmatpush1.bf16.msra.mxu0 %v8242
        %8306 = vmatprep.subr.bf16.mxu0 0
        %8307 = vmatpush1.bf16.msra.mxu0 %v8243
        %8308 = vmatprep.subr.bf16.mxu0 0
        %8309 = vmatpush1.bf16.msra.mxu0 %v8244
        %8310 = vmatprep.subr.bf16.mxu0 0
        %8311 = vmatpush1.bf16.msra.mxu0 %v8245
        %8312 = vmatprep.subr.bf16.mxu0 0
        %8313 = vmatpush1.bf16.msra.mxu0 %v8246
        %8314 = vmatprep.subr.bf16.mxu0 0
        %8315 = vmatpush1.bf16.msra.mxu0 %v8247
        %8316 = vmatprep.subr.bf16.mxu0 0
        %8317 = vmatpush1.bf16.msra.mxu0 %v8248
        %8318 = vmatprep.subr.bf16.mxu0 0
        %8319 = vmatpush1.bf16.msra.mxu0 %v8249
        %8320 = vmatprep.subr.bf16.mxu0 0
        %8321 = vmatpush1.bf16.msra.mxu0 %v8250
        %8322 = vmatprep.subr.bf16.mxu0 0
        %8323 = vmatpush1.bf16.msra.mxu0 %v8251
        %8324 = vmatprep.subr.bf16.mxu0 0
        %8325 = vmatpush1.bf16.msra.mxu0 %v8252
        %8326 = vmatprep.subr.bf16.mxu0 0
        %8327 = vmatpush1.bf16.msra.mxu0 %v8253
        %8328 = vmatprep.subr.bf16.mxu0 0
        %8329 = vmatpush1.bf16.msra.mxu0 %v8254
        %8330 = vmatprep.subr.bf16.mxu0 0
        %8331 = vmatpush1.bf16.msra.mxu0 %v8255
        %8332 = vmatprep.mubr.bf16.mxu0 %v8102
        %8333 = vmatmul.mubr.bf16.gmra.mrb[0].mxu0 %v8101
        %v8334 = vpop.f32.mrb[0].mxu0
        %v8335 = vadd.f32 %v8166, %v8334
        %v8336 = vpop.f32.mrb[0].mxu0
        %v8337 = vpop.f32.mrb[0].mxu0
        %v8338 = vadd.f32 %v8166, %v8337
        %v8339 = vpop.f32.mrb[0].mxu0
        %8340 = vmatprep.mubr.bf16.mxu0 %v8105
        %8341 = vmatmul.mubr.bf16.gmra.mrb[0].mxu0 %v8104
        %v8342 = vpop.f32.mrb[0].mxu0
        %v8343 = vadd.f32 %v8166, %v8342
        %v8344 = vpop.f32.mrb[0].mxu0
        %v8345 = vpop.f32.mrb[0].mxu0
        %v8346 = vadd.f32 %v8166, %v8345
        %v8347 = vpop.f32.mrb[0].mxu0
        %8348 = vmatprep.mubr.bf16.mxu0 %v8108
        %8349 = vmatmul.mubr.bf16.gmra.mrb[0].mxu0 %v8107
        %v8350 = vpop.f32.mrb[0].mxu0
        %v8351 = vadd.f32 %v8166, %v8350
        %v8352 = vpop.f32.mrb[0].mxu0
        %v8353 = vpop.f32.mrb[0].mxu0
        %v8354 = vadd.f32 %v8166, %v8353
        %v8355 = vpop.f32.mrb[0].mxu0
        %8356 = vmatprep.mubr.bf16.mxu0 %v8111
        %8357 = vmatmul.mubr.bf16.gmra.mrb[0].mxu0 %v8110
        %v8358 = vpop.f32.mrb[0].mxu0
        %v8359 = vadd.f32 %v8166, %v8358
        %v8360 = vpop.f32.mrb[0].mxu0
        %v8361 = vpop.f32.mrb[0].mxu0
        %v8362 = vadd.f32 %v8166, %v8361
        %v8363 = vpop.f32.mrb[0].mxu0
        %8364 = vmatprep.mubr.bf16.mxu0 %v8114
        %8365 = vmatmul.mubr.bf16.gmra.mrb[0].mxu0 %v8113
        %v8366 = vpop.f32.mrb[0].mxu0
        %v8367 = vadd.f32 %v8166, %v8366
        %v8368 = vpop.f32.mrb[0].mxu0
        %v8369 = vpop.f32.mrb[0].mxu0
        %v8370 = vadd.f32 %v8166, %v8369
        %v8371 = vpop.f32.mrb[0].mxu0
        %8372 = vmatprep.mubr.bf16.mxu0 %v8117
        %8373 = vmatmul.mubr.bf16.gmra.mrb[0].mxu0 %v8116
        %v8374 = vpop.f32.mrb[0].mxu0
        %v8375 = vadd.f32 %v8166, %v8374
        %v8376 = vpop.f32.mrb[0].mxu0
        %v8377 = vpop.f32.mrb[0].mxu0
        %v8378 = vadd.f32 %v8166, %v8377
        %v8379 = vpop.f32.mrb[0].mxu0
        %8380 = vmatprep.mubr.bf16.mxu0 %v8120
        %8381 = vmatmul.mubr.bf16.gmra.mrb[0].mxu0 %v8119
        %v8382 = vpop.f32.mrb[0].mxu0
        %v8383 = vadd.f32 %v8166, %v8382
        %v8384 = vpop.f32.mrb[0].mxu0
        %v8385 = vpop.f32.mrb[0].mxu0
        %v8386 = vadd.f32 %v8166, %v8385
        %v8387 = vpop.f32.mrb[0].mxu0
        %8388 = vmatprep.mubr.bf16.mxu0 %v8123
        %8389 = vmatmul.mubr.bf16.gmra.mrb[0].mxu0 %v8122
        %v8390 = vpop.f32.mrb[0].mxu0
        %v8391 = vadd.f32 %v8166, %v8390
        %v8392 = vpop.f32.mrb[0].mxu0
        %v8393 = vpop.f32.mrb[0].mxu0
        %v8394 = vadd.f32 %v8166, %v8393
        %v8395 = vpop.f32.mrb[0].mxu0
        %8396 = vdwg.mxu0
        %8397 = vmatprep.subr.bf16.mxu0 0
        %8398 = vmatpush1.bf16.msra.mxu0 %v8256
        %8399 = vmatprep.subr.bf16.mxu0 0
        %8400 = vmatpush1.bf16.msra.mxu0 %v8257
        %8401 = vmatprep.subr.bf16.mxu0 0
        %8402 = vmatpush1.bf16.msra.mxu0 0
        %8403 = vmatprep.subr.bf16.mxu0 0
        %8404 = vmatpush1.bf16.msra.mxu0 0
        %8405 = vmatprep.subr.bf16.mxu0 0
        %8406 = vmatpush1.bf16.msra.mxu0 0
        %8407 = vmatprep.subr.bf16.mxu0 0
        %8408 = vmatpush1.bf16.msra.mxu0 0
        %8409 = vmatprep.subr.bf16.mxu0 0
        %8410 = vmatpush1.bf16.msra.mxu0 0
        %8411 = vmatprep.subr.bf16.mxu0 0
        %8412 = vmatpush1.bf16.msra.mxu0 0
        %8413 = vmatprep.subr.bf16.mxu0 0
        %8414 = vmatpush1.bf16.msra.mxu0 0
        %8415 = vmatprep.subr.bf16.mxu0 0
        %8416 = vmatpush1.bf16.msra.mxu0 0
        %8417 = vmatprep.subr.bf16.mxu0 0
        %8418 = vmatpush1.bf16.msra.mxu0 0
        %8419 = vmatprep.subr.bf16.mxu0 0
        %8420 = vmatpush1.bf16.msra.mxu0 0
        %8421 = vmatprep.subr.bf16.mxu0 0
        %8422 = vmatpush1.bf16.msra.mxu0 0
        %8423 = vmatprep.subr.bf16.mxu0 0
        %8424 = vmatpush1.bf16.msra.mxu0 0
        %8425 = vmatprep.subr.bf16.mxu0 0
        %8426 = vmatpush1.bf16.msra.mxu0 0
        %8427 = vmatprep.subr.bf16.mxu0 0
        %8428 = vmatpush1.bf16.msra.mxu0 0
        %8429 = vmatprep.mubr.bf16.mxu0 0
        %8430 = vmatmul.mubr.bf16.gmra.mrb[0].mxu0 %v8277
        %v8431 = vpop.f32.mrb[0].mxu0
        %v8432 = vadd.f32 %v8335, %v8431
        %v8433 = vpop.f32.mrb[0].mxu0
        %v8434 = vpop.f32.mrb[0].mxu0
        %v8435 = vadd.f32 %v8338, %v8434
        %v8436 = vpop.f32.mrb[0].mxu0
        %8437 = vmatprep.mubr.bf16.mxu0 0
        %8438 = vmatmul.mubr.bf16.gmra.mrb[0].mxu0 %v8280
        %v8439 = vpop.f32.mrb[0].mxu0
        %v8440 = vadd.f32 %v8343, %v8439
        %v8441 = vpop.f32.mrb[0].mxu0
        %v8442 = vpop.f32.mrb[0].mxu0
        %v8443 = vadd.f32 %v8346, %v8442
        %v8444 = vpop.f32.mrb[0].mxu0
        %8445 = vmatprep.mubr.bf16.mxu0 0
        %8446 = vmatmul.mubr.bf16.gmra.mrb[0].mxu0 %v8283
        %v8447 = vpop.f32.mrb[0].mxu0
        %v8448 = vadd.f32 %v8351, %v8447
        %v8449 = vpop.f32.mrb[0].mxu0
        %v8450 = vpop.f32.mrb[0].mxu0
        %v8451 = vadd.f32 %v8354, %v8450
        %v8452 = vpop.f32.mrb[0].mxu0
        %8453 = vmatprep.mubr.bf16.mxu0 0
        %8454 = vmatmul.mubr.bf16.gmra.mrb[0].mxu0 %v8286
        %v8455 = vpop.f32.mrb[0].mxu0
        %v8456 = vadd.f32 %v8359, %v8455
        %v8457 = vpop.f32.mrb[0].mxu0
        %v8458 = vpop.f32.mrb[0].mxu0
        %v8459 = vadd.f32 %v8362, %v8458
        %v8460 = vpop.f32.mrb[0].mxu0
        %8461 = vmatprep.mubr.bf16.mxu0 0
        %8462 = vmatmul.mubr.bf16.gmra.mrb[0].mxu0 %v8289
        %v8463 = vpop.f32.mrb[0].mxu0
        %v8464 = vadd.f32 %v8367, %v8463
        %v8465 = vpop.f32.mrb[0].mxu0
        %v8466 = vpop.f32.mrb[0].mxu0
        %v8467 = vadd.f32 %v8370, %v8466
        %v8468 = vpop.f32.mrb[0].mxu0
        %8469 = vmatprep.mubr.bf16.mxu0 0
        %8470 = vmatmul.mubr.bf16.gmra.mrb[0].mxu0 %v8292
        %v8471 = vpop.f32.mrb[0].mxu0
        %v8472 = vadd.f32 %v8375, %v8471
        %v8473 = vpop.f32.mrb[0].mxu0
        %v8474 = vpop.f32.mrb[0].mxu0
        %v8475 = vadd.f32 %v8378, %v8474
        %v8476 = vpop.f32.mrb[0].mxu0
        %8477 = vmatprep.mubr.bf16.mxu0 0
        %8478 = vmatmul.mubr.bf16.gmra.mrb[0].mxu0 %v8295
        %v8479 = vpop.f32.mrb[0].mxu0
        %v8480 = vadd.f32 %v8383, %v8479
        %v8481 = vpop.f32.mrb[0].mxu0
        %v8482 = vpop.f32.mrb[0].mxu0
        %v8483 = vadd.f32 %v8386, %v8482
        %v8484 = vpop.f32.mrb[0].mxu0
        %8485 = vmatprep.mubr.bf16.mxu0 0
        %8486 = vmatmul.mubr.bf16.gmra.mrb[0].mxu0 %v8298
        %v8487 = vpop.f32.mrb[0].mxu0
        %v8488 = vadd.f32 %v8391, %v8487
        %v8489 = vpop.f32.mrb[0].mxu0
        %v8490 = vpop.f32.mrb[0].mxu0
        %v8491 = vadd.f32 %v8394, %v8490
        %v8492 = vpop.f32.mrb[0].mxu0
        %8493 = vdwg.mxu0
        %s8494 = scalar_lea.vmem %s222, 128
        %v8495 = vld [vmem:[%s8494] sm:$0xff]
        %v8496 = vld [vmem:[%s8494 + $0x8] sm:$0xff]
        %v8497 = vld [vmem:[%s8494 + $0x10] sm:$0xff]
        %v8498 = vld [vmem:[%s8494 + $0x18] sm:$0xff]
        %v8499 = vld [vmem:[%s8494 + $0x20] sm:$0xff]
        %v8500 = vld [vmem:[%s8494 + $0x28] sm:$0xff]
        %v8501 = vld [vmem:[%s8494 + $0x30] sm:$0xff]
        %v8502 = vld [vmem:[%s8494 + $0x38] sm:$0xff]
        %v8503 = vld [vmem:[%s8494 + $0x40] sm:$0xff]
        %v8504 = vld [vmem:[%s8494 + $0x48] sm:$0xff]
        %v8505 = vld [vmem:[%s8494 + $0x50] sm:$0xff]
        %v8506 = vld [vmem:[%s8494 + $0x58] sm:$0xff]
        %v8507 = vld [vmem:[%s8494 + $0x60] sm:$0xff]
        %v8508 = vld [vmem:[%s8494 + $0x68] sm:$0xff]
        %v8509 = vld [vmem:[%s8494 + $0x70] sm:$0xff]
        %v8510 = vld [vmem:[%s8494 + $0x78] sm:$0xff]
        %v8511 = vadd.f32 %v8432, %v8495
        %v8512 = vadd.f32 %v8435, %v8496
        %v8513 = vadd.f32 %v8440, %v8497
        %v8514 = vadd.f32 %v8443, %v8498
        %v8515 = vadd.f32 %v8448, %v8499
        %v8516 = vadd.f32 %v8451, %v8500
        %v8517 = vadd.f32 %v8456, %v8501
        %v8518 = vadd.f32 %v8459, %v8502
        %v8519 = vadd.f32 %v8464, %v8503
        %v8520 = vadd.f32 %v8467, %v8504
        %v8521 = vadd.f32 %v8472, %v8505
        %v8522 = vadd.f32 %v8475, %v8506
        %v8523 = vadd.f32 %v8480, %v8507
        %v8524 = vadd.f32 %v8483, %v8508
        %v8525 = vadd.f32 %v8488, %v8509
        %v8526 = vadd.f32 %v8491, %v8510
        %v8527 = vmax.f32 %v8511, 0.0
        %v8528 = vmax.f32 %v8512, 0.0
        %v8529 = vmax.f32 %v8513, 0.0
        %v8530 = vmax.f32 %v8514, 0.0
        %v8531 = vmax.f32 %v8515, 0.0
        %v8532 = vmax.f32 %v8516, 0.0
        %v8533 = vmax.f32 %v8517, 0.0
        %v8534 = vmax.f32 %v8518, 0.0
        %v8535 = vmax.f32 %v8519, 0.0
        %v8536 = vmax.f32 %v8520, 0.0
        %v8537 = vmax.f32 %v8521, 0.0
        %v8538 = vmax.f32 %v8522, 0.0
        %v8539 = vmax.f32 %v8523, 0.0
        %v8540 = vmax.f32 %v8524, 0.0
        %v8541 = vmax.f32 %v8525, 0.0
        %v8542 = vmax.f32 %v8526, 0.0
        %s8543 = scalar_lea.vmem %s217, 128 [#allocation5]
        %8544 = vst.msk [vmem:[%s8543] sm:$0xff] %vm1147, %v8527
        %8545 = vst.msk [vmem:[%s8543 + $0x8] sm:$0xff] %vm1147, %v8528
        %8546 = vst.msk [vmem:[%s8543 + $0x10] sm:$0xff] %vm1147, %v8529
        %8547 = vst.msk [vmem:[%s8543 + $0x18] sm:$0xff] %vm1147, %v8530
        %8548 = vst.msk [vmem:[%s8543 + $0x20] sm:$0xff] %vm1147, %v8531
        %8549 = vst.msk [vmem:[%s8543 + $0x28] sm:$0xff] %vm1147, %v8532
        %8550 = vst.msk [vmem:[%s8543 + $0x30] sm:$0xff] %vm1147, %v8533
        %8551 = vst.msk [vmem:[%s8543 + $0x38] sm:$0xff] %vm1147, %v8534
        %8552 = vst.msk [vmem:[%s8543 + $0x40] sm:$0xff] %vm1147, %v8535
        %8553 = vst.msk [vmem:[%s8543 + $0x48] sm:$0xff] %vm1147, %v8536
        %8554 = vst.msk [vmem:[%s8543 + $0x50] sm:$0xff] %vm1147, %v8537
        %8555 = vst.msk [vmem:[%s8543 + $0x58] sm:$0xff] %vm1147, %v8538
        %8556 = vst.msk [vmem:[%s8543 + $0x60] sm:$0xff] %vm1147, %v8539
        %8557 = vst.msk [vmem:[%s8543 + $0x68] sm:$0xff] %vm1147, %v8540
        %8558 = vst.msk [vmem:[%s8543 + $0x70] sm:$0xff] %vm1147, %v8541
        %8559 = vst.msk [vmem:[%s8543 + $0x78] sm:$0xff] %vm1147, %v8542
        %s8560 = sand.u32 %s137, 1
        %s8561 = scalar_lea.sflag [#allocation6], %s8560
        %s8562 = sand.u32 %s137, 1
        %s8563 = smul.addr %s8562, 256
        %s8564 = scalar_lea.vmem [#allocation5], %s8563
        // Predicated region
        $region41: #{_ring_call.1} parent=39 // pred_check
          %p8565 = pneg %p147
        $region42: #{_ring_call.1} parent=39 // pred_check_branch
          %8567 = sbr.rel (%p8565) target = $region44
        $region43: #{_ring_call.1} parent=39 // pred_region
          %s8569 = ssub.s32 4096, 4096
          %8570 = vsyncadd %s8561, %s8569
          %s8571 = smul.addr %s19, 32
          %s8572 = smul.addr %s8571, 128
          %s8573 = scalar_lea.hbm %s5, %s8572
          %s8574 = sshll.u32 %s8564, 4
          %s8575 = int_to_ptr.vmem [resolvable:$true] %s8574
          %8580 = dma.vmem_to_hbm [thread:$0]  %s8575, 4096, %s8573, %s8561, 128, 128, 8
        $region44: #{_ring_call.1} parent=39 // pred_fallthru
          _
      $region40: #{_ring_call.1} parent=5 // pred_fallthru
        _
      %p8581 = scmp.le.s32.totalorder 2, %s14
      // Predicated region
      $region45: #{_ring_call.1} parent=5 // pred_check
        %p8582 = pneg %p8581
      $region46: #{_ring_call.1} parent=5 // pred_check_branch
        %8584 = sbr.rel (%p8582) target = $region48
      $region47: #{_ring_call.1} parent=5 // pred_region
        %s8585 = ssub.s32 %s14, 2
        // Predicated region
        $region49: #{_ring_call.1} parent=47 // pred_check
          %p8586 = pneg %p153
        $region50: #{_ring_call.1} parent=47 // pred_check_branch
          %8588 = sbr.rel (%p8586) target = $region52
        $region51: #{_ring_call.1} parent=47 // pred_region
          %s8589 = sand.u32 %s138, 1
          %s8590 = scalar_lea.sflag [#allocation6], %s8589
          %s8591 = sand.u32 %s138, 1
          %s8592 = smul.addr %s8591, 256
          %s8593 = scalar_lea.vmem [#allocation5], %s8592
          %8594 = dma.done %s8590, 4096
        $region52: #{_ring_call.1} parent=47 // pred_fallthru
          _
      $region48: #{_ring_call.1} parent=5 // pred_fallthru
        _
    $region6: #{_ring_call.1} parent=1 // loop_footer
      %s18 = sadd.s32 1, %s14
    $region7: #{_ring_call.1} parent=1 // loop_footer_branch
      %13 = sbr.rel target = $region3
    $region8: #{_ring_call.1} parent=1 // loop_exit
      _
    %8595 = vsyncpa [#allocation6], 1
    %s8596 = scalar_lea.sflag [#allocation6], 1
    %8597 = vsyncpa %s8596, 1

</llo_original>
